<compile_context>
chip_gen: v7x
topology: tpu7x:2x2x1
jax: 0.10.0
libtpu: 0.0.40
codegen_flags: <defaults>
</compile_context>

<pallas_src>
import functools

import jax
import jax.numpy as jnp
from jax.experimental import pallas as pl
from jax.experimental.pallas import tpu as pltpu


def _round_up(x, m):
    return ((x + m - 1) // m) * m


def _group_norm(x, gamma, beta, n_group, eps=1e-5):
    """F.group_norm on a 2-D (N, C) input; gamma/beta are (1, C) or (N, C)."""
    b, c = x.shape
    if n_group == 1:
        mean = jnp.mean(x, axis=-1, keepdims=True)
        mean_sq = jnp.mean(x * x, axis=-1, keepdims=True)
        var = jnp.maximum(mean_sq - mean * mean, 0.0)
        xn = (x - mean) * jax.lax.rsqrt(var + eps)
    else:
        xg = x.reshape(b, n_group, c // n_group)
        mean = jnp.mean(xg, axis=-1, keepdims=True)
        mean_sq = jnp.mean(xg * xg, axis=-1, keepdims=True)
        var = jnp.maximum(mean_sq - mean * mean, 0.0)
        xn = ((xg - mean) * jax.lax.rsqrt(var + eps)).reshape(b, c)
    return xn * gamma + beta


def _shared_classifier_kernel(
    n_group,
    # inputs (one batch tile + resident weights)
    x_feat_ref, xp_ref,
    wA_ref, cA_ref,                                   # fused learner first stage
    ww1b_ref, wc1b_ref, bw1b_ref, bc1b_ref,           # learner second stages (2048)
    ww2b_ref, wc2b_ref, bw2b_ref, bc2b_ref,           # learner second stages (1024)
    w1_ref, b1_ref, w2_ref, b2_ref, w3_ref, b3_ref,   # base_net_linear{1,2,3}
    # output
    out_ref,
):
    f32 = jnp.float32
    xp = xp_ref[...]                                  # (tile_b, n_level) or (1, n_level)

    # Fused learner first stage: one matmul filling a full 128-lane result.
    h = jnp.maximum(
        jnp.dot(xp, wA_ref[...], preferred_element_type=f32) + cA_ref[...], 0.0)

    # ---- base-net layer 1 (learner params computed right before use) ----
    gn_w1 = jnp.dot(h[:, 0:32], ww1b_ref[...], preferred_element_type=f32) + wc1b_ref[...]
    gn_b1 = jnp.dot(h[:, 32:64], bw1b_ref[...], preferred_element_type=f32) + bc1b_ref[...]
    x = jnp.dot(x_feat_ref[...], w1_ref[...], preferred_element_type=f32) + b1_ref[...]
    x = jnp.maximum(_group_norm(x, gn_w1, gn_b1, n_group), 0.0)

    # ---- base-net layer 2 ----
    gn_w2 = jnp.dot(h[:, 64:96], ww2b_ref[...], preferred_element_type=f32) + wc2b_ref[...]
    gn_b2 = jnp.dot(h[:, 96:128], bw2b_ref[...], preferred_element_type=f32) + bc2b_ref[...]
    x = jnp.dot(x, w2_ref[...], preferred_element_type=f32) + b2_ref[...]
    x = jnp.maximum(_group_norm(x, gn_w2, gn_b2, n_group), 0.0)

    # ---- classifier head + log_softmax over dim=1 ----
    # Pad lanes carry bias -1e30 -> exp()==0, so the real-lane log-softmax is exact.
    logits = jnp.dot(x, w3_ref[...], preferred_element_type=f32) + b3_ref[...]
    m = jnp.max(logits, axis=1, keepdims=True)
    z = logits - m
    lse = jnp.log(jnp.sum(jnp.exp(z), axis=1, keepdims=True))
    out_ref[...] = z - lse


def init_params(key, n_param_in, n_channel_in, n_channel_out):
    """Deterministic params mimicking nn.Linear default init (U(-1/sqrt(fan_in), ..))."""
    def linear(k, fan_in, fan_out):
        k1, k2 = jax.random.split(k)
        bound = 1.0 / float(fan_in) ** 0.5
        w = jax.random.uniform(k1, (fan_in, fan_out), jnp.float32, -bound, bound)
        b = jax.random.uniform(k2, (1, fan_out), jnp.float32, -bound, bound)
        return w, b

    keys = jax.random.split(key, 11)
    p = {}
    p["ww1a"], p["wc1a"] = linear(keys[0], n_param_in, 32)
    p["ww1b"], p["wc1b"] = linear(keys[1], 32, 2048)
    p["bw1a"], p["bc1a"] = linear(keys[2], n_param_in, 32)
    p["bw1b"], p["bc1b"] = linear(keys[3], 32, 2048)
    p["ww2a"], p["wc2a"] = linear(keys[4], n_param_in, 32)
    p["ww2b"], p["wc2b"] = linear(keys[5], 32, 1024)
    p["bw2a"], p["bc2a"] = linear(keys[6], n_param_in, 32)
    p["bw2b"], p["bc2b"] = linear(keys[7], 32, 1024)
    p["w1"], p["b1"] = linear(keys[8], n_channel_in, 2048)
    p["w2"], p["b2"] = linear(keys[9], 2048, 1024)
    p["w3"], p["b3"] = linear(keys[10], 1024, n_channel_out)
    return p


def shared_classifier(params, x_feature, x_param, n_level, n_group=1,
                      b_level1=False, tile_b=256):
    x_param = x_param[:, :n_level].astype(jnp.float32)
    x_feature = x_feature.astype(jnp.float32)
    batch, n_feat = x_feature.shape
    n_out = params["w3"].shape[1]
    n_out_pad = _round_up(n_out, 128)

    # --- batch tiling (pad batch to a multiple of tile_b; min sublane = 8) ---
    tile_b = min(tile_b, _round_up(batch, 8))
    padded_b = _round_up(batch, tile_b)
    if padded_b != batch:
        x_feature = jnp.pad(x_feature, ((0, padded_b - batch), (0, 0)))
        x_param = jnp.pad(x_param, ((0, padded_b - batch), (0, 0)))
    grid = (padded_b // tile_b,)

    # --- fuse the four learner first-stage weights into one (n_level, 128) matmul ---
    wA = jnp.concatenate(
        [params["ww1a"], params["bw1a"], params["ww2a"], params["bw2a"]], axis=1)
    cA = jnp.concatenate(
        [params["wc1a"], params["bc1a"], params["wc2a"], params["bc2a"]], axis=1)

    # --- lane-dense classifier head: pad to n_out_pad lanes ---
    w3p = jnp.zeros((params["w3"].shape[0], n_out_pad), jnp.float32
                    ).at[:, :n_out].set(params["w3"])
    b3p = jnp.full((1, n_out_pad), -1e30, jnp.float32).at[:, :n_out].set(params["b3"])

    if b_level1:
        # Every sample uses GLOBAL sample 0's generated affine params: feed only
        # that row, with a constant index_map so it is correct across tiles.
        xp_in = x_param[0:1, :]
        xp_spec = pl.BlockSpec((1, n_level), lambda i: (0, 0))
    else:
        xp_in = x_param
        xp_spec = pl.BlockSpec((tile_b, n_level), lambda i: (i, 0))

    weights = [wA, cA,
               params["ww1b"], params["wc1b"], params["bw1b"], params["bc1b"],
               params["ww2b"], params["wc2b"], params["bw2b"], params["bc2b"],
               params["w1"], params["b1"], params["w2"], params["b2"], w3p, b3p]

    def const_spec(a):
        return pl.BlockSpec(a.shape, lambda i: (0, 0))

    in_specs = ([pl.BlockSpec((tile_b, n_feat), lambda i: (i, 0)), xp_spec]
                + [const_spec(a) for a in weights])
    out_spec = pl.BlockSpec((tile_b, n_out_pad), lambda i: (i, 0))

    # --- VMEM budget from actual sizes (weights double-buffered + activations) ---
    weight_bytes = sum(int(a.size) * a.dtype.itemsize for a in weights)
    act_bytes = tile_b * (3 * 2048 + 3 * 1024 + n_out_pad + n_feat + 128) * 4
    vmem_limit = int(min(2 * weight_bytes + 3 * act_bytes + (8 << 20), 56 << 20))

    kernel = functools.partial(_shared_classifier_kernel, n_group)
    out = pl.pallas_call(
        kernel,
        grid=grid,
        out_shape=jax.ShapeDtypeStruct((padded_b, n_out_pad), jnp.float32),
        in_specs=in_specs,
        out_specs=out_spec,
        compiler_params=pltpu.CompilerParams(
            dimension_semantics=("parallel",),
            vmem_limit_bytes=vmem_limit),
    )(x_feature, xp_in, *weights)
    return out[:batch, :n_out]


def reference(params, x_feature, x_param, n_level, n_group=1, b_level1=False):
    """Pure-JAX reference mirroring the torch forward (for correctness check)."""
    xp = x_param[:, :n_level]

    def learner(wa, ca, wb, cb):
        return jnp.maximum(xp @ wa + ca, 0.0) @ wb + cb

    gw1 = learner(params["ww1a"], params["wc1a"], params["ww1b"], params["wc1b"])
    gb1 = learner(params["bw1a"], params["bc1a"], params["bw1b"], params["bc1b"])
    gw2 = learner(params["ww2a"], params["wc2a"], params["ww2b"], params["wc2b"])
    gb2 = learner(params["bw2a"], params["bc2a"], params["bw2b"], params["bc2b"])
    if b_level1:
        gw1, gb1 = jnp.broadcast_to(gw1[0:1], gw1.shape), jnp.broadcast_to(gb1[0:1], gb1.shape)
        gw2, gb2 = jnp.broadcast_to(gw2[0:1], gw2.shape), jnp.broadcast_to(gb2[0:1], gb2.shape)

    def gn(x, g, b_):
        bsz, c = x.shape
        xg = x.reshape(bsz, n_group, c // n_group)
        mean = xg.mean(-1, keepdims=True)
        var = ((xg - mean) ** 2).mean(-1, keepdims=True)
        xn = ((xg - mean) / jnp.sqrt(var + 1e-5)).reshape(bsz, c)
        return xn * g + b_

    x = x_feature @ params["w1"] + params["b1"]
    x = jnp.maximum(gn(x, gw1, gb1), 0.0)
    x = x @ params["w2"] + params["b2"]
    x = jnp.maximum(gn(x, gw2, gb2), 0.0)
    logits = x @ params["w3"] + params["b3"]
    return jax.nn.log_softmax(logits, axis=1)


if __name__ == "__main__":
    key = jax.random.PRNGKey(0)
    n_param_in, n_channel_in, n_channel_out = 4, 64, 8

    kp, kf, kx = jax.random.split(key, 3)
    params = init_params(kp, n_param_in, n_channel_in, n_channel_out)

    def make_inputs(batch):
        xf = jax.random.normal(kf, (batch, n_channel_in), jnp.float32)
        # x_param is wider than n_param_in; the forward slices the first n_param_in cols.
        xpar = jax.random.normal(kx, (batch, 6), jnp.float32)
        # samples 0 and 1 share identical params (exercises the grouping equivalence)
        xpar = xpar.at[1, :].set(xpar[0, :])
        return xf, xpar

    # (batch, n_group, b_level1, tile_b) — last case exercises multi-tile grid + padding
    cases = [
        (4, 1, False, 256),
        (4, 1, True, 256),
        (4, 4, False, 256),
        (20, 1, False, 8),
        (20, 1, True, 8),
    ]
    for batch, n_group, b_level1, tile_b in cases:
        x_feature, x_param = make_inputs(batch)
        out = shared_classifier(params, x_feature, x_param, n_param_in,
                                n_group, b_level1, tile_b=tile_b)
        out = jax.block_until_ready(out)
        ref = reference(params, x_feature, x_param, n_param_in, n_group, b_level1)
        assert out.shape == (batch, n_channel_out)
        err = float(jnp.max(jnp.abs(out - ref)))
        assert err < 5e-4, (
            f"mismatch (batch={batch}, n_group={n_group}, b_level1={b_level1}): "
            f"max abs err {err}")

    print("KERNEL_OK")
</pallas_src>

<mosaic_0001>
module attributes {stable_mosaic.version = 11 : i64} {
  func.func @_shared_classifier_kernel(%arg0: i32, %arg1: memref<8x64xf32, #tpu.memory_space<vmem>>, %arg2: memref<8x4xf32, #tpu.memory_space<vmem>>, %arg3: memref<4x128xf32, #tpu.memory_space<vmem>>, %arg4: memref<1x128xf32, #tpu.memory_space<vmem>>, %arg5: memref<32x2048xf32, #tpu.memory_space<vmem>>, %arg6: memref<1x2048xf32, #tpu.memory_space<vmem>>, %arg7: memref<32x2048xf32, #tpu.memory_space<vmem>>, %arg8: memref<1x2048xf32, #tpu.memory_space<vmem>>, %arg9: memref<32x1024xf32, #tpu.memory_space<vmem>>, %arg10: memref<1x1024xf32, #tpu.memory_space<vmem>>, %arg11: memref<32x1024xf32, #tpu.memory_space<vmem>>, %arg12: memref<1x1024xf32, #tpu.memory_space<vmem>>, %arg13: memref<64x2048xf32, #tpu.memory_space<vmem>>, %arg14: memref<1x2048xf32, #tpu.memory_space<vmem>>, %arg15: memref<2048x1024xf32, #tpu.memory_space<vmem>>, %arg16: memref<1x1024xf32, #tpu.memory_space<vmem>>, %arg17: memref<1024x128xf32, #tpu.memory_space<vmem>>, %arg18: memref<1x128xf32, #tpu.memory_space<vmem>>, %arg19: memref<8x128xf32, #tpu.memory_space<vmem>>) attributes {dimension_semantics = [#tpu.dimension_semantics<parallel>], iteration_bounds = array<i64: 1>, scalar_prefetch = 0 : i64, scratch_operands = 0 : i64, tpu.core_type = #tpu.core_type<tc>, window_params = [{transform_indices = @transform_0, window_bounds = array<i64: 8, 64>}, {transform_indices = @transform_1, window_bounds = array<i64: 8, 4>}, {pipeline_mode = #tpu.pipeline_mode<synchronous>, transform_indices = @transform_2, window_bounds = array<i64: 4, 128>}, {pipeline_mode = #tpu.pipeline_mode<synchronous>, transform_indices = @transform_3, window_bounds = array<i64: 1, 128>}, {pipeline_mode = #tpu.pipeline_mode<synchronous>, transform_indices = @transform_4, window_bounds = array<i64: 32, 2048>}, {pipeline_mode = #tpu.pipeline_mode<synchronous>, transform_indices = @transform_5, window_bounds = array<i64: 1, 2048>}, {pipeline_mode = #tpu.pipeline_mode<synchronous>, transform_indices = @transform_6, window_bounds = array<i64: 32, 2048>}, {pipeline_mode = #tpu.pipeline_mode<synchronous>, transform_indices = @transform_7, window_bounds = array<i64: 1, 2048>}, {pipeline_mode = #tpu.pipeline_mode<synchronous>, transform_indices = @transform_8, window_bounds = array<i64: 32, 1024>}, {pipeline_mode = #tpu.pipeline_mode<synchronous>, transform_indices = @transform_9, window_bounds = array<i64: 1, 1024>}, {pipeline_mode = #tpu.pipeline_mode<synchronous>, transform_indices = @transform_10, window_bounds = array<i64: 32, 1024>}, {pipeline_mode = #tpu.pipeline_mode<synchronous>, transform_indices = @transform_11, window_bounds = array<i64: 1, 1024>}, {pipeline_mode = #tpu.pipeline_mode<synchronous>, transform_indices = @transform_12, window_bounds = array<i64: 64, 2048>}, {pipeline_mode = #tpu.pipeline_mode<synchronous>, transform_indices = @transform_13, window_bounds = array<i64: 1, 2048>}, {pipeline_mode = #tpu.pipeline_mode<synchronous>, transform_indices = @transform_14, window_bounds = array<i64: 2048, 1024>}, {pipeline_mode = #tpu.pipeline_mode<synchronous>, transform_indices = @transform_15, window_bounds = array<i64: 1, 1024>}, {pipeline_mode = #tpu.pipeline_mode<synchronous>, transform_indices = @transform_16, window_bounds = array<i64: 1024, 128>}, {pipeline_mode = #tpu.pipeline_mode<synchronous>, transform_indices = @transform_17, window_bounds = array<i64: 1, 128>}, {transform_indices = @transform_18, window_bounds = array<i64: 8, 128>}]} {
    %c0 = arith.constant 0 : index
    %c0_0 = arith.constant 0 : index
    %0 = vector.load %arg2[%c0, %c0_0] : memref<8x4xf32, #tpu.memory_space<vmem>>, vector<8x4xf32>
    %c0_1 = arith.constant 0 : index
    %c0_2 = arith.constant 0 : index
    %1 = vector.load %arg3[%c0_1, %c0_2] : memref<4x128xf32, #tpu.memory_space<vmem>>, vector<4x128xf32>
    %cst = arith.constant dense<0.000000e+00> : vector<8x128xf32>
    %2 = tpu.matmul %0, %1, %cst {dimension_numbers = #tpu.dot_dimension_numbers<[1], [0], [0], [1], [0, 0, 1, 1], [], []>} : vector<8x4xf32>, vector<4x128xf32>, vector<8x128xf32> -> vector<8x128xf32>
    %c0_3 = arith.constant 0 : index
    %c0_4 = arith.constant 0 : index
    %3 = vector.load %arg4[%c0_3, %c0_4] : memref<1x128xf32, #tpu.memory_space<vmem>>, vector<1x128xf32>
    %4 = vector.broadcast %3 : vector<1x128xf32> to vector<8x128xf32>
    %5 = arith.addf %2, %4 : vector<8x128xf32>
    %cst_5 = arith.constant 0.000000e+00 : f32
    %6 = vector.broadcast %cst_5 : f32 to vector<8x128xf32>
    %7 = arith.maximumf %5, %6 : vector<8x128xf32>
    %8 = vector.extract_strided_slice %7 {offsets = [0, 0], sizes = [8, 32], strides = [1, 1]} : vector<8x128xf32> to vector<8x32xf32>
    %c0_6 = arith.constant 0 : index
    %c0_7 = arith.constant 0 : index
    %9 = vector.load %arg5[%c0_6, %c0_7] : memref<32x2048xf32, #tpu.memory_space<vmem>>, vector<32x2048xf32>
    %cst_8 = arith.constant dense<0.000000e+00> : vector<8x2048xf32>
    %10 = tpu.matmul %8, %9, %cst_8 {dimension_numbers = #tpu.dot_dimension_numbers<[1], [0], [0], [1], [0, 0, 1, 1], [], []>} : vector<8x32xf32>, vector<32x2048xf32>, vector<8x2048xf32> -> vector<8x2048xf32>
    %c0_9 = arith.constant 0 : index
    %c0_10 = arith.constant 0 : index
    %11 = vector.load %arg6[%c0_9, %c0_10] : memref<1x2048xf32, #tpu.memory_space<vmem>>, vector<1x2048xf32>
    %12 = vector.broadcast %11 : vector<1x2048xf32> to vector<8x2048xf32>
    %13 = arith.addf %10, %12 : vector<8x2048xf32>
    %14 = vector.extract_strided_slice %7 {offsets = [0, 32], sizes = [8, 32], strides = [1, 1]} : vector<8x128xf32> to vector<8x32xf32>
    %c0_11 = arith.constant 0 : index
    %c0_12 = arith.constant 0 : index
    %15 = vector.load %arg7[%c0_11, %c0_12] : memref<32x2048xf32, #tpu.memory_space<vmem>>, vector<32x2048xf32>
    %cst_13 = arith.constant dense<0.000000e+00> : vector<8x2048xf32>
    %16 = tpu.matmul %14, %15, %cst_13 {dimension_numbers = #tpu.dot_dimension_numbers<[1], [0], [0], [1], [0, 0, 1, 1], [], []>} : vector<8x32xf32>, vector<32x2048xf32>, vector<8x2048xf32> -> vector<8x2048xf32>
    %c0_14 = arith.constant 0 : index
    %c0_15 = arith.constant 0 : index
    %17 = vector.load %arg8[%c0_14, %c0_15] : memref<1x2048xf32, #tpu.memory_space<vmem>>, vector<1x2048xf32>
    %18 = vector.broadcast %17 : vector<1x2048xf32> to vector<8x2048xf32>
    %19 = arith.addf %16, %18 : vector<8x2048xf32>
    %c0_16 = arith.constant 0 : index
    %c0_17 = arith.constant 0 : index
    %20 = vector.load %arg1[%c0_16, %c0_17] : memref<8x64xf32, #tpu.memory_space<vmem>>, vector<8x64xf32>
    %c0_18 = arith.constant 0 : index
    %c0_19 = arith.constant 0 : index
    %21 = vector.load %arg13[%c0_18, %c0_19] : memref<64x2048xf32, #tpu.memory_space<vmem>>, vector<64x2048xf32>
    %cst_20 = arith.constant dense<0.000000e+00> : vector<8x2048xf32>
    %22 = tpu.matmul %20, %21, %cst_20 {dimension_numbers = #tpu.dot_dimension_numbers<[1], [0], [0], [1], [0, 0, 1, 1], [], []>} : vector<8x64xf32>, vector<64x2048xf32>, vector<8x2048xf32> -> vector<8x2048xf32>
    %c0_21 = arith.constant 0 : index
    %c0_22 = arith.constant 0 : index
    %23 = vector.load %arg14[%c0_21, %c0_22] : memref<1x2048xf32, #tpu.memory_space<vmem>>, vector<1x2048xf32>
    %24 = vector.broadcast %23 : vector<1x2048xf32> to vector<8x2048xf32>
    %25 = arith.addf %22, %24 : vector<8x2048xf32>
    %cst_23 = arith.constant dense<0.000000e+00> : vector<8xf32>
    %26 = vector.multi_reduction <add>, %25, %cst_23 [1] : vector<8x2048xf32> to vector<8xf32>
    %27 = vector.shape_cast %26 : vector<8xf32> to vector<8x1xf32>
    %cst_24 = arith.constant 2.048000e+03 : f32
    %28 = vector.broadcast %cst_24 : f32 to vector<8x1xf32>
    %29 = arith.divf %27, %28 : vector<8x1xf32>
    %30 = arith.mulf %25, %25 : vector<8x2048xf32>
    %cst_25 = arith.constant dense<0.000000e+00> : vector<8xf32>
    %31 = vector.multi_reduction <add>, %30, %cst_25 [1] : vector<8x2048xf32> to vector<8xf32>
    %32 = vector.shape_cast %31 : vector<8xf32> to vector<8x1xf32>
    %cst_26 = arith.constant 2.048000e+03 : f32
    %33 = vector.broadcast %cst_26 : f32 to vector<8x1xf32>
    %34 = arith.divf %32, %33 : vector<8x1xf32>
    %35 = arith.mulf %29, %29 : vector<8x1xf32>
    %36 = arith.subf %34, %35 : vector<8x1xf32>
    %cst_27 = arith.constant 0.000000e+00 : f32
    %37 = vector.broadcast %cst_27 : f32 to vector<8x1xf32>
    %38 = arith.maximumf %36, %37 : vector<8x1xf32>
    %39 = vector.broadcast %29 : vector<8x1xf32> to vector<8x2048xf32>
    %40 = arith.subf %25, %39 : vector<8x2048xf32>
    %cst_28 = arith.constant 9.99999974E-6 : f32
    %41 = vector.broadcast %cst_28 : f32 to vector<8x1xf32>
    %42 = arith.addf %38, %41 : vector<8x1xf32>
    %43 = math.rsqrt %42 : vector<8x1xf32>
    %44 = vector.broadcast %43 : vector<8x1xf32> to vector<8x2048xf32>
    %45 = arith.mulf %40, %44 : vector<8x2048xf32>
    %46 = arith.mulf %45, %13 : vector<8x2048xf32>
    %47 = arith.addf %46, %19 : vector<8x2048xf32>
    %cst_29 = arith.constant 0.000000e+00 : f32
    %48 = vector.broadcast %cst_29 : f32 to vector<8x2048xf32>
    %49 = arith.maximumf %47, %48 : vector<8x2048xf32>
    %50 = vector.extract_strided_slice %7 {offsets = [0, 64], sizes = [8, 32], strides = [1, 1]} : vector<8x128xf32> to vector<8x32xf32>
    %c0_30 = arith.constant 0 : index
    %c0_31 = arith.constant 0 : index
    %51 = vector.load %arg9[%c0_30, %c0_31] : memref<32x1024xf32, #tpu.memory_space<vmem>>, vector<32x1024xf32>
    %cst_32 = arith.constant dense<0.000000e+00> : vector<8x1024xf32>
    %52 = tpu.matmul %50, %51, %cst_32 {dimension_numbers = #tpu.dot_dimension_numbers<[1], [0], [0], [1], [0, 0, 1, 1], [], []>} : vector<8x32xf32>, vector<32x1024xf32>, vector<8x1024xf32> -> vector<8x1024xf32>
    %c0_33 = arith.constant 0 : index
    %c0_34 = arith.constant 0 : index
    %53 = vector.load %arg10[%c0_33, %c0_34] : memref<1x1024xf32, #tpu.memory_space<vmem>>, vector<1x1024xf32>
    %54 = vector.broadcast %53 : vector<1x1024xf32> to vector<8x1024xf32>
    %55 = arith.addf %52, %54 : vector<8x1024xf32>
    %56 = vector.extract_strided_slice %7 {offsets = [0, 96], sizes = [8, 32], strides = [1, 1]} : vector<8x128xf32> to vector<8x32xf32>
    %c0_35 = arith.constant 0 : index
    %c0_36 = arith.constant 0 : index
    %57 = vector.load %arg11[%c0_35, %c0_36] : memref<32x1024xf32, #tpu.memory_space<vmem>>, vector<32x1024xf32>
    %cst_37 = arith.constant dense<0.000000e+00> : vector<8x1024xf32>
    %58 = tpu.matmul %56, %57, %cst_37 {dimension_numbers = #tpu.dot_dimension_numbers<[1], [0], [0], [1], [0, 0, 1, 1], [], []>} : vector<8x32xf32>, vector<32x1024xf32>, vector<8x1024xf32> -> vector<8x1024xf32>
    %c0_38 = arith.constant 0 : index
    %c0_39 = arith.constant 0 : index
    %59 = vector.load %arg12[%c0_38, %c0_39] : memref<1x1024xf32, #tpu.memory_space<vmem>>, vector<1x1024xf32>
    %60 = vector.broadcast %59 : vector<1x1024xf32> to vector<8x1024xf32>
    %61 = arith.addf %58, %60 : vector<8x1024xf32>
    %c0_40 = arith.constant 0 : index
    %c0_41 = arith.constant 0 : index
    %62 = vector.load %arg15[%c0_40, %c0_41] : memref<2048x1024xf32, #tpu.memory_space<vmem>>, vector<2048x1024xf32>
    %cst_42 = arith.constant dense<0.000000e+00> : vector<8x1024xf32>
    %63 = tpu.matmul %49, %62, %cst_42 {dimension_numbers = #tpu.dot_dimension_numbers<[1], [0], [0], [1], [0, 0, 1, 1], [], []>} : vector<8x2048xf32>, vector<2048x1024xf32>, vector<8x1024xf32> -> vector<8x1024xf32>
    %c0_43 = arith.constant 0 : index
    %c0_44 = arith.constant 0 : index
    %64 = vector.load %arg16[%c0_43, %c0_44] : memref<1x1024xf32, #tpu.memory_space<vmem>>, vector<1x1024xf32>
    %65 = vector.broadcast %64 : vector<1x1024xf32> to vector<8x1024xf32>
    %66 = arith.addf %63, %65 : vector<8x1024xf32>
    %cst_45 = arith.constant dense<0.000000e+00> : vector<8xf32>
    %67 = vector.multi_reduction <add>, %66, %cst_45 [1] : vector<8x1024xf32> to vector<8xf32>
    %68 = vector.shape_cast %67 : vector<8xf32> to vector<8x1xf32>
    %cst_46 = arith.constant 1.024000e+03 : f32
    %69 = vector.broadcast %cst_46 : f32 to vector<8x1xf32>
    %70 = arith.divf %68, %69 : vector<8x1xf32>
    %71 = arith.mulf %66, %66 : vector<8x1024xf32>
    %cst_47 = arith.constant dense<0.000000e+00> : vector<8xf32>
    %72 = vector.multi_reduction <add>, %71, %cst_47 [1] : vector<8x1024xf32> to vector<8xf32>
    %73 = vector.shape_cast %72 : vector<8xf32> to vector<8x1xf32>
    %cst_48 = arith.constant 1.024000e+03 : f32
    %74 = vector.broadcast %cst_48 : f32 to vector<8x1xf32>
    %75 = arith.divf %73, %74 : vector<8x1xf32>
    %76 = arith.mulf %70, %70 : vector<8x1xf32>
    %77 = arith.subf %75, %76 : vector<8x1xf32>
    %cst_49 = arith.constant 0.000000e+00 : f32
    %78 = vector.broadcast %cst_49 : f32 to vector<8x1xf32>
    %79 = arith.maximumf %77, %78 : vector<8x1xf32>
    %80 = vector.broadcast %70 : vector<8x1xf32> to vector<8x1024xf32>
    %81 = arith.subf %66, %80 : vector<8x1024xf32>
    %cst_50 = arith.constant 9.99999974E-6 : f32
    %82 = vector.broadcast %cst_50 : f32 to vector<8x1xf32>
    %83 = arith.addf %79, %82 : vector<8x1xf32>
    %84 = math.rsqrt %83 : vector<8x1xf32>
    %85 = vector.broadcast %84 : vector<8x1xf32> to vector<8x1024xf32>
    %86 = arith.mulf %81, %85 : vector<8x1024xf32>
    %87 = arith.mulf %86, %55 : vector<8x1024xf32>
    %88 = arith.addf %87, %61 : vector<8x1024xf32>
    %cst_51 = arith.constant 0.000000e+00 : f32
    %89 = vector.broadcast %cst_51 : f32 to vector<8x1024xf32>
    %90 = arith.maximumf %88, %89 : vector<8x1024xf32>
    %c0_52 = arith.constant 0 : index
    %c0_53 = arith.constant 0 : index
    %91 = vector.load %arg17[%c0_52, %c0_53] : memref<1024x128xf32, #tpu.memory_space<vmem>>, vector<1024x128xf32>
    %cst_54 = arith.constant dense<0.000000e+00> : vector<8x128xf32>
    %92 = tpu.matmul %90, %91, %cst_54 {dimension_numbers = #tpu.dot_dimension_numbers<[1], [0], [0], [1], [0, 0, 1, 1], [], []>} : vector<8x1024xf32>, vector<1024x128xf32>, vector<8x128xf32> -> vector<8x128xf32>
    %c0_55 = arith.constant 0 : index
    %c0_56 = arith.constant 0 : index
    %93 = vector.load %arg18[%c0_55, %c0_56] : memref<1x128xf32, #tpu.memory_space<vmem>>, vector<1x128xf32>
    %94 = vector.broadcast %93 : vector<1x128xf32> to vector<8x128xf32>
    %95 = arith.addf %92, %94 : vector<8x128xf32>
    %cst_57 = arith.constant dense<0xFF800000> : vector<8xf32>
    %96 = vector.multi_reduction <maximumf>, %95, %cst_57 [1] : vector<8x128xf32> to vector<8xf32>
    %97 = vector.shape_cast %96 : vector<8xf32> to vector<8x1xf32>
    %98 = vector.broadcast %97 : vector<8x1xf32> to vector<8x128xf32>
    %99 = arith.subf %95, %98 : vector<8x128xf32>
    %100 = math.exp %99 : vector<8x128xf32>
    %cst_58 = arith.constant dense<0.000000e+00> : vector<8xf32>
    %101 = vector.multi_reduction <add>, %100, %cst_58 [1] : vector<8x128xf32> to vector<8xf32>
    %102 = vector.shape_cast %101 : vector<8xf32> to vector<8x1xf32>
    %103 = math.log %102 : vector<8x1xf32>
    %104 = vector.broadcast %103 : vector<8x1xf32> to vector<8x128xf32>
    %105 = arith.subf %99, %104 : vector<8x128xf32>
    %c0_59 = arith.constant 0 : index
    %c0_60 = arith.constant 0 : index
    %106 = vector.load %arg19[%c0_59, %c0_60] : memref<8x128xf32, #tpu.memory_space<vmem>>, vector<8x128xf32>
    tpu.vector_store %arg19[%c0_59, %c0_60], %105 {strides = array<i32>} : memref<8x128xf32, #tpu.memory_space<vmem>>, vector<8x128xf32>,
    return
  }
  func.func @transform_0(%arg0: i32) -> (i32, i32) {
    %c0_i32 = arith.constant 0 : i32
    %c0_i32_0 = arith.constant 0 : i32
    return %arg0, %c0_i32 : i32, i32
  }
  func.func @transform_1(%arg0: i32) -> (i32, i32) {
    %c0_i32 = arith.constant 0 : i32
    %c0_i32_0 = arith.constant 0 : i32
    return %arg0, %c0_i32 : i32, i32
  }
  func.func @transform_2(%arg0: i32) -> (i32, i32) {
    %c0_i32 = arith.constant 0 : i32
    %c0_i32_0 = arith.constant 0 : i32
    %c0_i32_1 = arith.constant 0 : i32
    return %c0_i32, %c0_i32_0 : i32, i32
  }
  func.func @transform_3(%arg0: i32) -> (i32, i32) {
    %c0_i32 = arith.constant 0 : i32
    %c0_i32_0 = arith.constant 0 : i32
    %c0_i32_1 = arith.constant 0 : i32
    return %c0_i32, %c0_i32_0 : i32, i32
  }
  func.func @transform_4(%arg0: i32) -> (i32, i32) {
    %c0_i32 = arith.constant 0 : i32
    %c0_i32_0 = arith.constant 0 : i32
    %c0_i32_1 = arith.constant 0 : i32
    return %c0_i32, %c0_i32_0 : i32, i32
  }
  func.func @transform_5(%arg0: i32) -> (i32, i32) {
    %c0_i32 = arith.constant 0 : i32
    %c0_i32_0 = arith.constant 0 : i32
    %c0_i32_1 = arith.constant 0 : i32
    return %c0_i32, %c0_i32_0 : i32, i32
  }
  func.func @transform_6(%arg0: i32) -> (i32, i32) {
    %c0_i32 = arith.constant 0 : i32
    %c0_i32_0 = arith.constant 0 : i32
    %c0_i32_1 = arith.constant 0 : i32
    return %c0_i32, %c0_i32_0 : i32, i32
  }
  func.func @transform_7(%arg0: i32) -> (i32, i32) {
    %c0_i32 = arith.constant 0 : i32
    %c0_i32_0 = arith.constant 0 : i32
    %c0_i32_1 = arith.constant 0 : i32
    return %c0_i32, %c0_i32_0 : i32, i32
  }
  func.func @transform_8(%arg0: i32) -> (i32, i32) {
    %c0_i32 = arith.constant 0 : i32
    %c0_i32_0 = arith.constant 0 : i32
    %c0_i32_1 = arith.constant 0 : i32
    return %c0_i32, %c0_i32_0 : i32, i32
  }
  func.func @transform_9(%arg0: i32) -> (i32, i32) {
    %c0_i32 = arith.constant 0 : i32
    %c0_i32_0 = arith.constant 0 : i32
    %c0_i32_1 = arith.constant 0 : i32
    return %c0_i32, %c0_i32_0 : i32, i32
  }
  func.func @transform_10(%arg0: i32) -> (i32, i32) {
    %c0_i32 = arith.constant 0 : i32
    %c0_i32_0 = arith.constant 0 : i32
    %c0_i32_1 = arith.constant 0 : i32
    return %c0_i32, %c0_i32_0 : i32, i32
  }
  func.func @transform_11(%arg0: i32) -> (i32, i32) {
    %c0_i32 = arith.constant 0 : i32
    %c0_i32_0 = arith.constant 0 : i32
    %c0_i32_1 = arith.constant 0 : i32
    return %c0_i32, %c0_i32_0 : i32, i32
  }
  func.func @transform_12(%arg0: i32) -> (i32, i32) {
    %c0_i32 = arith.constant 0 : i32
    %c0_i32_0 = arith.constant 0 : i32
    %c0_i32_1 = arith.constant 0 : i32
    return %c0_i32, %c0_i32_0 : i32, i32
  }
  func.func @transform_13(%arg0: i32) -> (i32, i32) {
    %c0_i32 = arith.constant 0 : i32
    %c0_i32_0 = arith.constant 0 : i32
    %c0_i32_1 = arith.constant 0 : i32
    return %c0_i32, %c0_i32_0 : i32, i32
  }
  func.func @transform_14(%arg0: i32) -> (i32, i32) {
    %c0_i32 = arith.constant 0 : i32
    %c0_i32_0 = arith.constant 0 : i32
    %c0_i32_1 = arith.constant 0 : i32
    return %c0_i32, %c0_i32_0 : i32, i32
  }
  func.func @transform_15(%arg0: i32) -> (i32, i32) {
    %c0_i32 = arith.constant 0 : i32
    %c0_i32_0 = arith.constant 0 : i32
    %c0_i32_1 = arith.constant 0 : i32
    return %c0_i32, %c0_i32_0 : i32, i32
  }
  func.func @transform_16(%arg0: i32) -> (i32, i32) {
    %c0_i32 = arith.constant 0 : i32
    %c0_i32_0 = arith.constant 0 : i32
    %c0_i32_1 = arith.constant 0 : i32
    return %c0_i32, %c0_i32_0 : i32, i32
  }
  func.func @transform_17(%arg0: i32) -> (i32, i32) {
    %c0_i32 = arith.constant 0 : i32
    %c0_i32_0 = arith.constant 0 : i32
    %c0_i32_1 = arith.constant 0 : i32
    return %c0_i32, %c0_i32_0 : i32, i32
  }
  func.func @transform_18(%arg0: i32) -> (i32, i32) {
    %c0_i32 = arith.constant 0 : i32
    %c0_i32_0 = arith.constant 0 : i32
    return %arg0, %c0_i32 : i32, i32
  }
}

</mosaic_0001>

<llo_original>
// kernel: tpu_custom_call.1
$region0: #{tpu_custom_call.1}
  #allocation0 [shape = 'u32[]', space=smem, size = 0x4, offset = 0x4, fixed_abs, tag = 'smem constant byte address 0x4 - core index']
  #allocation1 [shape = 'u32[144,128]{1,0:T(1,128)}', space=vmem, size = 0x12000, scoped, tag = 'internal scratch']
  %s0 = inlined_call_operand.hbm [shape: f32[8,64], index: 0, kind: input, shape index: {}]
  %s1 = inlined_call_operand.vmem [shape: f32[8,4], index: 1, kind: input, shape index: {}]
  %s2 = inlined_call_operand.hbm [shape: f32[4,128], index: 2, kind: input, shape index: {}]
  %s3 = inlined_call_operand.hbm [shape: f32[1,128], index: 3, kind: input, shape index: {}]
  %s4 = inlined_call_operand.hbm [shape: f32[32,2048], index: 4, kind: input, shape index: {}]
  %s5 = inlined_call_operand.hbm [shape: f32[1,2048], index: 5, kind: input, shape index: {}]
  %s6 = inlined_call_operand.hbm [shape: f32[32,2048], index: 6, kind: input, shape index: {}]
  %s7 = inlined_call_operand.hbm [shape: f32[1,2048], index: 7, kind: input, shape index: {}]
  %s8 = inlined_call_operand.hbm [shape: f32[32,1024], index: 8, kind: input, shape index: {}]
  %s9 = inlined_call_operand.hbm [shape: f32[1,1024], index: 9, kind: input, shape index: {}]
  %s10 = inlined_call_operand.hbm [shape: f32[32,1024], index: 10, kind: input, shape index: {}]
  %s11 = inlined_call_operand.hbm [shape: f32[1,1024], index: 11, kind: input, shape index: {}]
  %s12 = inlined_call_operand.hbm [shape: f32[64,2048], index: 12, kind: input, shape index: {}]
  %s13 = inlined_call_operand.hbm [shape: f32[1,2048], index: 13, kind: input, shape index: {}]
  %s14 = inlined_call_operand.hbm [shape: f32[2048,1024], index: 14, kind: input, shape index: {}]
  %s15 = inlined_call_operand.hbm [shape: f32[1,1024], index: 15, kind: input, shape index: {}]
  %s16 = inlined_call_operand.hbm [shape: f32[1024,128], index: 16, kind: input, shape index: {}]
  %s17 = inlined_call_operand.hbm [shape: f32[1,128], index: 17, kind: input, shape index: {}]
  %s18 = inlined_call_operand.hbm [shape: f32[8,128], index: 18, kind: output, shape index: {}]
  %s19 = sld [smem:[#allocation0]]
  $region150: #{tpu_custom_call.1} parent=0
    _
  %s21 = ssub.s32 1, %s19
  %s22 = scalar_select 0, %s21, %s19
  $region1: #{tpu_custom_call.1} parent=0
    #allocation2 [shape = 'u8[4096]{0}', space=vmem, size = 0x1000, scoped, tag = 'input window, operand 0, single buffered']
    #allocation3 [shape = 's32[1]{0}', space=sflag, size = 0x4, scoped, tag = 'scoped memory for tpu_custom_call.1']
    #allocation4 [shape = 's32[1]{0}', space=sflag, size = 0x4, scoped, tag = 'scoped memory for tpu_custom_call.1']
    #allocation5 [shape = 'u8[2048]{0}', space=vmem, size = 0x800, scoped, tag = 'input window, operand 2, single buffered']
    #allocation6 [shape = 's32[1]{0}', space=sflag, size = 0x4, scoped, tag = 'scoped memory for tpu_custom_call.1']
    #allocation7 [shape = 'u8[512]{0}', space=vmem, size = 0x400, scoped, tag = 'input window, operand 3, single buffered']
    #allocation8 [shape = 'u8[262144]{0}', space=vmem, size = 0x40000, scoped, tag = 'input window, operand 4, single buffered']
    #allocation9 [shape = 's32[1]{0}', space=sflag, size = 0x4, scoped, tag = 'scoped memory for tpu_custom_call.1']
    #allocation10 [shape = 'u8[8192]{0}', space=vmem, size = 0x2000, scoped, tag = 'input window, operand 5, single buffered']
    #allocation11 [shape = 'u8[262144]{0}', space=vmem, size = 0x40000, scoped, tag = 'input window, operand 6, single buffered']
    #allocation12 [shape = 's32[1]{0}', space=sflag, size = 0x4, scoped, tag = 'scoped memory for tpu_custom_call.1']
    #allocation13 [shape = 'u8[8192]{0}', space=vmem, size = 0x2000, scoped, tag = 'input window, operand 7, single buffered']
    #allocation14 [shape = 'u8[131072]{0}', space=vmem, size = 0x20000, scoped, tag = 'input window, operand 8, single buffered']
    #allocation15 [shape = 's32[1]{0}', space=sflag, size = 0x4, scoped, tag = 'scoped memory for tpu_custom_call.1']
    #allocation16 [shape = 'u8[4096]{0}', space=vmem, size = 0x1000, scoped, tag = 'input window, operand 9, single buffered']
    #allocation17 [shape = 'u8[131072]{0}', space=vmem, size = 0x20000, scoped, tag = 'input window, operand 10, single buffered']
    #allocation18 [shape = 's32[1]{0}', space=sflag, size = 0x4, scoped, tag = 'scoped memory for tpu_custom_call.1']
    #allocation19 [shape = 'u8[4096]{0}', space=vmem, size = 0x1000, scoped, tag = 'input window, operand 11, single buffered']
    #allocation20 [shape = 'u8[524288]{0}', space=vmem, size = 0x80000, scoped, tag = 'input window, operand 12, single buffered']
    #allocation21 [shape = 's32[1]{0}', space=sflag, size = 0x4, scoped, tag = 'scoped memory for tpu_custom_call.1']
    #allocation22 [shape = 'u8[8192]{0}', space=vmem, size = 0x2000, scoped, tag = 'input window, operand 13, single buffered']
    #allocation23 [shape = 'u8[8388608]{0}', space=vmem, size = 0x800000, scoped, tag = 'input window, operand 14, single buffered']
    #allocation24 [shape = 's32[1]{0}', space=sflag, size = 0x4, scoped, tag = 'scoped memory for tpu_custom_call.1']
    #allocation25 [shape = 'u8[4096]{0}', space=vmem, size = 0x1000, scoped, tag = 'input window, operand 15, single buffered']
    #allocation26 [shape = 'u8[524288]{0}', space=vmem, size = 0x80000, scoped, tag = 'input window, operand 16, single buffered']
    #allocation27 [shape = 's32[1]{0}', space=sflag, size = 0x4, scoped, tag = 'scoped memory for tpu_custom_call.1']
    #allocation28 [shape = 'u8[512]{0}', space=vmem, size = 0x400, scoped, tag = 'input window, operand 17, single buffered']
    #allocation29 [shape = 'u8[4096]{0}', space=vmem, size = 0x1000, scoped, tag = 'output window, operand 0, single buffered']
    %23 = vsyncpa [#allocation3], 0
    %24 = vsyncpa [#allocation6], 0
    %25 = vsyncpa [#allocation9], 0
    %26 = vsyncpa [#allocation12], 0
    %27 = vsyncpa [#allocation15], 0
    %28 = vsyncpa [#allocation18], 0
    %29 = vsyncpa [#allocation21], 0
    %30 = vsyncpa [#allocation24], 0
    %31 = vsyncpa [#allocation27], 0
    %32 = vsyncpa [#allocation4], 0
    // Predicated region
    $region2: #{tpu_custom_call.1} parent=1 // pred_check
      _
    $region3: #{tpu_custom_call.1} parent=1 // pred_check_branch
      %34 = sbr.rel (0) target = $region5
    $region4: #{tpu_custom_call.1} parent=1 // pred_region
      %s36 = ssub.s32 128, 128
      %37 = vsyncadd [#allocation3], %s36
      %s39 = sshll.u32 [#allocation2], 4
      %s40 = int_to_ptr.vmem [resolvable:$true] %s39
      %42 = dma.hbm_to_vmem [thread:$0]  %s0, 128, %s40, [#allocation3]
    $region5: #{tpu_custom_call.1} parent=1 // pred_fallthru
      _
    // Predicated region
    $region6: #{tpu_custom_call.1} parent=1 // pred_check
      _
    $region7: #{tpu_custom_call.1} parent=1 // pred_check_branch
      %44 = sbr.rel (0) target = $region9
    $region8: #{tpu_custom_call.1} parent=1 // pred_region
      _
    $region9: #{tpu_custom_call.1} parent=1 // pred_fallthru
      _
    // Predicated region
    $region10: #{tpu_custom_call.1} parent=1 // pred_check
      _
    $region11: #{tpu_custom_call.1} parent=1 // pred_check_branch
      %46 = sbr.rel (0) target = $region13
    $region12: #{tpu_custom_call.1} parent=1 // pred_region
      %s48 = ssub.s32 64, 64
      %49 = vsyncadd [#allocation6], %s48
      %s51 = sshll.u32 [#allocation5], 4
      %s52 = int_to_ptr.vmem [resolvable:$true] %s51
      %54 = dma.hbm_to_vmem [thread:$0]  %s2, 64, %s52, [#allocation6]
    $region13: #{tpu_custom_call.1} parent=1 // pred_fallthru
      _
    // Predicated region
    $region14: #{tpu_custom_call.1} parent=1 // pred_check
      _
    $region15: #{tpu_custom_call.1} parent=1 // pred_check_branch
      %56 = sbr.rel (0) target = $region17
    $region16: #{tpu_custom_call.1} parent=1 // pred_region
      %s58 = ssub.s32 16, 16
      %59 = vsyncadd [#allocation6], %s58
      %s61 = sshll.u32 [#allocation7], 4
      %s62 = int_to_ptr.vmem [resolvable:$true] %s61
      %64 = dma.hbm_to_vmem [thread:$0]  %s3, 16, %s62, [#allocation6]
    $region17: #{tpu_custom_call.1} parent=1 // pred_fallthru
      _
    // Predicated region
    $region18: #{tpu_custom_call.1} parent=1 // pred_check
      _
    $region19: #{tpu_custom_call.1} parent=1 // pred_check_branch
      %66 = sbr.rel (0) target = $region21
    $region20: #{tpu_custom_call.1} parent=1 // pred_region
      %s68 = ssub.s32 8192, 8192
      %69 = vsyncadd [#allocation9], %s68
      %s70 = sshll.u32 [#allocation8], 4
      %s71 = int_to_ptr.vmem [resolvable:$true] %s70
      %76 = dma.hbm_to_vmem [thread:$0]  %s4, 8192, %s71, [#allocation9], 2048, 2048, 128
    $region21: #{tpu_custom_call.1} parent=1 // pred_fallthru
      _
    // Predicated region
    $region22: #{tpu_custom_call.1} parent=1 // pred_check
      _
    $region23: #{tpu_custom_call.1} parent=1 // pred_check_branch
      %78 = sbr.rel (0) target = $region25
    $region24: #{tpu_custom_call.1} parent=1 // pred_region
      %s80 = ssub.s32 256, 256
      %81 = vsyncadd [#allocation9], %s80
      %s83 = sshll.u32 [#allocation10], 4
      %s84 = int_to_ptr.vmem [resolvable:$true] %s83
      %86 = dma.hbm_to_vmem [thread:$0]  %s5, 256, %s84, [#allocation9]
    $region25: #{tpu_custom_call.1} parent=1 // pred_fallthru
      _
    // Predicated region
    $region26: #{tpu_custom_call.1} parent=1 // pred_check
      _
    $region27: #{tpu_custom_call.1} parent=1 // pred_check_branch
      %88 = sbr.rel (0) target = $region29
    $region28: #{tpu_custom_call.1} parent=1 // pred_region
      %s90 = ssub.s32 8192, 8192
      %91 = vsyncadd [#allocation12], %s90
      %s92 = sshll.u32 [#allocation11], 4
      %s93 = int_to_ptr.vmem [resolvable:$true] %s92
      %98 = dma.hbm_to_vmem [thread:$0]  %s6, 8192, %s93, [#allocation12], 2048, 2048, 128
    $region29: #{tpu_custom_call.1} parent=1 // pred_fallthru
      _
    // Predicated region
    $region30: #{tpu_custom_call.1} parent=1 // pred_check
      _
    $region31: #{tpu_custom_call.1} parent=1 // pred_check_branch
      %100 = sbr.rel (0) target = $region33
    $region32: #{tpu_custom_call.1} parent=1 // pred_region
      %s102 = ssub.s32 256, 256
      %103 = vsyncadd [#allocation12], %s102
      %s105 = sshll.u32 [#allocation13], 4
      %s106 = int_to_ptr.vmem [resolvable:$true] %s105
      %108 = dma.hbm_to_vmem [thread:$0]  %s7, 256, %s106, [#allocation12]
    $region33: #{tpu_custom_call.1} parent=1 // pred_fallthru
      _
    // Predicated region
    $region34: #{tpu_custom_call.1} parent=1 // pred_check
      _
    $region35: #{tpu_custom_call.1} parent=1 // pred_check_branch
      %110 = sbr.rel (0) target = $region37
    $region36: #{tpu_custom_call.1} parent=1 // pred_region
      %s112 = ssub.s32 4096, 4096
      %113 = vsyncadd [#allocation15], %s112
      %s114 = sshll.u32 [#allocation14], 4
      %s115 = int_to_ptr.vmem [resolvable:$true] %s114
      %120 = dma.hbm_to_vmem [thread:$0]  %s8, 4096, %s115, [#allocation15], 1024, 1024, 64
    $region37: #{tpu_custom_call.1} parent=1 // pred_fallthru
      _
    // Predicated region
    $region38: #{tpu_custom_call.1} parent=1 // pred_check
      _
    $region39: #{tpu_custom_call.1} parent=1 // pred_check_branch
      %122 = sbr.rel (0) target = $region41
    $region40: #{tpu_custom_call.1} parent=1 // pred_region
      %s124 = ssub.s32 128, 128
      %125 = vsyncadd [#allocation15], %s124
      %s127 = sshll.u32 [#allocation16], 4
      %s128 = int_to_ptr.vmem [resolvable:$true] %s127
      %130 = dma.hbm_to_vmem [thread:$0]  %s9, 128, %s128, [#allocation15]
    $region41: #{tpu_custom_call.1} parent=1 // pred_fallthru
      _
    // Predicated region
    $region42: #{tpu_custom_call.1} parent=1 // pred_check
      _
    $region43: #{tpu_custom_call.1} parent=1 // pred_check_branch
      %132 = sbr.rel (0) target = $region45
    $region44: #{tpu_custom_call.1} parent=1 // pred_region
      %s134 = ssub.s32 4096, 4096
      %135 = vsyncadd [#allocation18], %s134
      %s136 = sshll.u32 [#allocation17], 4
      %s137 = int_to_ptr.vmem [resolvable:$true] %s136
      %142 = dma.hbm_to_vmem [thread:$0]  %s10, 4096, %s137, [#allocation18], 1024, 1024, 64
    $region45: #{tpu_custom_call.1} parent=1 // pred_fallthru
      _
    // Predicated region
    $region46: #{tpu_custom_call.1} parent=1 // pred_check
      _
    $region47: #{tpu_custom_call.1} parent=1 // pred_check_branch
      %144 = sbr.rel (0) target = $region49
    $region48: #{tpu_custom_call.1} parent=1 // pred_region
      %s146 = ssub.s32 128, 128
      %147 = vsyncadd [#allocation18], %s146
      %s149 = sshll.u32 [#allocation19], 4
      %s150 = int_to_ptr.vmem [resolvable:$true] %s149
      %152 = dma.hbm_to_vmem [thread:$0]  %s11, 128, %s150, [#allocation18]
    $region49: #{tpu_custom_call.1} parent=1 // pred_fallthru
      _
    // Predicated region
    $region50: #{tpu_custom_call.1} parent=1 // pred_check
      _
    $region51: #{tpu_custom_call.1} parent=1 // pred_check_branch
      %154 = sbr.rel (0) target = $region53
    $region52: #{tpu_custom_call.1} parent=1 // pred_region
      %s156 = ssub.s32 16384, 16384
      %157 = vsyncadd [#allocation21], %s156
      %s158 = sshll.u32 [#allocation20], 4
      %s159 = int_to_ptr.vmem [resolvable:$true] %s158
      %164 = dma.hbm_to_vmem [thread:$0]  %s12, 16384, %s159, [#allocation21], 2048, 2048, 128
    $region53: #{tpu_custom_call.1} parent=1 // pred_fallthru
      _
    // Predicated region
    $region54: #{tpu_custom_call.1} parent=1 // pred_check
      _
    $region55: #{tpu_custom_call.1} parent=1 // pred_check_branch
      %166 = sbr.rel (0) target = $region57
    $region56: #{tpu_custom_call.1} parent=1 // pred_region
      %s168 = ssub.s32 256, 256
      %169 = vsyncadd [#allocation21], %s168
      %s171 = sshll.u32 [#allocation22], 4
      %s172 = int_to_ptr.vmem [resolvable:$true] %s171
      %174 = dma.hbm_to_vmem [thread:$0]  %s13, 256, %s172, [#allocation21]
    $region57: #{tpu_custom_call.1} parent=1 // pred_fallthru
      _
    // Predicated region
    $region58: #{tpu_custom_call.1} parent=1 // pred_check
      _
    $region59: #{tpu_custom_call.1} parent=1 // pred_check_branch
      %176 = sbr.rel (0) target = $region61
    $region60: #{tpu_custom_call.1} parent=1 // pred_region
      %s178 = ssub.s32 262144, 262144
      %179 = vsyncadd [#allocation24], %s178
      %s180 = sshll.u32 [#allocation23], 4
      %s181 = int_to_ptr.vmem [resolvable:$true] %s180
      %186 = dma.hbm_to_vmem [thread:$0]  %s14, 262144, %s181, [#allocation24], 1024, 1024, 64
    $region61: #{tpu_custom_call.1} parent=1 // pred_fallthru
      _
    // Predicated region
    $region62: #{tpu_custom_call.1} parent=1 // pred_check
      _
    $region63: #{tpu_custom_call.1} parent=1 // pred_check_branch
      %188 = sbr.rel (0) target = $region65
    $region64: #{tpu_custom_call.1} parent=1 // pred_region
      %s190 = ssub.s32 128, 128
      %191 = vsyncadd [#allocation24], %s190
      %s193 = sshll.u32 [#allocation25], 4
      %s194 = int_to_ptr.vmem [resolvable:$true] %s193
      %196 = dma.hbm_to_vmem [thread:$0]  %s15, 128, %s194, [#allocation24]
    $region65: #{tpu_custom_call.1} parent=1 // pred_fallthru
      _
    // Predicated region
    $region66: #{tpu_custom_call.1} parent=1 // pred_check
      _
    $region67: #{tpu_custom_call.1} parent=1 // pred_check_branch
      %198 = sbr.rel (0) target = $region69
    $region68: #{tpu_custom_call.1} parent=1 // pred_region
      %s200 = ssub.s32 16384, 16384
      %201 = vsyncadd [#allocation27], %s200
      %s202 = sshll.u32 [#allocation26], 4
      %s203 = int_to_ptr.vmem [resolvable:$true] %s202
      %208 = dma.hbm_to_vmem [thread:$0]  %s16, 16384, %s203, [#allocation27], 128, 128, 8
    $region69: #{tpu_custom_call.1} parent=1 // pred_fallthru
      _
    // Predicated region
    $region70: #{tpu_custom_call.1} parent=1 // pred_check
      _
    $region71: #{tpu_custom_call.1} parent=1 // pred_check_branch
      %210 = sbr.rel (0) target = $region73
    $region72: #{tpu_custom_call.1} parent=1 // pred_region
      %s212 = ssub.s32 16, 16
      %213 = vsyncadd [#allocation27], %s212
      %s215 = sshll.u32 [#allocation28], 4
      %s216 = int_to_ptr.vmem [resolvable:$true] %s215
      %218 = dma.hbm_to_vmem [thread:$0]  %s17, 16, %s216, [#allocation27]
    $region73: #{tpu_custom_call.1} parent=1 // pred_fallthru
      _
    // Predicated region
    $region74: #{tpu_custom_call.1} parent=1 // pred_check
      _
    $region75: #{tpu_custom_call.1} parent=1 // pred_check_branch
      %220 = sbr.rel (0) target = $region77
    $region76: #{tpu_custom_call.1} parent=1 // pred_region
      %221 = dma.done [#allocation3], 128
    $region77: #{tpu_custom_call.1} parent=1 // pred_fallthru
      _
    // Predicated region
    $region78: #{tpu_custom_call.1} parent=1 // pred_check
      _
    $region79: #{tpu_custom_call.1} parent=1 // pred_check_branch
      %223 = sbr.rel (0) target = $region81
    $region80: #{tpu_custom_call.1} parent=1 // pred_region
      %224 = dma.done [#allocation6], 64
    $region81: #{tpu_custom_call.1} parent=1 // pred_fallthru
      _
    // Predicated region
    $region82: #{tpu_custom_call.1} parent=1 // pred_check
      _
    $region83: #{tpu_custom_call.1} parent=1 // pred_check_branch
      %226 = sbr.rel (0) target = $region85
    $region84: #{tpu_custom_call.1} parent=1 // pred_region
      %227 = dma.done [#allocation6], 16
    $region85: #{tpu_custom_call.1} parent=1 // pred_fallthru
      _
    // Predicated region
    $region86: #{tpu_custom_call.1} parent=1 // pred_check
      _
    $region87: #{tpu_custom_call.1} parent=1 // pred_check_branch
      %229 = sbr.rel (0) target = $region89
    $region88: #{tpu_custom_call.1} parent=1 // pred_region
      %230 = dma.done [#allocation9], 8192
    $region89: #{tpu_custom_call.1} parent=1 // pred_fallthru
      _
    // Predicated region
    $region90: #{tpu_custom_call.1} parent=1 // pred_check
      _
    $region91: #{tpu_custom_call.1} parent=1 // pred_check_branch
      %232 = sbr.rel (0) target = $region93
    $region92: #{tpu_custom_call.1} parent=1 // pred_region
      %233 = dma.done [#allocation9], 256
    $region93: #{tpu_custom_call.1} parent=1 // pred_fallthru
      _
    // Predicated region
    $region94: #{tpu_custom_call.1} parent=1 // pred_check
      _
    $region95: #{tpu_custom_call.1} parent=1 // pred_check_branch
      %235 = sbr.rel (0) target = $region97
    $region96: #{tpu_custom_call.1} parent=1 // pred_region
      %236 = dma.done [#allocation12], 8192
    $region97: #{tpu_custom_call.1} parent=1 // pred_fallthru
      _
    // Predicated region
    $region98: #{tpu_custom_call.1} parent=1 // pred_check
      _
    $region99: #{tpu_custom_call.1} parent=1 // pred_check_branch
      %238 = sbr.rel (0) target = $region101
    $region100: #{tpu_custom_call.1} parent=1 // pred_region
      %239 = dma.done [#allocation12], 256
    $region101: #{tpu_custom_call.1} parent=1 // pred_fallthru
      _
    // Predicated region
    $region102: #{tpu_custom_call.1} parent=1 // pred_check
      _
    $region103: #{tpu_custom_call.1} parent=1 // pred_check_branch
      %241 = sbr.rel (0) target = $region105
    $region104: #{tpu_custom_call.1} parent=1 // pred_region
      %242 = dma.done [#allocation15], 4096
    $region105: #{tpu_custom_call.1} parent=1 // pred_fallthru
      _
    // Predicated region
    $region106: #{tpu_custom_call.1} parent=1 // pred_check
      _
    $region107: #{tpu_custom_call.1} parent=1 // pred_check_branch
      %244 = sbr.rel (0) target = $region109
    $region108: #{tpu_custom_call.1} parent=1 // pred_region
      %245 = dma.done [#allocation15], 128
    $region109: #{tpu_custom_call.1} parent=1 // pred_fallthru
      _
    // Predicated region
    $region110: #{tpu_custom_call.1} parent=1 // pred_check
      _
    $region111: #{tpu_custom_call.1} parent=1 // pred_check_branch
      %247 = sbr.rel (0) target = $region113
    $region112: #{tpu_custom_call.1} parent=1 // pred_region
      %248 = dma.done [#allocation18], 4096
    $region113: #{tpu_custom_call.1} parent=1 // pred_fallthru
      _
    // Predicated region
    $region114: #{tpu_custom_call.1} parent=1 // pred_check
      _
    $region115: #{tpu_custom_call.1} parent=1 // pred_check_branch
      %250 = sbr.rel (0) target = $region117
    $region116: #{tpu_custom_call.1} parent=1 // pred_region
      %251 = dma.done [#allocation18], 128
    $region117: #{tpu_custom_call.1} parent=1 // pred_fallthru
      _
    // Predicated region
    $region118: #{tpu_custom_call.1} parent=1 // pred_check
      _
    $region119: #{tpu_custom_call.1} parent=1 // pred_check_branch
      %253 = sbr.rel (0) target = $region121
    $region120: #{tpu_custom_call.1} parent=1 // pred_region
      %254 = dma.done [#allocation21], 16384
    $region121: #{tpu_custom_call.1} parent=1 // pred_fallthru
      _
    // Predicated region
    $region122: #{tpu_custom_call.1} parent=1 // pred_check
      _
    $region123: #{tpu_custom_call.1} parent=1 // pred_check_branch
      %256 = sbr.rel (0) target = $region125
    $region124: #{tpu_custom_call.1} parent=1 // pred_region
      %257 = dma.done [#allocation21], 256
    $region125: #{tpu_custom_call.1} parent=1 // pred_fallthru
      _
    // Predicated region
    $region126: #{tpu_custom_call.1} parent=1 // pred_check
      _
    $region127: #{tpu_custom_call.1} parent=1 // pred_check_branch
      %259 = sbr.rel (0) target = $region129
    $region128: #{tpu_custom_call.1} parent=1 // pred_region
      %260 = dma.done [#allocation24], 262144
    $region129: #{tpu_custom_call.1} parent=1 // pred_fallthru
      _
    // Predicated region
    $region130: #{tpu_custom_call.1} parent=1 // pred_check
      _
    $region131: #{tpu_custom_call.1} parent=1 // pred_check_branch
      %262 = sbr.rel (0) target = $region133
    $region132: #{tpu_custom_call.1} parent=1 // pred_region
      %263 = dma.done [#allocation24], 128
    $region133: #{tpu_custom_call.1} parent=1 // pred_fallthru
      _
    // Predicated region
    $region134: #{tpu_custom_call.1} parent=1 // pred_check
      _
    $region135: #{tpu_custom_call.1} parent=1 // pred_check_branch
      %265 = sbr.rel (0) target = $region137
    $region136: #{tpu_custom_call.1} parent=1 // pred_region
      %266 = dma.done [#allocation27], 16384
    $region137: #{tpu_custom_call.1} parent=1 // pred_fallthru
      _
    // Predicated region
    $region138: #{tpu_custom_call.1} parent=1 // pred_check
      _
    $region139: #{tpu_custom_call.1} parent=1 // pred_check_branch
      %268 = sbr.rel (0) target = $region141
    $region140: #{tpu_custom_call.1} parent=1 // pred_region
      %269 = dma.done [#allocation27], 16
    $region141: #{tpu_custom_call.1} parent=1 // pred_fallthru
      _
    %v270 = vld [vmem:[%s1] sm:$0xff]
    %v271 = vld [vmem:[#allocation5] sm:$0xf]
    %v272 = vld [vmem:[#allocation7] sm:$0x1]
    %v274 = vlaneseq
    %v275 = vshrl.u32 %v274, 7
    %v276 = vsub.s32 0, %v275
    %v277 = vrot.slane %v272, %v276
    %vm279 = vcmask 31744
    %v281 = vsel %vm279, %v270, 0
    %vm283 = vcmask 1043456
    %v285 = vsel %vm283, %v271, 0
    %287 = vmatprep.subr.mxu0 0.0
    %288 = vmatpush1.msra.mxu0 %v285
    %289 = vmatprep.subr.mxu0 0.0
    %290 = vmatpush1.msra.mxu0 0.0
    %291 = vmatprep.subr.mxu0 0.0
    %292 = vmatpush1.msra.mxu0 0.0
    %293 = vmatprep.subr.mxu0 0.0
    %294 = vmatpush1.msra.mxu0 0.0
    %295 = vmatprep.subr.mxu0 0.0
    %296 = vmatpush1.msra.mxu0 0.0
    %297 = vmatprep.subr.mxu0 0.0
    %298 = vmatpush1.msra.mxu0 0.0
    %299 = vmatprep.subr.mxu0 0.0
    %300 = vmatpush1.msra.mxu0 0.0
    %301 = vmatprep.subr.mxu0 0.0
    %302 = vmatpush1.msra.mxu0 0.0
    %303 = vmatprep.subr.mxu0 0.0
    %304 = vmatpush1.msra.mxu0 0.0
    %305 = vmatprep.subr.mxu0 0.0
    %306 = vmatpush1.msra.mxu0 0.0
    %307 = vmatprep.subr.mxu0 0.0
    %308 = vmatpush1.msra.mxu0 0.0
    %309 = vmatprep.subr.mxu0 0.0
    %310 = vmatpush1.msra.mxu0 0.0
    %311 = vmatprep.subr.mxu0 0.0
    %312 = vmatpush1.msra.mxu0 0.0
    %313 = vmatprep.subr.mxu0 0.0
    %314 = vmatpush1.msra.mxu0 0.0
    %315 = vmatprep.subr.mxu0 0.0
    %316 = vmatpush1.msra.mxu0 0.0
    %317 = vmatprep.subr.mxu0 0.0
    %318 = vmatpush1.msra.mxu0 0.0
    %319 = vmatprep.subr.mxu0 0.0
    %320 = vmatpush1.msra.mxu0 0.0
    %321 = vmatprep.subr.mxu0 0.0
    %322 = vmatpush1.msra.mxu0 0.0
    %323 = vmatprep.subr.mxu0 0.0
    %324 = vmatpush1.msra.mxu0 0.0
    %325 = vmatprep.subr.mxu0 0.0
    %326 = vmatpush1.msra.mxu0 0.0
    %327 = vmatprep.subr.mxu0 0.0
    %328 = vmatpush1.msra.mxu0 0.0
    %329 = vmatprep.subr.mxu0 0.0
    %330 = vmatpush1.msra.mxu0 0.0
    %331 = vmatprep.subr.mxu0 0.0
    %332 = vmatpush1.msra.mxu0 0.0
    %333 = vmatprep.subr.mxu0 0.0
    %334 = vmatpush1.msra.mxu0 0.0
    %335 = vmatprep.subr.mxu0 0.0
    %336 = vmatpush1.msra.mxu0 0.0
    %337 = vmatprep.subr.mxu0 0.0
    %338 = vmatpush1.msra.mxu0 0.0
    %339 = vmatprep.subr.mxu0 0.0
    %340 = vmatpush1.msra.mxu0 0.0
    %341 = vmatprep.subr.mxu0 0.0
    %342 = vmatpush1.msra.mxu0 0.0
    %343 = vmatprep.subr.mxu0 0.0
    %344 = vmatpush1.msra.mxu0 0.0
    %345 = vmatprep.subr.mxu0 0.0
    %346 = vmatpush1.msra.mxu0 0.0
    %347 = vmatprep.subr.mxu0 0.0
    %348 = vmatpush1.msra.mxu0 0.0
    %349 = vmatprep.subr.mxu0 0.0
    %350 = vmatpush1.msra.mxu0 0.0
    %351 = vmatprep.mubr.f32.mxu0 0.0
    %352 = vmatmul.mubr.f32.gmra.mrb[0].mxu0 %v281
    %v353 = vpop.f32.mrb[0].mxu0
    %v354 = vadd.f32 %v277, %v353
    %v355 = vpop.f32.mrb[0].mxu0
    %356 = vdwg.mxu0
    %v357 = vmax.f32 %v354, 0.0
    %v358 = vld [vmem:[#allocation8] sm:$0xff]
    %v359 = vld [vmem:[#allocation8 + $0x8] sm:$0xff]
    %v360 = vld [vmem:[#allocation8 + $0x10] sm:$0xff]
    %v361 = vld [vmem:[#allocation8 + $0x18] sm:$0xff]
    %v362 = vld [vmem:[#allocation8 + $0x20] sm:$0xff]
    %v363 = vld [vmem:[#allocation8 + $0x28] sm:$0xff]
    %v364 = vld [vmem:[#allocation8 + $0x30] sm:$0xff]
    %v365 = vld [vmem:[#allocation8 + $0x38] sm:$0xff]
    %v366 = vld [vmem:[#allocation8 + $0x40] sm:$0xff]
    %v367 = vld [vmem:[#allocation8 + $0x48] sm:$0xff]
    %v368 = vld [vmem:[#allocation8 + $0x50] sm:$0xff]
    %v369 = vld [vmem:[#allocation8 + $0x58] sm:$0xff]
    %v370 = vld [vmem:[#allocation8 + $0x60] sm:$0xff]
    %v371 = vld [vmem:[#allocation8 + $0x68] sm:$0xff]
    %v372 = vld [vmem:[#allocation8 + $0x70] sm:$0xff]
    %v373 = vld [vmem:[#allocation8 + $0x78] sm:$0xff]
    %v374 = vld [vmem:[#allocation8 + $0x80] sm:$0xff]
    %v375 = vld [vmem:[#allocation8 + $0x88] sm:$0xff]
    %v376 = vld [vmem:[#allocation8 + $0x90] sm:$0xff]
    %v377 = vld [vmem:[#allocation8 + $0x98] sm:$0xff]
    %v378 = vld [vmem:[#allocation8 + $0xa0] sm:$0xff]
    %v379 = vld [vmem:[#allocation8 + $0xa8] sm:$0xff]
    %v380 = vld [vmem:[#allocation8 + $0xb0] sm:$0xff]
    %v381 = vld [vmem:[#allocation8 + $0xb8] sm:$0xff]
    %v382 = vld [vmem:[#allocation8 + $0xc0] sm:$0xff]
    %v383 = vld [vmem:[#allocation8 + $0xc8] sm:$0xff]
    %v384 = vld [vmem:[#allocation8 + $0xd0] sm:$0xff]
    %v385 = vld [vmem:[#allocation8 + $0xd8] sm:$0xff]
    %v386 = vld [vmem:[#allocation8 + $0xe0] sm:$0xff]
    %v387 = vld [vmem:[#allocation8 + $0xe8] sm:$0xff]
    %v388 = vld [vmem:[#allocation8 + $0xf0] sm:$0xff]
    %v389 = vld [vmem:[#allocation8 + $0xf8] sm:$0xff]
    %v390 = vld [vmem:[#allocation8 + $0x100] sm:$0xff]
    %v391 = vld [vmem:[#allocation8 + $0x108] sm:$0xff]
    %v392 = vld [vmem:[#allocation8 + $0x110] sm:$0xff]
    %v393 = vld [vmem:[#allocation8 + $0x118] sm:$0xff]
    %v394 = vld [vmem:[#allocation8 + $0x120] sm:$0xff]
    %v395 = vld [vmem:[#allocation8 + $0x128] sm:$0xff]
    %v396 = vld [vmem:[#allocation8 + $0x130] sm:$0xff]
    %v397 = vld [vmem:[#allocation8 + $0x138] sm:$0xff]
    %v398 = vld [vmem:[#allocation8 + $0x140] sm:$0xff]
    %v399 = vld [vmem:[#allocation8 + $0x148] sm:$0xff]
    %v400 = vld [vmem:[#allocation8 + $0x150] sm:$0xff]
    %v401 = vld [vmem:[#allocation8 + $0x158] sm:$0xff]
    %v402 = vld [vmem:[#allocation8 + $0x160] sm:$0xff]
    %v403 = vld [vmem:[#allocation8 + $0x168] sm:$0xff]
    %v404 = vld [vmem:[#allocation8 + $0x170] sm:$0xff]
    %v405 = vld [vmem:[#allocation8 + $0x178] sm:$0xff]
    %v406 = vld [vmem:[#allocation8 + $0x180] sm:$0xff]
    %v407 = vld [vmem:[#allocation8 + $0x188] sm:$0xff]
    %v408 = vld [vmem:[#allocation8 + $0x190] sm:$0xff]
    %v409 = vld [vmem:[#allocation8 + $0x198] sm:$0xff]
    %v410 = vld [vmem:[#allocation8 + $0x1a0] sm:$0xff]
    %v411 = vld [vmem:[#allocation8 + $0x1a8] sm:$0xff]
    %v412 = vld [vmem:[#allocation8 + $0x1b0] sm:$0xff]
    %v413 = vld [vmem:[#allocation8 + $0x1b8] sm:$0xff]
    %v414 = vld [vmem:[#allocation8 + $0x1c0] sm:$0xff]
    %v415 = vld [vmem:[#allocation8 + $0x1c8] sm:$0xff]
    %v416 = vld [vmem:[#allocation8 + $0x1d0] sm:$0xff]
    %v417 = vld [vmem:[#allocation8 + $0x1d8] sm:$0xff]
    %v418 = vld [vmem:[#allocation8 + $0x1e0] sm:$0xff]
    %v419 = vld [vmem:[#allocation8 + $0x1e8] sm:$0xff]
    %v420 = vld [vmem:[#allocation8 + $0x1f0] sm:$0xff]
    %v421 = vld [vmem:[#allocation8 + $0x1f8] sm:$0xff]
    %v422 = vld [vmem:[#allocation10] sm:$0xff]
    %v423 = vld [vmem:[#allocation10 + $0x8] sm:$0xff]
    %v426 = vlaneseq
    %v427 = vshrl.u32 %v426, 7
    %v428 = vsub.s32 0, %v427
    %v429 = vrot.slane %v422, %v428
    %v430 = vlaneseq
    %v431 = vshrl.u32 %v430, 7
    %v432 = vsub.s32 1, %v431
    %v433 = vrot.slane %v422, %v432
    %v434 = vlaneseq
    %v435 = vshrl.u32 %v434, 7
    %v436 = vsub.s32 2, %v435
    %v437 = vrot.slane %v422, %v436
    %v438 = vlaneseq
    %v439 = vshrl.u32 %v438, 7
    %v440 = vsub.s32 3, %v439
    %v441 = vrot.slane %v422, %v440
    %v442 = vlaneseq
    %v443 = vshrl.u32 %v442, 7
    %v444 = vsub.s32 4, %v443
    %v445 = vrot.slane %v422, %v444
    %v446 = vlaneseq
    %v447 = vshrl.u32 %v446, 7
    %v448 = vsub.s32 5, %v447
    %v449 = vrot.slane %v422, %v448
    %v450 = vlaneseq
    %v451 = vshrl.u32 %v450, 7
    %v452 = vsub.s32 6, %v451
    %v453 = vrot.slane %v422, %v452
    %v454 = vlaneseq
    %v455 = vshrl.u32 %v454, 7
    %v456 = vsub.s32 7, %v455
    %v457 = vrot.slane %v422, %v456
    %v458 = vlaneseq
    %v459 = vshrl.u32 %v458, 7
    %v460 = vsub.s32 0, %v459
    %v461 = vrot.slane %v423, %v460
    %v462 = vlaneseq
    %v463 = vshrl.u32 %v462, 7
    %v464 = vsub.s32 1, %v463
    %v465 = vrot.slane %v423, %v464
    %v466 = vlaneseq
    %v467 = vshrl.u32 %v466, 7
    %v468 = vsub.s32 2, %v467
    %v469 = vrot.slane %v423, %v468
    %v470 = vlaneseq
    %v471 = vshrl.u32 %v470, 7
    %v472 = vsub.s32 3, %v471
    %v473 = vrot.slane %v423, %v472
    %v474 = vlaneseq
    %v475 = vshrl.u32 %v474, 7
    %v476 = vsub.s32 4, %v475
    %v477 = vrot.slane %v423, %v476
    %v478 = vlaneseq
    %v479 = vshrl.u32 %v478, 7
    %v480 = vsub.s32 5, %v479
    %v481 = vrot.slane %v423, %v480
    %v482 = vlaneseq
    %v483 = vshrl.u32 %v482, 7
    %v484 = vsub.s32 6, %v483
    %v485 = vrot.slane %v423, %v484
    %v486 = vlaneseq
    %v487 = vshrl.u32 %v486, 7
    %v488 = vsub.s32 7, %v487
    %v489 = vrot.slane %v423, %v488
    %vm506 = vcmask 261120
    %v508 = vsel %vm506, %v357, 0
    %510 = vmatprep.subr.mxu0 %v359
    %511 = vmatpush1.msra.mxu0 %v358
    %512 = vmatprep.subr.mxu0 %v375
    %513 = vmatpush1.msra.mxu0 %v374
    %514 = vmatprep.subr.mxu0 %v391
    %515 = vmatpush1.msra.mxu0 %v390
    %516 = vmatprep.subr.mxu0 %v407
    %517 = vmatpush1.msra.mxu0 %v406
    %518 = vmatprep.subr.mxu0 0.0
    %519 = vmatpush1.msra.mxu0 0.0
    %520 = vmatprep.subr.mxu0 0.0
    %521 = vmatpush1.msra.mxu0 0.0
    %522 = vmatprep.subr.mxu0 0.0
    %523 = vmatpush1.msra.mxu0 0.0
    %524 = vmatprep.subr.mxu0 0.0
    %525 = vmatpush1.msra.mxu0 0.0
    %526 = vmatprep.subr.mxu0 0.0
    %527 = vmatpush1.msra.mxu0 0.0
    %528 = vmatprep.subr.mxu0 0.0
    %529 = vmatpush1.msra.mxu0 0.0
    %530 = vmatprep.subr.mxu0 0.0
    %531 = vmatpush1.msra.mxu0 0.0
    %532 = vmatprep.subr.mxu0 0.0
    %533 = vmatpush1.msra.mxu0 0.0
    %534 = vmatprep.subr.mxu0 0.0
    %535 = vmatpush1.msra.mxu0 0.0
    %536 = vmatprep.subr.mxu0 0.0
    %537 = vmatpush1.msra.mxu0 0.0
    %538 = vmatprep.subr.mxu0 0.0
    %539 = vmatpush1.msra.mxu0 0.0
    %540 = vmatprep.subr.mxu0 0.0
    %541 = vmatpush1.msra.mxu0 0.0
    %542 = vmatprep.subr.mxu0 0.0
    %543 = vmatpush1.msra.mxu0 0.0
    %544 = vmatprep.subr.mxu0 0.0
    %545 = vmatpush1.msra.mxu0 0.0
    %546 = vmatprep.subr.mxu0 0.0
    %547 = vmatpush1.msra.mxu0 0.0
    %548 = vmatprep.subr.mxu0 0.0
    %549 = vmatpush1.msra.mxu0 0.0
    %550 = vmatprep.subr.mxu0 0.0
    %551 = vmatpush1.msra.mxu0 0.0
    %552 = vmatprep.subr.mxu0 0.0
    %553 = vmatpush1.msra.mxu0 0.0
    %554 = vmatprep.subr.mxu0 0.0
    %555 = vmatpush1.msra.mxu0 0.0
    %556 = vmatprep.subr.mxu0 0.0
    %557 = vmatpush1.msra.mxu0 0.0
    %558 = vmatprep.subr.mxu0 0.0
    %559 = vmatpush1.msra.mxu0 0.0
    %560 = vmatprep.subr.mxu0 0.0
    %561 = vmatpush1.msra.mxu0 0.0
    %562 = vmatprep.subr.mxu0 0.0
    %563 = vmatpush1.msra.mxu0 0.0
    %564 = vmatprep.subr.mxu0 0.0
    %565 = vmatpush1.msra.mxu0 0.0
    %566 = vmatprep.subr.mxu0 0.0
    %567 = vmatpush1.msra.mxu0 0.0
    %568 = vmatprep.subr.mxu0 0.0
    %569 = vmatpush1.msra.mxu0 0.0
    %570 = vmatprep.subr.mxu0 0.0
    %571 = vmatpush1.msra.mxu0 0.0
    %572 = vmatprep.subr.mxu0 0.0
    %573 = vmatpush1.msra.mxu0 0.0
    %574 = vmatprep.mubr.f32.mxu0 0.0
    %575 = vmatmul.mubr.f32.gmra.mrb[0].mxu0 %v508
    %v576 = vpop.f32.mrb[0].mxu0
    %v577 = vadd.f32 %v429, %v576
    %v578 = vpop.f32.mrb[0].mxu0
    %v579 = vadd.f32 %v433, %v578
    %580 = vdwg.mxu0
    %581 = vmatprep.subr.mxu0 %v361
    %582 = vmatpush1.msra.mxu0 %v360
    %583 = vmatprep.subr.mxu0 %v377
    %584 = vmatpush1.msra.mxu0 %v376
    %585 = vmatprep.subr.mxu0 %v393
    %586 = vmatpush1.msra.mxu0 %v392
    %587 = vmatprep.subr.mxu0 %v409
    %588 = vmatpush1.msra.mxu0 %v408
    %589 = vmatprep.subr.mxu0 0.0
    %590 = vmatpush1.msra.mxu0 0.0
    %591 = vmatprep.subr.mxu0 0.0
    %592 = vmatpush1.msra.mxu0 0.0
    %593 = vmatprep.subr.mxu0 0.0
    %594 = vmatpush1.msra.mxu0 0.0
    %595 = vmatprep.subr.mxu0 0.0
    %596 = vmatpush1.msra.mxu0 0.0
    %597 = vmatprep.subr.mxu0 0.0
    %598 = vmatpush1.msra.mxu0 0.0
    %599 = vmatprep.subr.mxu0 0.0
    %600 = vmatpush1.msra.mxu0 0.0
    %601 = vmatprep.subr.mxu0 0.0
    %602 = vmatpush1.msra.mxu0 0.0
    %603 = vmatprep.subr.mxu0 0.0
    %604 = vmatpush1.msra.mxu0 0.0
    %605 = vmatprep.subr.mxu0 0.0
    %606 = vmatpush1.msra.mxu0 0.0
    %607 = vmatprep.subr.mxu0 0.0
    %608 = vmatpush1.msra.mxu0 0.0
    %609 = vmatprep.subr.mxu0 0.0
    %610 = vmatpush1.msra.mxu0 0.0
    %611 = vmatprep.subr.mxu0 0.0
    %612 = vmatpush1.msra.mxu0 0.0
    %613 = vmatprep.subr.mxu0 0.0
    %614 = vmatpush1.msra.mxu0 0.0
    %615 = vmatprep.subr.mxu0 0.0
    %616 = vmatpush1.msra.mxu0 0.0
    %617 = vmatprep.subr.mxu0 0.0
    %618 = vmatpush1.msra.mxu0 0.0
    %619 = vmatprep.subr.mxu0 0.0
    %620 = vmatpush1.msra.mxu0 0.0
    %621 = vmatprep.subr.mxu0 0.0
    %622 = vmatpush1.msra.mxu0 0.0
    %623 = vmatprep.subr.mxu0 0.0
    %624 = vmatpush1.msra.mxu0 0.0
    %625 = vmatprep.subr.mxu0 0.0
    %626 = vmatpush1.msra.mxu0 0.0
    %627 = vmatprep.subr.mxu0 0.0
    %628 = vmatpush1.msra.mxu0 0.0
    %629 = vmatprep.subr.mxu0 0.0
    %630 = vmatpush1.msra.mxu0 0.0
    %631 = vmatprep.subr.mxu0 0.0
    %632 = vmatpush1.msra.mxu0 0.0
    %633 = vmatprep.subr.mxu0 0.0
    %634 = vmatpush1.msra.mxu0 0.0
    %635 = vmatprep.subr.mxu0 0.0
    %636 = vmatpush1.msra.mxu0 0.0
    %637 = vmatprep.subr.mxu0 0.0
    %638 = vmatpush1.msra.mxu0 0.0
    %639 = vmatprep.subr.mxu0 0.0
    %640 = vmatpush1.msra.mxu0 0.0
    %641 = vmatprep.subr.mxu0 0.0
    %642 = vmatpush1.msra.mxu0 0.0
    %643 = vmatprep.subr.mxu0 0.0
    %644 = vmatpush1.msra.mxu0 0.0
    %645 = vmatprep.mubr.f32.mxu0 0.0
    %646 = vmatmul.mubr.f32.gmra.mrb[0].mxu0 %v508
    %v647 = vpop.f32.mrb[0].mxu0
    %v648 = vadd.f32 %v437, %v647
    %v649 = vpop.f32.mrb[0].mxu0
    %v650 = vadd.f32 %v441, %v649
    %651 = vdwg.mxu0
    %652 = vmatprep.subr.mxu0 %v363
    %653 = vmatpush1.msra.mxu0 %v362
    %654 = vmatprep.subr.mxu0 %v379
    %655 = vmatpush1.msra.mxu0 %v378
    %656 = vmatprep.subr.mxu0 %v395
    %657 = vmatpush1.msra.mxu0 %v394
    %658 = vmatprep.subr.mxu0 %v411
    %659 = vmatpush1.msra.mxu0 %v410
    %660 = vmatprep.subr.mxu0 0.0
    %661 = vmatpush1.msra.mxu0 0.0
    %662 = vmatprep.subr.mxu0 0.0
    %663 = vmatpush1.msra.mxu0 0.0
    %664 = vmatprep.subr.mxu0 0.0
    %665 = vmatpush1.msra.mxu0 0.0
    %666 = vmatprep.subr.mxu0 0.0
    %667 = vmatpush1.msra.mxu0 0.0
    %668 = vmatprep.subr.mxu0 0.0
    %669 = vmatpush1.msra.mxu0 0.0
    %670 = vmatprep.subr.mxu0 0.0
    %671 = vmatpush1.msra.mxu0 0.0
    %672 = vmatprep.subr.mxu0 0.0
    %673 = vmatpush1.msra.mxu0 0.0
    %674 = vmatprep.subr.mxu0 0.0
    %675 = vmatpush1.msra.mxu0 0.0
    %676 = vmatprep.subr.mxu0 0.0
    %677 = vmatpush1.msra.mxu0 0.0
    %678 = vmatprep.subr.mxu0 0.0
    %679 = vmatpush1.msra.mxu0 0.0
    %680 = vmatprep.subr.mxu0 0.0
    %681 = vmatpush1.msra.mxu0 0.0
    %682 = vmatprep.subr.mxu0 0.0
    %683 = vmatpush1.msra.mxu0 0.0
    %684 = vmatprep.subr.mxu0 0.0
    %685 = vmatpush1.msra.mxu0 0.0
    %686 = vmatprep.subr.mxu0 0.0
    %687 = vmatpush1.msra.mxu0 0.0
    %688 = vmatprep.subr.mxu0 0.0
    %689 = vmatpush1.msra.mxu0 0.0
    %690 = vmatprep.subr.mxu0 0.0
    %691 = vmatpush1.msra.mxu0 0.0
    %692 = vmatprep.subr.mxu0 0.0
    %693 = vmatpush1.msra.mxu0 0.0
    %694 = vmatprep.subr.mxu0 0.0
    %695 = vmatpush1.msra.mxu0 0.0
    %696 = vmatprep.subr.mxu0 0.0
    %697 = vmatpush1.msra.mxu0 0.0
    %698 = vmatprep.subr.mxu0 0.0
    %699 = vmatpush1.msra.mxu0 0.0
    %700 = vmatprep.subr.mxu0 0.0
    %701 = vmatpush1.msra.mxu0 0.0
    %702 = vmatprep.subr.mxu0 0.0
    %703 = vmatpush1.msra.mxu0 0.0
    %704 = vmatprep.subr.mxu0 0.0
    %705 = vmatpush1.msra.mxu0 0.0
    %706 = vmatprep.subr.mxu0 0.0
    %707 = vmatpush1.msra.mxu0 0.0
    %708 = vmatprep.subr.mxu0 0.0
    %709 = vmatpush1.msra.mxu0 0.0
    %710 = vmatprep.subr.mxu0 0.0
    %711 = vmatpush1.msra.mxu0 0.0
    %712 = vmatprep.subr.mxu0 0.0
    %713 = vmatpush1.msra.mxu0 0.0
    %714 = vmatprep.subr.mxu0 0.0
    %715 = vmatpush1.msra.mxu0 0.0
    %716 = vmatprep.mubr.f32.mxu0 0.0
    %717 = vmatmul.mubr.f32.gmra.mrb[0].mxu0 %v508
    %v718 = vpop.f32.mrb[0].mxu0
    %v719 = vadd.f32 %v445, %v718
    %v720 = vpop.f32.mrb[0].mxu0
    %v721 = vadd.f32 %v449, %v720
    %722 = vdwg.mxu0
    %723 = vmatprep.subr.mxu0 %v365
    %724 = vmatpush1.msra.mxu0 %v364
    %725 = vmatprep.subr.mxu0 %v381
    %726 = vmatpush1.msra.mxu0 %v380
    %727 = vmatprep.subr.mxu0 %v397
    %728 = vmatpush1.msra.mxu0 %v396
    %729 = vmatprep.subr.mxu0 %v413
    %730 = vmatpush1.msra.mxu0 %v412
    %731 = vmatprep.subr.mxu0 0.0
    %732 = vmatpush1.msra.mxu0 0.0
    %733 = vmatprep.subr.mxu0 0.0
    %734 = vmatpush1.msra.mxu0 0.0
    %735 = vmatprep.subr.mxu0 0.0
    %736 = vmatpush1.msra.mxu0 0.0
    %737 = vmatprep.subr.mxu0 0.0
    %738 = vmatpush1.msra.mxu0 0.0
    %739 = vmatprep.subr.mxu0 0.0
    %740 = vmatpush1.msra.mxu0 0.0
    %741 = vmatprep.subr.mxu0 0.0
    %742 = vmatpush1.msra.mxu0 0.0
    %743 = vmatprep.subr.mxu0 0.0
    %744 = vmatpush1.msra.mxu0 0.0
    %745 = vmatprep.subr.mxu0 0.0
    %746 = vmatpush1.msra.mxu0 0.0
    %747 = vmatprep.subr.mxu0 0.0
    %748 = vmatpush1.msra.mxu0 0.0
    %749 = vmatprep.subr.mxu0 0.0
    %750 = vmatpush1.msra.mxu0 0.0
    %751 = vmatprep.subr.mxu0 0.0
    %752 = vmatpush1.msra.mxu0 0.0
    %753 = vmatprep.subr.mxu0 0.0
    %754 = vmatpush1.msra.mxu0 0.0
    %755 = vmatprep.subr.mxu0 0.0
    %756 = vmatpush1.msra.mxu0 0.0
    %757 = vmatprep.subr.mxu0 0.0
    %758 = vmatpush1.msra.mxu0 0.0
    %759 = vmatprep.subr.mxu0 0.0
    %760 = vmatpush1.msra.mxu0 0.0
    %761 = vmatprep.subr.mxu0 0.0
    %762 = vmatpush1.msra.mxu0 0.0
    %763 = vmatprep.subr.mxu0 0.0
    %764 = vmatpush1.msra.mxu0 0.0
    %765 = vmatprep.subr.mxu0 0.0
    %766 = vmatpush1.msra.mxu0 0.0
    %767 = vmatprep.subr.mxu0 0.0
    %768 = vmatpush1.msra.mxu0 0.0
    %769 = vmatprep.subr.mxu0 0.0
    %770 = vmatpush1.msra.mxu0 0.0
    %771 = vmatprep.subr.mxu0 0.0
    %772 = vmatpush1.msra.mxu0 0.0
    %773 = vmatprep.subr.mxu0 0.0
    %774 = vmatpush1.msra.mxu0 0.0
    %775 = vmatprep.subr.mxu0 0.0
    %776 = vmatpush1.msra.mxu0 0.0
    %777 = vmatprep.subr.mxu0 0.0
    %778 = vmatpush1.msra.mxu0 0.0
    %779 = vmatprep.subr.mxu0 0.0
    %780 = vmatpush1.msra.mxu0 0.0
    %781 = vmatprep.subr.mxu0 0.0
    %782 = vmatpush1.msra.mxu0 0.0
    %783 = vmatprep.subr.mxu0 0.0
    %784 = vmatpush1.msra.mxu0 0.0
    %785 = vmatprep.subr.mxu0 0.0
    %786 = vmatpush1.msra.mxu0 0.0
    %787 = vmatprep.mubr.f32.mxu0 0.0
    %788 = vmatmul.mubr.f32.gmra.mrb[0].mxu0 %v508
    %v789 = vpop.f32.mrb[0].mxu0
    %v790 = vadd.f32 %v453, %v789
    %v791 = vpop.f32.mrb[0].mxu0
    %v792 = vadd.f32 %v457, %v791
    %793 = vdwg.mxu0
    %794 = vmatprep.subr.mxu0 %v367
    %795 = vmatpush1.msra.mxu0 %v366
    %796 = vmatprep.subr.mxu0 %v383
    %797 = vmatpush1.msra.mxu0 %v382
    %798 = vmatprep.subr.mxu0 %v399
    %799 = vmatpush1.msra.mxu0 %v398
    %800 = vmatprep.subr.mxu0 %v415
    %801 = vmatpush1.msra.mxu0 %v414
    %802 = vmatprep.subr.mxu0 0.0
    %803 = vmatpush1.msra.mxu0 0.0
    %804 = vmatprep.subr.mxu0 0.0
    %805 = vmatpush1.msra.mxu0 0.0
    %806 = vmatprep.subr.mxu0 0.0
    %807 = vmatpush1.msra.mxu0 0.0
    %808 = vmatprep.subr.mxu0 0.0
    %809 = vmatpush1.msra.mxu0 0.0
    %810 = vmatprep.subr.mxu0 0.0
    %811 = vmatpush1.msra.mxu0 0.0
    %812 = vmatprep.subr.mxu0 0.0
    %813 = vmatpush1.msra.mxu0 0.0
    %814 = vmatprep.subr.mxu0 0.0
    %815 = vmatpush1.msra.mxu0 0.0
    %816 = vmatprep.subr.mxu0 0.0
    %817 = vmatpush1.msra.mxu0 0.0
    %818 = vmatprep.subr.mxu0 0.0
    %819 = vmatpush1.msra.mxu0 0.0
    %820 = vmatprep.subr.mxu0 0.0
    %821 = vmatpush1.msra.mxu0 0.0
    %822 = vmatprep.subr.mxu0 0.0
    %823 = vmatpush1.msra.mxu0 0.0
    %824 = vmatprep.subr.mxu0 0.0
    %825 = vmatpush1.msra.mxu0 0.0
    %826 = vmatprep.subr.mxu0 0.0
    %827 = vmatpush1.msra.mxu0 0.0
    %828 = vmatprep.subr.mxu0 0.0
    %829 = vmatpush1.msra.mxu0 0.0
    %830 = vmatprep.subr.mxu0 0.0
    %831 = vmatpush1.msra.mxu0 0.0
    %832 = vmatprep.subr.mxu0 0.0
    %833 = vmatpush1.msra.mxu0 0.0
    %834 = vmatprep.subr.mxu0 0.0
    %835 = vmatpush1.msra.mxu0 0.0
    %836 = vmatprep.subr.mxu0 0.0
    %837 = vmatpush1.msra.mxu0 0.0
    %838 = vmatprep.subr.mxu0 0.0
    %839 = vmatpush1.msra.mxu0 0.0
    %840 = vmatprep.subr.mxu0 0.0
    %841 = vmatpush1.msra.mxu0 0.0
    %842 = vmatprep.subr.mxu0 0.0
    %843 = vmatpush1.msra.mxu0 0.0
    %844 = vmatprep.subr.mxu0 0.0
    %845 = vmatpush1.msra.mxu0 0.0
    %846 = vmatprep.subr.mxu0 0.0
    %847 = vmatpush1.msra.mxu0 0.0
    %848 = vmatprep.subr.mxu0 0.0
    %849 = vmatpush1.msra.mxu0 0.0
    %850 = vmatprep.subr.mxu0 0.0
    %851 = vmatpush1.msra.mxu0 0.0
    %852 = vmatprep.subr.mxu0 0.0
    %853 = vmatpush1.msra.mxu0 0.0
    %854 = vmatprep.subr.mxu0 0.0
    %855 = vmatpush1.msra.mxu0 0.0
    %856 = vmatprep.subr.mxu0 0.0
    %857 = vmatpush1.msra.mxu0 0.0
    %858 = vmatprep.mubr.f32.mxu0 0.0
    %859 = vmatmul.mubr.f32.gmra.mrb[0].mxu0 %v508
    %v860 = vpop.f32.mrb[0].mxu0
    %v861 = vadd.f32 %v461, %v860
    %v862 = vpop.f32.mrb[0].mxu0
    %v863 = vadd.f32 %v465, %v862
    %864 = vdwg.mxu0
    %865 = vmatprep.subr.mxu0 %v369
    %866 = vmatpush1.msra.mxu0 %v368
    %867 = vmatprep.subr.mxu0 %v385
    %868 = vmatpush1.msra.mxu0 %v384
    %869 = vmatprep.subr.mxu0 %v401
    %870 = vmatpush1.msra.mxu0 %v400
    %871 = vmatprep.subr.mxu0 %v417
    %872 = vmatpush1.msra.mxu0 %v416
    %873 = vmatprep.subr.mxu0 0.0
    %874 = vmatpush1.msra.mxu0 0.0
    %875 = vmatprep.subr.mxu0 0.0
    %876 = vmatpush1.msra.mxu0 0.0
    %877 = vmatprep.subr.mxu0 0.0
    %878 = vmatpush1.msra.mxu0 0.0
    %879 = vmatprep.subr.mxu0 0.0
    %880 = vmatpush1.msra.mxu0 0.0
    %881 = vmatprep.subr.mxu0 0.0
    %882 = vmatpush1.msra.mxu0 0.0
    %883 = vmatprep.subr.mxu0 0.0
    %884 = vmatpush1.msra.mxu0 0.0
    %885 = vmatprep.subr.mxu0 0.0
    %886 = vmatpush1.msra.mxu0 0.0
    %887 = vmatprep.subr.mxu0 0.0
    %888 = vmatpush1.msra.mxu0 0.0
    %889 = vmatprep.subr.mxu0 0.0
    %890 = vmatpush1.msra.mxu0 0.0
    %891 = vmatprep.subr.mxu0 0.0
    %892 = vmatpush1.msra.mxu0 0.0
    %893 = vmatprep.subr.mxu0 0.0
    %894 = vmatpush1.msra.mxu0 0.0
    %895 = vmatprep.subr.mxu0 0.0
    %896 = vmatpush1.msra.mxu0 0.0
    %897 = vmatprep.subr.mxu0 0.0
    %898 = vmatpush1.msra.mxu0 0.0
    %899 = vmatprep.subr.mxu0 0.0
    %900 = vmatpush1.msra.mxu0 0.0
    %901 = vmatprep.subr.mxu0 0.0
    %902 = vmatpush1.msra.mxu0 0.0
    %903 = vmatprep.subr.mxu0 0.0
    %904 = vmatpush1.msra.mxu0 0.0
    %905 = vmatprep.subr.mxu0 0.0
    %906 = vmatpush1.msra.mxu0 0.0
    %907 = vmatprep.subr.mxu0 0.0
    %908 = vmatpush1.msra.mxu0 0.0
    %909 = vmatprep.subr.mxu0 0.0
    %910 = vmatpush1.msra.mxu0 0.0
    %911 = vmatprep.subr.mxu0 0.0
    %912 = vmatpush1.msra.mxu0 0.0
    %913 = vmatprep.subr.mxu0 0.0
    %914 = vmatpush1.msra.mxu0 0.0
    %915 = vmatprep.subr.mxu0 0.0
    %916 = vmatpush1.msra.mxu0 0.0
    %917 = vmatprep.subr.mxu0 0.0
    %918 = vmatpush1.msra.mxu0 0.0
    %919 = vmatprep.subr.mxu0 0.0
    %920 = vmatpush1.msra.mxu0 0.0
    %921 = vmatprep.subr.mxu0 0.0
    %922 = vmatpush1.msra.mxu0 0.0
    %923 = vmatprep.subr.mxu0 0.0
    %924 = vmatpush1.msra.mxu0 0.0
    %925 = vmatprep.subr.mxu0 0.0
    %926 = vmatpush1.msra.mxu0 0.0
    %927 = vmatprep.subr.mxu0 0.0
    %928 = vmatpush1.msra.mxu0 0.0
    %929 = vmatprep.mubr.f32.mxu0 0.0
    %930 = vmatmul.mubr.f32.gmra.mrb[0].mxu0 %v508
    %v931 = vpop.f32.mrb[0].mxu0
    %v932 = vadd.f32 %v469, %v931
    %v933 = vpop.f32.mrb[0].mxu0
    %v934 = vadd.f32 %v473, %v933
    %935 = vdwg.mxu0
    %936 = vmatprep.subr.mxu0 %v371
    %937 = vmatpush1.msra.mxu0 %v370
    %938 = vmatprep.subr.mxu0 %v387
    %939 = vmatpush1.msra.mxu0 %v386
    %940 = vmatprep.subr.mxu0 %v403
    %941 = vmatpush1.msra.mxu0 %v402
    %942 = vmatprep.subr.mxu0 %v419
    %943 = vmatpush1.msra.mxu0 %v418
    %944 = vmatprep.subr.mxu0 0.0
    %945 = vmatpush1.msra.mxu0 0.0
    %946 = vmatprep.subr.mxu0 0.0
    %947 = vmatpush1.msra.mxu0 0.0
    %948 = vmatprep.subr.mxu0 0.0
    %949 = vmatpush1.msra.mxu0 0.0
    %950 = vmatprep.subr.mxu0 0.0
    %951 = vmatpush1.msra.mxu0 0.0
    %952 = vmatprep.subr.mxu0 0.0
    %953 = vmatpush1.msra.mxu0 0.0
    %954 = vmatprep.subr.mxu0 0.0
    %955 = vmatpush1.msra.mxu0 0.0
    %956 = vmatprep.subr.mxu0 0.0
    %957 = vmatpush1.msra.mxu0 0.0
    %958 = vmatprep.subr.mxu0 0.0
    %959 = vmatpush1.msra.mxu0 0.0
    %960 = vmatprep.subr.mxu0 0.0
    %961 = vmatpush1.msra.mxu0 0.0
    %962 = vmatprep.subr.mxu0 0.0
    %963 = vmatpush1.msra.mxu0 0.0
    %964 = vmatprep.subr.mxu0 0.0
    %965 = vmatpush1.msra.mxu0 0.0
    %966 = vmatprep.subr.mxu0 0.0
    %967 = vmatpush1.msra.mxu0 0.0
    %968 = vmatprep.subr.mxu0 0.0
    %969 = vmatpush1.msra.mxu0 0.0
    %970 = vmatprep.subr.mxu0 0.0
    %971 = vmatpush1.msra.mxu0 0.0
    %972 = vmatprep.subr.mxu0 0.0
    %973 = vmatpush1.msra.mxu0 0.0
    %974 = vmatprep.subr.mxu0 0.0
    %975 = vmatpush1.msra.mxu0 0.0
    %976 = vmatprep.subr.mxu0 0.0
    %977 = vmatpush1.msra.mxu0 0.0
    %978 = vmatprep.subr.mxu0 0.0
    %979 = vmatpush1.msra.mxu0 0.0
    %980 = vmatprep.subr.mxu0 0.0
    %981 = vmatpush1.msra.mxu0 0.0
    %982 = vmatprep.subr.mxu0 0.0
    %983 = vmatpush1.msra.mxu0 0.0
    %984 = vmatprep.subr.mxu0 0.0
    %985 = vmatpush1.msra.mxu0 0.0
    %986 = vmatprep.subr.mxu0 0.0
    %987 = vmatpush1.msra.mxu0 0.0
    %988 = vmatprep.subr.mxu0 0.0
    %989 = vmatpush1.msra.mxu0 0.0
    %990 = vmatprep.subr.mxu0 0.0
    %991 = vmatpush1.msra.mxu0 0.0
    %992 = vmatprep.subr.mxu0 0.0
    %993 = vmatpush1.msra.mxu0 0.0
    %994 = vmatprep.subr.mxu0 0.0
    %995 = vmatpush1.msra.mxu0 0.0
    %996 = vmatprep.subr.mxu0 0.0
    %997 = vmatpush1.msra.mxu0 0.0
    %998 = vmatprep.subr.mxu0 0.0
    %999 = vmatpush1.msra.mxu0 0.0
    %1000 = vmatprep.mubr.f32.mxu0 0.0
    %1001 = vmatmul.mubr.f32.gmra.mrb[0].mxu0 %v508
    %v1002 = vpop.f32.mrb[0].mxu0
    %v1003 = vadd.f32 %v477, %v1002
    %v1004 = vpop.f32.mrb[0].mxu0
    %v1005 = vadd.f32 %v481, %v1004
    %1006 = vdwg.mxu0
    %1007 = vmatprep.subr.mxu0 %v373
    %1008 = vmatpush1.msra.mxu0 %v372
    %1009 = vmatprep.subr.mxu0 %v389
    %1010 = vmatpush1.msra.mxu0 %v388
    %1011 = vmatprep.subr.mxu0 %v405
    %1012 = vmatpush1.msra.mxu0 %v404
    %1013 = vmatprep.subr.mxu0 %v421
    %1014 = vmatpush1.msra.mxu0 %v420
    %1015 = vmatprep.subr.mxu0 0.0
    %1016 = vmatpush1.msra.mxu0 0.0
    %1017 = vmatprep.subr.mxu0 0.0
    %1018 = vmatpush1.msra.mxu0 0.0
    %1019 = vmatprep.subr.mxu0 0.0
    %1020 = vmatpush1.msra.mxu0 0.0
    %1021 = vmatprep.subr.mxu0 0.0
    %1022 = vmatpush1.msra.mxu0 0.0
    %1023 = vmatprep.subr.mxu0 0.0
    %1024 = vmatpush1.msra.mxu0 0.0
    %1025 = vmatprep.subr.mxu0 0.0
    %1026 = vmatpush1.msra.mxu0 0.0
    %1027 = vmatprep.subr.mxu0 0.0
    %1028 = vmatpush1.msra.mxu0 0.0
    %1029 = vmatprep.subr.mxu0 0.0
    %1030 = vmatpush1.msra.mxu0 0.0
    %1031 = vmatprep.subr.mxu0 0.0
    %1032 = vmatpush1.msra.mxu0 0.0
    %1033 = vmatprep.subr.mxu0 0.0
    %1034 = vmatpush1.msra.mxu0 0.0
    %1035 = vmatprep.subr.mxu0 0.0
    %1036 = vmatpush1.msra.mxu0 0.0
    %1037 = vmatprep.subr.mxu0 0.0
    %1038 = vmatpush1.msra.mxu0 0.0
    %1039 = vmatprep.subr.mxu0 0.0
    %1040 = vmatpush1.msra.mxu0 0.0
    %1041 = vmatprep.subr.mxu0 0.0
    %1042 = vmatpush1.msra.mxu0 0.0
    %1043 = vmatprep.subr.mxu0 0.0
    %1044 = vmatpush1.msra.mxu0 0.0
    %1045 = vmatprep.subr.mxu0 0.0
    %1046 = vmatpush1.msra.mxu0 0.0
    %1047 = vmatprep.subr.mxu0 0.0
    %1048 = vmatpush1.msra.mxu0 0.0
    %1049 = vmatprep.subr.mxu0 0.0
    %1050 = vmatpush1.msra.mxu0 0.0
    %1051 = vmatprep.subr.mxu0 0.0
    %1052 = vmatpush1.msra.mxu0 0.0
    %1053 = vmatprep.subr.mxu0 0.0
    %1054 = vmatpush1.msra.mxu0 0.0
    %1055 = vmatprep.subr.mxu0 0.0
    %1056 = vmatpush1.msra.mxu0 0.0
    %1057 = vmatprep.subr.mxu0 0.0
    %1058 = vmatpush1.msra.mxu0 0.0
    %1059 = vmatprep.subr.mxu0 0.0
    %1060 = vmatpush1.msra.mxu0 0.0
    %1061 = vmatprep.subr.mxu0 0.0
    %1062 = vmatpush1.msra.mxu0 0.0
    %1063 = vmatprep.subr.mxu0 0.0
    %1064 = vmatpush1.msra.mxu0 0.0
    %1065 = vmatprep.subr.mxu0 0.0
    %1066 = vmatpush1.msra.mxu0 0.0
    %1067 = vmatprep.subr.mxu0 0.0
    %1068 = vmatpush1.msra.mxu0 0.0
    %1069 = vmatprep.subr.mxu0 0.0
    %1070 = vmatpush1.msra.mxu0 0.0
    %1071 = vmatprep.mubr.f32.mxu0 0.0
    %1072 = vmatmul.mubr.f32.gmra.mrb[0].mxu0 %v508
    %v1073 = vpop.f32.mrb[0].mxu0
    %v1074 = vadd.f32 %v485, %v1073
    %v1075 = vpop.f32.mrb[0].mxu0
    %v1076 = vadd.f32 %v489, %v1075
    %1077 = vdwg.mxu0
    %v1078 = vld [vmem:[#allocation11] sm:$0xff]
    %v1079 = vld [vmem:[#allocation11 + $0x8] sm:$0xff]
    %v1080 = vld [vmem:[#allocation11 + $0x10] sm:$0xff]
    %v1081 = vld [vmem:[#allocation11 + $0x18] sm:$0xff]
    %v1082 = vld [vmem:[#allocation11 + $0x20] sm:$0xff]
    %v1083 = vld [vmem:[#allocation11 + $0x28] sm:$0xff]
    %v1084 = vld [vmem:[#allocation11 + $0x30] sm:$0xff]
    %v1085 = vld [vmem:[#allocation11 + $0x38] sm:$0xff]
    %v1086 = vld [vmem:[#allocation11 + $0x40] sm:$0xff]
    %v1087 = vld [vmem:[#allocation11 + $0x48] sm:$0xff]
    %v1088 = vld [vmem:[#allocation11 + $0x50] sm:$0xff]
    %v1089 = vld [vmem:[#allocation11 + $0x58] sm:$0xff]
    %v1090 = vld [vmem:[#allocation11 + $0x60] sm:$0xff]
    %v1091 = vld [vmem:[#allocation11 + $0x68] sm:$0xff]
    %v1092 = vld [vmem:[#allocation11 + $0x70] sm:$0xff]
    %v1093 = vld [vmem:[#allocation11 + $0x78] sm:$0xff]
    %v1094 = vld [vmem:[#allocation11 + $0x80] sm:$0xff]
    %v1095 = vld [vmem:[#allocation11 + $0x88] sm:$0xff]
    %v1096 = vld [vmem:[#allocation11 + $0x90] sm:$0xff]
    %v1097 = vld [vmem:[#allocation11 + $0x98] sm:$0xff]
    %v1098 = vld [vmem:[#allocation11 + $0xa0] sm:$0xff]
    %v1099 = vld [vmem:[#allocation11 + $0xa8] sm:$0xff]
    %v1100 = vld [vmem:[#allocation11 + $0xb0] sm:$0xff]
    %v1101 = vld [vmem:[#allocation11 + $0xb8] sm:$0xff]
    %v1102 = vld [vmem:[#allocation11 + $0xc0] sm:$0xff]
    %v1103 = vld [vmem:[#allocation11 + $0xc8] sm:$0xff]
    %v1104 = vld [vmem:[#allocation11 + $0xd0] sm:$0xff]
    %v1105 = vld [vmem:[#allocation11 + $0xd8] sm:$0xff]
    %v1106 = vld [vmem:[#allocation11 + $0xe0] sm:$0xff]
    %v1107 = vld [vmem:[#allocation11 + $0xe8] sm:$0xff]
    %v1108 = vld [vmem:[#allocation11 + $0xf0] sm:$0xff]
    %v1109 = vld [vmem:[#allocation11 + $0xf8] sm:$0xff]
    %v1110 = vld [vmem:[#allocation11 + $0x100] sm:$0xff]
    %v1111 = vld [vmem:[#allocation11 + $0x108] sm:$0xff]
    %v1112 = vld [vmem:[#allocation11 + $0x110] sm:$0xff]
    %v1113 = vld [vmem:[#allocation11 + $0x118] sm:$0xff]
    %v1114 = vld [vmem:[#allocation11 + $0x120] sm:$0xff]
    %v1115 = vld [vmem:[#allocation11 + $0x128] sm:$0xff]
    %v1116 = vld [vmem:[#allocation11 + $0x130] sm:$0xff]
    %v1117 = vld [vmem:[#allocation11 + $0x138] sm:$0xff]
    %v1118 = vld [vmem:[#allocation11 + $0x140] sm:$0xff]
    %v1119 = vld [vmem:[#allocation11 + $0x148] sm:$0xff]
    %v1120 = vld [vmem:[#allocation11 + $0x150] sm:$0xff]
    %v1121 = vld [vmem:[#allocation11 + $0x158] sm:$0xff]
    %v1122 = vld [vmem:[#allocation11 + $0x160] sm:$0xff]
    %v1123 = vld [vmem:[#allocation11 + $0x168] sm:$0xff]
    %v1124 = vld [vmem:[#allocation11 + $0x170] sm:$0xff]
    %v1125 = vld [vmem:[#allocation11 + $0x178] sm:$0xff]
    %v1126 = vld [vmem:[#allocation11 + $0x180] sm:$0xff]
    %v1127 = vld [vmem:[#allocation11 + $0x188] sm:$0xff]
    %v1128 = vld [vmem:[#allocation11 + $0x190] sm:$0xff]
    %v1129 = vld [vmem:[#allocation11 + $0x198] sm:$0xff]
    %v1130 = vld [vmem:[#allocation11 + $0x1a0] sm:$0xff]
    %v1131 = vld [vmem:[#allocation11 + $0x1a8] sm:$0xff]
    %v1132 = vld [vmem:[#allocation11 + $0x1b0] sm:$0xff]
    %v1133 = vld [vmem:[#allocation11 + $0x1b8] sm:$0xff]
    %v1134 = vld [vmem:[#allocation11 + $0x1c0] sm:$0xff]
    %v1135 = vld [vmem:[#allocation11 + $0x1c8] sm:$0xff]
    %v1136 = vld [vmem:[#allocation11 + $0x1d0] sm:$0xff]
    %v1137 = vld [vmem:[#allocation11 + $0x1d8] sm:$0xff]
    %v1138 = vld [vmem:[#allocation11 + $0x1e0] sm:$0xff]
    %v1139 = vld [vmem:[#allocation11 + $0x1e8] sm:$0xff]
    %v1140 = vld [vmem:[#allocation11 + $0x1f0] sm:$0xff]
    %v1141 = vld [vmem:[#allocation11 + $0x1f8] sm:$0xff]
    %v1142 = vld [vmem:[#allocation13] sm:$0xff]
    %v1143 = vld [vmem:[#allocation13 + $0x8] sm:$0xff]
    %v1146 = vlaneseq
    %v1147 = vshrl.u32 %v1146, 7
    %v1148 = vsub.s32 0, %v1147
    %v1149 = vrot.slane %v1142, %v1148
    %v1150 = vlaneseq
    %v1151 = vshrl.u32 %v1150, 7
    %v1152 = vsub.s32 1, %v1151
    %v1153 = vrot.slane %v1142, %v1152
    %v1154 = vlaneseq
    %v1155 = vshrl.u32 %v1154, 7
    %v1156 = vsub.s32 2, %v1155
    %v1157 = vrot.slane %v1142, %v1156
    %v1158 = vlaneseq
    %v1159 = vshrl.u32 %v1158, 7
    %v1160 = vsub.s32 3, %v1159
    %v1161 = vrot.slane %v1142, %v1160
    %v1162 = vlaneseq
    %v1163 = vshrl.u32 %v1162, 7
    %v1164 = vsub.s32 4, %v1163
    %v1165 = vrot.slane %v1142, %v1164
    %v1166 = vlaneseq
    %v1167 = vshrl.u32 %v1166, 7
    %v1168 = vsub.s32 5, %v1167
    %v1169 = vrot.slane %v1142, %v1168
    %v1170 = vlaneseq
    %v1171 = vshrl.u32 %v1170, 7
    %v1172 = vsub.s32 6, %v1171
    %v1173 = vrot.slane %v1142, %v1172
    %v1174 = vlaneseq
    %v1175 = vshrl.u32 %v1174, 7
    %v1176 = vsub.s32 7, %v1175
    %v1177 = vrot.slane %v1142, %v1176
    %v1178 = vlaneseq
    %v1179 = vshrl.u32 %v1178, 7
    %v1180 = vsub.s32 0, %v1179
    %v1181 = vrot.slane %v1143, %v1180
    %v1182 = vlaneseq
    %v1183 = vshrl.u32 %v1182, 7
    %v1184 = vsub.s32 1, %v1183
    %v1185 = vrot.slane %v1143, %v1184
    %v1186 = vlaneseq
    %v1187 = vshrl.u32 %v1186, 7
    %v1188 = vsub.s32 2, %v1187
    %v1189 = vrot.slane %v1143, %v1188
    %v1190 = vlaneseq
    %v1191 = vshrl.u32 %v1190, 7
    %v1192 = vsub.s32 3, %v1191
    %v1193 = vrot.slane %v1143, %v1192
    %v1194 = vlaneseq
    %v1195 = vshrl.u32 %v1194, 7
    %v1196 = vsub.s32 4, %v1195
    %v1197 = vrot.slane %v1143, %v1196
    %v1198 = vlaneseq
    %v1199 = vshrl.u32 %v1198, 7
    %v1200 = vsub.s32 5, %v1199
    %v1201 = vrot.slane %v1143, %v1200
    %v1202 = vlaneseq
    %v1203 = vshrl.u32 %v1202, 7
    %v1204 = vsub.s32 6, %v1203
    %v1205 = vrot.slane %v1143, %v1204
    %v1206 = vlaneseq
    %v1207 = vshrl.u32 %v1206, 7
    %v1208 = vsub.s32 7, %v1207
    %v1209 = vrot.slane %v1143, %v1208
    %1226 = vrot.lane.b32.xlu0 %v357, 96
    %v1227 = vpop.permute.xlu0 %1226
    %v1228 = vsel %vm506, %v1227, 0
    %1230 = vmatprep.subr.mxu0 %v1079
    %1231 = vmatpush1.msra.mxu0 %v1078
    %1232 = vmatprep.subr.mxu0 %v1095
    %1233 = vmatpush1.msra.mxu0 %v1094
    %1234 = vmatprep.subr.mxu0 %v1111
    %1235 = vmatpush1.msra.mxu0 %v1110
    %1236 = vmatprep.subr.mxu0 %v1127
    %1237 = vmatpush1.msra.mxu0 %v1126
    %1238 = vmatprep.subr.mxu0 0.0
    %1239 = vmatpush1.msra.mxu0 0.0
    %1240 = vmatprep.subr.mxu0 0.0
    %1241 = vmatpush1.msra.mxu0 0.0
    %1242 = vmatprep.subr.mxu0 0.0
    %1243 = vmatpush1.msra.mxu0 0.0
    %1244 = vmatprep.subr.mxu0 0.0
    %1245 = vmatpush1.msra.mxu0 0.0
    %1246 = vmatprep.subr.mxu0 0.0
    %1247 = vmatpush1.msra.mxu0 0.0
    %1248 = vmatprep.subr.mxu0 0.0
    %1249 = vmatpush1.msra.mxu0 0.0
    %1250 = vmatprep.subr.mxu0 0.0
    %1251 = vmatpush1.msra.mxu0 0.0
    %1252 = vmatprep.subr.mxu0 0.0
    %1253 = vmatpush1.msra.mxu0 0.0
    %1254 = vmatprep.subr.mxu0 0.0
    %1255 = vmatpush1.msra.mxu0 0.0
    %1256 = vmatprep.subr.mxu0 0.0
    %1257 = vmatpush1.msra.mxu0 0.0
    %1258 = vmatprep.subr.mxu0 0.0
    %1259 = vmatpush1.msra.mxu0 0.0
    %1260 = vmatprep.subr.mxu0 0.0
    %1261 = vmatpush1.msra.mxu0 0.0
    %1262 = vmatprep.subr.mxu0 0.0
    %1263 = vmatpush1.msra.mxu0 0.0
    %1264 = vmatprep.subr.mxu0 0.0
    %1265 = vmatpush1.msra.mxu0 0.0
    %1266 = vmatprep.subr.mxu0 0.0
    %1267 = vmatpush1.msra.mxu0 0.0
    %1268 = vmatprep.subr.mxu0 0.0
    %1269 = vmatpush1.msra.mxu0 0.0
    %1270 = vmatprep.subr.mxu0 0.0
    %1271 = vmatpush1.msra.mxu0 0.0
    %1272 = vmatprep.subr.mxu0 0.0
    %1273 = vmatpush1.msra.mxu0 0.0
    %1274 = vmatprep.subr.mxu0 0.0
    %1275 = vmatpush1.msra.mxu0 0.0
    %1276 = vmatprep.subr.mxu0 0.0
    %1277 = vmatpush1.msra.mxu0 0.0
    %1278 = vmatprep.subr.mxu0 0.0
    %1279 = vmatpush1.msra.mxu0 0.0
    %1280 = vmatprep.subr.mxu0 0.0
    %1281 = vmatpush1.msra.mxu0 0.0
    %1282 = vmatprep.subr.mxu0 0.0
    %1283 = vmatpush1.msra.mxu0 0.0
    %1284 = vmatprep.subr.mxu0 0.0
    %1285 = vmatpush1.msra.mxu0 0.0
    %1286 = vmatprep.subr.mxu0 0.0
    %1287 = vmatpush1.msra.mxu0 0.0
    %1288 = vmatprep.subr.mxu0 0.0
    %1289 = vmatpush1.msra.mxu0 0.0
    %1290 = vmatprep.subr.mxu0 0.0
    %1291 = vmatpush1.msra.mxu0 0.0
    %1292 = vmatprep.subr.mxu0 0.0
    %1293 = vmatpush1.msra.mxu0 0.0
    %1294 = vmatprep.mubr.f32.mxu0 0.0
    %1295 = vmatmul.mubr.f32.gmra.mrb[0].mxu0 %v1228
    %v1296 = vpop.f32.mrb[0].mxu0
    %v1297 = vadd.f32 %v1149, %v1296
    %v1298 = vpop.f32.mrb[0].mxu0
    %v1299 = vadd.f32 %v1153, %v1298
    %1300 = vdwg.mxu0
    %1301 = vmatprep.subr.mxu0 %v1081
    %1302 = vmatpush1.msra.mxu0 %v1080
    %1303 = vmatprep.subr.mxu0 %v1097
    %1304 = vmatpush1.msra.mxu0 %v1096
    %1305 = vmatprep.subr.mxu0 %v1113
    %1306 = vmatpush1.msra.mxu0 %v1112
    %1307 = vmatprep.subr.mxu0 %v1129
    %1308 = vmatpush1.msra.mxu0 %v1128
    %1309 = vmatprep.subr.mxu0 0.0
    %1310 = vmatpush1.msra.mxu0 0.0
    %1311 = vmatprep.subr.mxu0 0.0
    %1312 = vmatpush1.msra.mxu0 0.0
    %1313 = vmatprep.subr.mxu0 0.0
    %1314 = vmatpush1.msra.mxu0 0.0
    %1315 = vmatprep.subr.mxu0 0.0
    %1316 = vmatpush1.msra.mxu0 0.0
    %1317 = vmatprep.subr.mxu0 0.0
    %1318 = vmatpush1.msra.mxu0 0.0
    %1319 = vmatprep.subr.mxu0 0.0
    %1320 = vmatpush1.msra.mxu0 0.0
    %1321 = vmatprep.subr.mxu0 0.0
    %1322 = vmatpush1.msra.mxu0 0.0
    %1323 = vmatprep.subr.mxu0 0.0
    %1324 = vmatpush1.msra.mxu0 0.0
    %1325 = vmatprep.subr.mxu0 0.0
    %1326 = vmatpush1.msra.mxu0 0.0
    %1327 = vmatprep.subr.mxu0 0.0
    %1328 = vmatpush1.msra.mxu0 0.0
    %1329 = vmatprep.subr.mxu0 0.0
    %1330 = vmatpush1.msra.mxu0 0.0
    %1331 = vmatprep.subr.mxu0 0.0
    %1332 = vmatpush1.msra.mxu0 0.0
    %1333 = vmatprep.subr.mxu0 0.0
    %1334 = vmatpush1.msra.mxu0 0.0
    %1335 = vmatprep.subr.mxu0 0.0
    %1336 = vmatpush1.msra.mxu0 0.0
    %1337 = vmatprep.subr.mxu0 0.0
    %1338 = vmatpush1.msra.mxu0 0.0
    %1339 = vmatprep.subr.mxu0 0.0
    %1340 = vmatpush1.msra.mxu0 0.0
    %1341 = vmatprep.subr.mxu0 0.0
    %1342 = vmatpush1.msra.mxu0 0.0
    %1343 = vmatprep.subr.mxu0 0.0
    %1344 = vmatpush1.msra.mxu0 0.0
    %1345 = vmatprep.subr.mxu0 0.0
    %1346 = vmatpush1.msra.mxu0 0.0
    %1347 = vmatprep.subr.mxu0 0.0
    %1348 = vmatpush1.msra.mxu0 0.0
    %1349 = vmatprep.subr.mxu0 0.0
    %1350 = vmatpush1.msra.mxu0 0.0
    %1351 = vmatprep.subr.mxu0 0.0
    %1352 = vmatpush1.msra.mxu0 0.0
    %1353 = vmatprep.subr.mxu0 0.0
    %1354 = vmatpush1.msra.mxu0 0.0
    %1355 = vmatprep.subr.mxu0 0.0
    %1356 = vmatpush1.msra.mxu0 0.0
    %1357 = vmatprep.subr.mxu0 0.0
    %1358 = vmatpush1.msra.mxu0 0.0
    %1359 = vmatprep.subr.mxu0 0.0
    %1360 = vmatpush1.msra.mxu0 0.0
    %1361 = vmatprep.subr.mxu0 0.0
    %1362 = vmatpush1.msra.mxu0 0.0
    %1363 = vmatprep.subr.mxu0 0.0
    %1364 = vmatpush1.msra.mxu0 0.0
    %1365 = vmatprep.mubr.f32.mxu0 0.0
    %1366 = vmatmul.mubr.f32.gmra.mrb[0].mxu0 %v1228
    %v1367 = vpop.f32.mrb[0].mxu0
    %v1368 = vadd.f32 %v1157, %v1367
    %v1369 = vpop.f32.mrb[0].mxu0
    %v1370 = vadd.f32 %v1161, %v1369
    %1371 = vdwg.mxu0
    %1372 = vmatprep.subr.mxu0 %v1083
    %1373 = vmatpush1.msra.mxu0 %v1082
    %1374 = vmatprep.subr.mxu0 %v1099
    %1375 = vmatpush1.msra.mxu0 %v1098
    %1376 = vmatprep.subr.mxu0 %v1115
    %1377 = vmatpush1.msra.mxu0 %v1114
    %1378 = vmatprep.subr.mxu0 %v1131
    %1379 = vmatpush1.msra.mxu0 %v1130
    %1380 = vmatprep.subr.mxu0 0.0
    %1381 = vmatpush1.msra.mxu0 0.0
    %1382 = vmatprep.subr.mxu0 0.0
    %1383 = vmatpush1.msra.mxu0 0.0
    %1384 = vmatprep.subr.mxu0 0.0
    %1385 = vmatpush1.msra.mxu0 0.0
    %1386 = vmatprep.subr.mxu0 0.0
    %1387 = vmatpush1.msra.mxu0 0.0
    %1388 = vmatprep.subr.mxu0 0.0
    %1389 = vmatpush1.msra.mxu0 0.0
    %1390 = vmatprep.subr.mxu0 0.0
    %1391 = vmatpush1.msra.mxu0 0.0
    %1392 = vmatprep.subr.mxu0 0.0
    %1393 = vmatpush1.msra.mxu0 0.0
    %1394 = vmatprep.subr.mxu0 0.0
    %1395 = vmatpush1.msra.mxu0 0.0
    %1396 = vmatprep.subr.mxu0 0.0
    %1397 = vmatpush1.msra.mxu0 0.0
    %1398 = vmatprep.subr.mxu0 0.0
    %1399 = vmatpush1.msra.mxu0 0.0
    %1400 = vmatprep.subr.mxu0 0.0
    %1401 = vmatpush1.msra.mxu0 0.0
    %1402 = vmatprep.subr.mxu0 0.0
    %1403 = vmatpush1.msra.mxu0 0.0
    %1404 = vmatprep.subr.mxu0 0.0
    %1405 = vmatpush1.msra.mxu0 0.0
    %1406 = vmatprep.subr.mxu0 0.0
    %1407 = vmatpush1.msra.mxu0 0.0
    %1408 = vmatprep.subr.mxu0 0.0
    %1409 = vmatpush1.msra.mxu0 0.0
    %1410 = vmatprep.subr.mxu0 0.0
    %1411 = vmatpush1.msra.mxu0 0.0
    %1412 = vmatprep.subr.mxu0 0.0
    %1413 = vmatpush1.msra.mxu0 0.0
    %1414 = vmatprep.subr.mxu0 0.0
    %1415 = vmatpush1.msra.mxu0 0.0
    %1416 = vmatprep.subr.mxu0 0.0
    %1417 = vmatpush1.msra.mxu0 0.0
    %1418 = vmatprep.subr.mxu0 0.0
    %1419 = vmatpush1.msra.mxu0 0.0
    %1420 = vmatprep.subr.mxu0 0.0
    %1421 = vmatpush1.msra.mxu0 0.0
    %1422 = vmatprep.subr.mxu0 0.0
    %1423 = vmatpush1.msra.mxu0 0.0
    %1424 = vmatprep.subr.mxu0 0.0
    %1425 = vmatpush1.msra.mxu0 0.0
    %1426 = vmatprep.subr.mxu0 0.0
    %1427 = vmatpush1.msra.mxu0 0.0
    %1428 = vmatprep.subr.mxu0 0.0
    %1429 = vmatpush1.msra.mxu0 0.0
    %1430 = vmatprep.subr.mxu0 0.0
    %1431 = vmatpush1.msra.mxu0 0.0
    %1432 = vmatprep.subr.mxu0 0.0
    %1433 = vmatpush1.msra.mxu0 0.0
    %1434 = vmatprep.subr.mxu0 0.0
    %1435 = vmatpush1.msra.mxu0 0.0
    %1436 = vmatprep.mubr.f32.mxu0 0.0
    %1437 = vmatmul.mubr.f32.gmra.mrb[0].mxu0 %v1228
    %v1438 = vpop.f32.mrb[0].mxu0
    %v1439 = vadd.f32 %v1165, %v1438
    %v1440 = vpop.f32.mrb[0].mxu0
    %v1441 = vadd.f32 %v1169, %v1440
    %1442 = vdwg.mxu0
    %1443 = vmatprep.subr.mxu0 %v1085
    %1444 = vmatpush1.msra.mxu0 %v1084
    %1445 = vmatprep.subr.mxu0 %v1101
    %1446 = vmatpush1.msra.mxu0 %v1100
    %1447 = vmatprep.subr.mxu0 %v1117
    %1448 = vmatpush1.msra.mxu0 %v1116
    %1449 = vmatprep.subr.mxu0 %v1133
    %1450 = vmatpush1.msra.mxu0 %v1132
    %1451 = vmatprep.subr.mxu0 0.0
    %1452 = vmatpush1.msra.mxu0 0.0
    %1453 = vmatprep.subr.mxu0 0.0
    %1454 = vmatpush1.msra.mxu0 0.0
    %1455 = vmatprep.subr.mxu0 0.0
    %1456 = vmatpush1.msra.mxu0 0.0
    %1457 = vmatprep.subr.mxu0 0.0
    %1458 = vmatpush1.msra.mxu0 0.0
    %1459 = vmatprep.subr.mxu0 0.0
    %1460 = vmatpush1.msra.mxu0 0.0
    %1461 = vmatprep.subr.mxu0 0.0
    %1462 = vmatpush1.msra.mxu0 0.0
    %1463 = vmatprep.subr.mxu0 0.0
    %1464 = vmatpush1.msra.mxu0 0.0
    %1465 = vmatprep.subr.mxu0 0.0
    %1466 = vmatpush1.msra.mxu0 0.0
    %1467 = vmatprep.subr.mxu0 0.0
    %1468 = vmatpush1.msra.mxu0 0.0
    %1469 = vmatprep.subr.mxu0 0.0
    %1470 = vmatpush1.msra.mxu0 0.0
    %1471 = vmatprep.subr.mxu0 0.0
    %1472 = vmatpush1.msra.mxu0 0.0
    %1473 = vmatprep.subr.mxu0 0.0
    %1474 = vmatpush1.msra.mxu0 0.0
    %1475 = vmatprep.subr.mxu0 0.0
    %1476 = vmatpush1.msra.mxu0 0.0
    %1477 = vmatprep.subr.mxu0 0.0
    %1478 = vmatpush1.msra.mxu0 0.0
    %1479 = vmatprep.subr.mxu0 0.0
    %1480 = vmatpush1.msra.mxu0 0.0
    %1481 = vmatprep.subr.mxu0 0.0
    %1482 = vmatpush1.msra.mxu0 0.0
    %1483 = vmatprep.subr.mxu0 0.0
    %1484 = vmatpush1.msra.mxu0 0.0
    %1485 = vmatprep.subr.mxu0 0.0
    %1486 = vmatpush1.msra.mxu0 0.0
    %1487 = vmatprep.subr.mxu0 0.0
    %1488 = vmatpush1.msra.mxu0 0.0
    %1489 = vmatprep.subr.mxu0 0.0
    %1490 = vmatpush1.msra.mxu0 0.0
    %1491 = vmatprep.subr.mxu0 0.0
    %1492 = vmatpush1.msra.mxu0 0.0
    %1493 = vmatprep.subr.mxu0 0.0
    %1494 = vmatpush1.msra.mxu0 0.0
    %1495 = vmatprep.subr.mxu0 0.0
    %1496 = vmatpush1.msra.mxu0 0.0
    %1497 = vmatprep.subr.mxu0 0.0
    %1498 = vmatpush1.msra.mxu0 0.0
    %1499 = vmatprep.subr.mxu0 0.0
    %1500 = vmatpush1.msra.mxu0 0.0
    %1501 = vmatprep.subr.mxu0 0.0
    %1502 = vmatpush1.msra.mxu0 0.0
    %1503 = vmatprep.subr.mxu0 0.0
    %1504 = vmatpush1.msra.mxu0 0.0
    %1505 = vmatprep.subr.mxu0 0.0
    %1506 = vmatpush1.msra.mxu0 0.0
    %1507 = vmatprep.mubr.f32.mxu0 0.0
    %1508 = vmatmul.mubr.f32.gmra.mrb[0].mxu0 %v1228
    %v1509 = vpop.f32.mrb[0].mxu0
    %v1510 = vadd.f32 %v1173, %v1509
    %v1511 = vpop.f32.mrb[0].mxu0
    %v1512 = vadd.f32 %v1177, %v1511
    %1513 = vdwg.mxu0
    %1514 = vmatprep.subr.mxu0 %v1087
    %1515 = vmatpush1.msra.mxu0 %v1086
    %1516 = vmatprep.subr.mxu0 %v1103
    %1517 = vmatpush1.msra.mxu0 %v1102
    %1518 = vmatprep.subr.mxu0 %v1119
    %1519 = vmatpush1.msra.mxu0 %v1118
    %1520 = vmatprep.subr.mxu0 %v1135
    %1521 = vmatpush1.msra.mxu0 %v1134
    %1522 = vmatprep.subr.mxu0 0.0
    %1523 = vmatpush1.msra.mxu0 0.0
    %1524 = vmatprep.subr.mxu0 0.0
    %1525 = vmatpush1.msra.mxu0 0.0
    %1526 = vmatprep.subr.mxu0 0.0
    %1527 = vmatpush1.msra.mxu0 0.0
    %1528 = vmatprep.subr.mxu0 0.0
    %1529 = vmatpush1.msra.mxu0 0.0
    %1530 = vmatprep.subr.mxu0 0.0
    %1531 = vmatpush1.msra.mxu0 0.0
    %1532 = vmatprep.subr.mxu0 0.0
    %1533 = vmatpush1.msra.mxu0 0.0
    %1534 = vmatprep.subr.mxu0 0.0
    %1535 = vmatpush1.msra.mxu0 0.0
    %1536 = vmatprep.subr.mxu0 0.0
    %1537 = vmatpush1.msra.mxu0 0.0
    %1538 = vmatprep.subr.mxu0 0.0
    %1539 = vmatpush1.msra.mxu0 0.0
    %1540 = vmatprep.subr.mxu0 0.0
    %1541 = vmatpush1.msra.mxu0 0.0
    %1542 = vmatprep.subr.mxu0 0.0
    %1543 = vmatpush1.msra.mxu0 0.0
    %1544 = vmatprep.subr.mxu0 0.0
    %1545 = vmatpush1.msra.mxu0 0.0
    %1546 = vmatprep.subr.mxu0 0.0
    %1547 = vmatpush1.msra.mxu0 0.0
    %1548 = vmatprep.subr.mxu0 0.0
    %1549 = vmatpush1.msra.mxu0 0.0
    %1550 = vmatprep.subr.mxu0 0.0
    %1551 = vmatpush1.msra.mxu0 0.0
    %1552 = vmatprep.subr.mxu0 0.0
    %1553 = vmatpush1.msra.mxu0 0.0
    %1554 = vmatprep.subr.mxu0 0.0
    %1555 = vmatpush1.msra.mxu0 0.0
    %1556 = vmatprep.subr.mxu0 0.0
    %1557 = vmatpush1.msra.mxu0 0.0
    %1558 = vmatprep.subr.mxu0 0.0
    %1559 = vmatpush1.msra.mxu0 0.0
    %1560 = vmatprep.subr.mxu0 0.0
    %1561 = vmatpush1.msra.mxu0 0.0
    %1562 = vmatprep.subr.mxu0 0.0
    %1563 = vmatpush1.msra.mxu0 0.0
    %1564 = vmatprep.subr.mxu0 0.0
    %1565 = vmatpush1.msra.mxu0 0.0
    %1566 = vmatprep.subr.mxu0 0.0
    %1567 = vmatpush1.msra.mxu0 0.0
    %1568 = vmatprep.subr.mxu0 0.0
    %1569 = vmatpush1.msra.mxu0 0.0
    %1570 = vmatprep.subr.mxu0 0.0
    %1571 = vmatpush1.msra.mxu0 0.0
    %1572 = vmatprep.subr.mxu0 0.0
    %1573 = vmatpush1.msra.mxu0 0.0
    %1574 = vmatprep.subr.mxu0 0.0
    %1575 = vmatpush1.msra.mxu0 0.0
    %1576 = vmatprep.subr.mxu0 0.0
    %1577 = vmatpush1.msra.mxu0 0.0
    %1578 = vmatprep.mubr.f32.mxu0 0.0
    %1579 = vmatmul.mubr.f32.gmra.mrb[0].mxu0 %v1228
    %v1580 = vpop.f32.mrb[0].mxu0
    %v1581 = vadd.f32 %v1181, %v1580
    %v1582 = vpop.f32.mrb[0].mxu0
    %v1583 = vadd.f32 %v1185, %v1582
    %1584 = vdwg.mxu0
    %1585 = vmatprep.subr.mxu0 %v1089
    %1586 = vmatpush1.msra.mxu0 %v1088
    %1587 = vmatprep.subr.mxu0 %v1105
    %1588 = vmatpush1.msra.mxu0 %v1104
    %1589 = vmatprep.subr.mxu0 %v1121
    %1590 = vmatpush1.msra.mxu0 %v1120
    %1591 = vmatprep.subr.mxu0 %v1137
    %1592 = vmatpush1.msra.mxu0 %v1136
    %1593 = vmatprep.subr.mxu0 0.0
    %1594 = vmatpush1.msra.mxu0 0.0
    %1595 = vmatprep.subr.mxu0 0.0
    %1596 = vmatpush1.msra.mxu0 0.0
    %1597 = vmatprep.subr.mxu0 0.0
    %1598 = vmatpush1.msra.mxu0 0.0
    %1599 = vmatprep.subr.mxu0 0.0
    %1600 = vmatpush1.msra.mxu0 0.0
    %1601 = vmatprep.subr.mxu0 0.0
    %1602 = vmatpush1.msra.mxu0 0.0
    %1603 = vmatprep.subr.mxu0 0.0
    %1604 = vmatpush1.msra.mxu0 0.0
    %1605 = vmatprep.subr.mxu0 0.0
    %1606 = vmatpush1.msra.mxu0 0.0
    %1607 = vmatprep.subr.mxu0 0.0
    %1608 = vmatpush1.msra.mxu0 0.0
    %1609 = vmatprep.subr.mxu0 0.0
    %1610 = vmatpush1.msra.mxu0 0.0
    %1611 = vmatprep.subr.mxu0 0.0
    %1612 = vmatpush1.msra.mxu0 0.0
    %1613 = vmatprep.subr.mxu0 0.0
    %1614 = vmatpush1.msra.mxu0 0.0
    %1615 = vmatprep.subr.mxu0 0.0
    %1616 = vmatpush1.msra.mxu0 0.0
    %1617 = vmatprep.subr.mxu0 0.0
    %1618 = vmatpush1.msra.mxu0 0.0
    %1619 = vmatprep.subr.mxu0 0.0
    %1620 = vmatpush1.msra.mxu0 0.0
    %1621 = vmatprep.subr.mxu0 0.0
    %1622 = vmatpush1.msra.mxu0 0.0
    %1623 = vmatprep.subr.mxu0 0.0
    %1624 = vmatpush1.msra.mxu0 0.0
    %1625 = vmatprep.subr.mxu0 0.0
    %1626 = vmatpush1.msra.mxu0 0.0
    %1627 = vmatprep.subr.mxu0 0.0
    %1628 = vmatpush1.msra.mxu0 0.0
    %1629 = vmatprep.subr.mxu0 0.0
    %1630 = vmatpush1.msra.mxu0 0.0
    %1631 = vmatprep.subr.mxu0 0.0
    %1632 = vmatpush1.msra.mxu0 0.0
    %1633 = vmatprep.subr.mxu0 0.0
    %1634 = vmatpush1.msra.mxu0 0.0
    %1635 = vmatprep.subr.mxu0 0.0
    %1636 = vmatpush1.msra.mxu0 0.0
    %1637 = vmatprep.subr.mxu0 0.0
    %1638 = vmatpush1.msra.mxu0 0.0
    %1639 = vmatprep.subr.mxu0 0.0
    %1640 = vmatpush1.msra.mxu0 0.0
    %1641 = vmatprep.subr.mxu0 0.0
    %1642 = vmatpush1.msra.mxu0 0.0
    %1643 = vmatprep.subr.mxu0 0.0
    %1644 = vmatpush1.msra.mxu0 0.0
    %1645 = vmatprep.subr.mxu0 0.0
    %1646 = vmatpush1.msra.mxu0 0.0
    %1647 = vmatprep.subr.mxu0 0.0
    %1648 = vmatpush1.msra.mxu0 0.0
    %1649 = vmatprep.mubr.f32.mxu0 0.0
    %1650 = vmatmul.mubr.f32.gmra.mrb[0].mxu0 %v1228
    %v1651 = vpop.f32.mrb[0].mxu0
    %v1652 = vadd.f32 %v1189, %v1651
    %v1653 = vpop.f32.mrb[0].mxu0
    %v1654 = vadd.f32 %v1193, %v1653
    %1655 = vdwg.mxu0
    %1656 = vmatprep.subr.mxu0 %v1091
    %1657 = vmatpush1.msra.mxu0 %v1090
    %1658 = vmatprep.subr.mxu0 %v1107
    %1659 = vmatpush1.msra.mxu0 %v1106
    %1660 = vmatprep.subr.mxu0 %v1123
    %1661 = vmatpush1.msra.mxu0 %v1122
    %1662 = vmatprep.subr.mxu0 %v1139
    %1663 = vmatpush1.msra.mxu0 %v1138
    %1664 = vmatprep.subr.mxu0 0.0
    %1665 = vmatpush1.msra.mxu0 0.0
    %1666 = vmatprep.subr.mxu0 0.0
    %1667 = vmatpush1.msra.mxu0 0.0
    %1668 = vmatprep.subr.mxu0 0.0
    %1669 = vmatpush1.msra.mxu0 0.0
    %1670 = vmatprep.subr.mxu0 0.0
    %1671 = vmatpush1.msra.mxu0 0.0
    %1672 = vmatprep.subr.mxu0 0.0
    %1673 = vmatpush1.msra.mxu0 0.0
    %1674 = vmatprep.subr.mxu0 0.0
    %1675 = vmatpush1.msra.mxu0 0.0
    %1676 = vmatprep.subr.mxu0 0.0
    %1677 = vmatpush1.msra.mxu0 0.0
    %1678 = vmatprep.subr.mxu0 0.0
    %1679 = vmatpush1.msra.mxu0 0.0
    %1680 = vmatprep.subr.mxu0 0.0
    %1681 = vmatpush1.msra.mxu0 0.0
    %1682 = vmatprep.subr.mxu0 0.0
    %1683 = vmatpush1.msra.mxu0 0.0
    %1684 = vmatprep.subr.mxu0 0.0
    %1685 = vmatpush1.msra.mxu0 0.0
    %1686 = vmatprep.subr.mxu0 0.0
    %1687 = vmatpush1.msra.mxu0 0.0
    %1688 = vmatprep.subr.mxu0 0.0
    %1689 = vmatpush1.msra.mxu0 0.0
    %1690 = vmatprep.subr.mxu0 0.0
    %1691 = vmatpush1.msra.mxu0 0.0
    %1692 = vmatprep.subr.mxu0 0.0
    %1693 = vmatpush1.msra.mxu0 0.0
    %1694 = vmatprep.subr.mxu0 0.0
    %1695 = vmatpush1.msra.mxu0 0.0
    %1696 = vmatprep.subr.mxu0 0.0
    %1697 = vmatpush1.msra.mxu0 0.0
    %1698 = vmatprep.subr.mxu0 0.0
    %1699 = vmatpush1.msra.mxu0 0.0
    %1700 = vmatprep.subr.mxu0 0.0
    %1701 = vmatpush1.msra.mxu0 0.0
    %1702 = vmatprep.subr.mxu0 0.0
    %1703 = vmatpush1.msra.mxu0 0.0
    %1704 = vmatprep.subr.mxu0 0.0
    %1705 = vmatpush1.msra.mxu0 0.0
    %1706 = vmatprep.subr.mxu0 0.0
    %1707 = vmatpush1.msra.mxu0 0.0
    %1708 = vmatprep.subr.mxu0 0.0
    %1709 = vmatpush1.msra.mxu0 0.0
    %1710 = vmatprep.subr.mxu0 0.0
    %1711 = vmatpush1.msra.mxu0 0.0
    %1712 = vmatprep.subr.mxu0 0.0
    %1713 = vmatpush1.msra.mxu0 0.0
    %1714 = vmatprep.subr.mxu0 0.0
    %1715 = vmatpush1.msra.mxu0 0.0
    %1716 = vmatprep.subr.mxu0 0.0
    %1717 = vmatpush1.msra.mxu0 0.0
    %1718 = vmatprep.subr.mxu0 0.0
    %1719 = vmatpush1.msra.mxu0 0.0
    %1720 = vmatprep.mubr.f32.mxu0 0.0
    %1721 = vmatmul.mubr.f32.gmra.mrb[0].mxu0 %v1228
    %v1722 = vpop.f32.mrb[0].mxu0
    %v1723 = vadd.f32 %v1197, %v1722
    %v1724 = vpop.f32.mrb[0].mxu0
    %v1725 = vadd.f32 %v1201, %v1724
    %1726 = vdwg.mxu0
    %1727 = vmatprep.subr.mxu0 %v1093
    %1728 = vmatpush1.msra.mxu0 %v1092
    %1729 = vmatprep.subr.mxu0 %v1109
    %1730 = vmatpush1.msra.mxu0 %v1108
    %1731 = vmatprep.subr.mxu0 %v1125
    %1732 = vmatpush1.msra.mxu0 %v1124
    %1733 = vmatprep.subr.mxu0 %v1141
    %1734 = vmatpush1.msra.mxu0 %v1140
    %1735 = vmatprep.subr.mxu0 0.0
    %1736 = vmatpush1.msra.mxu0 0.0
    %1737 = vmatprep.subr.mxu0 0.0
    %1738 = vmatpush1.msra.mxu0 0.0
    %1739 = vmatprep.subr.mxu0 0.0
    %1740 = vmatpush1.msra.mxu0 0.0
    %1741 = vmatprep.subr.mxu0 0.0
    %1742 = vmatpush1.msra.mxu0 0.0
    %1743 = vmatprep.subr.mxu0 0.0
    %1744 = vmatpush1.msra.mxu0 0.0
    %1745 = vmatprep.subr.mxu0 0.0
    %1746 = vmatpush1.msra.mxu0 0.0
    %1747 = vmatprep.subr.mxu0 0.0
    %1748 = vmatpush1.msra.mxu0 0.0
    %1749 = vmatprep.subr.mxu0 0.0
    %1750 = vmatpush1.msra.mxu0 0.0
    %1751 = vmatprep.subr.mxu0 0.0
    %1752 = vmatpush1.msra.mxu0 0.0
    %1753 = vmatprep.subr.mxu0 0.0
    %1754 = vmatpush1.msra.mxu0 0.0
    %1755 = vmatprep.subr.mxu0 0.0
    %1756 = vmatpush1.msra.mxu0 0.0
    %1757 = vmatprep.subr.mxu0 0.0
    %1758 = vmatpush1.msra.mxu0 0.0
    %1759 = vmatprep.subr.mxu0 0.0
    %1760 = vmatpush1.msra.mxu0 0.0
    %1761 = vmatprep.subr.mxu0 0.0
    %1762 = vmatpush1.msra.mxu0 0.0
    %1763 = vmatprep.subr.mxu0 0.0
    %1764 = vmatpush1.msra.mxu0 0.0
    %1765 = vmatprep.subr.mxu0 0.0
    %1766 = vmatpush1.msra.mxu0 0.0
    %1767 = vmatprep.subr.mxu0 0.0
    %1768 = vmatpush1.msra.mxu0 0.0
    %1769 = vmatprep.subr.mxu0 0.0
    %1770 = vmatpush1.msra.mxu0 0.0
    %1771 = vmatprep.subr.mxu0 0.0
    %1772 = vmatpush1.msra.mxu0 0.0
    %1773 = vmatprep.subr.mxu0 0.0
    %1774 = vmatpush1.msra.mxu0 0.0
    %1775 = vmatprep.subr.mxu0 0.0
    %1776 = vmatpush1.msra.mxu0 0.0
    %1777 = vmatprep.subr.mxu0 0.0
    %1778 = vmatpush1.msra.mxu0 0.0
    %1779 = vmatprep.subr.mxu0 0.0
    %1780 = vmatpush1.msra.mxu0 0.0
    %1781 = vmatprep.subr.mxu0 0.0
    %1782 = vmatpush1.msra.mxu0 0.0
    %1783 = vmatprep.subr.mxu0 0.0
    %1784 = vmatpush1.msra.mxu0 0.0
    %1785 = vmatprep.subr.mxu0 0.0
    %1786 = vmatpush1.msra.mxu0 0.0
    %1787 = vmatprep.subr.mxu0 0.0
    %1788 = vmatpush1.msra.mxu0 0.0
    %1789 = vmatprep.subr.mxu0 0.0
    %1790 = vmatpush1.msra.mxu0 0.0
    %1791 = vmatprep.mubr.f32.mxu0 0.0
    %1792 = vmatmul.mubr.f32.gmra.mrb[0].mxu0 %v1228
    %v1793 = vpop.f32.mrb[0].mxu0
    %v1794 = vadd.f32 %v1205, %v1793
    %v1795 = vpop.f32.mrb[0].mxu0
    %v1796 = vadd.f32 %v1209, %v1795
    %1797 = vdwg.mxu0
    %v1798 = vld [vmem:[#allocation2] sm:$0xff]
    %v1799 = vld [vmem:[#allocation20] sm:$0xff]
    %v1800 = vld [vmem:[#allocation20 + $0x8] sm:$0xff]
    %v1801 = vld [vmem:[#allocation20 + $0x10] sm:$0xff]
    %v1802 = vld [vmem:[#allocation20 + $0x18] sm:$0xff]
    %v1803 = vld [vmem:[#allocation20 + $0x20] sm:$0xff]
    %v1804 = vld [vmem:[#allocation20 + $0x28] sm:$0xff]
    %v1805 = vld [vmem:[#allocation20 + $0x30] sm:$0xff]
    %v1806 = vld [vmem:[#allocation20 + $0x38] sm:$0xff]
    %v1807 = vld [vmem:[#allocation20 + $0x40] sm:$0xff]
    %v1808 = vld [vmem:[#allocation20 + $0x48] sm:$0xff]
    %v1809 = vld [vmem:[#allocation20 + $0x50] sm:$0xff]
    %v1810 = vld [vmem:[#allocation20 + $0x58] sm:$0xff]
    %v1811 = vld [vmem:[#allocation20 + $0x60] sm:$0xff]
    %v1812 = vld [vmem:[#allocation20 + $0x68] sm:$0xff]
    %v1813 = vld [vmem:[#allocation20 + $0x70] sm:$0xff]
    %v1814 = vld [vmem:[#allocation20 + $0x78] sm:$0xff]
    %v1815 = vld [vmem:[#allocation20 + $0x80] sm:$0xff]
    %v1816 = vld [vmem:[#allocation20 + $0x88] sm:$0xff]
    %v1817 = vld [vmem:[#allocation20 + $0x90] sm:$0xff]
    %v1818 = vld [vmem:[#allocation20 + $0x98] sm:$0xff]
    %v1819 = vld [vmem:[#allocation20 + $0xa0] sm:$0xff]
    %v1820 = vld [vmem:[#allocation20 + $0xa8] sm:$0xff]
    %v1821 = vld [vmem:[#allocation20 + $0xb0] sm:$0xff]
    %v1822 = vld [vmem:[#allocation20 + $0xb8] sm:$0xff]
    %v1823 = vld [vmem:[#allocation20 + $0xc0] sm:$0xff]
    %v1824 = vld [vmem:[#allocation20 + $0xc8] sm:$0xff]
    %v1825 = vld [vmem:[#allocation20 + $0xd0] sm:$0xff]
    %v1826 = vld [vmem:[#allocation20 + $0xd8] sm:$0xff]
    %v1827 = vld [vmem:[#allocation20 + $0xe0] sm:$0xff]
    %v1828 = vld [vmem:[#allocation20 + $0xe8] sm:$0xff]
    %v1829 = vld [vmem:[#allocation20 + $0xf0] sm:$0xff]
    %v1830 = vld [vmem:[#allocation20 + $0xf8] sm:$0xff]
    %v1831 = vld [vmem:[#allocation20 + $0x100] sm:$0xff]
    %v1832 = vld [vmem:[#allocation20 + $0x108] sm:$0xff]
    %v1833 = vld [vmem:[#allocation20 + $0x110] sm:$0xff]
    %v1834 = vld [vmem:[#allocation20 + $0x118] sm:$0xff]
    %v1835 = vld [vmem:[#allocation20 + $0x120] sm:$0xff]
    %v1836 = vld [vmem:[#allocation20 + $0x128] sm:$0xff]
    %v1837 = vld [vmem:[#allocation20 + $0x130] sm:$0xff]
    %v1838 = vld [vmem:[#allocation20 + $0x138] sm:$0xff]
    %v1839 = vld [vmem:[#allocation20 + $0x140] sm:$0xff]
    %v1840 = vld [vmem:[#allocation20 + $0x148] sm:$0xff]
    %v1841 = vld [vmem:[#allocation20 + $0x150] sm:$0xff]
    %v1842 = vld [vmem:[#allocation20 + $0x158] sm:$0xff]
    %v1843 = vld [vmem:[#allocation20 + $0x160] sm:$0xff]
    %v1844 = vld [vmem:[#allocation20 + $0x168] sm:$0xff]
    %v1845 = vld [vmem:[#allocation20 + $0x170] sm:$0xff]
    %v1846 = vld [vmem:[#allocation20 + $0x178] sm:$0xff]
    %v1847 = vld [vmem:[#allocation20 + $0x180] sm:$0xff]
    %v1848 = vld [vmem:[#allocation20 + $0x188] sm:$0xff]
    %v1849 = vld [vmem:[#allocation20 + $0x190] sm:$0xff]
    %v1850 = vld [vmem:[#allocation20 + $0x198] sm:$0xff]
    %v1851 = vld [vmem:[#allocation20 + $0x1a0] sm:$0xff]
    %v1852 = vld [vmem:[#allocation20 + $0x1a8] sm:$0xff]
    %v1853 = vld [vmem:[#allocation20 + $0x1b0] sm:$0xff]
    %v1854 = vld [vmem:[#allocation20 + $0x1b8] sm:$0xff]
    %v1855 = vld [vmem:[#allocation20 + $0x1c0] sm:$0xff]
    %v1856 = vld [vmem:[#allocation20 + $0x1c8] sm:$0xff]
    %v1857 = vld [vmem:[#allocation20 + $0x1d0] sm:$0xff]
    %v1858 = vld [vmem:[#allocation20 + $0x1d8] sm:$0xff]
    %v1859 = vld [vmem:[#allocation20 + $0x1e0] sm:$0xff]
    %v1860 = vld [vmem:[#allocation20 + $0x1e8] sm:$0xff]
    %v1861 = vld [vmem:[#allocation20 + $0x1f0] sm:$0xff]
    %v1862 = vld [vmem:[#allocation20 + $0x1f8] sm:$0xff]
    %v1863 = vld [vmem:[#allocation20 + $0x200] sm:$0xff]
    %v1864 = vld [vmem:[#allocation20 + $0x208] sm:$0xff]
    %v1865 = vld [vmem:[#allocation20 + $0x210] sm:$0xff]
    %v1866 = vld [vmem:[#allocation20 + $0x218] sm:$0xff]
    %v1867 = vld [vmem:[#allocation20 + $0x220] sm:$0xff]
    %v1868 = vld [vmem:[#allocation20 + $0x228] sm:$0xff]
    %v1869 = vld [vmem:[#allocation20 + $0x230] sm:$0xff]
    %v1870 = vld [vmem:[#allocation20 + $0x238] sm:$0xff]
    %v1871 = vld [vmem:[#allocation20 + $0x240] sm:$0xff]
    %v1872 = vld [vmem:[#allocation20 + $0x248] sm:$0xff]
    %v1873 = vld [vmem:[#allocation20 + $0x250] sm:$0xff]
    %v1874 = vld [vmem:[#allocation20 + $0x258] sm:$0xff]
    %v1875 = vld [vmem:[#allocation20 + $0x260] sm:$0xff]
    %v1876 = vld [vmem:[#allocation20 + $0x268] sm:$0xff]
    %v1877 = vld [vmem:[#allocation20 + $0x270] sm:$0xff]
    %v1878 = vld [vmem:[#allocation20 + $0x278] sm:$0xff]
    %v1879 = vld [vmem:[#allocation20 + $0x280] sm:$0xff]
    %v1880 = vld [vmem:[#allocation20 + $0x288] sm:$0xff]
    %v1881 = vld [vmem:[#allocation20 + $0x290] sm:$0xff]
    %v1882 = vld [vmem:[#allocation20 + $0x298] sm:$0xff]
    %v1883 = vld [vmem:[#allocation20 + $0x2a0] sm:$0xff]
    %v1884 = vld [vmem:[#allocation20 + $0x2a8] sm:$0xff]
    %v1885 = vld [vmem:[#allocation20 + $0x2b0] sm:$0xff]
    %v1886 = vld [vmem:[#allocation20 + $0x2b8] sm:$0xff]
    %v1887 = vld [vmem:[#allocation20 + $0x2c0] sm:$0xff]
    %v1888 = vld [vmem:[#allocation20 + $0x2c8] sm:$0xff]
    %v1889 = vld [vmem:[#allocation20 + $0x2d0] sm:$0xff]
    %v1890 = vld [vmem:[#allocation20 + $0x2d8] sm:$0xff]
    %v1891 = vld [vmem:[#allocation20 + $0x2e0] sm:$0xff]
    %v1892 = vld [vmem:[#allocation20 + $0x2e8] sm:$0xff]
    %v1893 = vld [vmem:[#allocation20 + $0x2f0] sm:$0xff]
    %v1894 = vld [vmem:[#allocation20 + $0x2f8] sm:$0xff]
    %v1895 = vld [vmem:[#allocation20 + $0x300] sm:$0xff]
    %v1896 = vld [vmem:[#allocation20 + $0x308] sm:$0xff]
    %v1897 = vld [vmem:[#allocation20 + $0x310] sm:$0xff]
    %v1898 = vld [vmem:[#allocation20 + $0x318] sm:$0xff]
    %v1899 = vld [vmem:[#allocation20 + $0x320] sm:$0xff]
    %v1900 = vld [vmem:[#allocation20 + $0x328] sm:$0xff]
    %v1901 = vld [vmem:[#allocation20 + $0x330] sm:$0xff]
    %v1902 = vld [vmem:[#allocation20 + $0x338] sm:$0xff]
    %v1903 = vld [vmem:[#allocation20 + $0x340] sm:$0xff]
    %v1904 = vld [vmem:[#allocation20 + $0x348] sm:$0xff]
    %v1905 = vld [vmem:[#allocation20 + $0x350] sm:$0xff]
    %v1906 = vld [vmem:[#allocation20 + $0x358] sm:$0xff]
    %v1907 = vld [vmem:[#allocation20 + $0x360] sm:$0xff]
    %v1908 = vld [vmem:[#allocation20 + $0x368] sm:$0xff]
    %v1909 = vld [vmem:[#allocation20 + $0x370] sm:$0xff]
    %v1910 = vld [vmem:[#allocation20 + $0x378] sm:$0xff]
    %v1911 = vld [vmem:[#allocation20 + $0x380] sm:$0xff]
    %v1912 = vld [vmem:[#allocation20 + $0x388] sm:$0xff]
    %v1913 = vld [vmem:[#allocation20 + $0x390] sm:$0xff]
    %v1914 = vld [vmem:[#allocation20 + $0x398] sm:$0xff]
    %v1915 = vld [vmem:[#allocation20 + $0x3a0] sm:$0xff]
    %v1916 = vld [vmem:[#allocation20 + $0x3a8] sm:$0xff]
    %v1917 = vld [vmem:[#allocation20 + $0x3b0] sm:$0xff]
    %v1918 = vld [vmem:[#allocation20 + $0x3b8] sm:$0xff]
    %v1919 = vld [vmem:[#allocation20 + $0x3c0] sm:$0xff]
    %v1920 = vld [vmem:[#allocation20 + $0x3c8] sm:$0xff]
    %v1921 = vld [vmem:[#allocation20 + $0x3d0] sm:$0xff]
    %v1922 = vld [vmem:[#allocation20 + $0x3d8] sm:$0xff]
    %v1923 = vld [vmem:[#allocation20 + $0x3e0] sm:$0xff]
    %v1924 = vld [vmem:[#allocation20 + $0x3e8] sm:$0xff]
    %v1925 = vld [vmem:[#allocation20 + $0x3f0] sm:$0xff]
    %v1926 = vld [vmem:[#allocation20 + $0x3f8] sm:$0xff]
    %v1927 = vld [vmem:[#allocation22] sm:$0xff]
    %v1928 = vld [vmem:[#allocation22 + $0x8] sm:$0xff]
    %v1931 = vlaneseq
    %v1932 = vshrl.u32 %v1931, 7
    %v1933 = vsub.s32 0, %v1932
    %v1934 = vrot.slane %v1927, %v1933
    %v1935 = vlaneseq
    %v1936 = vshrl.u32 %v1935, 7
    %v1937 = vsub.s32 1, %v1936
    %v1938 = vrot.slane %v1927, %v1937
    %v1939 = vlaneseq
    %v1940 = vshrl.u32 %v1939, 7
    %v1941 = vsub.s32 2, %v1940
    %v1942 = vrot.slane %v1927, %v1941
    %v1943 = vlaneseq
    %v1944 = vshrl.u32 %v1943, 7
    %v1945 = vsub.s32 3, %v1944
    %v1946 = vrot.slane %v1927, %v1945
    %v1947 = vlaneseq
    %v1948 = vshrl.u32 %v1947, 7
    %v1949 = vsub.s32 4, %v1948
    %v1950 = vrot.slane %v1927, %v1949
    %v1951 = vlaneseq
    %v1952 = vshrl.u32 %v1951, 7
    %v1953 = vsub.s32 5, %v1952
    %v1954 = vrot.slane %v1927, %v1953
    %v1955 = vlaneseq
    %v1956 = vshrl.u32 %v1955, 7
    %v1957 = vsub.s32 6, %v1956
    %v1958 = vrot.slane %v1927, %v1957
    %v1959 = vlaneseq
    %v1960 = vshrl.u32 %v1959, 7
    %v1961 = vsub.s32 7, %v1960
    %v1962 = vrot.slane %v1927, %v1961
    %v1963 = vlaneseq
    %v1964 = vshrl.u32 %v1963, 7
    %v1965 = vsub.s32 0, %v1964
    %v1966 = vrot.slane %v1928, %v1965
    %v1967 = vlaneseq
    %v1968 = vshrl.u32 %v1967, 7
    %v1969 = vsub.s32 1, %v1968
    %v1970 = vrot.slane %v1928, %v1969
    %v1971 = vlaneseq
    %v1972 = vshrl.u32 %v1971, 7
    %v1973 = vsub.s32 2, %v1972
    %v1974 = vrot.slane %v1928, %v1973
    %v1975 = vlaneseq
    %v1976 = vshrl.u32 %v1975, 7
    %v1977 = vsub.s32 3, %v1976
    %v1978 = vrot.slane %v1928, %v1977
    %v1979 = vlaneseq
    %v1980 = vshrl.u32 %v1979, 7
    %v1981 = vsub.s32 4, %v1980
    %v1982 = vrot.slane %v1928, %v1981
    %v1983 = vlaneseq
    %v1984 = vshrl.u32 %v1983, 7
    %v1985 = vsub.s32 5, %v1984
    %v1986 = vrot.slane %v1928, %v1985
    %v1987 = vlaneseq
    %v1988 = vshrl.u32 %v1987, 7
    %v1989 = vsub.s32 6, %v1988
    %v1990 = vrot.slane %v1928, %v1989
    %v1991 = vlaneseq
    %v1992 = vshrl.u32 %v1991, 7
    %v1993 = vsub.s32 7, %v1992
    %v1994 = vrot.slane %v1928, %v1993
    %vm2011 = vcmask 523264
    %v2013 = vsel %vm2011, %v1798, 0
    %2015 = vmatprep.subr.mxu0 %v1800
    %2016 = vmatpush1.msra.mxu0 %v1799
    %2017 = vmatprep.subr.mxu0 %v1816
    %2018 = vmatpush1.msra.mxu0 %v1815
    %2019 = vmatprep.subr.mxu0 %v1832
    %2020 = vmatpush1.msra.mxu0 %v1831
    %2021 = vmatprep.subr.mxu0 %v1848
    %2022 = vmatpush1.msra.mxu0 %v1847
    %2023 = vmatprep.subr.mxu0 %v1864
    %2024 = vmatpush1.msra.mxu0 %v1863
    %2025 = vmatprep.subr.mxu0 %v1880
    %2026 = vmatpush1.msra.mxu0 %v1879
    %2027 = vmatprep.subr.mxu0 %v1896
    %2028 = vmatpush1.msra.mxu0 %v1895
    %2029 = vmatprep.subr.mxu0 %v1912
    %2030 = vmatpush1.msra.mxu0 %v1911
    %2031 = vmatprep.subr.mxu0 0.0
    %2032 = vmatpush1.msra.mxu0 0.0
    %2033 = vmatprep.subr.mxu0 0.0
    %2034 = vmatpush1.msra.mxu0 0.0
    %2035 = vmatprep.subr.mxu0 0.0
    %2036 = vmatpush1.msra.mxu0 0.0
    %2037 = vmatprep.subr.mxu0 0.0
    %2038 = vmatpush1.msra.mxu0 0.0
    %2039 = vmatprep.subr.mxu0 0.0
    %2040 = vmatpush1.msra.mxu0 0.0
    %2041 = vmatprep.subr.mxu0 0.0
    %2042 = vmatpush1.msra.mxu0 0.0
    %2043 = vmatprep.subr.mxu0 0.0
    %2044 = vmatpush1.msra.mxu0 0.0
    %2045 = vmatprep.subr.mxu0 0.0
    %2046 = vmatpush1.msra.mxu0 0.0
    %2047 = vmatprep.subr.mxu0 0.0
    %2048 = vmatpush1.msra.mxu0 0.0
    %2049 = vmatprep.subr.mxu0 0.0
    %2050 = vmatpush1.msra.mxu0 0.0
    %2051 = vmatprep.subr.mxu0 0.0
    %2052 = vmatpush1.msra.mxu0 0.0
    %2053 = vmatprep.subr.mxu0 0.0
    %2054 = vmatpush1.msra.mxu0 0.0
    %2055 = vmatprep.subr.mxu0 0.0
    %2056 = vmatpush1.msra.mxu0 0.0
    %2057 = vmatprep.subr.mxu0 0.0
    %2058 = vmatpush1.msra.mxu0 0.0
    %2059 = vmatprep.subr.mxu0 0.0
    %2060 = vmatpush1.msra.mxu0 0.0
    %2061 = vmatprep.subr.mxu0 0.0
    %2062 = vmatpush1.msra.mxu0 0.0
    %2063 = vmatprep.subr.mxu0 0.0
    %2064 = vmatpush1.msra.mxu0 0.0
    %2065 = vmatprep.subr.mxu0 0.0
    %2066 = vmatpush1.msra.mxu0 0.0
    %2067 = vmatprep.subr.mxu0 0.0
    %2068 = vmatpush1.msra.mxu0 0.0
    %2069 = vmatprep.subr.mxu0 0.0
    %2070 = vmatpush1.msra.mxu0 0.0
    %2071 = vmatprep.subr.mxu0 0.0
    %2072 = vmatpush1.msra.mxu0 0.0
    %2073 = vmatprep.subr.mxu0 0.0
    %2074 = vmatpush1.msra.mxu0 0.0
    %2075 = vmatprep.subr.mxu0 0.0
    %2076 = vmatpush1.msra.mxu0 0.0
    %2077 = vmatprep.subr.mxu0 0.0
    %2078 = vmatpush1.msra.mxu0 0.0
    %2079 = vmatprep.mubr.f32.mxu0 0.0
    %2080 = vmatmul.mubr.f32.gmra.mrb[0].mxu0 %v2013
    %v2081 = vpop.f32.mrb[0].mxu0
    %v2082 = vadd.f32 %v1934, %v2081
    %v2083 = vpop.f32.mrb[0].mxu0
    %v2084 = vadd.f32 %v1938, %v2083
    %2085 = vdwg.mxu0
    %2086 = vmatprep.subr.mxu0 %v1802
    %2087 = vmatpush1.msra.mxu0 %v1801
    %2088 = vmatprep.subr.mxu0 %v1818
    %2089 = vmatpush1.msra.mxu0 %v1817
    %2090 = vmatprep.subr.mxu0 %v1834
    %2091 = vmatpush1.msra.mxu0 %v1833
    %2092 = vmatprep.subr.mxu0 %v1850
    %2093 = vmatpush1.msra.mxu0 %v1849
    %2094 = vmatprep.subr.mxu0 %v1866
    %2095 = vmatpush1.msra.mxu0 %v1865
    %2096 = vmatprep.subr.mxu0 %v1882
    %2097 = vmatpush1.msra.mxu0 %v1881
    %2098 = vmatprep.subr.mxu0 %v1898
    %2099 = vmatpush1.msra.mxu0 %v1897
    %2100 = vmatprep.subr.mxu0 %v1914
    %2101 = vmatpush1.msra.mxu0 %v1913
    %2102 = vmatprep.subr.mxu0 0.0
    %2103 = vmatpush1.msra.mxu0 0.0
    %2104 = vmatprep.subr.mxu0 0.0
    %2105 = vmatpush1.msra.mxu0 0.0
    %2106 = vmatprep.subr.mxu0 0.0
    %2107 = vmatpush1.msra.mxu0 0.0
    %2108 = vmatprep.subr.mxu0 0.0
    %2109 = vmatpush1.msra.mxu0 0.0
    %2110 = vmatprep.subr.mxu0 0.0
    %2111 = vmatpush1.msra.mxu0 0.0
    %2112 = vmatprep.subr.mxu0 0.0
    %2113 = vmatpush1.msra.mxu0 0.0
    %2114 = vmatprep.subr.mxu0 0.0
    %2115 = vmatpush1.msra.mxu0 0.0
    %2116 = vmatprep.subr.mxu0 0.0
    %2117 = vmatpush1.msra.mxu0 0.0
    %2118 = vmatprep.subr.mxu0 0.0
    %2119 = vmatpush1.msra.mxu0 0.0
    %2120 = vmatprep.subr.mxu0 0.0
    %2121 = vmatpush1.msra.mxu0 0.0
    %2122 = vmatprep.subr.mxu0 0.0
    %2123 = vmatpush1.msra.mxu0 0.0
    %2124 = vmatprep.subr.mxu0 0.0
    %2125 = vmatpush1.msra.mxu0 0.0
    %2126 = vmatprep.subr.mxu0 0.0
    %2127 = vmatpush1.msra.mxu0 0.0
    %2128 = vmatprep.subr.mxu0 0.0
    %2129 = vmatpush1.msra.mxu0 0.0
    %2130 = vmatprep.subr.mxu0 0.0
    %2131 = vmatpush1.msra.mxu0 0.0
    %2132 = vmatprep.subr.mxu0 0.0
    %2133 = vmatpush1.msra.mxu0 0.0
    %2134 = vmatprep.subr.mxu0 0.0
    %2135 = vmatpush1.msra.mxu0 0.0
    %2136 = vmatprep.subr.mxu0 0.0
    %2137 = vmatpush1.msra.mxu0 0.0
    %2138 = vmatprep.subr.mxu0 0.0
    %2139 = vmatpush1.msra.mxu0 0.0
    %2140 = vmatprep.subr.mxu0 0.0
    %2141 = vmatpush1.msra.mxu0 0.0
    %2142 = vmatprep.subr.mxu0 0.0
    %2143 = vmatpush1.msra.mxu0 0.0
    %2144 = vmatprep.subr.mxu0 0.0
    %2145 = vmatpush1.msra.mxu0 0.0
    %2146 = vmatprep.subr.mxu0 0.0
    %2147 = vmatpush1.msra.mxu0 0.0
    %2148 = vmatprep.subr.mxu0 0.0
    %2149 = vmatpush1.msra.mxu0 0.0
    %2150 = vmatprep.mubr.f32.mxu0 0.0
    %2151 = vmatmul.mubr.f32.gmra.mrb[0].mxu0 %v2013
    %v2152 = vpop.f32.mrb[0].mxu0
    %v2153 = vadd.f32 %v1942, %v2152
    %v2154 = vpop.f32.mrb[0].mxu0
    %v2155 = vadd.f32 %v1946, %v2154
    %2156 = vdwg.mxu0
    %2157 = vmatprep.subr.mxu0 %v1804
    %2158 = vmatpush1.msra.mxu0 %v1803
    %2159 = vmatprep.subr.mxu0 %v1820
    %2160 = vmatpush1.msra.mxu0 %v1819
    %2161 = vmatprep.subr.mxu0 %v1836
    %2162 = vmatpush1.msra.mxu0 %v1835
    %2163 = vmatprep.subr.mxu0 %v1852
    %2164 = vmatpush1.msra.mxu0 %v1851
    %2165 = vmatprep.subr.mxu0 %v1868
    %2166 = vmatpush1.msra.mxu0 %v1867
    %2167 = vmatprep.subr.mxu0 %v1884
    %2168 = vmatpush1.msra.mxu0 %v1883
    %2169 = vmatprep.subr.mxu0 %v1900
    %2170 = vmatpush1.msra.mxu0 %v1899
    %2171 = vmatprep.subr.mxu0 %v1916
    %2172 = vmatpush1.msra.mxu0 %v1915
    %2173 = vmatprep.subr.mxu0 0.0
    %2174 = vmatpush1.msra.mxu0 0.0
    %2175 = vmatprep.subr.mxu0 0.0
    %2176 = vmatpush1.msra.mxu0 0.0
    %2177 = vmatprep.subr.mxu0 0.0
    %2178 = vmatpush1.msra.mxu0 0.0
    %2179 = vmatprep.subr.mxu0 0.0
    %2180 = vmatpush1.msra.mxu0 0.0
    %2181 = vmatprep.subr.mxu0 0.0
    %2182 = vmatpush1.msra.mxu0 0.0
    %2183 = vmatprep.subr.mxu0 0.0
    %2184 = vmatpush1.msra.mxu0 0.0
    %2185 = vmatprep.subr.mxu0 0.0
    %2186 = vmatpush1.msra.mxu0 0.0
    %2187 = vmatprep.subr.mxu0 0.0
    %2188 = vmatpush1.msra.mxu0 0.0
    %2189 = vmatprep.subr.mxu0 0.0
    %2190 = vmatpush1.msra.mxu0 0.0
    %2191 = vmatprep.subr.mxu0 0.0
    %2192 = vmatpush1.msra.mxu0 0.0
    %2193 = vmatprep.subr.mxu0 0.0
    %2194 = vmatpush1.msra.mxu0 0.0
    %2195 = vmatprep.subr.mxu0 0.0
    %2196 = vmatpush1.msra.mxu0 0.0
    %2197 = vmatprep.subr.mxu0 0.0
    %2198 = vmatpush1.msra.mxu0 0.0
    %2199 = vmatprep.subr.mxu0 0.0
    %2200 = vmatpush1.msra.mxu0 0.0
    %2201 = vmatprep.subr.mxu0 0.0
    %2202 = vmatpush1.msra.mxu0 0.0
    %2203 = vmatprep.subr.mxu0 0.0
    %2204 = vmatpush1.msra.mxu0 0.0
    %2205 = vmatprep.subr.mxu0 0.0
    %2206 = vmatpush1.msra.mxu0 0.0
    %2207 = vmatprep.subr.mxu0 0.0
    %2208 = vmatpush1.msra.mxu0 0.0
    %2209 = vmatprep.subr.mxu0 0.0
    %2210 = vmatpush1.msra.mxu0 0.0
    %2211 = vmatprep.subr.mxu0 0.0
    %2212 = vmatpush1.msra.mxu0 0.0
    %2213 = vmatprep.subr.mxu0 0.0
    %2214 = vmatpush1.msra.mxu0 0.0
    %2215 = vmatprep.subr.mxu0 0.0
    %2216 = vmatpush1.msra.mxu0 0.0
    %2217 = vmatprep.subr.mxu0 0.0
    %2218 = vmatpush1.msra.mxu0 0.0
    %2219 = vmatprep.subr.mxu0 0.0
    %2220 = vmatpush1.msra.mxu0 0.0
    %2221 = vmatprep.mubr.f32.mxu0 0.0
    %2222 = vmatmul.mubr.f32.gmra.mrb[0].mxu0 %v2013
    %v2223 = vpop.f32.mrb[0].mxu0
    %v2224 = vadd.f32 %v1950, %v2223
    %v2225 = vpop.f32.mrb[0].mxu0
    %v2226 = vadd.f32 %v1954, %v2225
    %2227 = vdwg.mxu0
    %2228 = vmatprep.subr.mxu0 %v1806
    %2229 = vmatpush1.msra.mxu0 %v1805
    %2230 = vmatprep.subr.mxu0 %v1822
    %2231 = vmatpush1.msra.mxu0 %v1821
    %2232 = vmatprep.subr.mxu0 %v1838
    %2233 = vmatpush1.msra.mxu0 %v1837
    %2234 = vmatprep.subr.mxu0 %v1854
    %2235 = vmatpush1.msra.mxu0 %v1853
    %2236 = vmatprep.subr.mxu0 %v1870
    %2237 = vmatpush1.msra.mxu0 %v1869
    %2238 = vmatprep.subr.mxu0 %v1886
    %2239 = vmatpush1.msra.mxu0 %v1885
    %2240 = vmatprep.subr.mxu0 %v1902
    %2241 = vmatpush1.msra.mxu0 %v1901
    %2242 = vmatprep.subr.mxu0 %v1918
    %2243 = vmatpush1.msra.mxu0 %v1917
    %2244 = vmatprep.subr.mxu0 0.0
    %2245 = vmatpush1.msra.mxu0 0.0
    %2246 = vmatprep.subr.mxu0 0.0
    %2247 = vmatpush1.msra.mxu0 0.0
    %2248 = vmatprep.subr.mxu0 0.0
    %2249 = vmatpush1.msra.mxu0 0.0
    %2250 = vmatprep.subr.mxu0 0.0
    %2251 = vmatpush1.msra.mxu0 0.0
    %2252 = vmatprep.subr.mxu0 0.0
    %2253 = vmatpush1.msra.mxu0 0.0
    %2254 = vmatprep.subr.mxu0 0.0
    %2255 = vmatpush1.msra.mxu0 0.0
    %2256 = vmatprep.subr.mxu0 0.0
    %2257 = vmatpush1.msra.mxu0 0.0
    %2258 = vmatprep.subr.mxu0 0.0
    %2259 = vmatpush1.msra.mxu0 0.0
    %2260 = vmatprep.subr.mxu0 0.0
    %2261 = vmatpush1.msra.mxu0 0.0
    %2262 = vmatprep.subr.mxu0 0.0
    %2263 = vmatpush1.msra.mxu0 0.0
    %2264 = vmatprep.subr.mxu0 0.0
    %2265 = vmatpush1.msra.mxu0 0.0
    %2266 = vmatprep.subr.mxu0 0.0
    %2267 = vmatpush1.msra.mxu0 0.0
    %2268 = vmatprep.subr.mxu0 0.0
    %2269 = vmatpush1.msra.mxu0 0.0
    %2270 = vmatprep.subr.mxu0 0.0
    %2271 = vmatpush1.msra.mxu0 0.0
    %2272 = vmatprep.subr.mxu0 0.0
    %2273 = vmatpush1.msra.mxu0 0.0
    %2274 = vmatprep.subr.mxu0 0.0
    %2275 = vmatpush1.msra.mxu0 0.0
    %2276 = vmatprep.subr.mxu0 0.0
    %2277 = vmatpush1.msra.mxu0 0.0
    %2278 = vmatprep.subr.mxu0 0.0
    %2279 = vmatpush1.msra.mxu0 0.0
    %2280 = vmatprep.subr.mxu0 0.0
    %2281 = vmatpush1.msra.mxu0 0.0
    %2282 = vmatprep.subr.mxu0 0.0
    %2283 = vmatpush1.msra.mxu0 0.0
    %2284 = vmatprep.subr.mxu0 0.0
    %2285 = vmatpush1.msra.mxu0 0.0
    %2286 = vmatprep.subr.mxu0 0.0
    %2287 = vmatpush1.msra.mxu0 0.0
    %2288 = vmatprep.subr.mxu0 0.0
    %2289 = vmatpush1.msra.mxu0 0.0
    %2290 = vmatprep.subr.mxu0 0.0
    %2291 = vmatpush1.msra.mxu0 0.0
    %2292 = vmatprep.mubr.f32.mxu0 0.0
    %2293 = vmatmul.mubr.f32.gmra.mrb[0].mxu0 %v2013
    %v2294 = vpop.f32.mrb[0].mxu0
    %v2295 = vadd.f32 %v1958, %v2294
    %v2296 = vpop.f32.mrb[0].mxu0
    %v2297 = vadd.f32 %v1962, %v2296
    %2298 = vdwg.mxu0
    %2299 = vmatprep.subr.mxu0 %v1808
    %2300 = vmatpush1.msra.mxu0 %v1807
    %2301 = vmatprep.subr.mxu0 %v1824
    %2302 = vmatpush1.msra.mxu0 %v1823
    %2303 = vmatprep.subr.mxu0 %v1840
    %2304 = vmatpush1.msra.mxu0 %v1839
    %2305 = vmatprep.subr.mxu0 %v1856
    %2306 = vmatpush1.msra.mxu0 %v1855
    %2307 = vmatprep.subr.mxu0 %v1872
    %2308 = vmatpush1.msra.mxu0 %v1871
    %2309 = vmatprep.subr.mxu0 %v1888
    %2310 = vmatpush1.msra.mxu0 %v1887
    %2311 = vmatprep.subr.mxu0 %v1904
    %2312 = vmatpush1.msra.mxu0 %v1903
    %2313 = vmatprep.subr.mxu0 %v1920
    %2314 = vmatpush1.msra.mxu0 %v1919
    %2315 = vmatprep.subr.mxu0 0.0
    %2316 = vmatpush1.msra.mxu0 0.0
    %2317 = vmatprep.subr.mxu0 0.0
    %2318 = vmatpush1.msra.mxu0 0.0
    %2319 = vmatprep.subr.mxu0 0.0
    %2320 = vmatpush1.msra.mxu0 0.0
    %2321 = vmatprep.subr.mxu0 0.0
    %2322 = vmatpush1.msra.mxu0 0.0
    %2323 = vmatprep.subr.mxu0 0.0
    %2324 = vmatpush1.msra.mxu0 0.0
    %2325 = vmatprep.subr.mxu0 0.0
    %2326 = vmatpush1.msra.mxu0 0.0
    %2327 = vmatprep.subr.mxu0 0.0
    %2328 = vmatpush1.msra.mxu0 0.0
    %2329 = vmatprep.subr.mxu0 0.0
    %2330 = vmatpush1.msra.mxu0 0.0
    %2331 = vmatprep.subr.mxu0 0.0
    %2332 = vmatpush1.msra.mxu0 0.0
    %2333 = vmatprep.subr.mxu0 0.0
    %2334 = vmatpush1.msra.mxu0 0.0
    %2335 = vmatprep.subr.mxu0 0.0
    %2336 = vmatpush1.msra.mxu0 0.0
    %2337 = vmatprep.subr.mxu0 0.0
    %2338 = vmatpush1.msra.mxu0 0.0
    %2339 = vmatprep.subr.mxu0 0.0
    %2340 = vmatpush1.msra.mxu0 0.0
    %2341 = vmatprep.subr.mxu0 0.0
    %2342 = vmatpush1.msra.mxu0 0.0
    %2343 = vmatprep.subr.mxu0 0.0
    %2344 = vmatpush1.msra.mxu0 0.0
    %2345 = vmatprep.subr.mxu0 0.0
    %2346 = vmatpush1.msra.mxu0 0.0
    %2347 = vmatprep.subr.mxu0 0.0
    %2348 = vmatpush1.msra.mxu0 0.0
    %2349 = vmatprep.subr.mxu0 0.0
    %2350 = vmatpush1.msra.mxu0 0.0
    %2351 = vmatprep.subr.mxu0 0.0
    %2352 = vmatpush1.msra.mxu0 0.0
    %2353 = vmatprep.subr.mxu0 0.0
    %2354 = vmatpush1.msra.mxu0 0.0
    %2355 = vmatprep.subr.mxu0 0.0
    %2356 = vmatpush1.msra.mxu0 0.0
    %2357 = vmatprep.subr.mxu0 0.0
    %2358 = vmatpush1.msra.mxu0 0.0
    %2359 = vmatprep.subr.mxu0 0.0
    %2360 = vmatpush1.msra.mxu0 0.0
    %2361 = vmatprep.subr.mxu0 0.0
    %2362 = vmatpush1.msra.mxu0 0.0
    %2363 = vmatprep.mubr.f32.mxu0 0.0
    %2364 = vmatmul.mubr.f32.gmra.mrb[0].mxu0 %v2013
    %v2365 = vpop.f32.mrb[0].mxu0
    %v2366 = vadd.f32 %v1966, %v2365
    %v2367 = vpop.f32.mrb[0].mxu0
    %v2368 = vadd.f32 %v1970, %v2367
    %2369 = vdwg.mxu0
    %2370 = vmatprep.subr.mxu0 %v1810
    %2371 = vmatpush1.msra.mxu0 %v1809
    %2372 = vmatprep.subr.mxu0 %v1826
    %2373 = vmatpush1.msra.mxu0 %v1825
    %2374 = vmatprep.subr.mxu0 %v1842
    %2375 = vmatpush1.msra.mxu0 %v1841
    %2376 = vmatprep.subr.mxu0 %v1858
    %2377 = vmatpush1.msra.mxu0 %v1857
    %2378 = vmatprep.subr.mxu0 %v1874
    %2379 = vmatpush1.msra.mxu0 %v1873
    %2380 = vmatprep.subr.mxu0 %v1890
    %2381 = vmatpush1.msra.mxu0 %v1889
    %2382 = vmatprep.subr.mxu0 %v1906
    %2383 = vmatpush1.msra.mxu0 %v1905
    %2384 = vmatprep.subr.mxu0 %v1922
    %2385 = vmatpush1.msra.mxu0 %v1921
    %2386 = vmatprep.subr.mxu0 0.0
    %2387 = vmatpush1.msra.mxu0 0.0
    %2388 = vmatprep.subr.mxu0 0.0
    %2389 = vmatpush1.msra.mxu0 0.0
    %2390 = vmatprep.subr.mxu0 0.0
    %2391 = vmatpush1.msra.mxu0 0.0
    %2392 = vmatprep.subr.mxu0 0.0
    %2393 = vmatpush1.msra.mxu0 0.0
    %2394 = vmatprep.subr.mxu0 0.0
    %2395 = vmatpush1.msra.mxu0 0.0
    %2396 = vmatprep.subr.mxu0 0.0
    %2397 = vmatpush1.msra.mxu0 0.0
    %2398 = vmatprep.subr.mxu0 0.0
    %2399 = vmatpush1.msra.mxu0 0.0
    %2400 = vmatprep.subr.mxu0 0.0
    %2401 = vmatpush1.msra.mxu0 0.0
    %2402 = vmatprep.subr.mxu0 0.0
    %2403 = vmatpush1.msra.mxu0 0.0
    %2404 = vmatprep.subr.mxu0 0.0
    %2405 = vmatpush1.msra.mxu0 0.0
    %2406 = vmatprep.subr.mxu0 0.0
    %2407 = vmatpush1.msra.mxu0 0.0
    %2408 = vmatprep.subr.mxu0 0.0
    %2409 = vmatpush1.msra.mxu0 0.0
    %2410 = vmatprep.subr.mxu0 0.0
    %2411 = vmatpush1.msra.mxu0 0.0
    %2412 = vmatprep.subr.mxu0 0.0
    %2413 = vmatpush1.msra.mxu0 0.0
    %2414 = vmatprep.subr.mxu0 0.0
    %2415 = vmatpush1.msra.mxu0 0.0
    %2416 = vmatprep.subr.mxu0 0.0
    %2417 = vmatpush1.msra.mxu0 0.0
    %2418 = vmatprep.subr.mxu0 0.0
    %2419 = vmatpush1.msra.mxu0 0.0
    %2420 = vmatprep.subr.mxu0 0.0
    %2421 = vmatpush1.msra.mxu0 0.0
    %2422 = vmatprep.subr.mxu0 0.0
    %2423 = vmatpush1.msra.mxu0 0.0
    %2424 = vmatprep.subr.mxu0 0.0
    %2425 = vmatpush1.msra.mxu0 0.0
    %2426 = vmatprep.subr.mxu0 0.0
    %2427 = vmatpush1.msra.mxu0 0.0
    %2428 = vmatprep.subr.mxu0 0.0
    %2429 = vmatpush1.msra.mxu0 0.0
    %2430 = vmatprep.subr.mxu0 0.0
    %2431 = vmatpush1.msra.mxu0 0.0
    %2432 = vmatprep.subr.mxu0 0.0
    %2433 = vmatpush1.msra.mxu0 0.0
    %2434 = vmatprep.mubr.f32.mxu0 0.0
    %2435 = vmatmul.mubr.f32.gmra.mrb[0].mxu0 %v2013
    %v2436 = vpop.f32.mrb[0].mxu0
    %v2437 = vadd.f32 %v1974, %v2436
    %v2438 = vpop.f32.mrb[0].mxu0
    %v2439 = vadd.f32 %v1978, %v2438
    %2440 = vdwg.mxu0
    %2441 = vmatprep.subr.mxu0 %v1812
    %2442 = vmatpush1.msra.mxu0 %v1811
    %2443 = vmatprep.subr.mxu0 %v1828
    %2444 = vmatpush1.msra.mxu0 %v1827
    %2445 = vmatprep.subr.mxu0 %v1844
    %2446 = vmatpush1.msra.mxu0 %v1843
    %2447 = vmatprep.subr.mxu0 %v1860
    %2448 = vmatpush1.msra.mxu0 %v1859
    %2449 = vmatprep.subr.mxu0 %v1876
    %2450 = vmatpush1.msra.mxu0 %v1875
    %2451 = vmatprep.subr.mxu0 %v1892
    %2452 = vmatpush1.msra.mxu0 %v1891
    %2453 = vmatprep.subr.mxu0 %v1908
    %2454 = vmatpush1.msra.mxu0 %v1907
    %2455 = vmatprep.subr.mxu0 %v1924
    %2456 = vmatpush1.msra.mxu0 %v1923
    %2457 = vmatprep.subr.mxu0 0.0
    %2458 = vmatpush1.msra.mxu0 0.0
    %2459 = vmatprep.subr.mxu0 0.0
    %2460 = vmatpush1.msra.mxu0 0.0
    %2461 = vmatprep.subr.mxu0 0.0
    %2462 = vmatpush1.msra.mxu0 0.0
    %2463 = vmatprep.subr.mxu0 0.0
    %2464 = vmatpush1.msra.mxu0 0.0
    %2465 = vmatprep.subr.mxu0 0.0
    %2466 = vmatpush1.msra.mxu0 0.0
    %2467 = vmatprep.subr.mxu0 0.0
    %2468 = vmatpush1.msra.mxu0 0.0
    %2469 = vmatprep.subr.mxu0 0.0
    %2470 = vmatpush1.msra.mxu0 0.0
    %2471 = vmatprep.subr.mxu0 0.0
    %2472 = vmatpush1.msra.mxu0 0.0
    %2473 = vmatprep.subr.mxu0 0.0
    %2474 = vmatpush1.msra.mxu0 0.0
    %2475 = vmatprep.subr.mxu0 0.0
    %2476 = vmatpush1.msra.mxu0 0.0
    %2477 = vmatprep.subr.mxu0 0.0
    %2478 = vmatpush1.msra.mxu0 0.0
    %2479 = vmatprep.subr.mxu0 0.0
    %2480 = vmatpush1.msra.mxu0 0.0
    %2481 = vmatprep.subr.mxu0 0.0
    %2482 = vmatpush1.msra.mxu0 0.0
    %2483 = vmatprep.subr.mxu0 0.0
    %2484 = vmatpush1.msra.mxu0 0.0
    %2485 = vmatprep.subr.mxu0 0.0
    %2486 = vmatpush1.msra.mxu0 0.0
    %2487 = vmatprep.subr.mxu0 0.0
    %2488 = vmatpush1.msra.mxu0 0.0
    %2489 = vmatprep.subr.mxu0 0.0
    %2490 = vmatpush1.msra.mxu0 0.0
    %2491 = vmatprep.subr.mxu0 0.0
    %2492 = vmatpush1.msra.mxu0 0.0
    %2493 = vmatprep.subr.mxu0 0.0
    %2494 = vmatpush1.msra.mxu0 0.0
    %2495 = vmatprep.subr.mxu0 0.0
    %2496 = vmatpush1.msra.mxu0 0.0
    %2497 = vmatprep.subr.mxu0 0.0
    %2498 = vmatpush1.msra.mxu0 0.0
    %2499 = vmatprep.subr.mxu0 0.0
    %2500 = vmatpush1.msra.mxu0 0.0
    %2501 = vmatprep.subr.mxu0 0.0
    %2502 = vmatpush1.msra.mxu0 0.0
    %2503 = vmatprep.subr.mxu0 0.0
    %2504 = vmatpush1.msra.mxu0 0.0
    %2505 = vmatprep.mubr.f32.mxu0 0.0
    %2506 = vmatmul.mubr.f32.gmra.mrb[0].mxu0 %v2013
    %v2507 = vpop.f32.mrb[0].mxu0
    %v2508 = vadd.f32 %v1982, %v2507
    %v2509 = vpop.f32.mrb[0].mxu0
    %v2510 = vadd.f32 %v1986, %v2509
    %2511 = vdwg.mxu0
    %2512 = vmatprep.subr.mxu0 %v1814
    %2513 = vmatpush1.msra.mxu0 %v1813
    %2514 = vmatprep.subr.mxu0 %v1830
    %2515 = vmatpush1.msra.mxu0 %v1829
    %2516 = vmatprep.subr.mxu0 %v1846
    %2517 = vmatpush1.msra.mxu0 %v1845
    %2518 = vmatprep.subr.mxu0 %v1862
    %2519 = vmatpush1.msra.mxu0 %v1861
    %2520 = vmatprep.subr.mxu0 %v1878
    %2521 = vmatpush1.msra.mxu0 %v1877
    %2522 = vmatprep.subr.mxu0 %v1894
    %2523 = vmatpush1.msra.mxu0 %v1893
    %2524 = vmatprep.subr.mxu0 %v1910
    %2525 = vmatpush1.msra.mxu0 %v1909
    %2526 = vmatprep.subr.mxu0 %v1926
    %2527 = vmatpush1.msra.mxu0 %v1925
    %2528 = vmatprep.subr.mxu0 0.0
    %2529 = vmatpush1.msra.mxu0 0.0
    %2530 = vmatprep.subr.mxu0 0.0
    %2531 = vmatpush1.msra.mxu0 0.0
    %2532 = vmatprep.subr.mxu0 0.0
    %2533 = vmatpush1.msra.mxu0 0.0
    %2534 = vmatprep.subr.mxu0 0.0
    %2535 = vmatpush1.msra.mxu0 0.0
    %2536 = vmatprep.subr.mxu0 0.0
    %2537 = vmatpush1.msra.mxu0 0.0
    %2538 = vmatprep.subr.mxu0 0.0
    %2539 = vmatpush1.msra.mxu0 0.0
    %2540 = vmatprep.subr.mxu0 0.0
    %2541 = vmatpush1.msra.mxu0 0.0
    %2542 = vmatprep.subr.mxu0 0.0
    %2543 = vmatpush1.msra.mxu0 0.0
    %2544 = vmatprep.subr.mxu0 0.0
    %2545 = vmatpush1.msra.mxu0 0.0
    %2546 = vmatprep.subr.mxu0 0.0
    %2547 = vmatpush1.msra.mxu0 0.0
    %2548 = vmatprep.subr.mxu0 0.0
    %2549 = vmatpush1.msra.mxu0 0.0
    %2550 = vmatprep.subr.mxu0 0.0
    %2551 = vmatpush1.msra.mxu0 0.0
    %2552 = vmatprep.subr.mxu0 0.0
    %2553 = vmatpush1.msra.mxu0 0.0
    %2554 = vmatprep.subr.mxu0 0.0
    %2555 = vmatpush1.msra.mxu0 0.0
    %2556 = vmatprep.subr.mxu0 0.0
    %2557 = vmatpush1.msra.mxu0 0.0
    %2558 = vmatprep.subr.mxu0 0.0
    %2559 = vmatpush1.msra.mxu0 0.0
    %2560 = vmatprep.subr.mxu0 0.0
    %2561 = vmatpush1.msra.mxu0 0.0
    %2562 = vmatprep.subr.mxu0 0.0
    %2563 = vmatpush1.msra.mxu0 0.0
    %2564 = vmatprep.subr.mxu0 0.0
    %2565 = vmatpush1.msra.mxu0 0.0
    %2566 = vmatprep.subr.mxu0 0.0
    %2567 = vmatpush1.msra.mxu0 0.0
    %2568 = vmatprep.subr.mxu0 0.0
    %2569 = vmatpush1.msra.mxu0 0.0
    %2570 = vmatprep.subr.mxu0 0.0
    %2571 = vmatpush1.msra.mxu0 0.0
    %2572 = vmatprep.subr.mxu0 0.0
    %2573 = vmatpush1.msra.mxu0 0.0
    %2574 = vmatprep.subr.mxu0 0.0
    %2575 = vmatpush1.msra.mxu0 0.0
    %2576 = vmatprep.mubr.f32.mxu0 0.0
    %2577 = vmatmul.mubr.f32.gmra.mrb[0].mxu0 %v2013
    %v2578 = vpop.f32.mrb[0].mxu0
    %v2579 = vadd.f32 %v1990, %v2578
    %v2580 = vpop.f32.mrb[0].mxu0
    %v2581 = vadd.f32 %v1994, %v2580
    %2582 = vdwg.mxu0
    %v2583 = vadd.f32 %v2082, %v2084
    %v2584 = vadd.f32 %v2583, %v2153
    %v2585 = vadd.f32 %v2584, %v2155
    %v2586 = vadd.f32 %v2585, %v2224
    %v2587 = vadd.f32 %v2586, %v2226
    %v2588 = vadd.f32 %v2587, %v2295
    %v2589 = vadd.f32 %v2588, %v2297
    %v2590 = vadd.f32 %v2589, %v2366
    %v2591 = vadd.f32 %v2590, %v2368
    %v2592 = vadd.f32 %v2591, %v2437
    %v2593 = vadd.f32 %v2592, %v2439
    %v2594 = vadd.f32 %v2593, %v2508
    %v2595 = vadd.f32 %v2594, %v2510
    %v2596 = vadd.f32 %v2595, %v2579
    %v2597 = vadd.f32 %v2596, %v2581
    %2598 = vadd.xlane.f32.xlu0 %v2597
    %v2599 = vpop.xlane.xlu0 %2598
    %v2600 = vrcp.pop 2048.0
    %v2601 = vmul.f32 %v2599, %v2600
    %v2602 = vmul.f32 %v2082, %v2082
    %v2603 = vmul.f32 %v2084, %v2084
    %v2604 = vmul.f32 %v2153, %v2153
    %v2605 = vmul.f32 %v2155, %v2155
    %v2606 = vmul.f32 %v2224, %v2224
    %v2607 = vmul.f32 %v2226, %v2226
    %v2608 = vmul.f32 %v2295, %v2295
    %v2609 = vmul.f32 %v2297, %v2297
    %v2610 = vmul.f32 %v2366, %v2366
    %v2611 = vmul.f32 %v2368, %v2368
    %v2612 = vmul.f32 %v2437, %v2437
    %v2613 = vmul.f32 %v2439, %v2439
    %v2614 = vmul.f32 %v2508, %v2508
    %v2615 = vmul.f32 %v2510, %v2510
    %v2616 = vmul.f32 %v2579, %v2579
    %v2617 = vmul.f32 %v2581, %v2581
    %v2618 = vadd.f32 %v2602, %v2603
    %v2619 = vadd.f32 %v2618, %v2604
    %v2620 = vadd.f32 %v2619, %v2605
    %v2621 = vadd.f32 %v2620, %v2606
    %v2622 = vadd.f32 %v2621, %v2607
    %v2623 = vadd.f32 %v2622, %v2608
    %v2624 = vadd.f32 %v2623, %v2609
    %v2625 = vadd.f32 %v2624, %v2610
    %v2626 = vadd.f32 %v2625, %v2611
    %v2627 = vadd.f32 %v2626, %v2612
    %v2628 = vadd.f32 %v2627, %v2613
    %v2629 = vadd.f32 %v2628, %v2614
    %v2630 = vadd.f32 %v2629, %v2615
    %v2631 = vadd.f32 %v2630, %v2616
    %v2632 = vadd.f32 %v2631, %v2617
    %2633 = vadd.xlane.f32.xlu0 %v2632
    %v2634 = vpop.xlane.xlu0 %2633
    %v2635 = vmul.f32 %v2634, %v2600
    %v2636 = vmul.f32 %v2601, %v2601
    %v2637 = vsub.f32 %v2635, %v2636
    %v2638 = vmax.f32 %v2637, 0.0
    %v2639 = vsub.f32 %v2082, %v2601
    %v2640 = vsub.f32 %v2084, %v2601
    %v2641 = vsub.f32 %v2153, %v2601
    %v2642 = vsub.f32 %v2155, %v2601
    %v2643 = vsub.f32 %v2224, %v2601
    %v2644 = vsub.f32 %v2226, %v2601
    %v2645 = vsub.f32 %v2295, %v2601
    %v2646 = vsub.f32 %v2297, %v2601
    %v2647 = vsub.f32 %v2366, %v2601
    %v2648 = vsub.f32 %v2368, %v2601
    %v2649 = vsub.f32 %v2437, %v2601
    %v2650 = vsub.f32 %v2439, %v2601
    %v2651 = vsub.f32 %v2508, %v2601
    %v2652 = vsub.f32 %v2510, %v2601
    %v2653 = vsub.f32 %v2579, %v2601
    %v2654 = vsub.f32 %v2581, %v2601
    %v2655 = vadd.f32 %v2638, 1e-05
    %v2656 = vrsqrt.pop %v2655
    %v2657 = vmul.f32 %v2639, %v2656
    %v2658 = vmul.f32 %v2640, %v2656
    %v2659 = vmul.f32 %v2641, %v2656
    %v2660 = vmul.f32 %v2642, %v2656
    %v2661 = vmul.f32 %v2643, %v2656
    %v2662 = vmul.f32 %v2644, %v2656
    %v2663 = vmul.f32 %v2645, %v2656
    %v2664 = vmul.f32 %v2646, %v2656
    %v2665 = vmul.f32 %v2647, %v2656
    %v2666 = vmul.f32 %v2648, %v2656
    %v2667 = vmul.f32 %v2649, %v2656
    %v2668 = vmul.f32 %v2650, %v2656
    %v2669 = vmul.f32 %v2651, %v2656
    %v2670 = vmul.f32 %v2652, %v2656
    %v2671 = vmul.f32 %v2653, %v2656
    %v2672 = vmul.f32 %v2654, %v2656
    %v2673 = vmul.f32 %v2657, %v577
    %v2674 = vmul.f32 %v2658, %v579
    %v2675 = vmul.f32 %v2659, %v648
    %v2676 = vmul.f32 %v2660, %v650
    %v2677 = vmul.f32 %v2661, %v719
    %v2678 = vmul.f32 %v2662, %v721
    %v2679 = vmul.f32 %v2663, %v790
    %v2680 = vmul.f32 %v2664, %v792
    %v2681 = vmul.f32 %v2665, %v861
    %v2682 = vmul.f32 %v2666, %v863
    %v2683 = vmul.f32 %v2667, %v932
    %v2684 = vmul.f32 %v2668, %v934
    %v2685 = vmul.f32 %v2669, %v1003
    %v2686 = vmul.f32 %v2670, %v1005
    %v2687 = vmul.f32 %v2671, %v1074
    %v2688 = vmul.f32 %v2672, %v1076
    %v2689 = vadd.f32 %v2673, %v1297
    %v2690 = vadd.f32 %v2674, %v1299
    %v2691 = vadd.f32 %v2675, %v1368
    %v2692 = vadd.f32 %v2676, %v1370
    %v2693 = vadd.f32 %v2677, %v1439
    %v2694 = vadd.f32 %v2678, %v1441
    %v2695 = vadd.f32 %v2679, %v1510
    %v2696 = vadd.f32 %v2680, %v1512
    %v2697 = vadd.f32 %v2681, %v1581
    %v2698 = vadd.f32 %v2682, %v1583
    %v2699 = vadd.f32 %v2683, %v1652
    %v2700 = vadd.f32 %v2684, %v1654
    %v2701 = vadd.f32 %v2685, %v1723
    %v2702 = vadd.f32 %v2686, %v1725
    %v2703 = vadd.f32 %v2687, %v1794
    %v2704 = vadd.f32 %v2688, %v1796
    %v2705 = vmax.f32 %v2689, 0.0
    %v2706 = vmax.f32 %v2690, 0.0
    %v2707 = vmax.f32 %v2691, 0.0
    %v2708 = vmax.f32 %v2692, 0.0
    %v2709 = vmax.f32 %v2693, 0.0
    %v2710 = vmax.f32 %v2694, 0.0
    %v2711 = vmax.f32 %v2695, 0.0
    %v2712 = vmax.f32 %v2696, 0.0
    %v2713 = vmax.f32 %v2697, 0.0
    %v2714 = vmax.f32 %v2698, 0.0
    %v2715 = vmax.f32 %v2699, 0.0
    %v2716 = vmax.f32 %v2700, 0.0
    %v2717 = vmax.f32 %v2701, 0.0
    %v2718 = vmax.f32 %v2702, 0.0
    %v2719 = vmax.f32 %v2703, 0.0
    %v2720 = vmax.f32 %v2704, 0.0
    %v2721 = vld [vmem:[#allocation14] sm:$0xff]
    %v2722 = vld [vmem:[#allocation14 + $0x8] sm:$0xff]
    %v2723 = vld [vmem:[#allocation14 + $0x10] sm:$0xff]
    %v2724 = vld [vmem:[#allocation14 + $0x18] sm:$0xff]
    %v2725 = vld [vmem:[#allocation14 + $0x20] sm:$0xff]
    %v2726 = vld [vmem:[#allocation14 + $0x28] sm:$0xff]
    %v2727 = vld [vmem:[#allocation14 + $0x30] sm:$0xff]
    %v2728 = vld [vmem:[#allocation14 + $0x38] sm:$0xff]
    %v2729 = vld [vmem:[#allocation14 + $0x40] sm:$0xff]
    %v2730 = vld [vmem:[#allocation14 + $0x48] sm:$0xff]
    %v2731 = vld [vmem:[#allocation14 + $0x50] sm:$0xff]
    %v2732 = vld [vmem:[#allocation14 + $0x58] sm:$0xff]
    %v2733 = vld [vmem:[#allocation14 + $0x60] sm:$0xff]
    %v2734 = vld [vmem:[#allocation14 + $0x68] sm:$0xff]
    %v2735 = vld [vmem:[#allocation14 + $0x70] sm:$0xff]
    %v2736 = vld [vmem:[#allocation14 + $0x78] sm:$0xff]
    %v2737 = vld [vmem:[#allocation14 + $0x80] sm:$0xff]
    %v2738 = vld [vmem:[#allocation14 + $0x88] sm:$0xff]
    %v2739 = vld [vmem:[#allocation14 + $0x90] sm:$0xff]
    %v2740 = vld [vmem:[#allocation14 + $0x98] sm:$0xff]
    %v2741 = vld [vmem:[#allocation14 + $0xa0] sm:$0xff]
    %v2742 = vld [vmem:[#allocation14 + $0xa8] sm:$0xff]
    %v2743 = vld [vmem:[#allocation14 + $0xb0] sm:$0xff]
    %v2744 = vld [vmem:[#allocation14 + $0xb8] sm:$0xff]
    %v2745 = vld [vmem:[#allocation14 + $0xc0] sm:$0xff]
    %v2746 = vld [vmem:[#allocation14 + $0xc8] sm:$0xff]
    %v2747 = vld [vmem:[#allocation14 + $0xd0] sm:$0xff]
    %v2748 = vld [vmem:[#allocation14 + $0xd8] sm:$0xff]
    %v2749 = vld [vmem:[#allocation14 + $0xe0] sm:$0xff]
    %v2750 = vld [vmem:[#allocation14 + $0xe8] sm:$0xff]
    %v2751 = vld [vmem:[#allocation14 + $0xf0] sm:$0xff]
    %v2752 = vld [vmem:[#allocation14 + $0xf8] sm:$0xff]
    %v2753 = vld [vmem:[#allocation16] sm:$0xff]
    %v2755 = vlaneseq
    %v2756 = vshrl.u32 %v2755, 7
    %v2757 = vsub.s32 0, %v2756
    %v2758 = vrot.slane %v2753, %v2757
    %v2759 = vlaneseq
    %v2760 = vshrl.u32 %v2759, 7
    %v2761 = vsub.s32 1, %v2760
    %v2762 = vrot.slane %v2753, %v2761
    %v2763 = vlaneseq
    %v2764 = vshrl.u32 %v2763, 7
    %v2765 = vsub.s32 2, %v2764
    %v2766 = vrot.slane %v2753, %v2765
    %v2767 = vlaneseq
    %v2768 = vshrl.u32 %v2767, 7
    %v2769 = vsub.s32 3, %v2768
    %v2770 = vrot.slane %v2753, %v2769
    %v2771 = vlaneseq
    %v2772 = vshrl.u32 %v2771, 7
    %v2773 = vsub.s32 4, %v2772
    %v2774 = vrot.slane %v2753, %v2773
    %v2775 = vlaneseq
    %v2776 = vshrl.u32 %v2775, 7
    %v2777 = vsub.s32 5, %v2776
    %v2778 = vrot.slane %v2753, %v2777
    %v2779 = vlaneseq
    %v2780 = vshrl.u32 %v2779, 7
    %v2781 = vsub.s32 6, %v2780
    %v2782 = vrot.slane %v2753, %v2781
    %v2783 = vlaneseq
    %v2784 = vshrl.u32 %v2783, 7
    %v2785 = vsub.s32 7, %v2784
    %v2786 = vrot.slane %v2753, %v2785
    %2795 = vrot.lane.b32.xlu0 %v357, 64
    %v2796 = vpop.permute.xlu0 %2795
    %v2797 = vsel %vm506, %v2796, 0
    %2799 = vmatprep.subr.mxu0 %v2722
    %2800 = vmatpush1.msra.mxu0 %v2721
    %2801 = vmatprep.subr.mxu0 %v2730
    %2802 = vmatpush1.msra.mxu0 %v2729
    %2803 = vmatprep.subr.mxu0 %v2738
    %2804 = vmatpush1.msra.mxu0 %v2737
    %2805 = vmatprep.subr.mxu0 %v2746
    %2806 = vmatpush1.msra.mxu0 %v2745
    %2807 = vmatprep.subr.mxu0 0.0
    %2808 = vmatpush1.msra.mxu0 0.0
    %2809 = vmatprep.subr.mxu0 0.0
    %2810 = vmatpush1.msra.mxu0 0.0
    %2811 = vmatprep.subr.mxu0 0.0
    %2812 = vmatpush1.msra.mxu0 0.0
    %2813 = vmatprep.subr.mxu0 0.0
    %2814 = vmatpush1.msra.mxu0 0.0
    %2815 = vmatprep.subr.mxu0 0.0
    %2816 = vmatpush1.msra.mxu0 0.0
    %2817 = vmatprep.subr.mxu0 0.0
    %2818 = vmatpush1.msra.mxu0 0.0
    %2819 = vmatprep.subr.mxu0 0.0
    %2820 = vmatpush1.msra.mxu0 0.0
    %2821 = vmatprep.subr.mxu0 0.0
    %2822 = vmatpush1.msra.mxu0 0.0
    %2823 = vmatprep.subr.mxu0 0.0
    %2824 = vmatpush1.msra.mxu0 0.0
    %2825 = vmatprep.subr.mxu0 0.0
    %2826 = vmatpush1.msra.mxu0 0.0
    %2827 = vmatprep.subr.mxu0 0.0
    %2828 = vmatpush1.msra.mxu0 0.0
    %2829 = vmatprep.subr.mxu0 0.0
    %2830 = vmatpush1.msra.mxu0 0.0
    %2831 = vmatprep.subr.mxu0 0.0
    %2832 = vmatpush1.msra.mxu0 0.0
    %2833 = vmatprep.subr.mxu0 0.0
    %2834 = vmatpush1.msra.mxu0 0.0
    %2835 = vmatprep.subr.mxu0 0.0
    %2836 = vmatpush1.msra.mxu0 0.0
    %2837 = vmatprep.subr.mxu0 0.0
    %2838 = vmatpush1.msra.mxu0 0.0
    %2839 = vmatprep.subr.mxu0 0.0
    %2840 = vmatpush1.msra.mxu0 0.0
    %2841 = vmatprep.subr.mxu0 0.0
    %2842 = vmatpush1.msra.mxu0 0.0
    %2843 = vmatprep.subr.mxu0 0.0
    %2844 = vmatpush1.msra.mxu0 0.0
    %2845 = vmatprep.subr.mxu0 0.0
    %2846 = vmatpush1.msra.mxu0 0.0
    %2847 = vmatprep.subr.mxu0 0.0
    %2848 = vmatpush1.msra.mxu0 0.0
    %2849 = vmatprep.subr.mxu0 0.0
    %2850 = vmatpush1.msra.mxu0 0.0
    %2851 = vmatprep.subr.mxu0 0.0
    %2852 = vmatpush1.msra.mxu0 0.0
    %2853 = vmatprep.subr.mxu0 0.0
    %2854 = vmatpush1.msra.mxu0 0.0
    %2855 = vmatprep.subr.mxu0 0.0
    %2856 = vmatpush1.msra.mxu0 0.0
    %2857 = vmatprep.subr.mxu0 0.0
    %2858 = vmatpush1.msra.mxu0 0.0
    %2859 = vmatprep.subr.mxu0 0.0
    %2860 = vmatpush1.msra.mxu0 0.0
    %2861 = vmatprep.subr.mxu0 0.0
    %2862 = vmatpush1.msra.mxu0 0.0
    %2863 = vmatprep.mubr.f32.mxu0 0.0
    %2864 = vmatmul.mubr.f32.gmra.mrb[0].mxu0 %v2797
    %v2865 = vpop.f32.mrb[0].mxu0
    %v2866 = vadd.f32 %v2758, %v2865
    %v2867 = vpop.f32.mrb[0].mxu0
    %v2868 = vadd.f32 %v2762, %v2867
    %2869 = vdwg.mxu0
    %2870 = vmatprep.subr.mxu0 %v2724
    %2871 = vmatpush1.msra.mxu0 %v2723
    %2872 = vmatprep.subr.mxu0 %v2732
    %2873 = vmatpush1.msra.mxu0 %v2731
    %2874 = vmatprep.subr.mxu0 %v2740
    %2875 = vmatpush1.msra.mxu0 %v2739
    %2876 = vmatprep.subr.mxu0 %v2748
    %2877 = vmatpush1.msra.mxu0 %v2747
    %2878 = vmatprep.subr.mxu0 0.0
    %2879 = vmatpush1.msra.mxu0 0.0
    %2880 = vmatprep.subr.mxu0 0.0
    %2881 = vmatpush1.msra.mxu0 0.0
    %2882 = vmatprep.subr.mxu0 0.0
    %2883 = vmatpush1.msra.mxu0 0.0
    %2884 = vmatprep.subr.mxu0 0.0
    %2885 = vmatpush1.msra.mxu0 0.0
    %2886 = vmatprep.subr.mxu0 0.0
    %2887 = vmatpush1.msra.mxu0 0.0
    %2888 = vmatprep.subr.mxu0 0.0
    %2889 = vmatpush1.msra.mxu0 0.0
    %2890 = vmatprep.subr.mxu0 0.0
    %2891 = vmatpush1.msra.mxu0 0.0
    %2892 = vmatprep.subr.mxu0 0.0
    %2893 = vmatpush1.msra.mxu0 0.0
    %2894 = vmatprep.subr.mxu0 0.0
    %2895 = vmatpush1.msra.mxu0 0.0
    %2896 = vmatprep.subr.mxu0 0.0
    %2897 = vmatpush1.msra.mxu0 0.0
    %2898 = vmatprep.subr.mxu0 0.0
    %2899 = vmatpush1.msra.mxu0 0.0
    %2900 = vmatprep.subr.mxu0 0.0
    %2901 = vmatpush1.msra.mxu0 0.0
    %2902 = vmatprep.subr.mxu0 0.0
    %2903 = vmatpush1.msra.mxu0 0.0
    %2904 = vmatprep.subr.mxu0 0.0
    %2905 = vmatpush1.msra.mxu0 0.0
    %2906 = vmatprep.subr.mxu0 0.0
    %2907 = vmatpush1.msra.mxu0 0.0
    %2908 = vmatprep.subr.mxu0 0.0
    %2909 = vmatpush1.msra.mxu0 0.0
    %2910 = vmatprep.subr.mxu0 0.0
    %2911 = vmatpush1.msra.mxu0 0.0
    %2912 = vmatprep.subr.mxu0 0.0
    %2913 = vmatpush1.msra.mxu0 0.0
    %2914 = vmatprep.subr.mxu0 0.0
    %2915 = vmatpush1.msra.mxu0 0.0
    %2916 = vmatprep.subr.mxu0 0.0
    %2917 = vmatpush1.msra.mxu0 0.0
    %2918 = vmatprep.subr.mxu0 0.0
    %2919 = vmatpush1.msra.mxu0 0.0
    %2920 = vmatprep.subr.mxu0 0.0
    %2921 = vmatpush1.msra.mxu0 0.0
    %2922 = vmatprep.subr.mxu0 0.0
    %2923 = vmatpush1.msra.mxu0 0.0
    %2924 = vmatprep.subr.mxu0 0.0
    %2925 = vmatpush1.msra.mxu0 0.0
    %2926 = vmatprep.subr.mxu0 0.0
    %2927 = vmatpush1.msra.mxu0 0.0
    %2928 = vmatprep.subr.mxu0 0.0
    %2929 = vmatpush1.msra.mxu0 0.0
    %2930 = vmatprep.subr.mxu0 0.0
    %2931 = vmatpush1.msra.mxu0 0.0
    %2932 = vmatprep.subr.mxu0 0.0
    %2933 = vmatpush1.msra.mxu0 0.0
    %2934 = vmatprep.mubr.f32.mxu0 0.0
    %2935 = vmatmul.mubr.f32.gmra.mrb[0].mxu0 %v2797
    %v2936 = vpop.f32.mrb[0].mxu0
    %v2937 = vadd.f32 %v2766, %v2936
    %v2938 = vpop.f32.mrb[0].mxu0
    %v2939 = vadd.f32 %v2770, %v2938
    %2940 = vdwg.mxu0
    %2941 = vmatprep.subr.mxu0 %v2726
    %2942 = vmatpush1.msra.mxu0 %v2725
    %2943 = vmatprep.subr.mxu0 %v2734
    %2944 = vmatpush1.msra.mxu0 %v2733
    %2945 = vmatprep.subr.mxu0 %v2742
    %2946 = vmatpush1.msra.mxu0 %v2741
    %2947 = vmatprep.subr.mxu0 %v2750
    %2948 = vmatpush1.msra.mxu0 %v2749
    %2949 = vmatprep.subr.mxu0 0.0
    %2950 = vmatpush1.msra.mxu0 0.0
    %2951 = vmatprep.subr.mxu0 0.0
    %2952 = vmatpush1.msra.mxu0 0.0
    %2953 = vmatprep.subr.mxu0 0.0
    %2954 = vmatpush1.msra.mxu0 0.0
    %2955 = vmatprep.subr.mxu0 0.0
    %2956 = vmatpush1.msra.mxu0 0.0
    %2957 = vmatprep.subr.mxu0 0.0
    %2958 = vmatpush1.msra.mxu0 0.0
    %2959 = vmatprep.subr.mxu0 0.0
    %2960 = vmatpush1.msra.mxu0 0.0
    %2961 = vmatprep.subr.mxu0 0.0
    %2962 = vmatpush1.msra.mxu0 0.0
    %2963 = vmatprep.subr.mxu0 0.0
    %2964 = vmatpush1.msra.mxu0 0.0
    %2965 = vmatprep.subr.mxu0 0.0
    %2966 = vmatpush1.msra.mxu0 0.0
    %2967 = vmatprep.subr.mxu0 0.0
    %2968 = vmatpush1.msra.mxu0 0.0
    %2969 = vmatprep.subr.mxu0 0.0
    %2970 = vmatpush1.msra.mxu0 0.0
    %2971 = vmatprep.subr.mxu0 0.0
    %2972 = vmatpush1.msra.mxu0 0.0
    %2973 = vmatprep.subr.mxu0 0.0
    %2974 = vmatpush1.msra.mxu0 0.0
    %2975 = vmatprep.subr.mxu0 0.0
    %2976 = vmatpush1.msra.mxu0 0.0
    %2977 = vmatprep.subr.mxu0 0.0
    %2978 = vmatpush1.msra.mxu0 0.0
    %2979 = vmatprep.subr.mxu0 0.0
    %2980 = vmatpush1.msra.mxu0 0.0
    %2981 = vmatprep.subr.mxu0 0.0
    %2982 = vmatpush1.msra.mxu0 0.0
    %2983 = vmatprep.subr.mxu0 0.0
    %2984 = vmatpush1.msra.mxu0 0.0
    %2985 = vmatprep.subr.mxu0 0.0
    %2986 = vmatpush1.msra.mxu0 0.0
    %2987 = vmatprep.subr.mxu0 0.0
    %2988 = vmatpush1.msra.mxu0 0.0
    %2989 = vmatprep.subr.mxu0 0.0
    %2990 = vmatpush1.msra.mxu0 0.0
    %2991 = vmatprep.subr.mxu0 0.0
    %2992 = vmatpush1.msra.mxu0 0.0
    %2993 = vmatprep.subr.mxu0 0.0
    %2994 = vmatpush1.msra.mxu0 0.0
    %2995 = vmatprep.subr.mxu0 0.0
    %2996 = vmatpush1.msra.mxu0 0.0
    %2997 = vmatprep.subr.mxu0 0.0
    %2998 = vmatpush1.msra.mxu0 0.0
    %2999 = vmatprep.subr.mxu0 0.0
    %3000 = vmatpush1.msra.mxu0 0.0
    %3001 = vmatprep.subr.mxu0 0.0
    %3002 = vmatpush1.msra.mxu0 0.0
    %3003 = vmatprep.subr.mxu0 0.0
    %3004 = vmatpush1.msra.mxu0 0.0
    %3005 = vmatprep.mubr.f32.mxu0 0.0
    %3006 = vmatmul.mubr.f32.gmra.mrb[0].mxu0 %v2797
    %v3007 = vpop.f32.mrb[0].mxu0
    %v3008 = vadd.f32 %v2774, %v3007
    %v3009 = vpop.f32.mrb[0].mxu0
    %v3010 = vadd.f32 %v2778, %v3009
    %3011 = vdwg.mxu0
    %3012 = vmatprep.subr.mxu0 %v2728
    %3013 = vmatpush1.msra.mxu0 %v2727
    %3014 = vmatprep.subr.mxu0 %v2736
    %3015 = vmatpush1.msra.mxu0 %v2735
    %3016 = vmatprep.subr.mxu0 %v2744
    %3017 = vmatpush1.msra.mxu0 %v2743
    %3018 = vmatprep.subr.mxu0 %v2752
    %3019 = vmatpush1.msra.mxu0 %v2751
    %3020 = vmatprep.subr.mxu0 0.0
    %3021 = vmatpush1.msra.mxu0 0.0
    %3022 = vmatprep.subr.mxu0 0.0
    %3023 = vmatpush1.msra.mxu0 0.0
    %3024 = vmatprep.subr.mxu0 0.0
    %3025 = vmatpush1.msra.mxu0 0.0
    %3026 = vmatprep.subr.mxu0 0.0
    %3027 = vmatpush1.msra.mxu0 0.0
    %3028 = vmatprep.subr.mxu0 0.0
    %3029 = vmatpush1.msra.mxu0 0.0
    %3030 = vmatprep.subr.mxu0 0.0
    %3031 = vmatpush1.msra.mxu0 0.0
    %3032 = vmatprep.subr.mxu0 0.0
    %3033 = vmatpush1.msra.mxu0 0.0
    %3034 = vmatprep.subr.mxu0 0.0
    %3035 = vmatpush1.msra.mxu0 0.0
    %3036 = vmatprep.subr.mxu0 0.0
    %3037 = vmatpush1.msra.mxu0 0.0
    %3038 = vmatprep.subr.mxu0 0.0
    %3039 = vmatpush1.msra.mxu0 0.0
    %3040 = vmatprep.subr.mxu0 0.0
    %3041 = vmatpush1.msra.mxu0 0.0
    %3042 = vmatprep.subr.mxu0 0.0
    %3043 = vmatpush1.msra.mxu0 0.0
    %3044 = vmatprep.subr.mxu0 0.0
    %3045 = vmatpush1.msra.mxu0 0.0
    %3046 = vmatprep.subr.mxu0 0.0
    %3047 = vmatpush1.msra.mxu0 0.0
    %3048 = vmatprep.subr.mxu0 0.0
    %3049 = vmatpush1.msra.mxu0 0.0
    %3050 = vmatprep.subr.mxu0 0.0
    %3051 = vmatpush1.msra.mxu0 0.0
    %3052 = vmatprep.subr.mxu0 0.0
    %3053 = vmatpush1.msra.mxu0 0.0
    %3054 = vmatprep.subr.mxu0 0.0
    %3055 = vmatpush1.msra.mxu0 0.0
    %3056 = vmatprep.subr.mxu0 0.0
    %3057 = vmatpush1.msra.mxu0 0.0
    %3058 = vmatprep.subr.mxu0 0.0
    %3059 = vmatpush1.msra.mxu0 0.0
    %3060 = vmatprep.subr.mxu0 0.0
    %3061 = vmatpush1.msra.mxu0 0.0
    %3062 = vmatprep.subr.mxu0 0.0
    %3063 = vmatpush1.msra.mxu0 0.0
    %3064 = vmatprep.subr.mxu0 0.0
    %3065 = vmatpush1.msra.mxu0 0.0
    %3066 = vmatprep.subr.mxu0 0.0
    %3067 = vmatpush1.msra.mxu0 0.0
    %3068 = vmatprep.subr.mxu0 0.0
    %3069 = vmatpush1.msra.mxu0 0.0
    %3070 = vmatprep.subr.mxu0 0.0
    %3071 = vmatpush1.msra.mxu0 0.0
    %3072 = vmatprep.subr.mxu0 0.0
    %3073 = vmatpush1.msra.mxu0 0.0
    %3074 = vmatprep.subr.mxu0 0.0
    %3075 = vmatpush1.msra.mxu0 0.0
    %3076 = vmatprep.mubr.f32.mxu0 0.0
    %3077 = vmatmul.mubr.f32.gmra.mrb[0].mxu0 %v2797
    %v3078 = vpop.f32.mrb[0].mxu0
    %v3079 = vadd.f32 %v2782, %v3078
    %v3080 = vpop.f32.mrb[0].mxu0
    %v3081 = vadd.f32 %v2786, %v3080
    %3082 = vdwg.mxu0
    %v3083 = vld [vmem:[#allocation17] sm:$0xff]
    %v3084 = vld [vmem:[#allocation17 + $0x8] sm:$0xff]
    %v3085 = vld [vmem:[#allocation17 + $0x10] sm:$0xff]
    %v3086 = vld [vmem:[#allocation17 + $0x18] sm:$0xff]
    %v3087 = vld [vmem:[#allocation17 + $0x20] sm:$0xff]
    %v3088 = vld [vmem:[#allocation17 + $0x28] sm:$0xff]
    %v3089 = vld [vmem:[#allocation17 + $0x30] sm:$0xff]
    %v3090 = vld [vmem:[#allocation17 + $0x38] sm:$0xff]
    %v3091 = vld [vmem:[#allocation17 + $0x40] sm:$0xff]
    %v3092 = vld [vmem:[#allocation17 + $0x48] sm:$0xff]
    %v3093 = vld [vmem:[#allocation17 + $0x50] sm:$0xff]
    %v3094 = vld [vmem:[#allocation17 + $0x58] sm:$0xff]
    %v3095 = vld [vmem:[#allocation17 + $0x60] sm:$0xff]
    %v3096 = vld [vmem:[#allocation17 + $0x68] sm:$0xff]
    %v3097 = vld [vmem:[#allocation17 + $0x70] sm:$0xff]
    %v3098 = vld [vmem:[#allocation17 + $0x78] sm:$0xff]
    %v3099 = vld [vmem:[#allocation17 + $0x80] sm:$0xff]
    %v3100 = vld [vmem:[#allocation17 + $0x88] sm:$0xff]
    %v3101 = vld [vmem:[#allocation17 + $0x90] sm:$0xff]
    %v3102 = vld [vmem:[#allocation17 + $0x98] sm:$0xff]
    %v3103 = vld [vmem:[#allocation17 + $0xa0] sm:$0xff]
    %v3104 = vld [vmem:[#allocation17 + $0xa8] sm:$0xff]
    %v3105 = vld [vmem:[#allocation17 + $0xb0] sm:$0xff]
    %v3106 = vld [vmem:[#allocation17 + $0xb8] sm:$0xff]
    %v3107 = vld [vmem:[#allocation17 + $0xc0] sm:$0xff]
    %v3108 = vld [vmem:[#allocation17 + $0xc8] sm:$0xff]
    %v3109 = vld [vmem:[#allocation17 + $0xd0] sm:$0xff]
    %v3110 = vld [vmem:[#allocation17 + $0xd8] sm:$0xff]
    %v3111 = vld [vmem:[#allocation17 + $0xe0] sm:$0xff]
    %v3112 = vld [vmem:[#allocation17 + $0xe8] sm:$0xff]
    %v3113 = vld [vmem:[#allocation17 + $0xf0] sm:$0xff]
    %v3114 = vld [vmem:[#allocation17 + $0xf8] sm:$0xff]
    %v3115 = vld [vmem:[#allocation19] sm:$0xff]
    %v3117 = vlaneseq
    %v3118 = vshrl.u32 %v3117, 7
    %v3119 = vsub.s32 0, %v3118
    %v3120 = vrot.slane %v3115, %v3119
    %v3121 = vlaneseq
    %v3122 = vshrl.u32 %v3121, 7
    %v3123 = vsub.s32 1, %v3122
    %v3124 = vrot.slane %v3115, %v3123
    %v3125 = vlaneseq
    %v3126 = vshrl.u32 %v3125, 7
    %v3127 = vsub.s32 2, %v3126
    %v3128 = vrot.slane %v3115, %v3127
    %v3129 = vlaneseq
    %v3130 = vshrl.u32 %v3129, 7
    %v3131 = vsub.s32 3, %v3130
    %v3132 = vrot.slane %v3115, %v3131
    %v3133 = vlaneseq
    %v3134 = vshrl.u32 %v3133, 7
    %v3135 = vsub.s32 4, %v3134
    %v3136 = vrot.slane %v3115, %v3135
    %v3137 = vlaneseq
    %v3138 = vshrl.u32 %v3137, 7
    %v3139 = vsub.s32 5, %v3138
    %v3140 = vrot.slane %v3115, %v3139
    %v3141 = vlaneseq
    %v3142 = vshrl.u32 %v3141, 7
    %v3143 = vsub.s32 6, %v3142
    %v3144 = vrot.slane %v3115, %v3143
    %v3145 = vlaneseq
    %v3146 = vshrl.u32 %v3145, 7
    %v3147 = vsub.s32 7, %v3146
    %v3148 = vrot.slane %v3115, %v3147
    %3157 = vrot.lane.b32.xlu0 %v357, 32
    %v3158 = vpop.permute.xlu0 %3157
    %v3159 = vsel %vm506, %v3158, 0
    %3161 = vmatprep.subr.mxu0 %v3084
    %3162 = vmatpush1.msra.mxu0 %v3083
    %3163 = vmatprep.subr.mxu0 %v3092
    %3164 = vmatpush1.msra.mxu0 %v3091
    %3165 = vmatprep.subr.mxu0 %v3100
    %3166 = vmatpush1.msra.mxu0 %v3099
    %3167 = vmatprep.subr.mxu0 %v3108
    %3168 = vmatpush1.msra.mxu0 %v3107
    %3169 = vmatprep.subr.mxu0 0.0
    %3170 = vmatpush1.msra.mxu0 0.0
    %3171 = vmatprep.subr.mxu0 0.0
    %3172 = vmatpush1.msra.mxu0 0.0
    %3173 = vmatprep.subr.mxu0 0.0
    %3174 = vmatpush1.msra.mxu0 0.0
    %3175 = vmatprep.subr.mxu0 0.0
    %3176 = vmatpush1.msra.mxu0 0.0
    %3177 = vmatprep.subr.mxu0 0.0
    %3178 = vmatpush1.msra.mxu0 0.0
    %3179 = vmatprep.subr.mxu0 0.0
    %3180 = vmatpush1.msra.mxu0 0.0
    %3181 = vmatprep.subr.mxu0 0.0
    %3182 = vmatpush1.msra.mxu0 0.0
    %3183 = vmatprep.subr.mxu0 0.0
    %3184 = vmatpush1.msra.mxu0 0.0
    %3185 = vmatprep.subr.mxu0 0.0
    %3186 = vmatpush1.msra.mxu0 0.0
    %3187 = vmatprep.subr.mxu0 0.0
    %3188 = vmatpush1.msra.mxu0 0.0
    %3189 = vmatprep.subr.mxu0 0.0
    %3190 = vmatpush1.msra.mxu0 0.0
    %3191 = vmatprep.subr.mxu0 0.0
    %3192 = vmatpush1.msra.mxu0 0.0
    %3193 = vmatprep.subr.mxu0 0.0
    %3194 = vmatpush1.msra.mxu0 0.0
    %3195 = vmatprep.subr.mxu0 0.0
    %3196 = vmatpush1.msra.mxu0 0.0
    %3197 = vmatprep.subr.mxu0 0.0
    %3198 = vmatpush1.msra.mxu0 0.0
    %3199 = vmatprep.subr.mxu0 0.0
    %3200 = vmatpush1.msra.mxu0 0.0
    %3201 = vmatprep.subr.mxu0 0.0
    %3202 = vmatpush1.msra.mxu0 0.0
    %3203 = vmatprep.subr.mxu0 0.0
    %3204 = vmatpush1.msra.mxu0 0.0
    %3205 = vmatprep.subr.mxu0 0.0
    %3206 = vmatpush1.msra.mxu0 0.0
    %3207 = vmatprep.subr.mxu0 0.0
    %3208 = vmatpush1.msra.mxu0 0.0
    %3209 = vmatprep.subr.mxu0 0.0
    %3210 = vmatpush1.msra.mxu0 0.0
    %3211 = vmatprep.subr.mxu0 0.0
    %3212 = vmatpush1.msra.mxu0 0.0
    %3213 = vmatprep.subr.mxu0 0.0
    %3214 = vmatpush1.msra.mxu0 0.0
    %3215 = vmatprep.subr.mxu0 0.0
    %3216 = vmatpush1.msra.mxu0 0.0
    %3217 = vmatprep.subr.mxu0 0.0
    %3218 = vmatpush1.msra.mxu0 0.0
    %3219 = vmatprep.subr.mxu0 0.0
    %3220 = vmatpush1.msra.mxu0 0.0
    %3221 = vmatprep.subr.mxu0 0.0
    %3222 = vmatpush1.msra.mxu0 0.0
    %3223 = vmatprep.subr.mxu0 0.0
    %3224 = vmatpush1.msra.mxu0 0.0
    %3225 = vmatprep.mubr.f32.mxu0 0.0
    %3226 = vmatmul.mubr.f32.gmra.mrb[0].mxu0 %v3159
    %v3227 = vpop.f32.mrb[0].mxu0
    %v3228 = vadd.f32 %v3120, %v3227
    %v3229 = vpop.f32.mrb[0].mxu0
    %v3230 = vadd.f32 %v3124, %v3229
    %3231 = vdwg.mxu0
    %3232 = vmatprep.subr.mxu0 %v3086
    %3233 = vmatpush1.msra.mxu0 %v3085
    %3234 = vmatprep.subr.mxu0 %v3094
    %3235 = vmatpush1.msra.mxu0 %v3093
    %3236 = vmatprep.subr.mxu0 %v3102
    %3237 = vmatpush1.msra.mxu0 %v3101
    %3238 = vmatprep.subr.mxu0 %v3110
    %3239 = vmatpush1.msra.mxu0 %v3109
    %3240 = vmatprep.subr.mxu0 0.0
    %3241 = vmatpush1.msra.mxu0 0.0
    %3242 = vmatprep.subr.mxu0 0.0
    %3243 = vmatpush1.msra.mxu0 0.0
    %3244 = vmatprep.subr.mxu0 0.0
    %3245 = vmatpush1.msra.mxu0 0.0
    %3246 = vmatprep.subr.mxu0 0.0
    %3247 = vmatpush1.msra.mxu0 0.0
    %3248 = vmatprep.subr.mxu0 0.0
    %3249 = vmatpush1.msra.mxu0 0.0
    %3250 = vmatprep.subr.mxu0 0.0
    %3251 = vmatpush1.msra.mxu0 0.0
    %3252 = vmatprep.subr.mxu0 0.0
    %3253 = vmatpush1.msra.mxu0 0.0
    %3254 = vmatprep.subr.mxu0 0.0
    %3255 = vmatpush1.msra.mxu0 0.0
    %3256 = vmatprep.subr.mxu0 0.0
    %3257 = vmatpush1.msra.mxu0 0.0
    %3258 = vmatprep.subr.mxu0 0.0
    %3259 = vmatpush1.msra.mxu0 0.0
    %3260 = vmatprep.subr.mxu0 0.0
    %3261 = vmatpush1.msra.mxu0 0.0
    %3262 = vmatprep.subr.mxu0 0.0
    %3263 = vmatpush1.msra.mxu0 0.0
    %3264 = vmatprep.subr.mxu0 0.0
    %3265 = vmatpush1.msra.mxu0 0.0
    %3266 = vmatprep.subr.mxu0 0.0
    %3267 = vmatpush1.msra.mxu0 0.0
    %3268 = vmatprep.subr.mxu0 0.0
    %3269 = vmatpush1.msra.mxu0 0.0
    %3270 = vmatprep.subr.mxu0 0.0
    %3271 = vmatpush1.msra.mxu0 0.0
    %3272 = vmatprep.subr.mxu0 0.0
    %3273 = vmatpush1.msra.mxu0 0.0
    %3274 = vmatprep.subr.mxu0 0.0
    %3275 = vmatpush1.msra.mxu0 0.0
    %3276 = vmatprep.subr.mxu0 0.0
    %3277 = vmatpush1.msra.mxu0 0.0
    %3278 = vmatprep.subr.mxu0 0.0
    %3279 = vmatpush1.msra.mxu0 0.0
    %3280 = vmatprep.subr.mxu0 0.0
    %3281 = vmatpush1.msra.mxu0 0.0
    %3282 = vmatprep.subr.mxu0 0.0
    %3283 = vmatpush1.msra.mxu0 0.0
    %3284 = vmatprep.subr.mxu0 0.0
    %3285 = vmatpush1.msra.mxu0 0.0
    %3286 = vmatprep.subr.mxu0 0.0
    %3287 = vmatpush1.msra.mxu0 0.0
    %3288 = vmatprep.subr.mxu0 0.0
    %3289 = vmatpush1.msra.mxu0 0.0
    %3290 = vmatprep.subr.mxu0 0.0
    %3291 = vmatpush1.msra.mxu0 0.0
    %3292 = vmatprep.subr.mxu0 0.0
    %3293 = vmatpush1.msra.mxu0 0.0
    %3294 = vmatprep.subr.mxu0 0.0
    %3295 = vmatpush1.msra.mxu0 0.0
    %3296 = vmatprep.mubr.f32.mxu0 0.0
    %3297 = vmatmul.mubr.f32.gmra.mrb[0].mxu0 %v3159
    %v3298 = vpop.f32.mrb[0].mxu0
    %v3299 = vadd.f32 %v3128, %v3298
    %v3300 = vpop.f32.mrb[0].mxu0
    %v3301 = vadd.f32 %v3132, %v3300
    %3302 = vdwg.mxu0
    %3303 = vmatprep.subr.mxu0 %v3088
    %3304 = vmatpush1.msra.mxu0 %v3087
    %3305 = vmatprep.subr.mxu0 %v3096
    %3306 = vmatpush1.msra.mxu0 %v3095
    %3307 = vmatprep.subr.mxu0 %v3104
    %3308 = vmatpush1.msra.mxu0 %v3103
    %3309 = vmatprep.subr.mxu0 %v3112
    %3310 = vmatpush1.msra.mxu0 %v3111
    %3311 = vmatprep.subr.mxu0 0.0
    %3312 = vmatpush1.msra.mxu0 0.0
    %3313 = vmatprep.subr.mxu0 0.0
    %3314 = vmatpush1.msra.mxu0 0.0
    %3315 = vmatprep.subr.mxu0 0.0
    %3316 = vmatpush1.msra.mxu0 0.0
    %3317 = vmatprep.subr.mxu0 0.0
    %3318 = vmatpush1.msra.mxu0 0.0
    %3319 = vmatprep.subr.mxu0 0.0
    %3320 = vmatpush1.msra.mxu0 0.0
    %3321 = vmatprep.subr.mxu0 0.0
    %3322 = vmatpush1.msra.mxu0 0.0
    %3323 = vmatprep.subr.mxu0 0.0
    %3324 = vmatpush1.msra.mxu0 0.0
    %3325 = vmatprep.subr.mxu0 0.0
    %3326 = vmatpush1.msra.mxu0 0.0
    %3327 = vmatprep.subr.mxu0 0.0
    %3328 = vmatpush1.msra.mxu0 0.0
    %3329 = vmatprep.subr.mxu0 0.0
    %3330 = vmatpush1.msra.mxu0 0.0
    %3331 = vmatprep.subr.mxu0 0.0
    %3332 = vmatpush1.msra.mxu0 0.0
    %3333 = vmatprep.subr.mxu0 0.0
    %3334 = vmatpush1.msra.mxu0 0.0
    %3335 = vmatprep.subr.mxu0 0.0
    %3336 = vmatpush1.msra.mxu0 0.0
    %3337 = vmatprep.subr.mxu0 0.0
    %3338 = vmatpush1.msra.mxu0 0.0
    %3339 = vmatprep.subr.mxu0 0.0
    %3340 = vmatpush1.msra.mxu0 0.0
    %3341 = vmatprep.subr.mxu0 0.0
    %3342 = vmatpush1.msra.mxu0 0.0
    %3343 = vmatprep.subr.mxu0 0.0
    %3344 = vmatpush1.msra.mxu0 0.0
    %3345 = vmatprep.subr.mxu0 0.0
    %3346 = vmatpush1.msra.mxu0 0.0
    %3347 = vmatprep.subr.mxu0 0.0
    %3348 = vmatpush1.msra.mxu0 0.0
    %3349 = vmatprep.subr.mxu0 0.0
    %3350 = vmatpush1.msra.mxu0 0.0
    %3351 = vmatprep.subr.mxu0 0.0
    %3352 = vmatpush1.msra.mxu0 0.0
    %3353 = vmatprep.subr.mxu0 0.0
    %3354 = vmatpush1.msra.mxu0 0.0
    %3355 = vmatprep.subr.mxu0 0.0
    %3356 = vmatpush1.msra.mxu0 0.0
    %3357 = vmatprep.subr.mxu0 0.0
    %3358 = vmatpush1.msra.mxu0 0.0
    %3359 = vmatprep.subr.mxu0 0.0
    %3360 = vmatpush1.msra.mxu0 0.0
    %3361 = vmatprep.subr.mxu0 0.0
    %3362 = vmatpush1.msra.mxu0 0.0
    %3363 = vmatprep.subr.mxu0 0.0
    %3364 = vmatpush1.msra.mxu0 0.0
    %3365 = vmatprep.subr.mxu0 0.0
    %3366 = vmatpush1.msra.mxu0 0.0
    %3367 = vmatprep.mubr.f32.mxu0 0.0
    %3368 = vmatmul.mubr.f32.gmra.mrb[0].mxu0 %v3159
    %v3369 = vpop.f32.mrb[0].mxu0
    %v3370 = vadd.f32 %v3136, %v3369
    %v3371 = vpop.f32.mrb[0].mxu0
    %v3372 = vadd.f32 %v3140, %v3371
    %3373 = vdwg.mxu0
    %3374 = vmatprep.subr.mxu0 %v3090
    %3375 = vmatpush1.msra.mxu0 %v3089
    %3376 = vmatprep.subr.mxu0 %v3098
    %3377 = vmatpush1.msra.mxu0 %v3097
    %3378 = vmatprep.subr.mxu0 %v3106
    %3379 = vmatpush1.msra.mxu0 %v3105
    %3380 = vmatprep.subr.mxu0 %v3114
    %3381 = vmatpush1.msra.mxu0 %v3113
    %3382 = vmatprep.subr.mxu0 0.0
    %3383 = vmatpush1.msra.mxu0 0.0
    %3384 = vmatprep.subr.mxu0 0.0
    %3385 = vmatpush1.msra.mxu0 0.0
    %3386 = vmatprep.subr.mxu0 0.0
    %3387 = vmatpush1.msra.mxu0 0.0
    %3388 = vmatprep.subr.mxu0 0.0
    %3389 = vmatpush1.msra.mxu0 0.0
    %3390 = vmatprep.subr.mxu0 0.0
    %3391 = vmatpush1.msra.mxu0 0.0
    %3392 = vmatprep.subr.mxu0 0.0
    %3393 = vmatpush1.msra.mxu0 0.0
    %3394 = vmatprep.subr.mxu0 0.0
    %3395 = vmatpush1.msra.mxu0 0.0
    %3396 = vmatprep.subr.mxu0 0.0
    %3397 = vmatpush1.msra.mxu0 0.0
    %3398 = vmatprep.subr.mxu0 0.0
    %3399 = vmatpush1.msra.mxu0 0.0
    %3400 = vmatprep.subr.mxu0 0.0
    %3401 = vmatpush1.msra.mxu0 0.0
    %3402 = vmatprep.subr.mxu0 0.0
    %3403 = vmatpush1.msra.mxu0 0.0
    %3404 = vmatprep.subr.mxu0 0.0
    %3405 = vmatpush1.msra.mxu0 0.0
    %3406 = vmatprep.subr.mxu0 0.0
    %3407 = vmatpush1.msra.mxu0 0.0
    %3408 = vmatprep.subr.mxu0 0.0
    %3409 = vmatpush1.msra.mxu0 0.0
    %3410 = vmatprep.subr.mxu0 0.0
    %3411 = vmatpush1.msra.mxu0 0.0
    %3412 = vmatprep.subr.mxu0 0.0
    %3413 = vmatpush1.msra.mxu0 0.0
    %3414 = vmatprep.subr.mxu0 0.0
    %3415 = vmatpush1.msra.mxu0 0.0
    %3416 = vmatprep.subr.mxu0 0.0
    %3417 = vmatpush1.msra.mxu0 0.0
    %3418 = vmatprep.subr.mxu0 0.0
    %3419 = vmatpush1.msra.mxu0 0.0
    %3420 = vmatprep.subr.mxu0 0.0
    %3421 = vmatpush1.msra.mxu0 0.0
    %3422 = vmatprep.subr.mxu0 0.0
    %3423 = vmatpush1.msra.mxu0 0.0
    %3424 = vmatprep.subr.mxu0 0.0
    %3425 = vmatpush1.msra.mxu0 0.0
    %3426 = vmatprep.subr.mxu0 0.0
    %3427 = vmatpush1.msra.mxu0 0.0
    %3428 = vmatprep.subr.mxu0 0.0
    %3429 = vmatpush1.msra.mxu0 0.0
    %3430 = vmatprep.subr.mxu0 0.0
    %3431 = vmatpush1.msra.mxu0 0.0
    %3432 = vmatprep.subr.mxu0 0.0
    %3433 = vmatpush1.msra.mxu0 0.0
    %3434 = vmatprep.subr.mxu0 0.0
    %3435 = vmatpush1.msra.mxu0 0.0
    %3436 = vmatprep.subr.mxu0 0.0
    %3437 = vmatpush1.msra.mxu0 0.0
    %3438 = vmatprep.mubr.f32.mxu0 0.0
    %3439 = vmatmul.mubr.f32.gmra.mrb[0].mxu0 %v3159
    %v3440 = vpop.f32.mrb[0].mxu0
    %v3441 = vadd.f32 %v3144, %v3440
    %v3442 = vpop.f32.mrb[0].mxu0
    %v3443 = vadd.f32 %v3148, %v3442
    %3444 = vdwg.mxu0
    %v3445 = vld [vmem:[#allocation23] sm:$0xff]
    %v3446 = vld [vmem:[#allocation23 + $0x8] sm:$0xff]
    %v3447 = vld [vmem:[#allocation23 + $0x10] sm:$0xff]
    %v3448 = vld [vmem:[#allocation23 + $0x18] sm:$0xff]
    %v3449 = vld [vmem:[#allocation23 + $0x20] sm:$0xff]
    %v3450 = vld [vmem:[#allocation23 + $0x28] sm:$0xff]
    %v3451 = vld [vmem:[#allocation23 + $0x30] sm:$0xff]
    %v3452 = vld [vmem:[#allocation23 + $0x38] sm:$0xff]
    %v3453 = vld [vmem:[#allocation23 + $0x40] sm:$0xff]
    %v3454 = vld [vmem:[#allocation23 + $0x48] sm:$0xff]
    %v3455 = vld [vmem:[#allocation23 + $0x50] sm:$0xff]
    %v3456 = vld [vmem:[#allocation23 + $0x58] sm:$0xff]
    %v3457 = vld [vmem:[#allocation23 + $0x60] sm:$0xff]
    %v3458 = vld [vmem:[#allocation23 + $0x68] sm:$0xff]
    %v3459 = vld [vmem:[#allocation23 + $0x70] sm:$0xff]
    %v3460 = vld [vmem:[#allocation23 + $0x78] sm:$0xff]
    %v3461 = vld [vmem:[#allocation23 + $0x80] sm:$0xff]
    %v3462 = vld [vmem:[#allocation23 + $0x88] sm:$0xff]
    %v3463 = vld [vmem:[#allocation23 + $0x90] sm:$0xff]
    %v3464 = vld [vmem:[#allocation23 + $0x98] sm:$0xff]
    %v3465 = vld [vmem:[#allocation23 + $0xa0] sm:$0xff]
    %v3466 = vld [vmem:[#allocation23 + $0xa8] sm:$0xff]
    %v3467 = vld [vmem:[#allocation23 + $0xb0] sm:$0xff]
    %v3468 = vld [vmem:[#allocation23 + $0xb8] sm:$0xff]
    %v3469 = vld [vmem:[#allocation23 + $0xc0] sm:$0xff]
    %v3470 = vld [vmem:[#allocation23 + $0xc8] sm:$0xff]
    %v3471 = vld [vmem:[#allocation23 + $0xd0] sm:$0xff]
    %v3472 = vld [vmem:[#allocation23 + $0xd8] sm:$0xff]
    %v3473 = vld [vmem:[#allocation23 + $0xe0] sm:$0xff]
    %v3474 = vld [vmem:[#allocation23 + $0xe8] sm:$0xff]
    %v3475 = vld [vmem:[#allocation23 + $0xf0] sm:$0xff]
    %v3476 = vld [vmem:[#allocation23 + $0xf8] sm:$0xff]
    %v3477 = vld [vmem:[#allocation23 + $0x100] sm:$0xff]
    %v3478 = vld [vmem:[#allocation23 + $0x108] sm:$0xff]
    %v3479 = vld [vmem:[#allocation23 + $0x110] sm:$0xff]
    %v3480 = vld [vmem:[#allocation23 + $0x118] sm:$0xff]
    %v3481 = vld [vmem:[#allocation23 + $0x120] sm:$0xff]
    %v3482 = vld [vmem:[#allocation23 + $0x128] sm:$0xff]
    %v3483 = vld [vmem:[#allocation23 + $0x130] sm:$0xff]
    %v3484 = vld [vmem:[#allocation23 + $0x138] sm:$0xff]
    %v3485 = vld [vmem:[#allocation23 + $0x140] sm:$0xff]
    %v3486 = vld [vmem:[#allocation23 + $0x148] sm:$0xff]
    %v3487 = vld [vmem:[#allocation23 + $0x150] sm:$0xff]
    %v3488 = vld [vmem:[#allocation23 + $0x158] sm:$0xff]
    %v3489 = vld [vmem:[#allocation23 + $0x160] sm:$0xff]
    %v3490 = vld [vmem:[#allocation23 + $0x168] sm:$0xff]
    %v3491 = vld [vmem:[#allocation23 + $0x170] sm:$0xff]
    %v3492 = vld [vmem:[#allocation23 + $0x178] sm:$0xff]
    %v3493 = vld [vmem:[#allocation23 + $0x180] sm:$0xff]
    %v3494 = vld [vmem:[#allocation23 + $0x188] sm:$0xff]
    %v3495 = vld [vmem:[#allocation23 + $0x190] sm:$0xff]
    %v3496 = vld [vmem:[#allocation23 + $0x198] sm:$0xff]
    %v3497 = vld [vmem:[#allocation23 + $0x1a0] sm:$0xff]
    %v3498 = vld [vmem:[#allocation23 + $0x1a8] sm:$0xff]
    %v3499 = vld [vmem:[#allocation23 + $0x1b0] sm:$0xff]
    %v3500 = vld [vmem:[#allocation23 + $0x1b8] sm:$0xff]
    %v3501 = vld [vmem:[#allocation23 + $0x1c0] sm:$0xff]
    %v3502 = vld [vmem:[#allocation23 + $0x1c8] sm:$0xff]
    %v3503 = vld [vmem:[#allocation23 + $0x1d0] sm:$0xff]
    %v3504 = vld [vmem:[#allocation23 + $0x1d8] sm:$0xff]
    %v3505 = vld [vmem:[#allocation23 + $0x1e0] sm:$0xff]
    %v3506 = vld [vmem:[#allocation23 + $0x1e8] sm:$0xff]
    %v3507 = vld [vmem:[#allocation23 + $0x1f0] sm:$0xff]
    %v3508 = vld [vmem:[#allocation23 + $0x1f8] sm:$0xff]
    %v3509 = vld [vmem:[#allocation23 + $0x200] sm:$0xff]
    %v3510 = vld [vmem:[#allocation23 + $0x208] sm:$0xff]
    %v3511 = vld [vmem:[#allocation23 + $0x210] sm:$0xff]
    %v3512 = vld [vmem:[#allocation23 + $0x218] sm:$0xff]
    %v3513 = vld [vmem:[#allocation23 + $0x220] sm:$0xff]
    %v3514 = vld [vmem:[#allocation23 + $0x228] sm:$0xff]
    %v3515 = vld [vmem:[#allocation23 + $0x230] sm:$0xff]
    %v3516 = vld [vmem:[#allocation23 + $0x238] sm:$0xff]
    %v3517 = vld [vmem:[#allocation23 + $0x240] sm:$0xff]
    %v3518 = vld [vmem:[#allocation23 + $0x248] sm:$0xff]
    %v3519 = vld [vmem:[#allocation23 + $0x250] sm:$0xff]
    %v3520 = vld [vmem:[#allocation23 + $0x258] sm:$0xff]
    %v3521 = vld [vmem:[#allocation23 + $0x260] sm:$0xff]
    %v3522 = vld [vmem:[#allocation23 + $0x268] sm:$0xff]
    %v3523 = vld [vmem:[#allocation23 + $0x270] sm:$0xff]
    %v3524 = vld [vmem:[#allocation23 + $0x278] sm:$0xff]
    %v3525 = vld [vmem:[#allocation23 + $0x280] sm:$0xff]
    %v3526 = vld [vmem:[#allocation23 + $0x288] sm:$0xff]
    %v3527 = vld [vmem:[#allocation23 + $0x290] sm:$0xff]
    %v3528 = vld [vmem:[#allocation23 + $0x298] sm:$0xff]
    %v3529 = vld [vmem:[#allocation23 + $0x2a0] sm:$0xff]
    %v3530 = vld [vmem:[#allocation23 + $0x2a8] sm:$0xff]
    %v3531 = vld [vmem:[#allocation23 + $0x2b0] sm:$0xff]
    %v3532 = vld [vmem:[#allocation23 + $0x2b8] sm:$0xff]
    %v3533 = vld [vmem:[#allocation23 + $0x2c0] sm:$0xff]
    %v3534 = vld [vmem:[#allocation23 + $0x2c8] sm:$0xff]
    %v3535 = vld [vmem:[#allocation23 + $0x2d0] sm:$0xff]
    %v3536 = vld [vmem:[#allocation23 + $0x2d8] sm:$0xff]
    %v3537 = vld [vmem:[#allocation23 + $0x2e0] sm:$0xff]
    %v3538 = vld [vmem:[#allocation23 + $0x2e8] sm:$0xff]
    %v3539 = vld [vmem:[#allocation23 + $0x2f0] sm:$0xff]
    %v3540 = vld [vmem:[#allocation23 + $0x2f8] sm:$0xff]
    %v3541 = vld [vmem:[#allocation23 + $0x300] sm:$0xff]
    %v3542 = vld [vmem:[#allocation23 + $0x308] sm:$0xff]
    %v3543 = vld [vmem:[#allocation23 + $0x310] sm:$0xff]
    %v3544 = vld [vmem:[#allocation23 + $0x318] sm:$0xff]
    %v3545 = vld [vmem:[#allocation23 + $0x320] sm:$0xff]
    %v3546 = vld [vmem:[#allocation23 + $0x328] sm:$0xff]
    %v3547 = vld [vmem:[#allocation23 + $0x330] sm:$0xff]
    %v3548 = vld [vmem:[#allocation23 + $0x338] sm:$0xff]
    %v3549 = vld [vmem:[#allocation23 + $0x340] sm:$0xff]
    %v3550 = vld [vmem:[#allocation23 + $0x348] sm:$0xff]
    %v3551 = vld [vmem:[#allocation23 + $0x350] sm:$0xff]
    %v3552 = vld [vmem:[#allocation23 + $0x358] sm:$0xff]
    %v3553 = vld [vmem:[#allocation23 + $0x360] sm:$0xff]
    %v3554 = vld [vmem:[#allocation23 + $0x368] sm:$0xff]
    %v3555 = vld [vmem:[#allocation23 + $0x370] sm:$0xff]
    %v3556 = vld [vmem:[#allocation23 + $0x378] sm:$0xff]
    %v3557 = vld [vmem:[#allocation23 + $0x380] sm:$0xff]
    %v3558 = vld [vmem:[#allocation23 + $0x388] sm:$0xff]
    %v3559 = vld [vmem:[#allocation23 + $0x390] sm:$0xff]
    %v3560 = vld [vmem:[#allocation23 + $0x398] sm:$0xff]
    %v3561 = vld [vmem:[#allocation23 + $0x3a0] sm:$0xff]
    %v3562 = vld [vmem:[#allocation23 + $0x3a8] sm:$0xff]
    %v3563 = vld [vmem:[#allocation23 + $0x3b0] sm:$0xff]
    %v3564 = vld [vmem:[#allocation23 + $0x3b8] sm:$0xff]
    %v3565 = vld [vmem:[#allocation23 + $0x3c0] sm:$0xff]
    %v3566 = vld [vmem:[#allocation23 + $0x3c8] sm:$0xff]
    %v3567 = vld [vmem:[#allocation23 + $0x3d0] sm:$0xff]
    %v3568 = vld [vmem:[#allocation23 + $0x3d8] sm:$0xff]
    %v3569 = vld [vmem:[#allocation23 + $0x3e0] sm:$0xff]
    %v3570 = vld [vmem:[#allocation23 + $0x3e8] sm:$0xff]
    %v3571 = vld [vmem:[#allocation23 + $0x3f0] sm:$0xff]
    %v3572 = vld [vmem:[#allocation23 + $0x3f8] sm:$0xff]
    %v3573 = vld [vmem:[#allocation23 + $0x400] sm:$0xff]
    %v3574 = vld [vmem:[#allocation23 + $0x408] sm:$0xff]
    %v3575 = vld [vmem:[#allocation23 + $0x410] sm:$0xff]
    %v3576 = vld [vmem:[#allocation23 + $0x418] sm:$0xff]
    %v3577 = vld [vmem:[#allocation23 + $0x420] sm:$0xff]
    %v3578 = vld [vmem:[#allocation23 + $0x428] sm:$0xff]
    %v3579 = vld [vmem:[#allocation23 + $0x430] sm:$0xff]
    %v3580 = vld [vmem:[#allocation23 + $0x438] sm:$0xff]
    %v3581 = vld [vmem:[#allocation23 + $0x440] sm:$0xff]
    %v3582 = vld [vmem:[#allocation23 + $0x448] sm:$0xff]
    %v3583 = vld [vmem:[#allocation23 + $0x450] sm:$0xff]
    %v3584 = vld [vmem:[#allocation23 + $0x458] sm:$0xff]
    %v3585 = vld [vmem:[#allocation23 + $0x460] sm:$0xff]
    %v3586 = vld [vmem:[#allocation23 + $0x468] sm:$0xff]
    %v3587 = vld [vmem:[#allocation23 + $0x470] sm:$0xff]
    %v3588 = vld [vmem:[#allocation23 + $0x478] sm:$0xff]
    %v3589 = vld [vmem:[#allocation23 + $0x480] sm:$0xff]
    %v3590 = vld [vmem:[#allocation23 + $0x488] sm:$0xff]
    %v3591 = vld [vmem:[#allocation23 + $0x490] sm:$0xff]
    %v3592 = vld [vmem:[#allocation23 + $0x498] sm:$0xff]
    %v3593 = vld [vmem:[#allocation23 + $0x4a0] sm:$0xff]
    %v3594 = vld [vmem:[#allocation23 + $0x4a8] sm:$0xff]
    %v3595 = vld [vmem:[#allocation23 + $0x4b0] sm:$0xff]
    %v3596 = vld [vmem:[#allocation23 + $0x4b8] sm:$0xff]
    %v3597 = vld [vmem:[#allocation23 + $0x4c0] sm:$0xff]
    %v3598 = vld [vmem:[#allocation23 + $0x4c8] sm:$0xff]
    %v3599 = vld [vmem:[#allocation23 + $0x4d0] sm:$0xff]
    %v3600 = vld [vmem:[#allocation23 + $0x4d8] sm:$0xff]
    %v3601 = vld [vmem:[#allocation23 + $0x4e0] sm:$0xff]
    %v3602 = vld [vmem:[#allocation23 + $0x4e8] sm:$0xff]
    %v3603 = vld [vmem:[#allocation23 + $0x4f0] sm:$0xff]
    %v3604 = vld [vmem:[#allocation23 + $0x4f8] sm:$0xff]
    %v3605 = vld [vmem:[#allocation23 + $0x500] sm:$0xff]
    %v3606 = vld [vmem:[#allocation23 + $0x508] sm:$0xff]
    %v3607 = vld [vmem:[#allocation23 + $0x510] sm:$0xff]
    %v3608 = vld [vmem:[#allocation23 + $0x518] sm:$0xff]
    %v3609 = vld [vmem:[#allocation23 + $0x520] sm:$0xff]
    %v3610 = vld [vmem:[#allocation23 + $0x528] sm:$0xff]
    %v3611 = vld [vmem:[#allocation23 + $0x530] sm:$0xff]
    %v3612 = vld [vmem:[#allocation23 + $0x538] sm:$0xff]
    %v3613 = vld [vmem:[#allocation23 + $0x540] sm:$0xff]
    %v3614 = vld [vmem:[#allocation23 + $0x548] sm:$0xff]
    %v3615 = vld [vmem:[#allocation23 + $0x550] sm:$0xff]
    %v3616 = vld [vmem:[#allocation23 + $0x558] sm:$0xff]
    %v3617 = vld [vmem:[#allocation23 + $0x560] sm:$0xff]
    %v3618 = vld [vmem:[#allocation23 + $0x568] sm:$0xff]
    %v3619 = vld [vmem:[#allocation23 + $0x570] sm:$0xff]
    %v3620 = vld [vmem:[#allocation23 + $0x578] sm:$0xff]
    %v3621 = vld [vmem:[#allocation23 + $0x580] sm:$0xff]
    %v3622 = vld [vmem:[#allocation23 + $0x588] sm:$0xff]
    %v3623 = vld [vmem:[#allocation23 + $0x590] sm:$0xff]
    %v3624 = vld [vmem:[#allocation23 + $0x598] sm:$0xff]
    %v3625 = vld [vmem:[#allocation23 + $0x5a0] sm:$0xff]
    %v3626 = vld [vmem:[#allocation23 + $0x5a8] sm:$0xff]
    %v3627 = vld [vmem:[#allocation23 + $0x5b0] sm:$0xff]
    %v3628 = vld [vmem:[#allocation23 + $0x5b8] sm:$0xff]
    %v3629 = vld [vmem:[#allocation23 + $0x5c0] sm:$0xff]
    %v3630 = vld [vmem:[#allocation23 + $0x5c8] sm:$0xff]
    %v3631 = vld [vmem:[#allocation23 + $0x5d0] sm:$0xff]
    %v3632 = vld [vmem:[#allocation23 + $0x5d8] sm:$0xff]
    %v3633 = vld [vmem:[#allocation23 + $0x5e0] sm:$0xff]
    %v3634 = vld [vmem:[#allocation23 + $0x5e8] sm:$0xff]
    %v3635 = vld [vmem:[#allocation23 + $0x5f0] sm:$0xff]
    %v3636 = vld [vmem:[#allocation23 + $0x5f8] sm:$0xff]
    %v3637 = vld [vmem:[#allocation23 + $0x600] sm:$0xff]
    %v3638 = vld [vmem:[#allocation23 + $0x608] sm:$0xff]
    %v3639 = vld [vmem:[#allocation23 + $0x610] sm:$0xff]
    %v3640 = vld [vmem:[#allocation23 + $0x618] sm:$0xff]
    %v3641 = vld [vmem:[#allocation23 + $0x620] sm:$0xff]
    %v3642 = vld [vmem:[#allocation23 + $0x628] sm:$0xff]
    %v3643 = vld [vmem:[#allocation23 + $0x630] sm:$0xff]
    %v3644 = vld [vmem:[#allocation23 + $0x638] sm:$0xff]
    %v3645 = vld [vmem:[#allocation23 + $0x640] sm:$0xff]
    %v3646 = vld [vmem:[#allocation23 + $0x648] sm:$0xff]
    %v3647 = vld [vmem:[#allocation23 + $0x650] sm:$0xff]
    %v3648 = vld [vmem:[#allocation23 + $0x658] sm:$0xff]
    %v3649 = vld [vmem:[#allocation23 + $0x660] sm:$0xff]
    %v3650 = vld [vmem:[#allocation23 + $0x668] sm:$0xff]
    %v3651 = vld [vmem:[#allocation23 + $0x670] sm:$0xff]
    %v3652 = vld [vmem:[#allocation23 + $0x678] sm:$0xff]
    %v3653 = vld [vmem:[#allocation23 + $0x680] sm:$0xff]
    %v3654 = vld [vmem:[#allocation23 + $0x688] sm:$0xff]
    %v3655 = vld [vmem:[#allocation23 + $0x690] sm:$0xff]
    %v3656 = vld [vmem:[#allocation23 + $0x698] sm:$0xff]
    %v3657 = vld [vmem:[#allocation23 + $0x6a0] sm:$0xff]
    %v3658 = vld [vmem:[#allocation23 + $0x6a8] sm:$0xff]
    %v3659 = vld [vmem:[#allocation23 + $0x6b0] sm:$0xff]
    %v3660 = vld [vmem:[#allocation23 + $0x6b8] sm:$0xff]
    %v3661 = vld [vmem:[#allocation23 + $0x6c0] sm:$0xff]
    %v3662 = vld [vmem:[#allocation23 + $0x6c8] sm:$0xff]
    %v3663 = vld [vmem:[#allocation23 + $0x6d0] sm:$0xff]
    %v3664 = vld [vmem:[#allocation23 + $0x6d8] sm:$0xff]
    %v3665 = vld [vmem:[#allocation23 + $0x6e0] sm:$0xff]
    %v3666 = vld [vmem:[#allocation23 + $0x6e8] sm:$0xff]
    %v3667 = vld [vmem:[#allocation23 + $0x6f0] sm:$0xff]
    %v3668 = vld [vmem:[#allocation23 + $0x6f8] sm:$0xff]
    %v3669 = vld [vmem:[#allocation23 + $0x700] sm:$0xff]
    %v3670 = vld [vmem:[#allocation23 + $0x708] sm:$0xff]
    %v3671 = vld [vmem:[#allocation23 + $0x710] sm:$0xff]
    %v3672 = vld [vmem:[#allocation23 + $0x718] sm:$0xff]
    %v3673 = vld [vmem:[#allocation23 + $0x720] sm:$0xff]
    %v3674 = vld [vmem:[#allocation23 + $0x728] sm:$0xff]
    %v3675 = vld [vmem:[#allocation23 + $0x730] sm:$0xff]
    %v3676 = vld [vmem:[#allocation23 + $0x738] sm:$0xff]
    %v3677 = vld [vmem:[#allocation23 + $0x740] sm:$0xff]
    %v3678 = vld [vmem:[#allocation23 + $0x748] sm:$0xff]
    %v3679 = vld [vmem:[#allocation23 + $0x750] sm:$0xff]
    %v3680 = vld [vmem:[#allocation23 + $0x758] sm:$0xff]
    %v3681 = vld [vmem:[#allocation23 + $0x760] sm:$0xff]
    %v3682 = vld [vmem:[#allocation23 + $0x768] sm:$0xff]
    %v3683 = vld [vmem:[#allocation23 + $0x770] sm:$0xff]
    %v3684 = vld [vmem:[#allocation23 + $0x778] sm:$0xff]
    %v3685 = vld [vmem:[#allocation23 + $0x780] sm:$0xff]
    %v3686 = vld [vmem:[#allocation23 + $0x788] sm:$0xff]
    %v3687 = vld [vmem:[#allocation23 + $0x790] sm:$0xff]
    %v3688 = vld [vmem:[#allocation23 + $0x798] sm:$0xff]
    %v3689 = vld [vmem:[#allocation23 + $0x7a0] sm:$0xff]
    %v3690 = vld [vmem:[#allocation23 + $0x7a8] sm:$0xff]
    %v3691 = vld [vmem:[#allocation23 + $0x7b0] sm:$0xff]
    %v3692 = vld [vmem:[#allocation23 + $0x7b8] sm:$0xff]
    %v3693 = vld [vmem:[#allocation23 + $0x7c0] sm:$0xff]
    %v3694 = vld [vmem:[#allocation23 + $0x7c8] sm:$0xff]
    %v3695 = vld [vmem:[#allocation23 + $0x7d0] sm:$0xff]
    %v3696 = vld [vmem:[#allocation23 + $0x7d8] sm:$0xff]
    %v3697 = vld [vmem:[#allocation23 + $0x7e0] sm:$0xff]
    %v3698 = vld [vmem:[#allocation23 + $0x7e8] sm:$0xff]
    %v3699 = vld [vmem:[#allocation23 + $0x7f0] sm:$0xff]
    %v3700 = vld [vmem:[#allocation23 + $0x7f8] sm:$0xff]
    %v3701 = vld [vmem:[#allocation23 + $0x800] sm:$0xff]
    %v3702 = vld [vmem:[#allocation23 + $0x808] sm:$0xff]
    %v3703 = vld [vmem:[#allocation23 + $0x810] sm:$0xff]
    %v3704 = vld [vmem:[#allocation23 + $0x818] sm:$0xff]
    %v3705 = vld [vmem:[#allocation23 + $0x820] sm:$0xff]
    %v3706 = vld [vmem:[#allocation23 + $0x828] sm:$0xff]
    %v3707 = vld [vmem:[#allocation23 + $0x830] sm:$0xff]
    %v3708 = vld [vmem:[#allocation23 + $0x838] sm:$0xff]
    %v3709 = vld [vmem:[#allocation23 + $0x840] sm:$0xff]
    %v3710 = vld [vmem:[#allocation23 + $0x848] sm:$0xff]
    %v3711 = vld [vmem:[#allocation23 + $0x850] sm:$0xff]
    %v3712 = vld [vmem:[#allocation23 + $0x858] sm:$0xff]
    %v3713 = vld [vmem:[#allocation23 + $0x860] sm:$0xff]
    %v3714 = vld [vmem:[#allocation23 + $0x868] sm:$0xff]
    %v3715 = vld [vmem:[#allocation23 + $0x870] sm:$0xff]
    %v3716 = vld [vmem:[#allocation23 + $0x878] sm:$0xff]
    %v3717 = vld [vmem:[#allocation23 + $0x880] sm:$0xff]
    %v3718 = vld [vmem:[#allocation23 + $0x888] sm:$0xff]
    %v3719 = vld [vmem:[#allocation23 + $0x890] sm:$0xff]
    %v3720 = vld [vmem:[#allocation23 + $0x898] sm:$0xff]
    %v3721 = vld [vmem:[#allocation23 + $0x8a0] sm:$0xff]
    %v3722 = vld [vmem:[#allocation23 + $0x8a8] sm:$0xff]
    %v3723 = vld [vmem:[#allocation23 + $0x8b0] sm:$0xff]
    %v3724 = vld [vmem:[#allocation23 + $0x8b8] sm:$0xff]
    %v3725 = vld [vmem:[#allocation23 + $0x8c0] sm:$0xff]
    %v3726 = vld [vmem:[#allocation23 + $0x8c8] sm:$0xff]
    %v3727 = vld [vmem:[#allocation23 + $0x8d0] sm:$0xff]
    %v3728 = vld [vmem:[#allocation23 + $0x8d8] sm:$0xff]
    %v3729 = vld [vmem:[#allocation23 + $0x8e0] sm:$0xff]
    %v3730 = vld [vmem:[#allocation23 + $0x8e8] sm:$0xff]
    %v3731 = vld [vmem:[#allocation23 + $0x8f0] sm:$0xff]
    %v3732 = vld [vmem:[#allocation23 + $0x8f8] sm:$0xff]
    %v3733 = vld [vmem:[#allocation23 + $0x900] sm:$0xff]
    %v3734 = vld [vmem:[#allocation23 + $0x908] sm:$0xff]
    %v3735 = vld [vmem:[#allocation23 + $0x910] sm:$0xff]
    %v3736 = vld [vmem:[#allocation23 + $0x918] sm:$0xff]
    %v3737 = vld [vmem:[#allocation23 + $0x920] sm:$0xff]
    %v3738 = vld [vmem:[#allocation23 + $0x928] sm:$0xff]
    %v3739 = vld [vmem:[#allocation23 + $0x930] sm:$0xff]
    %v3740 = vld [vmem:[#allocation23 + $0x938] sm:$0xff]
    %v3741 = vld [vmem:[#allocation23 + $0x940] sm:$0xff]
    %v3742 = vld [vmem:[#allocation23 + $0x948] sm:$0xff]
    %v3743 = vld [vmem:[#allocation23 + $0x950] sm:$0xff]
    %v3744 = vld [vmem:[#allocation23 + $0x958] sm:$0xff]
    %v3745 = vld [vmem:[#allocation23 + $0x960] sm:$0xff]
    %v3746 = vld [vmem:[#allocation23 + $0x968] sm:$0xff]
    %v3747 = vld [vmem:[#allocation23 + $0x970] sm:$0xff]
    %v3748 = vld [vmem:[#allocation23 + $0x978] sm:$0xff]
    %v3749 = vld [vmem:[#allocation23 + $0x980] sm:$0xff]
    %v3750 = vld [vmem:[#allocation23 + $0x988] sm:$0xff]
    %v3751 = vld [vmem:[#allocation23 + $0x990] sm:$0xff]
    %v3752 = vld [vmem:[#allocation23 + $0x998] sm:$0xff]
    %v3753 = vld [vmem:[#allocation23 + $0x9a0] sm:$0xff]
    %v3754 = vld [vmem:[#allocation23 + $0x9a8] sm:$0xff]
    %v3755 = vld [vmem:[#allocation23 + $0x9b0] sm:$0xff]
    %v3756 = vld [vmem:[#allocation23 + $0x9b8] sm:$0xff]
    %v3757 = vld [vmem:[#allocation23 + $0x9c0] sm:$0xff]
    %v3758 = vld [vmem:[#allocation23 + $0x9c8] sm:$0xff]
    %v3759 = vld [vmem:[#allocation23 + $0x9d0] sm:$0xff]
    %v3760 = vld [vmem:[#allocation23 + $0x9d8] sm:$0xff]
    %v3761 = vld [vmem:[#allocation23 + $0x9e0] sm:$0xff]
    %v3762 = vld [vmem:[#allocation23 + $0x9e8] sm:$0xff]
    %v3763 = vld [vmem:[#allocation23 + $0x9f0] sm:$0xff]
    %v3764 = vld [vmem:[#allocation23 + $0x9f8] sm:$0xff]
    %v3765 = vld [vmem:[#allocation23 + $0xa00] sm:$0xff]
    %v3766 = vld [vmem:[#allocation23 + $0xa08] sm:$0xff]
    %v3767 = vld [vmem:[#allocation23 + $0xa10] sm:$0xff]
    %v3768 = vld [vmem:[#allocation23 + $0xa18] sm:$0xff]
    %v3769 = vld [vmem:[#allocation23 + $0xa20] sm:$0xff]
    %v3770 = vld [vmem:[#allocation23 + $0xa28] sm:$0xff]
    %v3771 = vld [vmem:[#allocation23 + $0xa30] sm:$0xff]
    %v3772 = vld [vmem:[#allocation23 + $0xa38] sm:$0xff]
    %v3773 = vld [vmem:[#allocation23 + $0xa40] sm:$0xff]
    %v3774 = vld [vmem:[#allocation23 + $0xa48] sm:$0xff]
    %v3775 = vld [vmem:[#allocation23 + $0xa50] sm:$0xff]
    %v3776 = vld [vmem:[#allocation23 + $0xa58] sm:$0xff]
    %v3777 = vld [vmem:[#allocation23 + $0xa60] sm:$0xff]
    %v3778 = vld [vmem:[#allocation23 + $0xa68] sm:$0xff]
    %v3779 = vld [vmem:[#allocation23 + $0xa70] sm:$0xff]
    %v3780 = vld [vmem:[#allocation23 + $0xa78] sm:$0xff]
    %v3781 = vld [vmem:[#allocation23 + $0xa80] sm:$0xff]
    %v3782 = vld [vmem:[#allocation23 + $0xa88] sm:$0xff]
    %v3783 = vld [vmem:[#allocation23 + $0xa90] sm:$0xff]
    %v3784 = vld [vmem:[#allocation23 + $0xa98] sm:$0xff]
    %v3785 = vld [vmem:[#allocation23 + $0xaa0] sm:$0xff]
    %v3786 = vld [vmem:[#allocation23 + $0xaa8] sm:$0xff]
    %v3787 = vld [vmem:[#allocation23 + $0xab0] sm:$0xff]
    %v3788 = vld [vmem:[#allocation23 + $0xab8] sm:$0xff]
    %v3789 = vld [vmem:[#allocation23 + $0xac0] sm:$0xff]
    %v3790 = vld [vmem:[#allocation23 + $0xac8] sm:$0xff]
    %v3791 = vld [vmem:[#allocation23 + $0xad0] sm:$0xff]
    %v3792 = vld [vmem:[#allocation23 + $0xad8] sm:$0xff]
    %v3793 = vld [vmem:[#allocation23 + $0xae0] sm:$0xff]
    %v3794 = vld [vmem:[#allocation23 + $0xae8] sm:$0xff]
    %v3795 = vld [vmem:[#allocation23 + $0xaf0] sm:$0xff]
    %v3796 = vld [vmem:[#allocation23 + $0xaf8] sm:$0xff]
    %v3797 = vld [vmem:[#allocation23 + $0xb00] sm:$0xff]
    %v3798 = vld [vmem:[#allocation23 + $0xb08] sm:$0xff]
    %v3799 = vld [vmem:[#allocation23 + $0xb10] sm:$0xff]
    %v3800 = vld [vmem:[#allocation23 + $0xb18] sm:$0xff]
    %v3801 = vld [vmem:[#allocation23 + $0xb20] sm:$0xff]
    %v3802 = vld [vmem:[#allocation23 + $0xb28] sm:$0xff]
    %v3803 = vld [vmem:[#allocation23 + $0xb30] sm:$0xff]
    %v3804 = vld [vmem:[#allocation23 + $0xb38] sm:$0xff]
    %v3805 = vld [vmem:[#allocation23 + $0xb40] sm:$0xff]
    %v3806 = vld [vmem:[#allocation23 + $0xb48] sm:$0xff]
    %v3807 = vld [vmem:[#allocation23 + $0xb50] sm:$0xff]
    %v3808 = vld [vmem:[#allocation23 + $0xb58] sm:$0xff]
    %v3809 = vld [vmem:[#allocation23 + $0xb60] sm:$0xff]
    %v3810 = vld [vmem:[#allocation23 + $0xb68] sm:$0xff]
    %v3811 = vld [vmem:[#allocation23 + $0xb70] sm:$0xff]
    %v3812 = vld [vmem:[#allocation23 + $0xb78] sm:$0xff]
    %v3813 = vld [vmem:[#allocation23 + $0xb80] sm:$0xff]
    %v3814 = vld [vmem:[#allocation23 + $0xb88] sm:$0xff]
    %v3815 = vld [vmem:[#allocation23 + $0xb90] sm:$0xff]
    %v3816 = vld [vmem:[#allocation23 + $0xb98] sm:$0xff]
    %v3817 = vld [vmem:[#allocation23 + $0xba0] sm:$0xff]
    %v3818 = vld [vmem:[#allocation23 + $0xba8] sm:$0xff]
    %v3819 = vld [vmem:[#allocation23 + $0xbb0] sm:$0xff]
    %v3820 = vld [vmem:[#allocation23 + $0xbb8] sm:$0xff]
    %v3821 = vld [vmem:[#allocation23 + $0xbc0] sm:$0xff]
    %v3822 = vld [vmem:[#allocation23 + $0xbc8] sm:$0xff]
    %v3823 = vld [vmem:[#allocation23 + $0xbd0] sm:$0xff]
    %v3824 = vld [vmem:[#allocation23 + $0xbd8] sm:$0xff]
    %v3825 = vld [vmem:[#allocation23 + $0xbe0] sm:$0xff]
    %v3826 = vld [vmem:[#allocation23 + $0xbe8] sm:$0xff]
    %v3827 = vld [vmem:[#allocation23 + $0xbf0] sm:$0xff]
    %v3828 = vld [vmem:[#allocation23 + $0xbf8] sm:$0xff]
    %v3829 = vld [vmem:[#allocation23 + $0xc00] sm:$0xff]
    %v3830 = vld [vmem:[#allocation23 + $0xc08] sm:$0xff]
    %v3831 = vld [vmem:[#allocation23 + $0xc10] sm:$0xff]
    %v3832 = vld [vmem:[#allocation23 + $0xc18] sm:$0xff]
    %v3833 = vld [vmem:[#allocation23 + $0xc20] sm:$0xff]
    %v3834 = vld [vmem:[#allocation23 + $0xc28] sm:$0xff]
    %v3835 = vld [vmem:[#allocation23 + $0xc30] sm:$0xff]
    %v3836 = vld [vmem:[#allocation23 + $0xc38] sm:$0xff]
    %v3837 = vld [vmem:[#allocation23 + $0xc40] sm:$0xff]
    %v3838 = vld [vmem:[#allocation23 + $0xc48] sm:$0xff]
    %v3839 = vld [vmem:[#allocation23 + $0xc50] sm:$0xff]
    %v3840 = vld [vmem:[#allocation23 + $0xc58] sm:$0xff]
    %v3841 = vld [vmem:[#allocation23 + $0xc60] sm:$0xff]
    %v3842 = vld [vmem:[#allocation23 + $0xc68] sm:$0xff]
    %v3843 = vld [vmem:[#allocation23 + $0xc70] sm:$0xff]
    %v3844 = vld [vmem:[#allocation23 + $0xc78] sm:$0xff]
    %v3845 = vld [vmem:[#allocation23 + $0xc80] sm:$0xff]
    %v3846 = vld [vmem:[#allocation23 + $0xc88] sm:$0xff]
    %v3847 = vld [vmem:[#allocation23 + $0xc90] sm:$0xff]
    %v3848 = vld [vmem:[#allocation23 + $0xc98] sm:$0xff]
    %v3849 = vld [vmem:[#allocation23 + $0xca0] sm:$0xff]
    %v3850 = vld [vmem:[#allocation23 + $0xca8] sm:$0xff]
    %v3851 = vld [vmem:[#allocation23 + $0xcb0] sm:$0xff]
    %v3852 = vld [vmem:[#allocation23 + $0xcb8] sm:$0xff]
    %v3853 = vld [vmem:[#allocation23 + $0xcc0] sm:$0xff]
    %v3854 = vld [vmem:[#allocation23 + $0xcc8] sm:$0xff]
    %v3855 = vld [vmem:[#allocation23 + $0xcd0] sm:$0xff]
    %v3856 = vld [vmem:[#allocation23 + $0xcd8] sm:$0xff]
    %v3857 = vld [vmem:[#allocation23 + $0xce0] sm:$0xff]
    %v3858 = vld [vmem:[#allocation23 + $0xce8] sm:$0xff]
    %v3859 = vld [vmem:[#allocation23 + $0xcf0] sm:$0xff]
    %v3860 = vld [vmem:[#allocation23 + $0xcf8] sm:$0xff]
    %v3861 = vld [vmem:[#allocation23 + $0xd00] sm:$0xff]
    %v3862 = vld [vmem:[#allocation23 + $0xd08] sm:$0xff]
    %v3863 = vld [vmem:[#allocation23 + $0xd10] sm:$0xff]
    %v3864 = vld [vmem:[#allocation23 + $0xd18] sm:$0xff]
    %v3865 = vld [vmem:[#allocation23 + $0xd20] sm:$0xff]
    %v3866 = vld [vmem:[#allocation23 + $0xd28] sm:$0xff]
    %v3867 = vld [vmem:[#allocation23 + $0xd30] sm:$0xff]
    %v3868 = vld [vmem:[#allocation23 + $0xd38] sm:$0xff]
    %v3869 = vld [vmem:[#allocation23 + $0xd40] sm:$0xff]
    %v3870 = vld [vmem:[#allocation23 + $0xd48] sm:$0xff]
    %v3871 = vld [vmem:[#allocation23 + $0xd50] sm:$0xff]
    %v3872 = vld [vmem:[#allocation23 + $0xd58] sm:$0xff]
    %v3873 = vld [vmem:[#allocation23 + $0xd60] sm:$0xff]
    %v3874 = vld [vmem:[#allocation23 + $0xd68] sm:$0xff]
    %v3875 = vld [vmem:[#allocation23 + $0xd70] sm:$0xff]
    %v3876 = vld [vmem:[#allocation23 + $0xd78] sm:$0xff]
    %v3877 = vld [vmem:[#allocation23 + $0xd80] sm:$0xff]
    %v3878 = vld [vmem:[#allocation23 + $0xd88] sm:$0xff]
    %v3879 = vld [vmem:[#allocation23 + $0xd90] sm:$0xff]
    %v3880 = vld [vmem:[#allocation23 + $0xd98] sm:$0xff]
    %v3881 = vld [vmem:[#allocation23 + $0xda0] sm:$0xff]
    %v3882 = vld [vmem:[#allocation23 + $0xda8] sm:$0xff]
    %v3883 = vld [vmem:[#allocation23 + $0xdb0] sm:$0xff]
    %v3884 = vld [vmem:[#allocation23 + $0xdb8] sm:$0xff]
    %v3885 = vld [vmem:[#allocation23 + $0xdc0] sm:$0xff]
    %v3886 = vld [vmem:[#allocation23 + $0xdc8] sm:$0xff]
    %v3887 = vld [vmem:[#allocation23 + $0xdd0] sm:$0xff]
    %v3888 = vld [vmem:[#allocation23 + $0xdd8] sm:$0xff]
    %v3889 = vld [vmem:[#allocation23 + $0xde0] sm:$0xff]
    %v3890 = vld [vmem:[#allocation23 + $0xde8] sm:$0xff]
    %v3891 = vld [vmem:[#allocation23 + $0xdf0] sm:$0xff]
    %v3892 = vld [vmem:[#allocation23 + $0xdf8] sm:$0xff]
    %v3893 = vld [vmem:[#allocation23 + $0xe00] sm:$0xff]
    %v3894 = vld [vmem:[#allocation23 + $0xe08] sm:$0xff]
    %v3895 = vld [vmem:[#allocation23 + $0xe10] sm:$0xff]
    %v3896 = vld [vmem:[#allocation23 + $0xe18] sm:$0xff]
    %v3897 = vld [vmem:[#allocation23 + $0xe20] sm:$0xff]
    %v3898 = vld [vmem:[#allocation23 + $0xe28] sm:$0xff]
    %v3899 = vld [vmem:[#allocation23 + $0xe30] sm:$0xff]
    %v3900 = vld [vmem:[#allocation23 + $0xe38] sm:$0xff]
    %v3901 = vld [vmem:[#allocation23 + $0xe40] sm:$0xff]
    %v3902 = vld [vmem:[#allocation23 + $0xe48] sm:$0xff]
    %v3903 = vld [vmem:[#allocation23 + $0xe50] sm:$0xff]
    %v3904 = vld [vmem:[#allocation23 + $0xe58] sm:$0xff]
    %v3905 = vld [vmem:[#allocation23 + $0xe60] sm:$0xff]
    %v3906 = vld [vmem:[#allocation23 + $0xe68] sm:$0xff]
    %v3907 = vld [vmem:[#allocation23 + $0xe70] sm:$0xff]
    %v3908 = vld [vmem:[#allocation23 + $0xe78] sm:$0xff]
    %v3909 = vld [vmem:[#allocation23 + $0xe80] sm:$0xff]
    %v3910 = vld [vmem:[#allocation23 + $0xe88] sm:$0xff]
    %v3911 = vld [vmem:[#allocation23 + $0xe90] sm:$0xff]
    %v3912 = vld [vmem:[#allocation23 + $0xe98] sm:$0xff]
    %v3913 = vld [vmem:[#allocation23 + $0xea0] sm:$0xff]
    %v3914 = vld [vmem:[#allocation23 + $0xea8] sm:$0xff]
    %v3915 = vld [vmem:[#allocation23 + $0xeb0] sm:$0xff]
    %v3916 = vld [vmem:[#allocation23 + $0xeb8] sm:$0xff]
    %v3917 = vld [vmem:[#allocation23 + $0xec0] sm:$0xff]
    %v3918 = vld [vmem:[#allocation23 + $0xec8] sm:$0xff]
    %v3919 = vld [vmem:[#allocation23 + $0xed0] sm:$0xff]
    %v3920 = vld [vmem:[#allocation23 + $0xed8] sm:$0xff]
    %v3921 = vld [vmem:[#allocation23 + $0xee0] sm:$0xff]
    %v3922 = vld [vmem:[#allocation23 + $0xee8] sm:$0xff]
    %v3923 = vld [vmem:[#allocation23 + $0xef0] sm:$0xff]
    %v3924 = vld [vmem:[#allocation23 + $0xef8] sm:$0xff]
    %v3925 = vld [vmem:[#allocation23 + $0xf00] sm:$0xff]
    %v3926 = vld [vmem:[#allocation23 + $0xf08] sm:$0xff]
    %v3927 = vld [vmem:[#allocation23 + $0xf10] sm:$0xff]
    %v3928 = vld [vmem:[#allocation23 + $0xf18] sm:$0xff]
    %v3929 = vld [vmem:[#allocation23 + $0xf20] sm:$0xff]
    %v3930 = vld [vmem:[#allocation23 + $0xf28] sm:$0xff]
    %v3931 = vld [vmem:[#allocation23 + $0xf30] sm:$0xff]
    %v3932 = vld [vmem:[#allocation23 + $0xf38] sm:$0xff]
    %v3933 = vld [vmem:[#allocation23 + $0xf40] sm:$0xff]
    %v3934 = vld [vmem:[#allocation23 + $0xf48] sm:$0xff]
    %v3935 = vld [vmem:[#allocation23 + $0xf50] sm:$0xff]
    %v3936 = vld [vmem:[#allocation23 + $0xf58] sm:$0xff]
    %v3937 = vld [vmem:[#allocation23 + $0xf60] sm:$0xff]
    %v3938 = vld [vmem:[#allocation23 + $0xf68] sm:$0xff]
    %v3939 = vld [vmem:[#allocation23 + $0xf70] sm:$0xff]
    %v3940 = vld [vmem:[#allocation23 + $0xf78] sm:$0xff]
    %v3941 = vld [vmem:[#allocation23 + $0xf80] sm:$0xff]
    %v3942 = vld [vmem:[#allocation23 + $0xf88] sm:$0xff]
    %v3943 = vld [vmem:[#allocation23 + $0xf90] sm:$0xff]
    %v3944 = vld [vmem:[#allocation23 + $0xf98] sm:$0xff]
    %v3945 = vld [vmem:[#allocation23 + $0xfa0] sm:$0xff]
    %v3946 = vld [vmem:[#allocation23 + $0xfa8] sm:$0xff]
    %v3947 = vld [vmem:[#allocation23 + $0xfb0] sm:$0xff]
    %v3948 = vld [vmem:[#allocation23 + $0xfb8] sm:$0xff]
    %v3949 = vld [vmem:[#allocation23 + $0xfc0] sm:$0xff]
    %v3950 = vld [vmem:[#allocation23 + $0xfc8] sm:$0xff]
    %v3951 = vld [vmem:[#allocation23 + $0xfd0] sm:$0xff]
    %v3952 = vld [vmem:[#allocation23 + $0xfd8] sm:$0xff]
    %v3953 = vld [vmem:[#allocation23 + $0xfe0] sm:$0xff]
    %v3954 = vld [vmem:[#allocation23 + $0xfe8] sm:$0xff]
    %v3955 = vld [vmem:[#allocation23 + $0xff0] sm:$0xff]
    %v3956 = vld [vmem:[#allocation23 + $0xff8] sm:$0xff]
    %v3957 = vld [vmem:[#allocation23 + $0x1000] sm:$0xff]
    %v3958 = vld [vmem:[#allocation23 + $0x1008] sm:$0xff]
    %v3959 = vld [vmem:[#allocation23 + $0x1010] sm:$0xff]
    %v3960 = vld [vmem:[#allocation23 + $0x1018] sm:$0xff]
    %v3961 = vld [vmem:[#allocation23 + $0x1020] sm:$0xff]
    %v3962 = vld [vmem:[#allocation23 + $0x1028] sm:$0xff]
    %v3963 = vld [vmem:[#allocation23 + $0x1030] sm:$0xff]
    %v3964 = vld [vmem:[#allocation23 + $0x1038] sm:$0xff]
    %v3965 = vld [vmem:[#allocation23 + $0x1040] sm:$0xff]
    %v3966 = vld [vmem:[#allocation23 + $0x1048] sm:$0xff]
    %v3967 = vld [vmem:[#allocation23 + $0x1050] sm:$0xff]
    %v3968 = vld [vmem:[#allocation23 + $0x1058] sm:$0xff]
    %v3969 = vld [vmem:[#allocation23 + $0x1060] sm:$0xff]
    %v3970 = vld [vmem:[#allocation23 + $0x1068] sm:$0xff]
    %v3971 = vld [vmem:[#allocation23 + $0x1070] sm:$0xff]
    %v3972 = vld [vmem:[#allocation23 + $0x1078] sm:$0xff]
    %v3973 = vld [vmem:[#allocation23 + $0x1080] sm:$0xff]
    %v3974 = vld [vmem:[#allocation23 + $0x1088] sm:$0xff]
    %v3975 = vld [vmem:[#allocation23 + $0x1090] sm:$0xff]
    %v3976 = vld [vmem:[#allocation23 + $0x1098] sm:$0xff]
    %v3977 = vld [vmem:[#allocation23 + $0x10a0] sm:$0xff]
    %v3978 = vld [vmem:[#allocation23 + $0x10a8] sm:$0xff]
    %v3979 = vld [vmem:[#allocation23 + $0x10b0] sm:$0xff]
    %v3980 = vld [vmem:[#allocation23 + $0x10b8] sm:$0xff]
    %v3981 = vld [vmem:[#allocation23 + $0x10c0] sm:$0xff]
    %v3982 = vld [vmem:[#allocation23 + $0x10c8] sm:$0xff]
    %v3983 = vld [vmem:[#allocation23 + $0x10d0] sm:$0xff]
    %v3984 = vld [vmem:[#allocation23 + $0x10d8] sm:$0xff]
    %v3985 = vld [vmem:[#allocation23 + $0x10e0] sm:$0xff]
    %v3986 = vld [vmem:[#allocation23 + $0x10e8] sm:$0xff]
    %v3987 = vld [vmem:[#allocation23 + $0x10f0] sm:$0xff]
    %v3988 = vld [vmem:[#allocation23 + $0x10f8] sm:$0xff]
    %v3989 = vld [vmem:[#allocation23 + $0x1100] sm:$0xff]
    %v3990 = vld [vmem:[#allocation23 + $0x1108] sm:$0xff]
    %v3991 = vld [vmem:[#allocation23 + $0x1110] sm:$0xff]
    %v3992 = vld [vmem:[#allocation23 + $0x1118] sm:$0xff]
    %v3993 = vld [vmem:[#allocation23 + $0x1120] sm:$0xff]
    %v3994 = vld [vmem:[#allocation23 + $0x1128] sm:$0xff]
    %v3995 = vld [vmem:[#allocation23 + $0x1130] sm:$0xff]
    %v3996 = vld [vmem:[#allocation23 + $0x1138] sm:$0xff]
    %v3997 = vld [vmem:[#allocation23 + $0x1140] sm:$0xff]
    %v3998 = vld [vmem:[#allocation23 + $0x1148] sm:$0xff]
    %v3999 = vld [vmem:[#allocation23 + $0x1150] sm:$0xff]
    %v4000 = vld [vmem:[#allocation23 + $0x1158] sm:$0xff]
    %v4001 = vld [vmem:[#allocation23 + $0x1160] sm:$0xff]
    %v4002 = vld [vmem:[#allocation23 + $0x1168] sm:$0xff]
    %v4003 = vld [vmem:[#allocation23 + $0x1170] sm:$0xff]
    %v4004 = vld [vmem:[#allocation23 + $0x1178] sm:$0xff]
    %v4005 = vld [vmem:[#allocation23 + $0x1180] sm:$0xff]
    %v4006 = vld [vmem:[#allocation23 + $0x1188] sm:$0xff]
    %v4007 = vld [vmem:[#allocation23 + $0x1190] sm:$0xff]
    %v4008 = vld [vmem:[#allocation23 + $0x1198] sm:$0xff]
    %v4009 = vld [vmem:[#allocation23 + $0x11a0] sm:$0xff]
    %v4010 = vld [vmem:[#allocation23 + $0x11a8] sm:$0xff]
    %v4011 = vld [vmem:[#allocation23 + $0x11b0] sm:$0xff]
    %v4012 = vld [vmem:[#allocation23 + $0x11b8] sm:$0xff]
    %v4013 = vld [vmem:[#allocation23 + $0x11c0] sm:$0xff]
    %v4014 = vld [vmem:[#allocation23 + $0x11c8] sm:$0xff]
    %v4015 = vld [vmem:[#allocation23 + $0x11d0] sm:$0xff]
    %v4016 = vld [vmem:[#allocation23 + $0x11d8] sm:$0xff]
    %v4017 = vld [vmem:[#allocation23 + $0x11e0] sm:$0xff]
    %v4018 = vld [vmem:[#allocation23 + $0x11e8] sm:$0xff]
    %v4019 = vld [vmem:[#allocation23 + $0x11f0] sm:$0xff]
    %v4020 = vld [vmem:[#allocation23 + $0x11f8] sm:$0xff]
    %v4021 = vld [vmem:[#allocation23 + $0x1200] sm:$0xff]
    %v4022 = vld [vmem:[#allocation23 + $0x1208] sm:$0xff]
    %v4023 = vld [vmem:[#allocation23 + $0x1210] sm:$0xff]
    %v4024 = vld [vmem:[#allocation23 + $0x1218] sm:$0xff]
    %v4025 = vld [vmem:[#allocation23 + $0x1220] sm:$0xff]
    %v4026 = vld [vmem:[#allocation23 + $0x1228] sm:$0xff]
    %v4027 = vld [vmem:[#allocation23 + $0x1230] sm:$0xff]
    %v4028 = vld [vmem:[#allocation23 + $0x1238] sm:$0xff]
    %v4029 = vld [vmem:[#allocation23 + $0x1240] sm:$0xff]
    %v4030 = vld [vmem:[#allocation23 + $0x1248] sm:$0xff]
    %v4031 = vld [vmem:[#allocation23 + $0x1250] sm:$0xff]
    %v4032 = vld [vmem:[#allocation23 + $0x1258] sm:$0xff]
    %v4033 = vld [vmem:[#allocation23 + $0x1260] sm:$0xff]
    %v4034 = vld [vmem:[#allocation23 + $0x1268] sm:$0xff]
    %v4035 = vld [vmem:[#allocation23 + $0x1270] sm:$0xff]
    %v4036 = vld [vmem:[#allocation23 + $0x1278] sm:$0xff]
    %v4037 = vld [vmem:[#allocation23 + $0x1280] sm:$0xff]
    %v4038 = vld [vmem:[#allocation23 + $0x1288] sm:$0xff]
    %v4039 = vld [vmem:[#allocation23 + $0x1290] sm:$0xff]
    %v4040 = vld [vmem:[#allocation23 + $0x1298] sm:$0xff]
    %v4041 = vld [vmem:[#allocation23 + $0x12a0] sm:$0xff]
    %v4042 = vld [vmem:[#allocation23 + $0x12a8] sm:$0xff]
    %v4043 = vld [vmem:[#allocation23 + $0x12b0] sm:$0xff]
    %v4044 = vld [vmem:[#allocation23 + $0x12b8] sm:$0xff]
    %v4045 = vld [vmem:[#allocation23 + $0x12c0] sm:$0xff]
    %v4046 = vld [vmem:[#allocation23 + $0x12c8] sm:$0xff]
    %v4047 = vld [vmem:[#allocation23 + $0x12d0] sm:$0xff]
    %v4048 = vld [vmem:[#allocation23 + $0x12d8] sm:$0xff]
    %v4049 = vld [vmem:[#allocation23 + $0x12e0] sm:$0xff]
    %v4050 = vld [vmem:[#allocation23 + $0x12e8] sm:$0xff]
    %v4051 = vld [vmem:[#allocation23 + $0x12f0] sm:$0xff]
    %v4052 = vld [vmem:[#allocation23 + $0x12f8] sm:$0xff]
    %v4053 = vld [vmem:[#allocation23 + $0x1300] sm:$0xff]
    %v4054 = vld [vmem:[#allocation23 + $0x1308] sm:$0xff]
    %v4055 = vld [vmem:[#allocation23 + $0x1310] sm:$0xff]
    %v4056 = vld [vmem:[#allocation23 + $0x1318] sm:$0xff]
    %v4057 = vld [vmem:[#allocation23 + $0x1320] sm:$0xff]
    %v4058 = vld [vmem:[#allocation23 + $0x1328] sm:$0xff]
    %v4059 = vld [vmem:[#allocation23 + $0x1330] sm:$0xff]
    %v4060 = vld [vmem:[#allocation23 + $0x1338] sm:$0xff]
    %v4061 = vld [vmem:[#allocation23 + $0x1340] sm:$0xff]
    %v4062 = vld [vmem:[#allocation23 + $0x1348] sm:$0xff]
    %v4063 = vld [vmem:[#allocation23 + $0x1350] sm:$0xff]
    %v4064 = vld [vmem:[#allocation23 + $0x1358] sm:$0xff]
    %v4065 = vld [vmem:[#allocation23 + $0x1360] sm:$0xff]
    %v4066 = vld [vmem:[#allocation23 + $0x1368] sm:$0xff]
    %v4067 = vld [vmem:[#allocation23 + $0x1370] sm:$0xff]
    %v4068 = vld [vmem:[#allocation23 + $0x1378] sm:$0xff]
    %v4069 = vld [vmem:[#allocation23 + $0x1380] sm:$0xff]
    %v4070 = vld [vmem:[#allocation23 + $0x1388] sm:$0xff]
    %v4071 = vld [vmem:[#allocation23 + $0x1390] sm:$0xff]
    %v4072 = vld [vmem:[#allocation23 + $0x1398] sm:$0xff]
    %v4073 = vld [vmem:[#allocation23 + $0x13a0] sm:$0xff]
    %v4074 = vld [vmem:[#allocation23 + $0x13a8] sm:$0xff]
    %v4075 = vld [vmem:[#allocation23 + $0x13b0] sm:$0xff]
    %v4076 = vld [vmem:[#allocation23 + $0x13b8] sm:$0xff]
    %v4077 = vld [vmem:[#allocation23 + $0x13c0] sm:$0xff]
    %v4078 = vld [vmem:[#allocation23 + $0x13c8] sm:$0xff]
    %v4079 = vld [vmem:[#allocation23 + $0x13d0] sm:$0xff]
    %v4080 = vld [vmem:[#allocation23 + $0x13d8] sm:$0xff]
    %v4081 = vld [vmem:[#allocation23 + $0x13e0] sm:$0xff]
    %v4082 = vld [vmem:[#allocation23 + $0x13e8] sm:$0xff]
    %v4083 = vld [vmem:[#allocation23 + $0x13f0] sm:$0xff]
    %v4084 = vld [vmem:[#allocation23 + $0x13f8] sm:$0xff]
    %v4085 = vld [vmem:[#allocation23 + $0x1400] sm:$0xff]
    %v4086 = vld [vmem:[#allocation23 + $0x1408] sm:$0xff]
    %v4087 = vld [vmem:[#allocation23 + $0x1410] sm:$0xff]
    %v4088 = vld [vmem:[#allocation23 + $0x1418] sm:$0xff]
    %v4089 = vld [vmem:[#allocation23 + $0x1420] sm:$0xff]
    %v4090 = vld [vmem:[#allocation23 + $0x1428] sm:$0xff]
    %v4091 = vld [vmem:[#allocation23 + $0x1430] sm:$0xff]
    %v4092 = vld [vmem:[#allocation23 + $0x1438] sm:$0xff]
    %v4093 = vld [vmem:[#allocation23 + $0x1440] sm:$0xff]
    %v4094 = vld [vmem:[#allocation23 + $0x1448] sm:$0xff]
    %v4095 = vld [vmem:[#allocation23 + $0x1450] sm:$0xff]
    %v4096 = vld [vmem:[#allocation23 + $0x1458] sm:$0xff]
    %v4097 = vld [vmem:[#allocation23 + $0x1460] sm:$0xff]
    %v4098 = vld [vmem:[#allocation23 + $0x1468] sm:$0xff]
    %v4099 = vld [vmem:[#allocation23 + $0x1470] sm:$0xff]
    %v4100 = vld [vmem:[#allocation23 + $0x1478] sm:$0xff]
    %v4101 = vld [vmem:[#allocation23 + $0x1480] sm:$0xff]
    %v4102 = vld [vmem:[#allocation23 + $0x1488] sm:$0xff]
    %v4103 = vld [vmem:[#allocation23 + $0x1490] sm:$0xff]
    %v4104 = vld [vmem:[#allocation23 + $0x1498] sm:$0xff]
    %v4105 = vld [vmem:[#allocation23 + $0x14a0] sm:$0xff]
    %v4106 = vld [vmem:[#allocation23 + $0x14a8] sm:$0xff]
    %v4107 = vld [vmem:[#allocation23 + $0x14b0] sm:$0xff]
    %v4108 = vld [vmem:[#allocation23 + $0x14b8] sm:$0xff]
    %v4109 = vld [vmem:[#allocation23 + $0x14c0] sm:$0xff]
    %v4110 = vld [vmem:[#allocation23 + $0x14c8] sm:$0xff]
    %v4111 = vld [vmem:[#allocation23 + $0x14d0] sm:$0xff]
    %v4112 = vld [vmem:[#allocation23 + $0x14d8] sm:$0xff]
    %v4113 = vld [vmem:[#allocation23 + $0x14e0] sm:$0xff]
    %v4114 = vld [vmem:[#allocation23 + $0x14e8] sm:$0xff]
    %v4115 = vld [vmem:[#allocation23 + $0x14f0] sm:$0xff]
    %v4116 = vld [vmem:[#allocation23 + $0x14f8] sm:$0xff]
    %v4117 = vld [vmem:[#allocation23 + $0x1500] sm:$0xff]
    %v4118 = vld [vmem:[#allocation23 + $0x1508] sm:$0xff]
    %v4119 = vld [vmem:[#allocation23 + $0x1510] sm:$0xff]
    %v4120 = vld [vmem:[#allocation23 + $0x1518] sm:$0xff]
    %v4121 = vld [vmem:[#allocation23 + $0x1520] sm:$0xff]
    %v4122 = vld [vmem:[#allocation23 + $0x1528] sm:$0xff]
    %v4123 = vld [vmem:[#allocation23 + $0x1530] sm:$0xff]
    %v4124 = vld [vmem:[#allocation23 + $0x1538] sm:$0xff]
    %v4125 = vld [vmem:[#allocation23 + $0x1540] sm:$0xff]
    %v4126 = vld [vmem:[#allocation23 + $0x1548] sm:$0xff]
    %v4127 = vld [vmem:[#allocation23 + $0x1550] sm:$0xff]
    %v4128 = vld [vmem:[#allocation23 + $0x1558] sm:$0xff]
    %v4129 = vld [vmem:[#allocation23 + $0x1560] sm:$0xff]
    %v4130 = vld [vmem:[#allocation23 + $0x1568] sm:$0xff]
    %v4131 = vld [vmem:[#allocation23 + $0x1570] sm:$0xff]
    %v4132 = vld [vmem:[#allocation23 + $0x1578] sm:$0xff]
    %v4133 = vld [vmem:[#allocation23 + $0x1580] sm:$0xff]
    %v4134 = vld [vmem:[#allocation23 + $0x1588] sm:$0xff]
    %v4135 = vld [vmem:[#allocation23 + $0x1590] sm:$0xff]
    %v4136 = vld [vmem:[#allocation23 + $0x1598] sm:$0xff]
    %v4137 = vld [vmem:[#allocation23 + $0x15a0] sm:$0xff]
    %v4138 = vld [vmem:[#allocation23 + $0x15a8] sm:$0xff]
    %v4139 = vld [vmem:[#allocation23 + $0x15b0] sm:$0xff]
    %v4140 = vld [vmem:[#allocation23 + $0x15b8] sm:$0xff]
    %v4141 = vld [vmem:[#allocation23 + $0x15c0] sm:$0xff]
    %v4142 = vld [vmem:[#allocation23 + $0x15c8] sm:$0xff]
    %v4143 = vld [vmem:[#allocation23 + $0x15d0] sm:$0xff]
    %v4144 = vld [vmem:[#allocation23 + $0x15d8] sm:$0xff]
    %v4145 = vld [vmem:[#allocation23 + $0x15e0] sm:$0xff]
    %v4146 = vld [vmem:[#allocation23 + $0x15e8] sm:$0xff]
    %v4147 = vld [vmem:[#allocation23 + $0x15f0] sm:$0xff]
    %v4148 = vld [vmem:[#allocation23 + $0x15f8] sm:$0xff]
    %v4149 = vld [vmem:[#allocation23 + $0x1600] sm:$0xff]
    %v4150 = vld [vmem:[#allocation23 + $0x1608] sm:$0xff]
    %v4151 = vld [vmem:[#allocation23 + $0x1610] sm:$0xff]
    %v4152 = vld [vmem:[#allocation23 + $0x1618] sm:$0xff]
    %v4153 = vld [vmem:[#allocation23 + $0x1620] sm:$0xff]
    %v4154 = vld [vmem:[#allocation23 + $0x1628] sm:$0xff]
    %v4155 = vld [vmem:[#allocation23 + $0x1630] sm:$0xff]
    %v4156 = vld [vmem:[#allocation23 + $0x1638] sm:$0xff]
    %v4157 = vld [vmem:[#allocation23 + $0x1640] sm:$0xff]
    %v4158 = vld [vmem:[#allocation23 + $0x1648] sm:$0xff]
    %v4159 = vld [vmem:[#allocation23 + $0x1650] sm:$0xff]
    %v4160 = vld [vmem:[#allocation23 + $0x1658] sm:$0xff]
    %v4161 = vld [vmem:[#allocation23 + $0x1660] sm:$0xff]
    %v4162 = vld [vmem:[#allocation23 + $0x1668] sm:$0xff]
    %v4163 = vld [vmem:[#allocation23 + $0x1670] sm:$0xff]
    %v4164 = vld [vmem:[#allocation23 + $0x1678] sm:$0xff]
    %v4165 = vld [vmem:[#allocation23 + $0x1680] sm:$0xff]
    %v4166 = vld [vmem:[#allocation23 + $0x1688] sm:$0xff]
    %v4167 = vld [vmem:[#allocation23 + $0x1690] sm:$0xff]
    %v4168 = vld [vmem:[#allocation23 + $0x1698] sm:$0xff]
    %v4169 = vld [vmem:[#allocation23 + $0x16a0] sm:$0xff]
    %v4170 = vld [vmem:[#allocation23 + $0x16a8] sm:$0xff]
    %v4171 = vld [vmem:[#allocation23 + $0x16b0] sm:$0xff]
    %v4172 = vld [vmem:[#allocation23 + $0x16b8] sm:$0xff]
    %v4173 = vld [vmem:[#allocation23 + $0x16c0] sm:$0xff]
    %v4174 = vld [vmem:[#allocation23 + $0x16c8] sm:$0xff]
    %v4175 = vld [vmem:[#allocation23 + $0x16d0] sm:$0xff]
    %v4176 = vld [vmem:[#allocation23 + $0x16d8] sm:$0xff]
    %v4177 = vld [vmem:[#allocation23 + $0x16e0] sm:$0xff]
    %v4178 = vld [vmem:[#allocation23 + $0x16e8] sm:$0xff]
    %v4179 = vld [vmem:[#allocation23 + $0x16f0] sm:$0xff]
    %v4180 = vld [vmem:[#allocation23 + $0x16f8] sm:$0xff]
    %v4181 = vld [vmem:[#allocation23 + $0x1700] sm:$0xff]
    %v4182 = vld [vmem:[#allocation23 + $0x1708] sm:$0xff]
    %v4183 = vld [vmem:[#allocation23 + $0x1710] sm:$0xff]
    %v4184 = vld [vmem:[#allocation23 + $0x1718] sm:$0xff]
    %v4185 = vld [vmem:[#allocation23 + $0x1720] sm:$0xff]
    %v4186 = vld [vmem:[#allocation23 + $0x1728] sm:$0xff]
    %v4187 = vld [vmem:[#allocation23 + $0x1730] sm:$0xff]
    %v4188 = vld [vmem:[#allocation23 + $0x1738] sm:$0xff]
    %v4189 = vld [vmem:[#allocation23 + $0x1740] sm:$0xff]
    %v4190 = vld [vmem:[#allocation23 + $0x1748] sm:$0xff]
    %v4191 = vld [vmem:[#allocation23 + $0x1750] sm:$0xff]
    %v4192 = vld [vmem:[#allocation23 + $0x1758] sm:$0xff]
    %v4193 = vld [vmem:[#allocation23 + $0x1760] sm:$0xff]
    %v4194 = vld [vmem:[#allocation23 + $0x1768] sm:$0xff]
    %v4195 = vld [vmem:[#allocation23 + $0x1770] sm:$0xff]
    %v4196 = vld [vmem:[#allocation23 + $0x1778] sm:$0xff]
    %v4197 = vld [vmem:[#allocation23 + $0x1780] sm:$0xff]
    %v4198 = vld [vmem:[#allocation23 + $0x1788] sm:$0xff]
    %v4199 = vld [vmem:[#allocation23 + $0x1790] sm:$0xff]
    %v4200 = vld [vmem:[#allocation23 + $0x1798] sm:$0xff]
    %v4201 = vld [vmem:[#allocation23 + $0x17a0] sm:$0xff]
    %v4202 = vld [vmem:[#allocation23 + $0x17a8] sm:$0xff]
    %v4203 = vld [vmem:[#allocation23 + $0x17b0] sm:$0xff]
    %v4204 = vld [vmem:[#allocation23 + $0x17b8] sm:$0xff]
    %v4205 = vld [vmem:[#allocation23 + $0x17c0] sm:$0xff]
    %v4206 = vld [vmem:[#allocation23 + $0x17c8] sm:$0xff]
    %v4207 = vld [vmem:[#allocation23 + $0x17d0] sm:$0xff]
    %v4208 = vld [vmem:[#allocation23 + $0x17d8] sm:$0xff]
    %v4209 = vld [vmem:[#allocation23 + $0x17e0] sm:$0xff]
    %v4210 = vld [vmem:[#allocation23 + $0x17e8] sm:$0xff]
    %v4211 = vld [vmem:[#allocation23 + $0x17f0] sm:$0xff]
    %v4212 = vld [vmem:[#allocation23 + $0x17f8] sm:$0xff]
    %v4213 = vld [vmem:[#allocation23 + $0x1800] sm:$0xff]
    %v4214 = vld [vmem:[#allocation23 + $0x1808] sm:$0xff]
    %v4215 = vld [vmem:[#allocation23 + $0x1810] sm:$0xff]
    %v4216 = vld [vmem:[#allocation23 + $0x1818] sm:$0xff]
    %v4217 = vld [vmem:[#allocation23 + $0x1820] sm:$0xff]
    %v4218 = vld [vmem:[#allocation23 + $0x1828] sm:$0xff]
    %v4219 = vld [vmem:[#allocation23 + $0x1830] sm:$0xff]
    %v4220 = vld [vmem:[#allocation23 + $0x1838] sm:$0xff]
    %v4221 = vld [vmem:[#allocation23 + $0x1840] sm:$0xff]
    %v4222 = vld [vmem:[#allocation23 + $0x1848] sm:$0xff]
    %v4223 = vld [vmem:[#allocation23 + $0x1850] sm:$0xff]
    %v4224 = vld [vmem:[#allocation23 + $0x1858] sm:$0xff]
    %v4225 = vld [vmem:[#allocation23 + $0x1860] sm:$0xff]
    %v4226 = vld [vmem:[#allocation23 + $0x1868] sm:$0xff]
    %v4227 = vld [vmem:[#allocation23 + $0x1870] sm:$0xff]
    %v4228 = vld [vmem:[#allocation23 + $0x1878] sm:$0xff]
    %v4229 = vld [vmem:[#allocation23 + $0x1880] sm:$0xff]
    %v4230 = vld [vmem:[#allocation23 + $0x1888] sm:$0xff]
    %v4231 = vld [vmem:[#allocation23 + $0x1890] sm:$0xff]
    %v4232 = vld [vmem:[#allocation23 + $0x1898] sm:$0xff]
    %v4233 = vld [vmem:[#allocation23 + $0x18a0] sm:$0xff]
    %v4234 = vld [vmem:[#allocation23 + $0x18a8] sm:$0xff]
    %v4235 = vld [vmem:[#allocation23 + $0x18b0] sm:$0xff]
    %v4236 = vld [vmem:[#allocation23 + $0x18b8] sm:$0xff]
    %v4237 = vld [vmem:[#allocation23 + $0x18c0] sm:$0xff]
    %v4238 = vld [vmem:[#allocation23 + $0x18c8] sm:$0xff]
    %v4239 = vld [vmem:[#allocation23 + $0x18d0] sm:$0xff]
    %v4240 = vld [vmem:[#allocation23 + $0x18d8] sm:$0xff]
    %v4241 = vld [vmem:[#allocation23 + $0x18e0] sm:$0xff]
    %v4242 = vld [vmem:[#allocation23 + $0x18e8] sm:$0xff]
    %v4243 = vld [vmem:[#allocation23 + $0x18f0] sm:$0xff]
    %v4244 = vld [vmem:[#allocation23 + $0x18f8] sm:$0xff]
    %v4245 = vld [vmem:[#allocation23 + $0x1900] sm:$0xff]
    %v4246 = vld [vmem:[#allocation23 + $0x1908] sm:$0xff]
    %v4247 = vld [vmem:[#allocation23 + $0x1910] sm:$0xff]
    %v4248 = vld [vmem:[#allocation23 + $0x1918] sm:$0xff]
    %v4249 = vld [vmem:[#allocation23 + $0x1920] sm:$0xff]
    %v4250 = vld [vmem:[#allocation23 + $0x1928] sm:$0xff]
    %v4251 = vld [vmem:[#allocation23 + $0x1930] sm:$0xff]
    %v4252 = vld [vmem:[#allocation23 + $0x1938] sm:$0xff]
    %v4253 = vld [vmem:[#allocation23 + $0x1940] sm:$0xff]
    %v4254 = vld [vmem:[#allocation23 + $0x1948] sm:$0xff]
    %v4255 = vld [vmem:[#allocation23 + $0x1950] sm:$0xff]
    %v4256 = vld [vmem:[#allocation23 + $0x1958] sm:$0xff]
    %v4257 = vld [vmem:[#allocation23 + $0x1960] sm:$0xff]
    %v4258 = vld [vmem:[#allocation23 + $0x1968] sm:$0xff]
    %v4259 = vld [vmem:[#allocation23 + $0x1970] sm:$0xff]
    %v4260 = vld [vmem:[#allocation23 + $0x1978] sm:$0xff]
    %v4261 = vld [vmem:[#allocation23 + $0x1980] sm:$0xff]
    %v4262 = vld [vmem:[#allocation23 + $0x1988] sm:$0xff]
    %v4263 = vld [vmem:[#allocation23 + $0x1990] sm:$0xff]
    %v4264 = vld [vmem:[#allocation23 + $0x1998] sm:$0xff]
    %v4265 = vld [vmem:[#allocation23 + $0x19a0] sm:$0xff]
    %v4266 = vld [vmem:[#allocation23 + $0x19a8] sm:$0xff]
    %v4267 = vld [vmem:[#allocation23 + $0x19b0] sm:$0xff]
    %v4268 = vld [vmem:[#allocation23 + $0x19b8] sm:$0xff]
    %v4269 = vld [vmem:[#allocation23 + $0x19c0] sm:$0xff]
    %v4270 = vld [vmem:[#allocation23 + $0x19c8] sm:$0xff]
    %v4271 = vld [vmem:[#allocation23 + $0x19d0] sm:$0xff]
    %v4272 = vld [vmem:[#allocation23 + $0x19d8] sm:$0xff]
    %v4273 = vld [vmem:[#allocation23 + $0x19e0] sm:$0xff]
    %v4274 = vld [vmem:[#allocation23 + $0x19e8] sm:$0xff]
    %v4275 = vld [vmem:[#allocation23 + $0x19f0] sm:$0xff]
    %v4276 = vld [vmem:[#allocation23 + $0x19f8] sm:$0xff]
    %v4277 = vld [vmem:[#allocation23 + $0x1a00] sm:$0xff]
    %v4278 = vld [vmem:[#allocation23 + $0x1a08] sm:$0xff]
    %v4279 = vld [vmem:[#allocation23 + $0x1a10] sm:$0xff]
    %v4280 = vld [vmem:[#allocation23 + $0x1a18] sm:$0xff]
    %v4281 = vld [vmem:[#allocation23 + $0x1a20] sm:$0xff]
    %v4282 = vld [vmem:[#allocation23 + $0x1a28] sm:$0xff]
    %v4283 = vld [vmem:[#allocation23 + $0x1a30] sm:$0xff]
    %v4284 = vld [vmem:[#allocation23 + $0x1a38] sm:$0xff]
    %v4285 = vld [vmem:[#allocation23 + $0x1a40] sm:$0xff]
    %v4286 = vld [vmem:[#allocation23 + $0x1a48] sm:$0xff]
    %v4287 = vld [vmem:[#allocation23 + $0x1a50] sm:$0xff]
    %v4288 = vld [vmem:[#allocation23 + $0x1a58] sm:$0xff]
    %v4289 = vld [vmem:[#allocation23 + $0x1a60] sm:$0xff]
    %v4290 = vld [vmem:[#allocation23 + $0x1a68] sm:$0xff]
    %v4291 = vld [vmem:[#allocation23 + $0x1a70] sm:$0xff]
    %v4292 = vld [vmem:[#allocation23 + $0x1a78] sm:$0xff]
    %v4293 = vld [vmem:[#allocation23 + $0x1a80] sm:$0xff]
    %v4294 = vld [vmem:[#allocation23 + $0x1a88] sm:$0xff]
    %v4295 = vld [vmem:[#allocation23 + $0x1a90] sm:$0xff]
    %v4296 = vld [vmem:[#allocation23 + $0x1a98] sm:$0xff]
    %v4297 = vld [vmem:[#allocation23 + $0x1aa0] sm:$0xff]
    %v4298 = vld [vmem:[#allocation23 + $0x1aa8] sm:$0xff]
    %v4299 = vld [vmem:[#allocation23 + $0x1ab0] sm:$0xff]
    %v4300 = vld [vmem:[#allocation23 + $0x1ab8] sm:$0xff]
    %v4301 = vld [vmem:[#allocation23 + $0x1ac0] sm:$0xff]
    %v4302 = vld [vmem:[#allocation23 + $0x1ac8] sm:$0xff]
    %v4303 = vld [vmem:[#allocation23 + $0x1ad0] sm:$0xff]
    %v4304 = vld [vmem:[#allocation23 + $0x1ad8] sm:$0xff]
    %v4305 = vld [vmem:[#allocation23 + $0x1ae0] sm:$0xff]
    %v4306 = vld [vmem:[#allocation23 + $0x1ae8] sm:$0xff]
    %v4307 = vld [vmem:[#allocation23 + $0x1af0] sm:$0xff]
    %v4308 = vld [vmem:[#allocation23 + $0x1af8] sm:$0xff]
    %v4309 = vld [vmem:[#allocation23 + $0x1b00] sm:$0xff]
    %v4310 = vld [vmem:[#allocation23 + $0x1b08] sm:$0xff]
    %v4311 = vld [vmem:[#allocation23 + $0x1b10] sm:$0xff]
    %v4312 = vld [vmem:[#allocation23 + $0x1b18] sm:$0xff]
    %v4313 = vld [vmem:[#allocation23 + $0x1b20] sm:$0xff]
    %v4314 = vld [vmem:[#allocation23 + $0x1b28] sm:$0xff]
    %v4315 = vld [vmem:[#allocation23 + $0x1b30] sm:$0xff]
    %v4316 = vld [vmem:[#allocation23 + $0x1b38] sm:$0xff]
    %v4317 = vld [vmem:[#allocation23 + $0x1b40] sm:$0xff]
    %v4318 = vld [vmem:[#allocation23 + $0x1b48] sm:$0xff]
    %v4319 = vld [vmem:[#allocation23 + $0x1b50] sm:$0xff]
    %v4320 = vld [vmem:[#allocation23 + $0x1b58] sm:$0xff]
    %v4321 = vld [vmem:[#allocation23 + $0x1b60] sm:$0xff]
    %v4322 = vld [vmem:[#allocation23 + $0x1b68] sm:$0xff]
    %v4323 = vld [vmem:[#allocation23 + $0x1b70] sm:$0xff]
    %v4324 = vld [vmem:[#allocation23 + $0x1b78] sm:$0xff]
    %v4325 = vld [vmem:[#allocation23 + $0x1b80] sm:$0xff]
    %v4326 = vld [vmem:[#allocation23 + $0x1b88] sm:$0xff]
    %v4327 = vld [vmem:[#allocation23 + $0x1b90] sm:$0xff]
    %v4328 = vld [vmem:[#allocation23 + $0x1b98] sm:$0xff]
    %v4329 = vld [vmem:[#allocation23 + $0x1ba0] sm:$0xff]
    %v4330 = vld [vmem:[#allocation23 + $0x1ba8] sm:$0xff]
    %v4331 = vld [vmem:[#allocation23 + $0x1bb0] sm:$0xff]
    %v4332 = vld [vmem:[#allocation23 + $0x1bb8] sm:$0xff]
    %v4333 = vld [vmem:[#allocation23 + $0x1bc0] sm:$0xff]
    %v4334 = vld [vmem:[#allocation23 + $0x1bc8] sm:$0xff]
    %v4335 = vld [vmem:[#allocation23 + $0x1bd0] sm:$0xff]
    %v4336 = vld [vmem:[#allocation23 + $0x1bd8] sm:$0xff]
    %v4337 = vld [vmem:[#allocation23 + $0x1be0] sm:$0xff]
    %v4338 = vld [vmem:[#allocation23 + $0x1be8] sm:$0xff]
    %v4339 = vld [vmem:[#allocation23 + $0x1bf0] sm:$0xff]
    %v4340 = vld [vmem:[#allocation23 + $0x1bf8] sm:$0xff]
    %v4341 = vld [vmem:[#allocation23 + $0x1c00] sm:$0xff]
    %v4342 = vld [vmem:[#allocation23 + $0x1c08] sm:$0xff]
    %v4343 = vld [vmem:[#allocation23 + $0x1c10] sm:$0xff]
    %v4344 = vld [vmem:[#allocation23 + $0x1c18] sm:$0xff]
    %v4345 = vld [vmem:[#allocation23 + $0x1c20] sm:$0xff]
    %v4346 = vld [vmem:[#allocation23 + $0x1c28] sm:$0xff]
    %v4347 = vld [vmem:[#allocation23 + $0x1c30] sm:$0xff]
    %v4348 = vld [vmem:[#allocation23 + $0x1c38] sm:$0xff]
    %v4349 = vld [vmem:[#allocation23 + $0x1c40] sm:$0xff]
    %v4350 = vld [vmem:[#allocation23 + $0x1c48] sm:$0xff]
    %v4351 = vld [vmem:[#allocation23 + $0x1c50] sm:$0xff]
    %v4352 = vld [vmem:[#allocation23 + $0x1c58] sm:$0xff]
    %v4353 = vld [vmem:[#allocation23 + $0x1c60] sm:$0xff]
    %v4354 = vld [vmem:[#allocation23 + $0x1c68] sm:$0xff]
    %v4355 = vld [vmem:[#allocation23 + $0x1c70] sm:$0xff]
    %v4356 = vld [vmem:[#allocation23 + $0x1c78] sm:$0xff]
    %v4357 = vld [vmem:[#allocation23 + $0x1c80] sm:$0xff]
    %v4358 = vld [vmem:[#allocation23 + $0x1c88] sm:$0xff]
    %v4359 = vld [vmem:[#allocation23 + $0x1c90] sm:$0xff]
    %v4360 = vld [vmem:[#allocation23 + $0x1c98] sm:$0xff]
    %v4361 = vld [vmem:[#allocation23 + $0x1ca0] sm:$0xff]
    %v4362 = vld [vmem:[#allocation23 + $0x1ca8] sm:$0xff]
    %v4363 = vld [vmem:[#allocation23 + $0x1cb0] sm:$0xff]
    %v4364 = vld [vmem:[#allocation23 + $0x1cb8] sm:$0xff]
    %v4365 = vld [vmem:[#allocation23 + $0x1cc0] sm:$0xff]
    %v4366 = vld [vmem:[#allocation23 + $0x1cc8] sm:$0xff]
    %v4367 = vld [vmem:[#allocation23 + $0x1cd0] sm:$0xff]
    %v4368 = vld [vmem:[#allocation23 + $0x1cd8] sm:$0xff]
    %v4369 = vld [vmem:[#allocation23 + $0x1ce0] sm:$0xff]
    %v4370 = vld [vmem:[#allocation23 + $0x1ce8] sm:$0xff]
    %v4371 = vld [vmem:[#allocation23 + $0x1cf0] sm:$0xff]
    %v4372 = vld [vmem:[#allocation23 + $0x1cf8] sm:$0xff]
    %v4373 = vld [vmem:[#allocation23 + $0x1d00] sm:$0xff]
    %v4374 = vld [vmem:[#allocation23 + $0x1d08] sm:$0xff]
    %v4375 = vld [vmem:[#allocation23 + $0x1d10] sm:$0xff]
    %v4376 = vld [vmem:[#allocation23 + $0x1d18] sm:$0xff]
    %v4377 = vld [vmem:[#allocation23 + $0x1d20] sm:$0xff]
    %v4378 = vld [vmem:[#allocation23 + $0x1d28] sm:$0xff]
    %v4379 = vld [vmem:[#allocation23 + $0x1d30] sm:$0xff]
    %v4380 = vld [vmem:[#allocation23 + $0x1d38] sm:$0xff]
    %v4381 = vld [vmem:[#allocation23 + $0x1d40] sm:$0xff]
    %v4382 = vld [vmem:[#allocation23 + $0x1d48] sm:$0xff]
    %v4383 = vld [vmem:[#allocation23 + $0x1d50] sm:$0xff]
    %v4384 = vld [vmem:[#allocation23 + $0x1d58] sm:$0xff]
    %v4385 = vld [vmem:[#allocation23 + $0x1d60] sm:$0xff]
    %v4386 = vld [vmem:[#allocation23 + $0x1d68] sm:$0xff]
    %v4387 = vld [vmem:[#allocation23 + $0x1d70] sm:$0xff]
    %v4388 = vld [vmem:[#allocation23 + $0x1d78] sm:$0xff]
    %v4389 = vld [vmem:[#allocation23 + $0x1d80] sm:$0xff]
    %v4390 = vld [vmem:[#allocation23 + $0x1d88] sm:$0xff]
    %v4391 = vld [vmem:[#allocation23 + $0x1d90] sm:$0xff]
    %v4392 = vld [vmem:[#allocation23 + $0x1d98] sm:$0xff]
    %v4393 = vld [vmem:[#allocation23 + $0x1da0] sm:$0xff]
    %v4394 = vld [vmem:[#allocation23 + $0x1da8] sm:$0xff]
    %v4395 = vld [vmem:[#allocation23 + $0x1db0] sm:$0xff]
    %v4396 = vld [vmem:[#allocation23 + $0x1db8] sm:$0xff]
    %v4397 = vld [vmem:[#allocation23 + $0x1dc0] sm:$0xff]
    %v4398 = vld [vmem:[#allocation23 + $0x1dc8] sm:$0xff]
    %v4399 = vld [vmem:[#allocation23 + $0x1dd0] sm:$0xff]
    %v4400 = vld [vmem:[#allocation23 + $0x1dd8] sm:$0xff]
    %v4401 = vld [vmem:[#allocation23 + $0x1de0] sm:$0xff]
    %v4402 = vld [vmem:[#allocation23 + $0x1de8] sm:$0xff]
    %v4403 = vld [vmem:[#allocation23 + $0x1df0] sm:$0xff]
    %v4404 = vld [vmem:[#allocation23 + $0x1df8] sm:$0xff]
    %v4405 = vld [vmem:[#allocation23 + $0x1e00] sm:$0xff]
    %v4406 = vld [vmem:[#allocation23 + $0x1e08] sm:$0xff]
    %v4407 = vld [vmem:[#allocation23 + $0x1e10] sm:$0xff]
    %v4408 = vld [vmem:[#allocation23 + $0x1e18] sm:$0xff]
    %v4409 = vld [vmem:[#allocation23 + $0x1e20] sm:$0xff]
    %v4410 = vld [vmem:[#allocation23 + $0x1e28] sm:$0xff]
    %v4411 = vld [vmem:[#allocation23 + $0x1e30] sm:$0xff]
    %v4412 = vld [vmem:[#allocation23 + $0x1e38] sm:$0xff]
    %v4413 = vld [vmem:[#allocation23 + $0x1e40] sm:$0xff]
    %v4414 = vld [vmem:[#allocation23 + $0x1e48] sm:$0xff]
    %v4415 = vld [vmem:[#allocation23 + $0x1e50] sm:$0xff]
    %v4416 = vld [vmem:[#allocation23 + $0x1e58] sm:$0xff]
    %v4417 = vld [vmem:[#allocation23 + $0x1e60] sm:$0xff]
    %v4418 = vld [vmem:[#allocation23 + $0x1e68] sm:$0xff]
    %v4419 = vld [vmem:[#allocation23 + $0x1e70] sm:$0xff]
    %v4420 = vld [vmem:[#allocation23 + $0x1e78] sm:$0xff]
    %v4421 = vld [vmem:[#allocation23 + $0x1e80] sm:$0xff]
    %v4422 = vld [vmem:[#allocation23 + $0x1e88] sm:$0xff]
    %v4423 = vld [vmem:[#allocation23 + $0x1e90] sm:$0xff]
    %v4424 = vld [vmem:[#allocation23 + $0x1e98] sm:$0xff]
    %v4425 = vld [vmem:[#allocation23 + $0x1ea0] sm:$0xff]
    %v4426 = vld [vmem:[#allocation23 + $0x1ea8] sm:$0xff]
    %v4427 = vld [vmem:[#allocation23 + $0x1eb0] sm:$0xff]
    %v4428 = vld [vmem:[#allocation23 + $0x1eb8] sm:$0xff]
    %v4429 = vld [vmem:[#allocation23 + $0x1ec0] sm:$0xff]
    %v4430 = vld [vmem:[#allocation23 + $0x1ec8] sm:$0xff]
    %v4431 = vld [vmem:[#allocation23 + $0x1ed0] sm:$0xff]
    %v4432 = vld [vmem:[#allocation23 + $0x1ed8] sm:$0xff]
    %v4433 = vld [vmem:[#allocation23 + $0x1ee0] sm:$0xff]
    %v4434 = vld [vmem:[#allocation23 + $0x1ee8] sm:$0xff]
    %v4435 = vld [vmem:[#allocation23 + $0x1ef0] sm:$0xff]
    %v4436 = vld [vmem:[#allocation23 + $0x1ef8] sm:$0xff]
    %v4437 = vld [vmem:[#allocation23 + $0x1f00] sm:$0xff]
    %v4438 = vld [vmem:[#allocation23 + $0x1f08] sm:$0xff]
    %v4439 = vld [vmem:[#allocation23 + $0x1f10] sm:$0xff]
    %v4440 = vld [vmem:[#allocation23 + $0x1f18] sm:$0xff]
    %v4441 = vld [vmem:[#allocation23 + $0x1f20] sm:$0xff]
    %v4442 = vld [vmem:[#allocation23 + $0x1f28] sm:$0xff]
    %v4443 = vld [vmem:[#allocation23 + $0x1f30] sm:$0xff]
    %v4444 = vld [vmem:[#allocation23 + $0x1f38] sm:$0xff]
    %v4445 = vld [vmem:[#allocation23 + $0x1f40] sm:$0xff]
    %v4446 = vld [vmem:[#allocation23 + $0x1f48] sm:$0xff]
    %v4447 = vld [vmem:[#allocation23 + $0x1f50] sm:$0xff]
    %v4448 = vld [vmem:[#allocation23 + $0x1f58] sm:$0xff]
    %v4449 = vld [vmem:[#allocation23 + $0x1f60] sm:$0xff]
    %v4450 = vld [vmem:[#allocation23 + $0x1f68] sm:$0xff]
    %v4451 = vld [vmem:[#allocation23 + $0x1f70] sm:$0xff]
    %v4452 = vld [vmem:[#allocation23 + $0x1f78] sm:$0xff]
    %v4453 = vld [vmem:[#allocation23 + $0x1f80] sm:$0xff]
    %v4454 = vld [vmem:[#allocation23 + $0x1f88] sm:$0xff]
    %v4455 = vld [vmem:[#allocation23 + $0x1f90] sm:$0xff]
    %v4456 = vld [vmem:[#allocation23 + $0x1f98] sm:$0xff]
    %v4457 = vld [vmem:[#allocation23 + $0x1fa0] sm:$0xff]
    %v4458 = vld [vmem:[#allocation23 + $0x1fa8] sm:$0xff]
    %v4459 = vld [vmem:[#allocation23 + $0x1fb0] sm:$0xff]
    %v4460 = vld [vmem:[#allocation23 + $0x1fb8] sm:$0xff]
    %v4461 = vld [vmem:[#allocation23 + $0x1fc0] sm:$0xff]
    %v4462 = vld [vmem:[#allocation23 + $0x1fc8] sm:$0xff]
    %v4463 = vld [vmem:[#allocation23 + $0x1fd0] sm:$0xff]
    %v4464 = vld [vmem:[#allocation23 + $0x1fd8] sm:$0xff]
    %v4465 = vld [vmem:[#allocation23 + $0x1fe0] sm:$0xff]
    %v4466 = vld [vmem:[#allocation23 + $0x1fe8] sm:$0xff]
    %v4467 = vld [vmem:[#allocation23 + $0x1ff0] sm:$0xff]
    %v4468 = vld [vmem:[#allocation23 + $0x1ff8] sm:$0xff]
    %v4469 = vld [vmem:[#allocation23 + $0x2000] sm:$0xff]
    %v4470 = vld [vmem:[#allocation23 + $0x2008] sm:$0xff]
    %v4471 = vld [vmem:[#allocation23 + $0x2010] sm:$0xff]
    %v4472 = vld [vmem:[#allocation23 + $0x2018] sm:$0xff]
    %v4473 = vld [vmem:[#allocation23 + $0x2020] sm:$0xff]
    %v4474 = vld [vmem:[#allocation23 + $0x2028] sm:$0xff]
    %v4475 = vld [vmem:[#allocation23 + $0x2030] sm:$0xff]
    %v4476 = vld [vmem:[#allocation23 + $0x2038] sm:$0xff]
    %v4477 = vld [vmem:[#allocation23 + $0x2040] sm:$0xff]
    %v4478 = vld [vmem:[#allocation23 + $0x2048] sm:$0xff]
    %v4479 = vld [vmem:[#allocation23 + $0x2050] sm:$0xff]
    %v4480 = vld [vmem:[#allocation23 + $0x2058] sm:$0xff]
    %v4481 = vld [vmem:[#allocation23 + $0x2060] sm:$0xff]
    %v4482 = vld [vmem:[#allocation23 + $0x2068] sm:$0xff]
    %v4483 = vld [vmem:[#allocation23 + $0x2070] sm:$0xff]
    %v4484 = vld [vmem:[#allocation23 + $0x2078] sm:$0xff]
    %v4485 = vld [vmem:[#allocation23 + $0x2080] sm:$0xff]
    %v4486 = vld [vmem:[#allocation23 + $0x2088] sm:$0xff]
    %v4487 = vld [vmem:[#allocation23 + $0x2090] sm:$0xff]
    %v4488 = vld [vmem:[#allocation23 + $0x2098] sm:$0xff]
    %v4489 = vld [vmem:[#allocation23 + $0x20a0] sm:$0xff]
    %v4490 = vld [vmem:[#allocation23 + $0x20a8] sm:$0xff]
    %v4491 = vld [vmem:[#allocation23 + $0x20b0] sm:$0xff]
    %v4492 = vld [vmem:[#allocation23 + $0x20b8] sm:$0xff]
    %v4493 = vld [vmem:[#allocation23 + $0x20c0] sm:$0xff]
    %v4494 = vld [vmem:[#allocation23 + $0x20c8] sm:$0xff]
    %v4495 = vld [vmem:[#allocation23 + $0x20d0] sm:$0xff]
    %v4496 = vld [vmem:[#allocation23 + $0x20d8] sm:$0xff]
    %v4497 = vld [vmem:[#allocation23 + $0x20e0] sm:$0xff]
    %v4498 = vld [vmem:[#allocation23 + $0x20e8] sm:$0xff]
    %v4499 = vld [vmem:[#allocation23 + $0x20f0] sm:$0xff]
    %v4500 = vld [vmem:[#allocation23 + $0x20f8] sm:$0xff]
    %v4501 = vld [vmem:[#allocation23 + $0x2100] sm:$0xff]
    %v4502 = vld [vmem:[#allocation23 + $0x2108] sm:$0xff]
    %v4503 = vld [vmem:[#allocation23 + $0x2110] sm:$0xff]
    %v4504 = vld [vmem:[#allocation23 + $0x2118] sm:$0xff]
    %v4505 = vld [vmem:[#allocation23 + $0x2120] sm:$0xff]
    %v4506 = vld [vmem:[#allocation23 + $0x2128] sm:$0xff]
    %v4507 = vld [vmem:[#allocation23 + $0x2130] sm:$0xff]
    %v4508 = vld [vmem:[#allocation23 + $0x2138] sm:$0xff]
    %v4509 = vld [vmem:[#allocation23 + $0x2140] sm:$0xff]
    %v4510 = vld [vmem:[#allocation23 + $0x2148] sm:$0xff]
    %v4511 = vld [vmem:[#allocation23 + $0x2150] sm:$0xff]
    %v4512 = vld [vmem:[#allocation23 + $0x2158] sm:$0xff]
    %v4513 = vld [vmem:[#allocation23 + $0x2160] sm:$0xff]
    %v4514 = vld [vmem:[#allocation23 + $0x2168] sm:$0xff]
    %v4515 = vld [vmem:[#allocation23 + $0x2170] sm:$0xff]
    %v4516 = vld [vmem:[#allocation23 + $0x2178] sm:$0xff]
    %v4517 = vld [vmem:[#allocation23 + $0x2180] sm:$0xff]
    %v4518 = vld [vmem:[#allocation23 + $0x2188] sm:$0xff]
    %v4519 = vld [vmem:[#allocation23 + $0x2190] sm:$0xff]
    %v4520 = vld [vmem:[#allocation23 + $0x2198] sm:$0xff]
    %v4521 = vld [vmem:[#allocation23 + $0x21a0] sm:$0xff]
    %v4522 = vld [vmem:[#allocation23 + $0x21a8] sm:$0xff]
    %v4523 = vld [vmem:[#allocation23 + $0x21b0] sm:$0xff]
    %v4524 = vld [vmem:[#allocation23 + $0x21b8] sm:$0xff]
    %v4525 = vld [vmem:[#allocation23 + $0x21c0] sm:$0xff]
    %v4526 = vld [vmem:[#allocation23 + $0x21c8] sm:$0xff]
    %v4527 = vld [vmem:[#allocation23 + $0x21d0] sm:$0xff]
    %v4528 = vld [vmem:[#allocation23 + $0x21d8] sm:$0xff]
    %v4529 = vld [vmem:[#allocation23 + $0x21e0] sm:$0xff]
    %v4530 = vld [vmem:[#allocation23 + $0x21e8] sm:$0xff]
    %v4531 = vld [vmem:[#allocation23 + $0x21f0] sm:$0xff]
    %v4532 = vld [vmem:[#allocation23 + $0x21f8] sm:$0xff]
    %v4533 = vld [vmem:[#allocation23 + $0x2200] sm:$0xff]
    %v4534 = vld [vmem:[#allocation23 + $0x2208] sm:$0xff]
    %v4535 = vld [vmem:[#allocation23 + $0x2210] sm:$0xff]
    %v4536 = vld [vmem:[#allocation23 + $0x2218] sm:$0xff]
    %v4537 = vld [vmem:[#allocation23 + $0x2220] sm:$0xff]
    %v4538 = vld [vmem:[#allocation23 + $0x2228] sm:$0xff]
    %v4539 = vld [vmem:[#allocation23 + $0x2230] sm:$0xff]
    %v4540 = vld [vmem:[#allocation23 + $0x2238] sm:$0xff]
    %v4541 = vld [vmem:[#allocation23 + $0x2240] sm:$0xff]
    %v4542 = vld [vmem:[#allocation23 + $0x2248] sm:$0xff]
    %v4543 = vld [vmem:[#allocation23 + $0x2250] sm:$0xff]
    %v4544 = vld [vmem:[#allocation23 + $0x2258] sm:$0xff]
    %v4545 = vld [vmem:[#allocation23 + $0x2260] sm:$0xff]
    %v4546 = vld [vmem:[#allocation23 + $0x2268] sm:$0xff]
    %v4547 = vld [vmem:[#allocation23 + $0x2270] sm:$0xff]
    %v4548 = vld [vmem:[#allocation23 + $0x2278] sm:$0xff]
    %v4549 = vld [vmem:[#allocation23 + $0x2280] sm:$0xff]
    %v4550 = vld [vmem:[#allocation23 + $0x2288] sm:$0xff]
    %v4551 = vld [vmem:[#allocation23 + $0x2290] sm:$0xff]
    %v4552 = vld [vmem:[#allocation23 + $0x2298] sm:$0xff]
    %v4553 = vld [vmem:[#allocation23 + $0x22a0] sm:$0xff]
    %v4554 = vld [vmem:[#allocation23 + $0x22a8] sm:$0xff]
    %v4555 = vld [vmem:[#allocation23 + $0x22b0] sm:$0xff]
    %v4556 = vld [vmem:[#allocation23 + $0x22b8] sm:$0xff]
    %v4557 = vld [vmem:[#allocation23 + $0x22c0] sm:$0xff]
    %v4558 = vld [vmem:[#allocation23 + $0x22c8] sm:$0xff]
    %v4559 = vld [vmem:[#allocation23 + $0x22d0] sm:$0xff]
    %v4560 = vld [vmem:[#allocation23 + $0x22d8] sm:$0xff]
    %v4561 = vld [vmem:[#allocation23 + $0x22e0] sm:$0xff]
    %v4562 = vld [vmem:[#allocation23 + $0x22e8] sm:$0xff]
    %v4563 = vld [vmem:[#allocation23 + $0x22f0] sm:$0xff]
    %v4564 = vld [vmem:[#allocation23 + $0x22f8] sm:$0xff]
    %v4565 = vld [vmem:[#allocation23 + $0x2300] sm:$0xff]
    %v4566 = vld [vmem:[#allocation23 + $0x2308] sm:$0xff]
    %v4567 = vld [vmem:[#allocation23 + $0x2310] sm:$0xff]
    %v4568 = vld [vmem:[#allocation23 + $0x2318] sm:$0xff]
    %v4569 = vld [vmem:[#allocation23 + $0x2320] sm:$0xff]
    %v4570 = vld [vmem:[#allocation23 + $0x2328] sm:$0xff]
    %v4571 = vld [vmem:[#allocation23 + $0x2330] sm:$0xff]
    %v4572 = vld [vmem:[#allocation23 + $0x2338] sm:$0xff]
    %v4573 = vld [vmem:[#allocation23 + $0x2340] sm:$0xff]
    %v4574 = vld [vmem:[#allocation23 + $0x2348] sm:$0xff]
    %v4575 = vld [vmem:[#allocation23 + $0x2350] sm:$0xff]
    %v4576 = vld [vmem:[#allocation23 + $0x2358] sm:$0xff]
    %v4577 = vld [vmem:[#allocation23 + $0x2360] sm:$0xff]
    %v4578 = vld [vmem:[#allocation23 + $0x2368] sm:$0xff]
    %v4579 = vld [vmem:[#allocation23 + $0x2370] sm:$0xff]
    %v4580 = vld [vmem:[#allocation23 + $0x2378] sm:$0xff]
    %v4581 = vld [vmem:[#allocation23 + $0x2380] sm:$0xff]
    %v4582 = vld [vmem:[#allocation23 + $0x2388] sm:$0xff]
    %v4583 = vld [vmem:[#allocation23 + $0x2390] sm:$0xff]
    %v4584 = vld [vmem:[#allocation23 + $0x2398] sm:$0xff]
    %v4585 = vld [vmem:[#allocation23 + $0x23a0] sm:$0xff]
    %v4586 = vld [vmem:[#allocation23 + $0x23a8] sm:$0xff]
    %v4587 = vld [vmem:[#allocation23 + $0x23b0] sm:$0xff]
    %v4588 = vld [vmem:[#allocation23 + $0x23b8] sm:$0xff]
    %v4589 = vld [vmem:[#allocation23 + $0x23c0] sm:$0xff]
    %v4590 = vld [vmem:[#allocation23 + $0x23c8] sm:$0xff]
    %v4591 = vld [vmem:[#allocation23 + $0x23d0] sm:$0xff]
    %v4592 = vld [vmem:[#allocation23 + $0x23d8] sm:$0xff]
    %v4593 = vld [vmem:[#allocation23 + $0x23e0] sm:$0xff]
    %v4594 = vld [vmem:[#allocation23 + $0x23e8] sm:$0xff]
    %v4595 = vld [vmem:[#allocation23 + $0x23f0] sm:$0xff]
    %v4596 = vld [vmem:[#allocation23 + $0x23f8] sm:$0xff]
    %v4597 = vld [vmem:[#allocation23 + $0x2400] sm:$0xff]
    %v4598 = vld [vmem:[#allocation23 + $0x2408] sm:$0xff]
    %v4599 = vld [vmem:[#allocation23 + $0x2410] sm:$0xff]
    %v4600 = vld [vmem:[#allocation23 + $0x2418] sm:$0xff]
    %v4601 = vld [vmem:[#allocation23 + $0x2420] sm:$0xff]
    %v4602 = vld [vmem:[#allocation23 + $0x2428] sm:$0xff]
    %v4603 = vld [vmem:[#allocation23 + $0x2430] sm:$0xff]
    %v4604 = vld [vmem:[#allocation23 + $0x2438] sm:$0xff]
    %v4605 = vld [vmem:[#allocation23 + $0x2440] sm:$0xff]
    %v4606 = vld [vmem:[#allocation23 + $0x2448] sm:$0xff]
    %v4607 = vld [vmem:[#allocation23 + $0x2450] sm:$0xff]
    %v4608 = vld [vmem:[#allocation23 + $0x2458] sm:$0xff]
    %v4609 = vld [vmem:[#allocation23 + $0x2460] sm:$0xff]
    %v4610 = vld [vmem:[#allocation23 + $0x2468] sm:$0xff]
    %v4611 = vld [vmem:[#allocation23 + $0x2470] sm:$0xff]
    %v4612 = vld [vmem:[#allocation23 + $0x2478] sm:$0xff]
    %v4613 = vld [vmem:[#allocation23 + $0x2480] sm:$0xff]
    %v4614 = vld [vmem:[#allocation23 + $0x2488] sm:$0xff]
    %v4615 = vld [vmem:[#allocation23 + $0x2490] sm:$0xff]
    %v4616 = vld [vmem:[#allocation23 + $0x2498] sm:$0xff]
    %v4617 = vld [vmem:[#allocation23 + $0x24a0] sm:$0xff]
    %v4618 = vld [vmem:[#allocation23 + $0x24a8] sm:$0xff]
    %v4619 = vld [vmem:[#allocation23 + $0x24b0] sm:$0xff]
    %v4620 = vld [vmem:[#allocation23 + $0x24b8] sm:$0xff]
    %v4621 = vld [vmem:[#allocation23 + $0x24c0] sm:$0xff]
    %v4622 = vld [vmem:[#allocation23 + $0x24c8] sm:$0xff]
    %v4623 = vld [vmem:[#allocation23 + $0x24d0] sm:$0xff]
    %v4624 = vld [vmem:[#allocation23 + $0x24d8] sm:$0xff]
    %v4625 = vld [vmem:[#allocation23 + $0x24e0] sm:$0xff]
    %v4626 = vld [vmem:[#allocation23 + $0x24e8] sm:$0xff]
    %v4627 = vld [vmem:[#allocation23 + $0x24f0] sm:$0xff]
    %v4628 = vld [vmem:[#allocation23 + $0x24f8] sm:$0xff]
    %v4629 = vld [vmem:[#allocation23 + $0x2500] sm:$0xff]
    %v4630 = vld [vmem:[#allocation23 + $0x2508] sm:$0xff]
    %v4631 = vld [vmem:[#allocation23 + $0x2510] sm:$0xff]
    %v4632 = vld [vmem:[#allocation23 + $0x2518] sm:$0xff]
    %v4633 = vld [vmem:[#allocation23 + $0x2520] sm:$0xff]
    %v4634 = vld [vmem:[#allocation23 + $0x2528] sm:$0xff]
    %v4635 = vld [vmem:[#allocation23 + $0x2530] sm:$0xff]
    %v4636 = vld [vmem:[#allocation23 + $0x2538] sm:$0xff]
    %v4637 = vld [vmem:[#allocation23 + $0x2540] sm:$0xff]
    %v4638 = vld [vmem:[#allocation23 + $0x2548] sm:$0xff]
    %v4639 = vld [vmem:[#allocation23 + $0x2550] sm:$0xff]
    %v4640 = vld [vmem:[#allocation23 + $0x2558] sm:$0xff]
    %v4641 = vld [vmem:[#allocation23 + $0x2560] sm:$0xff]
    %v4642 = vld [vmem:[#allocation23 + $0x2568] sm:$0xff]
    %v4643 = vld [vmem:[#allocation23 + $0x2570] sm:$0xff]
    %v4644 = vld [vmem:[#allocation23 + $0x2578] sm:$0xff]
    %v4645 = vld [vmem:[#allocation23 + $0x2580] sm:$0xff]
    %v4646 = vld [vmem:[#allocation23 + $0x2588] sm:$0xff]
    %v4647 = vld [vmem:[#allocation23 + $0x2590] sm:$0xff]
    %v4648 = vld [vmem:[#allocation23 + $0x2598] sm:$0xff]
    %v4649 = vld [vmem:[#allocation23 + $0x25a0] sm:$0xff]
    %v4650 = vld [vmem:[#allocation23 + $0x25a8] sm:$0xff]
    %v4651 = vld [vmem:[#allocation23 + $0x25b0] sm:$0xff]
    %v4652 = vld [vmem:[#allocation23 + $0x25b8] sm:$0xff]
    %v4653 = vld [vmem:[#allocation23 + $0x25c0] sm:$0xff]
    %v4654 = vld [vmem:[#allocation23 + $0x25c8] sm:$0xff]
    %v4655 = vld [vmem:[#allocation23 + $0x25d0] sm:$0xff]
    %v4656 = vld [vmem:[#allocation23 + $0x25d8] sm:$0xff]
    %v4657 = vld [vmem:[#allocation23 + $0x25e0] sm:$0xff]
    %v4658 = vld [vmem:[#allocation23 + $0x25e8] sm:$0xff]
    %v4659 = vld [vmem:[#allocation23 + $0x25f0] sm:$0xff]
    %v4660 = vld [vmem:[#allocation23 + $0x25f8] sm:$0xff]
    %v4661 = vld [vmem:[#allocation23 + $0x2600] sm:$0xff]
    %v4662 = vld [vmem:[#allocation23 + $0x2608] sm:$0xff]
    %v4663 = vld [vmem:[#allocation23 + $0x2610] sm:$0xff]
    %v4664 = vld [vmem:[#allocation23 + $0x2618] sm:$0xff]
    %v4665 = vld [vmem:[#allocation23 + $0x2620] sm:$0xff]
    %v4666 = vld [vmem:[#allocation23 + $0x2628] sm:$0xff]
    %v4667 = vld [vmem:[#allocation23 + $0x2630] sm:$0xff]
    %v4668 = vld [vmem:[#allocation23 + $0x2638] sm:$0xff]
    %v4669 = vld [vmem:[#allocation23 + $0x2640] sm:$0xff]
    %v4670 = vld [vmem:[#allocation23 + $0x2648] sm:$0xff]
    %v4671 = vld [vmem:[#allocation23 + $0x2650] sm:$0xff]
    %v4672 = vld [vmem:[#allocation23 + $0x2658] sm:$0xff]
    %v4673 = vld [vmem:[#allocation23 + $0x2660] sm:$0xff]
    %v4674 = vld [vmem:[#allocation23 + $0x2668] sm:$0xff]
    %v4675 = vld [vmem:[#allocation23 + $0x2670] sm:$0xff]
    %v4676 = vld [vmem:[#allocation23 + $0x2678] sm:$0xff]
    %v4677 = vld [vmem:[#allocation23 + $0x2680] sm:$0xff]
    %v4678 = vld [vmem:[#allocation23 + $0x2688] sm:$0xff]
    %v4679 = vld [vmem:[#allocation23 + $0x2690] sm:$0xff]
    %v4680 = vld [vmem:[#allocation23 + $0x2698] sm:$0xff]
    %v4681 = vld [vmem:[#allocation23 + $0x26a0] sm:$0xff]
    %v4682 = vld [vmem:[#allocation23 + $0x26a8] sm:$0xff]
    %v4683 = vld [vmem:[#allocation23 + $0x26b0] sm:$0xff]
    %v4684 = vld [vmem:[#allocation23 + $0x26b8] sm:$0xff]
    %v4685 = vld [vmem:[#allocation23 + $0x26c0] sm:$0xff]
    %v4686 = vld [vmem:[#allocation23 + $0x26c8] sm:$0xff]
    %v4687 = vld [vmem:[#allocation23 + $0x26d0] sm:$0xff]
    %v4688 = vld [vmem:[#allocation23 + $0x26d8] sm:$0xff]
    %v4689 = vld [vmem:[#allocation23 + $0x26e0] sm:$0xff]
    %v4690 = vld [vmem:[#allocation23 + $0x26e8] sm:$0xff]
    %v4691 = vld [vmem:[#allocation23 + $0x26f0] sm:$0xff]
    %v4692 = vld [vmem:[#allocation23 + $0x26f8] sm:$0xff]
    %v4693 = vld [vmem:[#allocation23 + $0x2700] sm:$0xff]
    %v4694 = vld [vmem:[#allocation23 + $0x2708] sm:$0xff]
    %v4695 = vld [vmem:[#allocation23 + $0x2710] sm:$0xff]
    %v4696 = vld [vmem:[#allocation23 + $0x2718] sm:$0xff]
    %v4697 = vld [vmem:[#allocation23 + $0x2720] sm:$0xff]
    %v4698 = vld [vmem:[#allocation23 + $0x2728] sm:$0xff]
    %v4699 = vld [vmem:[#allocation23 + $0x2730] sm:$0xff]
    %v4700 = vld [vmem:[#allocation23 + $0x2738] sm:$0xff]
    %v4701 = vld [vmem:[#allocation23 + $0x2740] sm:$0xff]
    %v4702 = vld [vmem:[#allocation23 + $0x2748] sm:$0xff]
    %v4703 = vld [vmem:[#allocation23 + $0x2750] sm:$0xff]
    %v4704 = vld [vmem:[#allocation23 + $0x2758] sm:$0xff]
    %v4705 = vld [vmem:[#allocation23 + $0x2760] sm:$0xff]
    %v4706 = vld [vmem:[#allocation23 + $0x2768] sm:$0xff]
    %v4707 = vld [vmem:[#allocation23 + $0x2770] sm:$0xff]
    %v4708 = vld [vmem:[#allocation23 + $0x2778] sm:$0xff]
    %v4709 = vld [vmem:[#allocation23 + $0x2780] sm:$0xff]
    %v4710 = vld [vmem:[#allocation23 + $0x2788] sm:$0xff]
    %v4711 = vld [vmem:[#allocation23 + $0x2790] sm:$0xff]
    %v4712 = vld [vmem:[#allocation23 + $0x2798] sm:$0xff]
    %v4713 = vld [vmem:[#allocation23 + $0x27a0] sm:$0xff]
    %v4714 = vld [vmem:[#allocation23 + $0x27a8] sm:$0xff]
    %v4715 = vld [vmem:[#allocation23 + $0x27b0] sm:$0xff]
    %v4716 = vld [vmem:[#allocation23 + $0x27b8] sm:$0xff]
    %v4717 = vld [vmem:[#allocation23 + $0x27c0] sm:$0xff]
    %v4718 = vld [vmem:[#allocation23 + $0x27c8] sm:$0xff]
    %v4719 = vld [vmem:[#allocation23 + $0x27d0] sm:$0xff]
    %v4720 = vld [vmem:[#allocation23 + $0x27d8] sm:$0xff]
    %v4721 = vld [vmem:[#allocation23 + $0x27e0] sm:$0xff]
    %v4722 = vld [vmem:[#allocation23 + $0x27e8] sm:$0xff]
    %v4723 = vld [vmem:[#allocation23 + $0x27f0] sm:$0xff]
    %v4724 = vld [vmem:[#allocation23 + $0x27f8] sm:$0xff]
    %v4725 = vld [vmem:[#allocation23 + $0x2800] sm:$0xff]
    %v4726 = vld [vmem:[#allocation23 + $0x2808] sm:$0xff]
    %v4727 = vld [vmem:[#allocation23 + $0x2810] sm:$0xff]
    %v4728 = vld [vmem:[#allocation23 + $0x2818] sm:$0xff]
    %v4729 = vld [vmem:[#allocation23 + $0x2820] sm:$0xff]
    %v4730 = vld [vmem:[#allocation23 + $0x2828] sm:$0xff]
    %v4731 = vld [vmem:[#allocation23 + $0x2830] sm:$0xff]
    %v4732 = vld [vmem:[#allocation23 + $0x2838] sm:$0xff]
    %v4733 = vld [vmem:[#allocation23 + $0x2840] sm:$0xff]
    %v4734 = vld [vmem:[#allocation23 + $0x2848] sm:$0xff]
    %v4735 = vld [vmem:[#allocation23 + $0x2850] sm:$0xff]
    %v4736 = vld [vmem:[#allocation23 + $0x2858] sm:$0xff]
    %v4737 = vld [vmem:[#allocation23 + $0x2860] sm:$0xff]
    %v4738 = vld [vmem:[#allocation23 + $0x2868] sm:$0xff]
    %v4739 = vld [vmem:[#allocation23 + $0x2870] sm:$0xff]
    %v4740 = vld [vmem:[#allocation23 + $0x2878] sm:$0xff]
    %v4741 = vld [vmem:[#allocation23 + $0x2880] sm:$0xff]
    %v4742 = vld [vmem:[#allocation23 + $0x2888] sm:$0xff]
    %v4743 = vld [vmem:[#allocation23 + $0x2890] sm:$0xff]
    %v4744 = vld [vmem:[#allocation23 + $0x2898] sm:$0xff]
    %v4745 = vld [vmem:[#allocation23 + $0x28a0] sm:$0xff]
    %v4746 = vld [vmem:[#allocation23 + $0x28a8] sm:$0xff]
    %v4747 = vld [vmem:[#allocation23 + $0x28b0] sm:$0xff]
    %v4748 = vld [vmem:[#allocation23 + $0x28b8] sm:$0xff]
    %v4749 = vld [vmem:[#allocation23 + $0x28c0] sm:$0xff]
    %v4750 = vld [vmem:[#allocation23 + $0x28c8] sm:$0xff]
    %v4751 = vld [vmem:[#allocation23 + $0x28d0] sm:$0xff]
    %v4752 = vld [vmem:[#allocation23 + $0x28d8] sm:$0xff]
    %v4753 = vld [vmem:[#allocation23 + $0x28e0] sm:$0xff]
    %v4754 = vld [vmem:[#allocation23 + $0x28e8] sm:$0xff]
    %v4755 = vld [vmem:[#allocation23 + $0x28f0] sm:$0xff]
    %v4756 = vld [vmem:[#allocation23 + $0x28f8] sm:$0xff]
    %v4757 = vld [vmem:[#allocation23 + $0x2900] sm:$0xff]
    %v4758 = vld [vmem:[#allocation23 + $0x2908] sm:$0xff]
    %v4759 = vld [vmem:[#allocation23 + $0x2910] sm:$0xff]
    %v4760 = vld [vmem:[#allocation23 + $0x2918] sm:$0xff]
    %v4761 = vld [vmem:[#allocation23 + $0x2920] sm:$0xff]
    %v4762 = vld [vmem:[#allocation23 + $0x2928] sm:$0xff]
    %v4763 = vld [vmem:[#allocation23 + $0x2930] sm:$0xff]
    %v4764 = vld [vmem:[#allocation23 + $0x2938] sm:$0xff]
    %v4765 = vld [vmem:[#allocation23 + $0x2940] sm:$0xff]
    %v4766 = vld [vmem:[#allocation23 + $0x2948] sm:$0xff]
    %v4767 = vld [vmem:[#allocation23 + $0x2950] sm:$0xff]
    %v4768 = vld [vmem:[#allocation23 + $0x2958] sm:$0xff]
    %v4769 = vld [vmem:[#allocation23 + $0x2960] sm:$0xff]
    %v4770 = vld [vmem:[#allocation23 + $0x2968] sm:$0xff]
    %v4771 = vld [vmem:[#allocation23 + $0x2970] sm:$0xff]
    %v4772 = vld [vmem:[#allocation23 + $0x2978] sm:$0xff]
    %v4773 = vld [vmem:[#allocation23 + $0x2980] sm:$0xff]
    %v4774 = vld [vmem:[#allocation23 + $0x2988] sm:$0xff]
    %v4775 = vld [vmem:[#allocation23 + $0x2990] sm:$0xff]
    %v4776 = vld [vmem:[#allocation23 + $0x2998] sm:$0xff]
    %v4777 = vld [vmem:[#allocation23 + $0x29a0] sm:$0xff]
    %v4778 = vld [vmem:[#allocation23 + $0x29a8] sm:$0xff]
    %v4779 = vld [vmem:[#allocation23 + $0x29b0] sm:$0xff]
    %v4780 = vld [vmem:[#allocation23 + $0x29b8] sm:$0xff]
    %v4781 = vld [vmem:[#allocation23 + $0x29c0] sm:$0xff]
    %v4782 = vld [vmem:[#allocation23 + $0x29c8] sm:$0xff]
    %v4783 = vld [vmem:[#allocation23 + $0x29d0] sm:$0xff]
    %v4784 = vld [vmem:[#allocation23 + $0x29d8] sm:$0xff]
    %v4785 = vld [vmem:[#allocation23 + $0x29e0] sm:$0xff]
    %v4786 = vld [vmem:[#allocation23 + $0x29e8] sm:$0xff]
    %v4787 = vld [vmem:[#allocation23 + $0x29f0] sm:$0xff]
    %v4788 = vld [vmem:[#allocation23 + $0x29f8] sm:$0xff]
    %v4789 = vld [vmem:[#allocation23 + $0x2a00] sm:$0xff]
    %v4790 = vld [vmem:[#allocation23 + $0x2a08] sm:$0xff]
    %v4791 = vld [vmem:[#allocation23 + $0x2a10] sm:$0xff]
    %v4792 = vld [vmem:[#allocation23 + $0x2a18] sm:$0xff]
    %v4793 = vld [vmem:[#allocation23 + $0x2a20] sm:$0xff]
    %v4794 = vld [vmem:[#allocation23 + $0x2a28] sm:$0xff]
    %v4795 = vld [vmem:[#allocation23 + $0x2a30] sm:$0xff]
    %v4796 = vld [vmem:[#allocation23 + $0x2a38] sm:$0xff]
    %v4797 = vld [vmem:[#allocation23 + $0x2a40] sm:$0xff]
    %v4798 = vld [vmem:[#allocation23 + $0x2a48] sm:$0xff]
    %v4799 = vld [vmem:[#allocation23 + $0x2a50] sm:$0xff]
    %v4800 = vld [vmem:[#allocation23 + $0x2a58] sm:$0xff]
    %v4801 = vld [vmem:[#allocation23 + $0x2a60] sm:$0xff]
    %v4802 = vld [vmem:[#allocation23 + $0x2a68] sm:$0xff]
    %v4803 = vld [vmem:[#allocation23 + $0x2a70] sm:$0xff]
    %v4804 = vld [vmem:[#allocation23 + $0x2a78] sm:$0xff]
    %v4805 = vld [vmem:[#allocation23 + $0x2a80] sm:$0xff]
    %v4806 = vld [vmem:[#allocation23 + $0x2a88] sm:$0xff]
    %v4807 = vld [vmem:[#allocation23 + $0x2a90] sm:$0xff]
    %v4808 = vld [vmem:[#allocation23 + $0x2a98] sm:$0xff]
    %v4809 = vld [vmem:[#allocation23 + $0x2aa0] sm:$0xff]
    %v4810 = vld [vmem:[#allocation23 + $0x2aa8] sm:$0xff]
    %v4811 = vld [vmem:[#allocation23 + $0x2ab0] sm:$0xff]
    %v4812 = vld [vmem:[#allocation23 + $0x2ab8] sm:$0xff]
    %v4813 = vld [vmem:[#allocation23 + $0x2ac0] sm:$0xff]
    %v4814 = vld [vmem:[#allocation23 + $0x2ac8] sm:$0xff]
    %v4815 = vld [vmem:[#allocation23 + $0x2ad0] sm:$0xff]
    %v4816 = vld [vmem:[#allocation23 + $0x2ad8] sm:$0xff]
    %v4817 = vld [vmem:[#allocation23 + $0x2ae0] sm:$0xff]
    %v4818 = vld [vmem:[#allocation23 + $0x2ae8] sm:$0xff]
    %v4819 = vld [vmem:[#allocation23 + $0x2af0] sm:$0xff]
    %v4820 = vld [vmem:[#allocation23 + $0x2af8] sm:$0xff]
    %v4821 = vld [vmem:[#allocation23 + $0x2b00] sm:$0xff]
    %v4822 = vld [vmem:[#allocation23 + $0x2b08] sm:$0xff]
    %v4823 = vld [vmem:[#allocation23 + $0x2b10] sm:$0xff]
    %v4824 = vld [vmem:[#allocation23 + $0x2b18] sm:$0xff]
    %v4825 = vld [vmem:[#allocation23 + $0x2b20] sm:$0xff]
    %v4826 = vld [vmem:[#allocation23 + $0x2b28] sm:$0xff]
    %v4827 = vld [vmem:[#allocation23 + $0x2b30] sm:$0xff]
    %v4828 = vld [vmem:[#allocation23 + $0x2b38] sm:$0xff]
    %v4829 = vld [vmem:[#allocation23 + $0x2b40] sm:$0xff]
    %v4830 = vld [vmem:[#allocation23 + $0x2b48] sm:$0xff]
    %v4831 = vld [vmem:[#allocation23 + $0x2b50] sm:$0xff]
    %v4832 = vld [vmem:[#allocation23 + $0x2b58] sm:$0xff]
    %v4833 = vld [vmem:[#allocation23 + $0x2b60] sm:$0xff]
    %v4834 = vld [vmem:[#allocation23 + $0x2b68] sm:$0xff]
    %v4835 = vld [vmem:[#allocation23 + $0x2b70] sm:$0xff]
    %v4836 = vld [vmem:[#allocation23 + $0x2b78] sm:$0xff]
    %v4837 = vld [vmem:[#allocation23 + $0x2b80] sm:$0xff]
    %v4838 = vld [vmem:[#allocation23 + $0x2b88] sm:$0xff]
    %v4839 = vld [vmem:[#allocation23 + $0x2b90] sm:$0xff]
    %v4840 = vld [vmem:[#allocation23 + $0x2b98] sm:$0xff]
    %v4841 = vld [vmem:[#allocation23 + $0x2ba0] sm:$0xff]
    %v4842 = vld [vmem:[#allocation23 + $0x2ba8] sm:$0xff]
    %v4843 = vld [vmem:[#allocation23 + $0x2bb0] sm:$0xff]
    %v4844 = vld [vmem:[#allocation23 + $0x2bb8] sm:$0xff]
    %v4845 = vld [vmem:[#allocation23 + $0x2bc0] sm:$0xff]
    %v4846 = vld [vmem:[#allocation23 + $0x2bc8] sm:$0xff]
    %v4847 = vld [vmem:[#allocation23 + $0x2bd0] sm:$0xff]
    %v4848 = vld [vmem:[#allocation23 + $0x2bd8] sm:$0xff]
    %v4849 = vld [vmem:[#allocation23 + $0x2be0] sm:$0xff]
    %v4850 = vld [vmem:[#allocation23 + $0x2be8] sm:$0xff]
    %v4851 = vld [vmem:[#allocation23 + $0x2bf0] sm:$0xff]
    %v4852 = vld [vmem:[#allocation23 + $0x2bf8] sm:$0xff]
    %v4853 = vld [vmem:[#allocation23 + $0x2c00] sm:$0xff]
    %v4854 = vld [vmem:[#allocation23 + $0x2c08] sm:$0xff]
    %v4855 = vld [vmem:[#allocation23 + $0x2c10] sm:$0xff]
    %v4856 = vld [vmem:[#allocation23 + $0x2c18] sm:$0xff]
    %v4857 = vld [vmem:[#allocation23 + $0x2c20] sm:$0xff]
    %v4858 = vld [vmem:[#allocation23 + $0x2c28] sm:$0xff]
    %v4859 = vld [vmem:[#allocation23 + $0x2c30] sm:$0xff]
    %v4860 = vld [vmem:[#allocation23 + $0x2c38] sm:$0xff]
    %v4861 = vld [vmem:[#allocation23 + $0x2c40] sm:$0xff]
    %v4862 = vld [vmem:[#allocation23 + $0x2c48] sm:$0xff]
    %v4863 = vld [vmem:[#allocation23 + $0x2c50] sm:$0xff]
    %v4864 = vld [vmem:[#allocation23 + $0x2c58] sm:$0xff]
    %v4865 = vld [vmem:[#allocation23 + $0x2c60] sm:$0xff]
    %v4866 = vld [vmem:[#allocation23 + $0x2c68] sm:$0xff]
    %v4867 = vld [vmem:[#allocation23 + $0x2c70] sm:$0xff]
    %v4868 = vld [vmem:[#allocation23 + $0x2c78] sm:$0xff]
    %v4869 = vld [vmem:[#allocation23 + $0x2c80] sm:$0xff]
    %v4870 = vld [vmem:[#allocation23 + $0x2c88] sm:$0xff]
    %v4871 = vld [vmem:[#allocation23 + $0x2c90] sm:$0xff]
    %v4872 = vld [vmem:[#allocation23 + $0x2c98] sm:$0xff]
    %v4873 = vld [vmem:[#allocation23 + $0x2ca0] sm:$0xff]
    %v4874 = vld [vmem:[#allocation23 + $0x2ca8] sm:$0xff]
    %v4875 = vld [vmem:[#allocation23 + $0x2cb0] sm:$0xff]
    %v4876 = vld [vmem:[#allocation23 + $0x2cb8] sm:$0xff]
    %v4877 = vld [vmem:[#allocation23 + $0x2cc0] sm:$0xff]
    %v4878 = vld [vmem:[#allocation23 + $0x2cc8] sm:$0xff]
    %v4879 = vld [vmem:[#allocation23 + $0x2cd0] sm:$0xff]
    %v4880 = vld [vmem:[#allocation23 + $0x2cd8] sm:$0xff]
    %v4881 = vld [vmem:[#allocation23 + $0x2ce0] sm:$0xff]
    %v4882 = vld [vmem:[#allocation23 + $0x2ce8] sm:$0xff]
    %v4883 = vld [vmem:[#allocation23 + $0x2cf0] sm:$0xff]
    %v4884 = vld [vmem:[#allocation23 + $0x2cf8] sm:$0xff]
    %v4885 = vld [vmem:[#allocation23 + $0x2d00] sm:$0xff]
    %v4886 = vld [vmem:[#allocation23 + $0x2d08] sm:$0xff]
    %v4887 = vld [vmem:[#allocation23 + $0x2d10] sm:$0xff]
    %v4888 = vld [vmem:[#allocation23 + $0x2d18] sm:$0xff]
    %v4889 = vld [vmem:[#allocation23 + $0x2d20] sm:$0xff]
    %v4890 = vld [vmem:[#allocation23 + $0x2d28] sm:$0xff]
    %v4891 = vld [vmem:[#allocation23 + $0x2d30] sm:$0xff]
    %v4892 = vld [vmem:[#allocation23 + $0x2d38] sm:$0xff]
    %v4893 = vld [vmem:[#allocation23 + $0x2d40] sm:$0xff]
    %v4894 = vld [vmem:[#allocation23 + $0x2d48] sm:$0xff]
    %v4895 = vld [vmem:[#allocation23 + $0x2d50] sm:$0xff]
    %v4896 = vld [vmem:[#allocation23 + $0x2d58] sm:$0xff]
    %v4897 = vld [vmem:[#allocation23 + $0x2d60] sm:$0xff]
    %v4898 = vld [vmem:[#allocation23 + $0x2d68] sm:$0xff]
    %v4899 = vld [vmem:[#allocation23 + $0x2d70] sm:$0xff]
    %v4900 = vld [vmem:[#allocation23 + $0x2d78] sm:$0xff]
    %v4901 = vld [vmem:[#allocation23 + $0x2d80] sm:$0xff]
    %v4902 = vld [vmem:[#allocation23 + $0x2d88] sm:$0xff]
    %v4903 = vld [vmem:[#allocation23 + $0x2d90] sm:$0xff]
    %v4904 = vld [vmem:[#allocation23 + $0x2d98] sm:$0xff]
    %v4905 = vld [vmem:[#allocation23 + $0x2da0] sm:$0xff]
    %v4906 = vld [vmem:[#allocation23 + $0x2da8] sm:$0xff]
    %v4907 = vld [vmem:[#allocation23 + $0x2db0] sm:$0xff]
    %v4908 = vld [vmem:[#allocation23 + $0x2db8] sm:$0xff]
    %v4909 = vld [vmem:[#allocation23 + $0x2dc0] sm:$0xff]
    %v4910 = vld [vmem:[#allocation23 + $0x2dc8] sm:$0xff]
    %v4911 = vld [vmem:[#allocation23 + $0x2dd0] sm:$0xff]
    %v4912 = vld [vmem:[#allocation23 + $0x2dd8] sm:$0xff]
    %v4913 = vld [vmem:[#allocation23 + $0x2de0] sm:$0xff]
    %v4914 = vld [vmem:[#allocation23 + $0x2de8] sm:$0xff]
    %v4915 = vld [vmem:[#allocation23 + $0x2df0] sm:$0xff]
    %v4916 = vld [vmem:[#allocation23 + $0x2df8] sm:$0xff]
    %v4917 = vld [vmem:[#allocation23 + $0x2e00] sm:$0xff]
    %v4918 = vld [vmem:[#allocation23 + $0x2e08] sm:$0xff]
    %v4919 = vld [vmem:[#allocation23 + $0x2e10] sm:$0xff]
    %v4920 = vld [vmem:[#allocation23 + $0x2e18] sm:$0xff]
    %v4921 = vld [vmem:[#allocation23 + $0x2e20] sm:$0xff]
    %v4922 = vld [vmem:[#allocation23 + $0x2e28] sm:$0xff]
    %v4923 = vld [vmem:[#allocation23 + $0x2e30] sm:$0xff]
    %v4924 = vld [vmem:[#allocation23 + $0x2e38] sm:$0xff]
    %v4925 = vld [vmem:[#allocation23 + $0x2e40] sm:$0xff]
    %v4926 = vld [vmem:[#allocation23 + $0x2e48] sm:$0xff]
    %v4927 = vld [vmem:[#allocation23 + $0x2e50] sm:$0xff]
    %v4928 = vld [vmem:[#allocation23 + $0x2e58] sm:$0xff]
    %v4929 = vld [vmem:[#allocation23 + $0x2e60] sm:$0xff]
    %v4930 = vld [vmem:[#allocation23 + $0x2e68] sm:$0xff]
    %v4931 = vld [vmem:[#allocation23 + $0x2e70] sm:$0xff]
    %v4932 = vld [vmem:[#allocation23 + $0x2e78] sm:$0xff]
    %v4933 = vld [vmem:[#allocation23 + $0x2e80] sm:$0xff]
    %v4934 = vld [vmem:[#allocation23 + $0x2e88] sm:$0xff]
    %v4935 = vld [vmem:[#allocation23 + $0x2e90] sm:$0xff]
    %v4936 = vld [vmem:[#allocation23 + $0x2e98] sm:$0xff]
    %v4937 = vld [vmem:[#allocation23 + $0x2ea0] sm:$0xff]
    %v4938 = vld [vmem:[#allocation23 + $0x2ea8] sm:$0xff]
    %v4939 = vld [vmem:[#allocation23 + $0x2eb0] sm:$0xff]
    %v4940 = vld [vmem:[#allocation23 + $0x2eb8] sm:$0xff]
    %v4941 = vld [vmem:[#allocation23 + $0x2ec0] sm:$0xff]
    %v4942 = vld [vmem:[#allocation23 + $0x2ec8] sm:$0xff]
    %v4943 = vld [vmem:[#allocation23 + $0x2ed0] sm:$0xff]
    %v4944 = vld [vmem:[#allocation23 + $0x2ed8] sm:$0xff]
    %v4945 = vld [vmem:[#allocation23 + $0x2ee0] sm:$0xff]
    %v4946 = vld [vmem:[#allocation23 + $0x2ee8] sm:$0xff]
    %v4947 = vld [vmem:[#allocation23 + $0x2ef0] sm:$0xff]
    %v4948 = vld [vmem:[#allocation23 + $0x2ef8] sm:$0xff]
    %v4949 = vld [vmem:[#allocation23 + $0x2f00] sm:$0xff]
    %v4950 = vld [vmem:[#allocation23 + $0x2f08] sm:$0xff]
    %v4951 = vld [vmem:[#allocation23 + $0x2f10] sm:$0xff]
    %v4952 = vld [vmem:[#allocation23 + $0x2f18] sm:$0xff]
    %v4953 = vld [vmem:[#allocation23 + $0x2f20] sm:$0xff]
    %v4954 = vld [vmem:[#allocation23 + $0x2f28] sm:$0xff]
    %v4955 = vld [vmem:[#allocation23 + $0x2f30] sm:$0xff]
    %v4956 = vld [vmem:[#allocation23 + $0x2f38] sm:$0xff]
    %v4957 = vld [vmem:[#allocation23 + $0x2f40] sm:$0xff]
    %v4958 = vld [vmem:[#allocation23 + $0x2f48] sm:$0xff]
    %v4959 = vld [vmem:[#allocation23 + $0x2f50] sm:$0xff]
    %v4960 = vld [vmem:[#allocation23 + $0x2f58] sm:$0xff]
    %v4961 = vld [vmem:[#allocation23 + $0x2f60] sm:$0xff]
    %v4962 = vld [vmem:[#allocation23 + $0x2f68] sm:$0xff]
    %v4963 = vld [vmem:[#allocation23 + $0x2f70] sm:$0xff]
    %v4964 = vld [vmem:[#allocation23 + $0x2f78] sm:$0xff]
    %v4965 = vld [vmem:[#allocation23 + $0x2f80] sm:$0xff]
    %v4966 = vld [vmem:[#allocation23 + $0x2f88] sm:$0xff]
    %v4967 = vld [vmem:[#allocation23 + $0x2f90] sm:$0xff]
    %v4968 = vld [vmem:[#allocation23 + $0x2f98] sm:$0xff]
    %v4969 = vld [vmem:[#allocation23 + $0x2fa0] sm:$0xff]
    %v4970 = vld [vmem:[#allocation23 + $0x2fa8] sm:$0xff]
    %v4971 = vld [vmem:[#allocation23 + $0x2fb0] sm:$0xff]
    %v4972 = vld [vmem:[#allocation23 + $0x2fb8] sm:$0xff]
    %v4973 = vld [vmem:[#allocation23 + $0x2fc0] sm:$0xff]
    %v4974 = vld [vmem:[#allocation23 + $0x2fc8] sm:$0xff]
    %v4975 = vld [vmem:[#allocation23 + $0x2fd0] sm:$0xff]
    %v4976 = vld [vmem:[#allocation23 + $0x2fd8] sm:$0xff]
    %v4977 = vld [vmem:[#allocation23 + $0x2fe0] sm:$0xff]
    %v4978 = vld [vmem:[#allocation23 + $0x2fe8] sm:$0xff]
    %v4979 = vld [vmem:[#allocation23 + $0x2ff0] sm:$0xff]
    %v4980 = vld [vmem:[#allocation23 + $0x2ff8] sm:$0xff]
    %v4981 = vld [vmem:[#allocation23 + $0x3000] sm:$0xff]
    %v4982 = vld [vmem:[#allocation23 + $0x3008] sm:$0xff]
    %v4983 = vld [vmem:[#allocation23 + $0x3010] sm:$0xff]
    %v4984 = vld [vmem:[#allocation23 + $0x3018] sm:$0xff]
    %v4985 = vld [vmem:[#allocation23 + $0x3020] sm:$0xff]
    %v4986 = vld [vmem:[#allocation23 + $0x3028] sm:$0xff]
    %v4987 = vld [vmem:[#allocation23 + $0x3030] sm:$0xff]
    %v4988 = vld [vmem:[#allocation23 + $0x3038] sm:$0xff]
    %v4989 = vld [vmem:[#allocation23 + $0x3040] sm:$0xff]
    %v4990 = vld [vmem:[#allocation23 + $0x3048] sm:$0xff]
    %v4991 = vld [vmem:[#allocation23 + $0x3050] sm:$0xff]
    %v4992 = vld [vmem:[#allocation23 + $0x3058] sm:$0xff]
    %v4993 = vld [vmem:[#allocation23 + $0x3060] sm:$0xff]
    %v4994 = vld [vmem:[#allocation23 + $0x3068] sm:$0xff]
    %v4995 = vld [vmem:[#allocation23 + $0x3070] sm:$0xff]
    %v4996 = vld [vmem:[#allocation23 + $0x3078] sm:$0xff]
    %v4997 = vld [vmem:[#allocation23 + $0x3080] sm:$0xff]
    %v4998 = vld [vmem:[#allocation23 + $0x3088] sm:$0xff]
    %v4999 = vld [vmem:[#allocation23 + $0x3090] sm:$0xff]
    %v5000 = vld [vmem:[#allocation23 + $0x3098] sm:$0xff]
    %v5001 = vld [vmem:[#allocation23 + $0x30a0] sm:$0xff]
    %v5002 = vld [vmem:[#allocation23 + $0x30a8] sm:$0xff]
    %v5003 = vld [vmem:[#allocation23 + $0x30b0] sm:$0xff]
    %v5004 = vld [vmem:[#allocation23 + $0x30b8] sm:$0xff]
    %v5005 = vld [vmem:[#allocation23 + $0x30c0] sm:$0xff]
    %v5006 = vld [vmem:[#allocation23 + $0x30c8] sm:$0xff]
    %v5007 = vld [vmem:[#allocation23 + $0x30d0] sm:$0xff]
    %v5008 = vld [vmem:[#allocation23 + $0x30d8] sm:$0xff]
    %v5009 = vld [vmem:[#allocation23 + $0x30e0] sm:$0xff]
    %v5010 = vld [vmem:[#allocation23 + $0x30e8] sm:$0xff]
    %v5011 = vld [vmem:[#allocation23 + $0x30f0] sm:$0xff]
    %v5012 = vld [vmem:[#allocation23 + $0x30f8] sm:$0xff]
    %v5013 = vld [vmem:[#allocation23 + $0x3100] sm:$0xff]
    %v5014 = vld [vmem:[#allocation23 + $0x3108] sm:$0xff]
    %v5015 = vld [vmem:[#allocation23 + $0x3110] sm:$0xff]
    %v5016 = vld [vmem:[#allocation23 + $0x3118] sm:$0xff]
    %v5017 = vld [vmem:[#allocation23 + $0x3120] sm:$0xff]
    %v5018 = vld [vmem:[#allocation23 + $0x3128] sm:$0xff]
    %v5019 = vld [vmem:[#allocation23 + $0x3130] sm:$0xff]
    %v5020 = vld [vmem:[#allocation23 + $0x3138] sm:$0xff]
    %v5021 = vld [vmem:[#allocation23 + $0x3140] sm:$0xff]
    %v5022 = vld [vmem:[#allocation23 + $0x3148] sm:$0xff]
    %v5023 = vld [vmem:[#allocation23 + $0x3150] sm:$0xff]
    %v5024 = vld [vmem:[#allocation23 + $0x3158] sm:$0xff]
    %v5025 = vld [vmem:[#allocation23 + $0x3160] sm:$0xff]
    %v5026 = vld [vmem:[#allocation23 + $0x3168] sm:$0xff]
    %v5027 = vld [vmem:[#allocation23 + $0x3170] sm:$0xff]
    %v5028 = vld [vmem:[#allocation23 + $0x3178] sm:$0xff]
    %v5029 = vld [vmem:[#allocation23 + $0x3180] sm:$0xff]
    %v5030 = vld [vmem:[#allocation23 + $0x3188] sm:$0xff]
    %v5031 = vld [vmem:[#allocation23 + $0x3190] sm:$0xff]
    %v5032 = vld [vmem:[#allocation23 + $0x3198] sm:$0xff]
    %v5033 = vld [vmem:[#allocation23 + $0x31a0] sm:$0xff]
    %v5034 = vld [vmem:[#allocation23 + $0x31a8] sm:$0xff]
    %v5035 = vld [vmem:[#allocation23 + $0x31b0] sm:$0xff]
    %v5036 = vld [vmem:[#allocation23 + $0x31b8] sm:$0xff]
    %v5037 = vld [vmem:[#allocation23 + $0x31c0] sm:$0xff]
    %v5038 = vld [vmem:[#allocation23 + $0x31c8] sm:$0xff]
    %v5039 = vld [vmem:[#allocation23 + $0x31d0] sm:$0xff]
    %v5040 = vld [vmem:[#allocation23 + $0x31d8] sm:$0xff]
    %v5041 = vld [vmem:[#allocation23 + $0x31e0] sm:$0xff]
    %v5042 = vld [vmem:[#allocation23 + $0x31e8] sm:$0xff]
    %v5043 = vld [vmem:[#allocation23 + $0x31f0] sm:$0xff]
    %v5044 = vld [vmem:[#allocation23 + $0x31f8] sm:$0xff]
    %v5045 = vld [vmem:[#allocation23 + $0x3200] sm:$0xff]
    %v5046 = vld [vmem:[#allocation23 + $0x3208] sm:$0xff]
    %v5047 = vld [vmem:[#allocation23 + $0x3210] sm:$0xff]
    %v5048 = vld [vmem:[#allocation23 + $0x3218] sm:$0xff]
    %v5049 = vld [vmem:[#allocation23 + $0x3220] sm:$0xff]
    %v5050 = vld [vmem:[#allocation23 + $0x3228] sm:$0xff]
    %v5051 = vld [vmem:[#allocation23 + $0x3230] sm:$0xff]
    %v5052 = vld [vmem:[#allocation23 + $0x3238] sm:$0xff]
    %v5053 = vld [vmem:[#allocation23 + $0x3240] sm:$0xff]
    %v5054 = vld [vmem:[#allocation23 + $0x3248] sm:$0xff]
    %v5055 = vld [vmem:[#allocation23 + $0x3250] sm:$0xff]
    %v5056 = vld [vmem:[#allocation23 + $0x3258] sm:$0xff]
    %v5057 = vld [vmem:[#allocation23 + $0x3260] sm:$0xff]
    %v5058 = vld [vmem:[#allocation23 + $0x3268] sm:$0xff]
    %v5059 = vld [vmem:[#allocation23 + $0x3270] sm:$0xff]
    %v5060 = vld [vmem:[#allocation23 + $0x3278] sm:$0xff]
    %v5061 = vld [vmem:[#allocation23 + $0x3280] sm:$0xff]
    %v5062 = vld [vmem:[#allocation23 + $0x3288] sm:$0xff]
    %v5063 = vld [vmem:[#allocation23 + $0x3290] sm:$0xff]
    %v5064 = vld [vmem:[#allocation23 + $0x3298] sm:$0xff]
    %v5065 = vld [vmem:[#allocation23 + $0x32a0] sm:$0xff]
    %v5066 = vld [vmem:[#allocation23 + $0x32a8] sm:$0xff]
    %v5067 = vld [vmem:[#allocation23 + $0x32b0] sm:$0xff]
    %v5068 = vld [vmem:[#allocation23 + $0x32b8] sm:$0xff]
    %v5069 = vld [vmem:[#allocation23 + $0x32c0] sm:$0xff]
    %v5070 = vld [vmem:[#allocation23 + $0x32c8] sm:$0xff]
    %v5071 = vld [vmem:[#allocation23 + $0x32d0] sm:$0xff]
    %v5072 = vld [vmem:[#allocation23 + $0x32d8] sm:$0xff]
    %v5073 = vld [vmem:[#allocation23 + $0x32e0] sm:$0xff]
    %v5074 = vld [vmem:[#allocation23 + $0x32e8] sm:$0xff]
    %v5075 = vld [vmem:[#allocation23 + $0x32f0] sm:$0xff]
    %v5076 = vld [vmem:[#allocation23 + $0x32f8] sm:$0xff]
    %v5077 = vld [vmem:[#allocation23 + $0x3300] sm:$0xff]
    %v5078 = vld [vmem:[#allocation23 + $0x3308] sm:$0xff]
    %v5079 = vld [vmem:[#allocation23 + $0x3310] sm:$0xff]
    %v5080 = vld [vmem:[#allocation23 + $0x3318] sm:$0xff]
    %v5081 = vld [vmem:[#allocation23 + $0x3320] sm:$0xff]
    %v5082 = vld [vmem:[#allocation23 + $0x3328] sm:$0xff]
    %v5083 = vld [vmem:[#allocation23 + $0x3330] sm:$0xff]
    %v5084 = vld [vmem:[#allocation23 + $0x3338] sm:$0xff]
    %v5085 = vld [vmem:[#allocation23 + $0x3340] sm:$0xff]
    %v5086 = vld [vmem:[#allocation23 + $0x3348] sm:$0xff]
    %v5087 = vld [vmem:[#allocation23 + $0x3350] sm:$0xff]
    %v5088 = vld [vmem:[#allocation23 + $0x3358] sm:$0xff]
    %v5089 = vld [vmem:[#allocation23 + $0x3360] sm:$0xff]
    %v5090 = vld [vmem:[#allocation23 + $0x3368] sm:$0xff]
    %v5091 = vld [vmem:[#allocation23 + $0x3370] sm:$0xff]
    %v5092 = vld [vmem:[#allocation23 + $0x3378] sm:$0xff]
    %v5093 = vld [vmem:[#allocation23 + $0x3380] sm:$0xff]
    %v5094 = vld [vmem:[#allocation23 + $0x3388] sm:$0xff]
    %v5095 = vld [vmem:[#allocation23 + $0x3390] sm:$0xff]
    %v5096 = vld [vmem:[#allocation23 + $0x3398] sm:$0xff]
    %v5097 = vld [vmem:[#allocation23 + $0x33a0] sm:$0xff]
    %v5098 = vld [vmem:[#allocation23 + $0x33a8] sm:$0xff]
    %v5099 = vld [vmem:[#allocation23 + $0x33b0] sm:$0xff]
    %v5100 = vld [vmem:[#allocation23 + $0x33b8] sm:$0xff]
    %v5101 = vld [vmem:[#allocation23 + $0x33c0] sm:$0xff]
    %v5102 = vld [vmem:[#allocation23 + $0x33c8] sm:$0xff]
    %v5103 = vld [vmem:[#allocation23 + $0x33d0] sm:$0xff]
    %v5104 = vld [vmem:[#allocation23 + $0x33d8] sm:$0xff]
    %v5105 = vld [vmem:[#allocation23 + $0x33e0] sm:$0xff]
    %v5106 = vld [vmem:[#allocation23 + $0x33e8] sm:$0xff]
    %v5107 = vld [vmem:[#allocation23 + $0x33f0] sm:$0xff]
    %v5108 = vld [vmem:[#allocation23 + $0x33f8] sm:$0xff]
    %v5109 = vld [vmem:[#allocation23 + $0x3400] sm:$0xff]
    %v5110 = vld [vmem:[#allocation23 + $0x3408] sm:$0xff]
    %v5111 = vld [vmem:[#allocation23 + $0x3410] sm:$0xff]
    %v5112 = vld [vmem:[#allocation23 + $0x3418] sm:$0xff]
    %v5113 = vld [vmem:[#allocation23 + $0x3420] sm:$0xff]
    %v5114 = vld [vmem:[#allocation23 + $0x3428] sm:$0xff]
    %v5115 = vld [vmem:[#allocation23 + $0x3430] sm:$0xff]
    %v5116 = vld [vmem:[#allocation23 + $0x3438] sm:$0xff]
    %v5117 = vld [vmem:[#allocation23 + $0x3440] sm:$0xff]
    %v5118 = vld [vmem:[#allocation23 + $0x3448] sm:$0xff]
    %v5119 = vld [vmem:[#allocation23 + $0x3450] sm:$0xff]
    %v5120 = vld [vmem:[#allocation23 + $0x3458] sm:$0xff]
    %v5121 = vld [vmem:[#allocation23 + $0x3460] sm:$0xff]
    %v5122 = vld [vmem:[#allocation23 + $0x3468] sm:$0xff]
    %v5123 = vld [vmem:[#allocation23 + $0x3470] sm:$0xff]
    %v5124 = vld [vmem:[#allocation23 + $0x3478] sm:$0xff]
    %v5125 = vld [vmem:[#allocation23 + $0x3480] sm:$0xff]
    %v5126 = vld [vmem:[#allocation23 + $0x3488] sm:$0xff]
    %v5127 = vld [vmem:[#allocation23 + $0x3490] sm:$0xff]
    %v5128 = vld [vmem:[#allocation23 + $0x3498] sm:$0xff]
    %v5129 = vld [vmem:[#allocation23 + $0x34a0] sm:$0xff]
    %v5130 = vld [vmem:[#allocation23 + $0x34a8] sm:$0xff]
    %v5131 = vld [vmem:[#allocation23 + $0x34b0] sm:$0xff]
    %v5132 = vld [vmem:[#allocation23 + $0x34b8] sm:$0xff]
    %v5133 = vld [vmem:[#allocation23 + $0x34c0] sm:$0xff]
    %v5134 = vld [vmem:[#allocation23 + $0x34c8] sm:$0xff]
    %v5135 = vld [vmem:[#allocation23 + $0x34d0] sm:$0xff]
    %v5136 = vld [vmem:[#allocation23 + $0x34d8] sm:$0xff]
    %v5137 = vld [vmem:[#allocation23 + $0x34e0] sm:$0xff]
    %v5138 = vld [vmem:[#allocation23 + $0x34e8] sm:$0xff]
    %v5139 = vld [vmem:[#allocation23 + $0x34f0] sm:$0xff]
    %v5140 = vld [vmem:[#allocation23 + $0x34f8] sm:$0xff]
    %v5141 = vld [vmem:[#allocation23 + $0x3500] sm:$0xff]
    %v5142 = vld [vmem:[#allocation23 + $0x3508] sm:$0xff]
    %v5143 = vld [vmem:[#allocation23 + $0x3510] sm:$0xff]
    %v5144 = vld [vmem:[#allocation23 + $0x3518] sm:$0xff]
    %v5145 = vld [vmem:[#allocation23 + $0x3520] sm:$0xff]
    %v5146 = vld [vmem:[#allocation23 + $0x3528] sm:$0xff]
    %v5147 = vld [vmem:[#allocation23 + $0x3530] sm:$0xff]
    %v5148 = vld [vmem:[#allocation23 + $0x3538] sm:$0xff]
    %v5149 = vld [vmem:[#allocation23 + $0x3540] sm:$0xff]
    %v5150 = vld [vmem:[#allocation23 + $0x3548] sm:$0xff]
    %v5151 = vld [vmem:[#allocation23 + $0x3550] sm:$0xff]
    %v5152 = vld [vmem:[#allocation23 + $0x3558] sm:$0xff]
    %v5153 = vld [vmem:[#allocation23 + $0x3560] sm:$0xff]
    %v5154 = vld [vmem:[#allocation23 + $0x3568] sm:$0xff]
    %v5155 = vld [vmem:[#allocation23 + $0x3570] sm:$0xff]
    %v5156 = vld [vmem:[#allocation23 + $0x3578] sm:$0xff]
    %v5157 = vld [vmem:[#allocation23 + $0x3580] sm:$0xff]
    %v5158 = vld [vmem:[#allocation23 + $0x3588] sm:$0xff]
    %v5159 = vld [vmem:[#allocation23 + $0x3590] sm:$0xff]
    %v5160 = vld [vmem:[#allocation23 + $0x3598] sm:$0xff]
    %v5161 = vld [vmem:[#allocation23 + $0x35a0] sm:$0xff]
    %v5162 = vld [vmem:[#allocation23 + $0x35a8] sm:$0xff]
    %v5163 = vld [vmem:[#allocation23 + $0x35b0] sm:$0xff]
    %v5164 = vld [vmem:[#allocation23 + $0x35b8] sm:$0xff]
    %v5165 = vld [vmem:[#allocation23 + $0x35c0] sm:$0xff]
    %v5166 = vld [vmem:[#allocation23 + $0x35c8] sm:$0xff]
    %v5167 = vld [vmem:[#allocation23 + $0x35d0] sm:$0xff]
    %v5168 = vld [vmem:[#allocation23 + $0x35d8] sm:$0xff]
    %v5169 = vld [vmem:[#allocation23 + $0x35e0] sm:$0xff]
    %v5170 = vld [vmem:[#allocation23 + $0x35e8] sm:$0xff]
    %v5171 = vld [vmem:[#allocation23 + $0x35f0] sm:$0xff]
    %v5172 = vld [vmem:[#allocation23 + $0x35f8] sm:$0xff]
    %v5173 = vld [vmem:[#allocation23 + $0x3600] sm:$0xff]
    %v5174 = vld [vmem:[#allocation23 + $0x3608] sm:$0xff]
    %v5175 = vld [vmem:[#allocation23 + $0x3610] sm:$0xff]
    %v5176 = vld [vmem:[#allocation23 + $0x3618] sm:$0xff]
    %v5177 = vld [vmem:[#allocation23 + $0x3620] sm:$0xff]
    %v5178 = vld [vmem:[#allocation23 + $0x3628] sm:$0xff]
    %v5179 = vld [vmem:[#allocation23 + $0x3630] sm:$0xff]
    %v5180 = vld [vmem:[#allocation23 + $0x3638] sm:$0xff]
    %v5181 = vld [vmem:[#allocation23 + $0x3640] sm:$0xff]
    %v5182 = vld [vmem:[#allocation23 + $0x3648] sm:$0xff]
    %v5183 = vld [vmem:[#allocation23 + $0x3650] sm:$0xff]
    %v5184 = vld [vmem:[#allocation23 + $0x3658] sm:$0xff]
    %v5185 = vld [vmem:[#allocation23 + $0x3660] sm:$0xff]
    %v5186 = vld [vmem:[#allocation23 + $0x3668] sm:$0xff]
    %v5187 = vld [vmem:[#allocation23 + $0x3670] sm:$0xff]
    %v5188 = vld [vmem:[#allocation23 + $0x3678] sm:$0xff]
    %v5189 = vld [vmem:[#allocation23 + $0x3680] sm:$0xff]
    %v5190 = vld [vmem:[#allocation23 + $0x3688] sm:$0xff]
    %v5191 = vld [vmem:[#allocation23 + $0x3690] sm:$0xff]
    %v5192 = vld [vmem:[#allocation23 + $0x3698] sm:$0xff]
    %v5193 = vld [vmem:[#allocation23 + $0x36a0] sm:$0xff]
    %v5194 = vld [vmem:[#allocation23 + $0x36a8] sm:$0xff]
    %v5195 = vld [vmem:[#allocation23 + $0x36b0] sm:$0xff]
    %v5196 = vld [vmem:[#allocation23 + $0x36b8] sm:$0xff]
    %v5197 = vld [vmem:[#allocation23 + $0x36c0] sm:$0xff]
    %v5198 = vld [vmem:[#allocation23 + $0x36c8] sm:$0xff]
    %v5199 = vld [vmem:[#allocation23 + $0x36d0] sm:$0xff]
    %v5200 = vld [vmem:[#allocation23 + $0x36d8] sm:$0xff]
    %v5201 = vld [vmem:[#allocation23 + $0x36e0] sm:$0xff]
    %v5202 = vld [vmem:[#allocation23 + $0x36e8] sm:$0xff]
    %v5203 = vld [vmem:[#allocation23 + $0x36f0] sm:$0xff]
    %v5204 = vld [vmem:[#allocation23 + $0x36f8] sm:$0xff]
    %v5205 = vld [vmem:[#allocation23 + $0x3700] sm:$0xff]
    %v5206 = vld [vmem:[#allocation23 + $0x3708] sm:$0xff]
    %v5207 = vld [vmem:[#allocation23 + $0x3710] sm:$0xff]
    %v5208 = vld [vmem:[#allocation23 + $0x3718] sm:$0xff]
    %v5209 = vld [vmem:[#allocation23 + $0x3720] sm:$0xff]
    %v5210 = vld [vmem:[#allocation23 + $0x3728] sm:$0xff]
    %v5211 = vld [vmem:[#allocation23 + $0x3730] sm:$0xff]
    %v5212 = vld [vmem:[#allocation23 + $0x3738] sm:$0xff]
    %v5213 = vld [vmem:[#allocation23 + $0x3740] sm:$0xff]
    %v5214 = vld [vmem:[#allocation23 + $0x3748] sm:$0xff]
    %v5215 = vld [vmem:[#allocation23 + $0x3750] sm:$0xff]
    %v5216 = vld [vmem:[#allocation23 + $0x3758] sm:$0xff]
    %v5217 = vld [vmem:[#allocation23 + $0x3760] sm:$0xff]
    %v5218 = vld [vmem:[#allocation23 + $0x3768] sm:$0xff]
    %v5219 = vld [vmem:[#allocation23 + $0x3770] sm:$0xff]
    %v5220 = vld [vmem:[#allocation23 + $0x3778] sm:$0xff]
    %v5221 = vld [vmem:[#allocation23 + $0x3780] sm:$0xff]
    %v5222 = vld [vmem:[#allocation23 + $0x3788] sm:$0xff]
    %v5223 = vld [vmem:[#allocation23 + $0x3790] sm:$0xff]
    %v5224 = vld [vmem:[#allocation23 + $0x3798] sm:$0xff]
    %v5225 = vld [vmem:[#allocation23 + $0x37a0] sm:$0xff]
    %v5226 = vld [vmem:[#allocation23 + $0x37a8] sm:$0xff]
    %v5227 = vld [vmem:[#allocation23 + $0x37b0] sm:$0xff]
    %v5228 = vld [vmem:[#allocation23 + $0x37b8] sm:$0xff]
    %v5229 = vld [vmem:[#allocation23 + $0x37c0] sm:$0xff]
    %v5230 = vld [vmem:[#allocation23 + $0x37c8] sm:$0xff]
    %v5231 = vld [vmem:[#allocation23 + $0x37d0] sm:$0xff]
    %v5232 = vld [vmem:[#allocation23 + $0x37d8] sm:$0xff]
    %v5233 = vld [vmem:[#allocation23 + $0x37e0] sm:$0xff]
    %v5234 = vld [vmem:[#allocation23 + $0x37e8] sm:$0xff]
    %v5235 = vld [vmem:[#allocation23 + $0x37f0] sm:$0xff]
    %v5236 = vld [vmem:[#allocation23 + $0x37f8] sm:$0xff]
    %v5237 = vld [vmem:[#allocation23 + $0x3800] sm:$0xff]
    %v5238 = vld [vmem:[#allocation23 + $0x3808] sm:$0xff]
    %v5239 = vld [vmem:[#allocation23 + $0x3810] sm:$0xff]
    %v5240 = vld [vmem:[#allocation23 + $0x3818] sm:$0xff]
    %v5241 = vld [vmem:[#allocation23 + $0x3820] sm:$0xff]
    %v5242 = vld [vmem:[#allocation23 + $0x3828] sm:$0xff]
    %v5243 = vld [vmem:[#allocation23 + $0x3830] sm:$0xff]
    %v5244 = vld [vmem:[#allocation23 + $0x3838] sm:$0xff]
    %v5245 = vld [vmem:[#allocation23 + $0x3840] sm:$0xff]
    %v5246 = vld [vmem:[#allocation23 + $0x3848] sm:$0xff]
    %v5247 = vld [vmem:[#allocation23 + $0x3850] sm:$0xff]
    %v5248 = vld [vmem:[#allocation23 + $0x3858] sm:$0xff]
    %v5249 = vld [vmem:[#allocation23 + $0x3860] sm:$0xff]
    %v5250 = vld [vmem:[#allocation23 + $0x3868] sm:$0xff]
    %v5251 = vld [vmem:[#allocation23 + $0x3870] sm:$0xff]
    %v5252 = vld [vmem:[#allocation23 + $0x3878] sm:$0xff]
    %v5253 = vld [vmem:[#allocation23 + $0x3880] sm:$0xff]
    %v5254 = vld [vmem:[#allocation23 + $0x3888] sm:$0xff]
    %v5255 = vld [vmem:[#allocation23 + $0x3890] sm:$0xff]
    %v5256 = vld [vmem:[#allocation23 + $0x3898] sm:$0xff]
    %v5257 = vld [vmem:[#allocation23 + $0x38a0] sm:$0xff]
    %v5258 = vld [vmem:[#allocation23 + $0x38a8] sm:$0xff]
    %v5259 = vld [vmem:[#allocation23 + $0x38b0] sm:$0xff]
    %v5260 = vld [vmem:[#allocation23 + $0x38b8] sm:$0xff]
    %v5261 = vld [vmem:[#allocation23 + $0x38c0] sm:$0xff]
    %v5262 = vld [vmem:[#allocation23 + $0x38c8] sm:$0xff]
    %v5263 = vld [vmem:[#allocation23 + $0x38d0] sm:$0xff]
    %v5264 = vld [vmem:[#allocation23 + $0x38d8] sm:$0xff]
    %v5265 = vld [vmem:[#allocation23 + $0x38e0] sm:$0xff]
    %v5266 = vld [vmem:[#allocation23 + $0x38e8] sm:$0xff]
    %v5267 = vld [vmem:[#allocation23 + $0x38f0] sm:$0xff]
    %v5268 = vld [vmem:[#allocation23 + $0x38f8] sm:$0xff]
    %v5269 = vld [vmem:[#allocation23 + $0x3900] sm:$0xff]
    %v5270 = vld [vmem:[#allocation23 + $0x3908] sm:$0xff]
    %v5271 = vld [vmem:[#allocation23 + $0x3910] sm:$0xff]
    %v5272 = vld [vmem:[#allocation23 + $0x3918] sm:$0xff]
    %v5273 = vld [vmem:[#allocation23 + $0x3920] sm:$0xff]
    %v5274 = vld [vmem:[#allocation23 + $0x3928] sm:$0xff]
    %v5275 = vld [vmem:[#allocation23 + $0x3930] sm:$0xff]
    %v5276 = vld [vmem:[#allocation23 + $0x3938] sm:$0xff]
    %v5277 = vld [vmem:[#allocation23 + $0x3940] sm:$0xff]
    %v5278 = vld [vmem:[#allocation23 + $0x3948] sm:$0xff]
    %v5279 = vld [vmem:[#allocation23 + $0x3950] sm:$0xff]
    %v5280 = vld [vmem:[#allocation23 + $0x3958] sm:$0xff]
    %v5281 = vld [vmem:[#allocation23 + $0x3960] sm:$0xff]
    %v5282 = vld [vmem:[#allocation23 + $0x3968] sm:$0xff]
    %v5283 = vld [vmem:[#allocation23 + $0x3970] sm:$0xff]
    %v5284 = vld [vmem:[#allocation23 + $0x3978] sm:$0xff]
    %v5285 = vld [vmem:[#allocation23 + $0x3980] sm:$0xff]
    %v5286 = vld [vmem:[#allocation23 + $0x3988] sm:$0xff]
    %v5287 = vld [vmem:[#allocation23 + $0x3990] sm:$0xff]
    %v5288 = vld [vmem:[#allocation23 + $0x3998] sm:$0xff]
    %v5289 = vld [vmem:[#allocation23 + $0x39a0] sm:$0xff]
    %v5290 = vld [vmem:[#allocation23 + $0x39a8] sm:$0xff]
    %v5291 = vld [vmem:[#allocation23 + $0x39b0] sm:$0xff]
    %v5292 = vld [vmem:[#allocation23 + $0x39b8] sm:$0xff]
    %v5293 = vld [vmem:[#allocation23 + $0x39c0] sm:$0xff]
    %v5294 = vld [vmem:[#allocation23 + $0x39c8] sm:$0xff]
    %v5295 = vld [vmem:[#allocation23 + $0x39d0] sm:$0xff]
    %v5296 = vld [vmem:[#allocation23 + $0x39d8] sm:$0xff]
    %v5297 = vld [vmem:[#allocation23 + $0x39e0] sm:$0xff]
    %v5298 = vld [vmem:[#allocation23 + $0x39e8] sm:$0xff]
    %v5299 = vld [vmem:[#allocation23 + $0x39f0] sm:$0xff]
    %v5300 = vld [vmem:[#allocation23 + $0x39f8] sm:$0xff]
    %v5301 = vld [vmem:[#allocation23 + $0x3a00] sm:$0xff]
    %v5302 = vld [vmem:[#allocation23 + $0x3a08] sm:$0xff]
    %v5303 = vld [vmem:[#allocation23 + $0x3a10] sm:$0xff]
    %v5304 = vld [vmem:[#allocation23 + $0x3a18] sm:$0xff]
    %v5305 = vld [vmem:[#allocation23 + $0x3a20] sm:$0xff]
    %v5306 = vld [vmem:[#allocation23 + $0x3a28] sm:$0xff]
    %v5307 = vld [vmem:[#allocation23 + $0x3a30] sm:$0xff]
    %v5308 = vld [vmem:[#allocation23 + $0x3a38] sm:$0xff]
    %v5309 = vld [vmem:[#allocation23 + $0x3a40] sm:$0xff]
    %v5310 = vld [vmem:[#allocation23 + $0x3a48] sm:$0xff]
    %v5311 = vld [vmem:[#allocation23 + $0x3a50] sm:$0xff]
    %v5312 = vld [vmem:[#allocation23 + $0x3a58] sm:$0xff]
    %v5313 = vld [vmem:[#allocation23 + $0x3a60] sm:$0xff]
    %v5314 = vld [vmem:[#allocation23 + $0x3a68] sm:$0xff]
    %v5315 = vld [vmem:[#allocation23 + $0x3a70] sm:$0xff]
    %v5316 = vld [vmem:[#allocation23 + $0x3a78] sm:$0xff]
    %v5317 = vld [vmem:[#allocation23 + $0x3a80] sm:$0xff]
    %v5318 = vld [vmem:[#allocation23 + $0x3a88] sm:$0xff]
    %v5319 = vld [vmem:[#allocation23 + $0x3a90] sm:$0xff]
    %v5320 = vld [vmem:[#allocation23 + $0x3a98] sm:$0xff]
    %v5321 = vld [vmem:[#allocation23 + $0x3aa0] sm:$0xff]
    %v5322 = vld [vmem:[#allocation23 + $0x3aa8] sm:$0xff]
    %v5323 = vld [vmem:[#allocation23 + $0x3ab0] sm:$0xff]
    %v5324 = vld [vmem:[#allocation23 + $0x3ab8] sm:$0xff]
    %v5325 = vld [vmem:[#allocation23 + $0x3ac0] sm:$0xff]
    %v5326 = vld [vmem:[#allocation23 + $0x3ac8] sm:$0xff]
    %v5327 = vld [vmem:[#allocation23 + $0x3ad0] sm:$0xff]
    %v5328 = vld [vmem:[#allocation23 + $0x3ad8] sm:$0xff]
    %v5329 = vld [vmem:[#allocation23 + $0x3ae0] sm:$0xff]
    %v5330 = vld [vmem:[#allocation23 + $0x3ae8] sm:$0xff]
    %v5331 = vld [vmem:[#allocation23 + $0x3af0] sm:$0xff]
    %v5332 = vld [vmem:[#allocation23 + $0x3af8] sm:$0xff]
    %v5333 = vld [vmem:[#allocation23 + $0x3b00] sm:$0xff]
    %v5334 = vld [vmem:[#allocation23 + $0x3b08] sm:$0xff]
    %v5335 = vld [vmem:[#allocation23 + $0x3b10] sm:$0xff]
    %v5336 = vld [vmem:[#allocation23 + $0x3b18] sm:$0xff]
    %v5337 = vld [vmem:[#allocation23 + $0x3b20] sm:$0xff]
    %v5338 = vld [vmem:[#allocation23 + $0x3b28] sm:$0xff]
    %v5339 = vld [vmem:[#allocation23 + $0x3b30] sm:$0xff]
    %v5340 = vld [vmem:[#allocation23 + $0x3b38] sm:$0xff]
    %v5341 = vld [vmem:[#allocation23 + $0x3b40] sm:$0xff]
    %v5342 = vld [vmem:[#allocation23 + $0x3b48] sm:$0xff]
    %v5343 = vld [vmem:[#allocation23 + $0x3b50] sm:$0xff]
    %v5344 = vld [vmem:[#allocation23 + $0x3b58] sm:$0xff]
    %v5345 = vld [vmem:[#allocation23 + $0x3b60] sm:$0xff]
    %v5346 = vld [vmem:[#allocation23 + $0x3b68] sm:$0xff]
    %v5347 = vld [vmem:[#allocation23 + $0x3b70] sm:$0xff]
    %v5348 = vld [vmem:[#allocation23 + $0x3b78] sm:$0xff]
    %v5349 = vld [vmem:[#allocation23 + $0x3b80] sm:$0xff]
    %v5350 = vld [vmem:[#allocation23 + $0x3b88] sm:$0xff]
    %v5351 = vld [vmem:[#allocation23 + $0x3b90] sm:$0xff]
    %v5352 = vld [vmem:[#allocation23 + $0x3b98] sm:$0xff]
    %v5353 = vld [vmem:[#allocation23 + $0x3ba0] sm:$0xff]
    %v5354 = vld [vmem:[#allocation23 + $0x3ba8] sm:$0xff]
    %v5355 = vld [vmem:[#allocation23 + $0x3bb0] sm:$0xff]
    %v5356 = vld [vmem:[#allocation23 + $0x3bb8] sm:$0xff]
    %v5357 = vld [vmem:[#allocation23 + $0x3bc0] sm:$0xff]
    %v5358 = vld [vmem:[#allocation23 + $0x3bc8] sm:$0xff]
    %v5359 = vld [vmem:[#allocation23 + $0x3bd0] sm:$0xff]
    %v5360 = vld [vmem:[#allocation23 + $0x3bd8] sm:$0xff]
    %v5361 = vld [vmem:[#allocation23 + $0x3be0] sm:$0xff]
    %v5362 = vld [vmem:[#allocation23 + $0x3be8] sm:$0xff]
    %v5363 = vld [vmem:[#allocation23 + $0x3bf0] sm:$0xff]
    %v5364 = vld [vmem:[#allocation23 + $0x3bf8] sm:$0xff]
    %v5365 = vld [vmem:[#allocation23 + $0x3c00] sm:$0xff]
    %v5366 = vld [vmem:[#allocation23 + $0x3c08] sm:$0xff]
    %v5367 = vld [vmem:[#allocation23 + $0x3c10] sm:$0xff]
    %v5368 = vld [vmem:[#allocation23 + $0x3c18] sm:$0xff]
    %v5369 = vld [vmem:[#allocation23 + $0x3c20] sm:$0xff]
    %v5370 = vld [vmem:[#allocation23 + $0x3c28] sm:$0xff]
    %v5371 = vld [vmem:[#allocation23 + $0x3c30] sm:$0xff]
    %v5372 = vld [vmem:[#allocation23 + $0x3c38] sm:$0xff]
    %v5373 = vld [vmem:[#allocation23 + $0x3c40] sm:$0xff]
    %v5374 = vld [vmem:[#allocation23 + $0x3c48] sm:$0xff]
    %v5375 = vld [vmem:[#allocation23 + $0x3c50] sm:$0xff]
    %v5376 = vld [vmem:[#allocation23 + $0x3c58] sm:$0xff]
    %v5377 = vld [vmem:[#allocation23 + $0x3c60] sm:$0xff]
    %v5378 = vld [vmem:[#allocation23 + $0x3c68] sm:$0xff]
    %v5379 = vld [vmem:[#allocation23 + $0x3c70] sm:$0xff]
    %v5380 = vld [vmem:[#allocation23 + $0x3c78] sm:$0xff]
    %v5381 = vld [vmem:[#allocation23 + $0x3c80] sm:$0xff]
    %v5382 = vld [vmem:[#allocation23 + $0x3c88] sm:$0xff]
    %v5383 = vld [vmem:[#allocation23 + $0x3c90] sm:$0xff]
    %v5384 = vld [vmem:[#allocation23 + $0x3c98] sm:$0xff]
    %v5385 = vld [vmem:[#allocation23 + $0x3ca0] sm:$0xff]
    %v5386 = vld [vmem:[#allocation23 + $0x3ca8] sm:$0xff]
    %v5387 = vld [vmem:[#allocation23 + $0x3cb0] sm:$0xff]
    %v5388 = vld [vmem:[#allocation23 + $0x3cb8] sm:$0xff]
    %v5389 = vld [vmem:[#allocation23 + $0x3cc0] sm:$0xff]
    %v5390 = vld [vmem:[#allocation23 + $0x3cc8] sm:$0xff]
    %v5391 = vld [vmem:[#allocation23 + $0x3cd0] sm:$0xff]
    %v5392 = vld [vmem:[#allocation23 + $0x3cd8] sm:$0xff]
    %v5393 = vld [vmem:[#allocation23 + $0x3ce0] sm:$0xff]
    %v5394 = vld [vmem:[#allocation23 + $0x3ce8] sm:$0xff]
    %v5395 = vld [vmem:[#allocation23 + $0x3cf0] sm:$0xff]
    %v5396 = vld [vmem:[#allocation23 + $0x3cf8] sm:$0xff]
    %v5397 = vld [vmem:[#allocation23 + $0x3d00] sm:$0xff]
    %v5398 = vld [vmem:[#allocation23 + $0x3d08] sm:$0xff]
    %v5399 = vld [vmem:[#allocation23 + $0x3d10] sm:$0xff]
    %v5400 = vld [vmem:[#allocation23 + $0x3d18] sm:$0xff]
    %v5401 = vld [vmem:[#allocation23 + $0x3d20] sm:$0xff]
    %v5402 = vld [vmem:[#allocation23 + $0x3d28] sm:$0xff]
    %v5403 = vld [vmem:[#allocation23 + $0x3d30] sm:$0xff]
    %v5404 = vld [vmem:[#allocation23 + $0x3d38] sm:$0xff]
    %v5405 = vld [vmem:[#allocation23 + $0x3d40] sm:$0xff]
    %v5406 = vld [vmem:[#allocation23 + $0x3d48] sm:$0xff]
    %v5407 = vld [vmem:[#allocation23 + $0x3d50] sm:$0xff]
    %v5408 = vld [vmem:[#allocation23 + $0x3d58] sm:$0xff]
    %v5409 = vld [vmem:[#allocation23 + $0x3d60] sm:$0xff]
    %v5410 = vld [vmem:[#allocation23 + $0x3d68] sm:$0xff]
    %v5411 = vld [vmem:[#allocation23 + $0x3d70] sm:$0xff]
    %v5412 = vld [vmem:[#allocation23 + $0x3d78] sm:$0xff]
    %v5413 = vld [vmem:[#allocation23 + $0x3d80] sm:$0xff]
    %v5414 = vld [vmem:[#allocation23 + $0x3d88] sm:$0xff]
    %v5415 = vld [vmem:[#allocation23 + $0x3d90] sm:$0xff]
    %v5416 = vld [vmem:[#allocation23 + $0x3d98] sm:$0xff]
    %v5417 = vld [vmem:[#allocation23 + $0x3da0] sm:$0xff]
    %v5418 = vld [vmem:[#allocation23 + $0x3da8] sm:$0xff]
    %v5419 = vld [vmem:[#allocation23 + $0x3db0] sm:$0xff]
    %v5420 = vld [vmem:[#allocation23 + $0x3db8] sm:$0xff]
    %v5421 = vld [vmem:[#allocation23 + $0x3dc0] sm:$0xff]
    %v5422 = vld [vmem:[#allocation23 + $0x3dc8] sm:$0xff]
    %v5423 = vld [vmem:[#allocation23 + $0x3dd0] sm:$0xff]
    %v5424 = vld [vmem:[#allocation23 + $0x3dd8] sm:$0xff]
    %v5425 = vld [vmem:[#allocation23 + $0x3de0] sm:$0xff]
    %v5426 = vld [vmem:[#allocation23 + $0x3de8] sm:$0xff]
    %v5427 = vld [vmem:[#allocation23 + $0x3df0] sm:$0xff]
    %v5428 = vld [vmem:[#allocation23 + $0x3df8] sm:$0xff]
    %v5429 = vld [vmem:[#allocation23 + $0x3e00] sm:$0xff]
    %v5430 = vld [vmem:[#allocation23 + $0x3e08] sm:$0xff]
    %v5431 = vld [vmem:[#allocation23 + $0x3e10] sm:$0xff]
    %v5432 = vld [vmem:[#allocation23 + $0x3e18] sm:$0xff]
    %v5433 = vld [vmem:[#allocation23 + $0x3e20] sm:$0xff]
    %v5434 = vld [vmem:[#allocation23 + $0x3e28] sm:$0xff]
    %v5435 = vld [vmem:[#allocation23 + $0x3e30] sm:$0xff]
    %v5436 = vld [vmem:[#allocation23 + $0x3e38] sm:$0xff]
    %v5437 = vld [vmem:[#allocation23 + $0x3e40] sm:$0xff]
    %v5438 = vld [vmem:[#allocation23 + $0x3e48] sm:$0xff]
    %v5439 = vld [vmem:[#allocation23 + $0x3e50] sm:$0xff]
    %v5440 = vld [vmem:[#allocation23 + $0x3e58] sm:$0xff]
    %v5441 = vld [vmem:[#allocation23 + $0x3e60] sm:$0xff]
    %v5442 = vld [vmem:[#allocation23 + $0x3e68] sm:$0xff]
    %v5443 = vld [vmem:[#allocation23 + $0x3e70] sm:$0xff]
    %v5444 = vld [vmem:[#allocation23 + $0x3e78] sm:$0xff]
    %v5445 = vld [vmem:[#allocation23 + $0x3e80] sm:$0xff]
    %v5446 = vld [vmem:[#allocation23 + $0x3e88] sm:$0xff]
    %v5447 = vld [vmem:[#allocation23 + $0x3e90] sm:$0xff]
    %v5448 = vld [vmem:[#allocation23 + $0x3e98] sm:$0xff]
    %v5449 = vld [vmem:[#allocation23 + $0x3ea0] sm:$0xff]
    %v5450 = vld [vmem:[#allocation23 + $0x3ea8] sm:$0xff]
    %v5451 = vld [vmem:[#allocation23 + $0x3eb0] sm:$0xff]
    %v5452 = vld [vmem:[#allocation23 + $0x3eb8] sm:$0xff]
    %v5453 = vld [vmem:[#allocation23 + $0x3ec0] sm:$0xff]
    %v5454 = vld [vmem:[#allocation23 + $0x3ec8] sm:$0xff]
    %v5455 = vld [vmem:[#allocation23 + $0x3ed0] sm:$0xff]
    %v5456 = vld [vmem:[#allocation23 + $0x3ed8] sm:$0xff]
    %v5457 = vld [vmem:[#allocation23 + $0x3ee0] sm:$0xff]
    %v5458 = vld [vmem:[#allocation23 + $0x3ee8] sm:$0xff]
    %v5459 = vld [vmem:[#allocation23 + $0x3ef0] sm:$0xff]
    %v5460 = vld [vmem:[#allocation23 + $0x3ef8] sm:$0xff]
    %v5461 = vld [vmem:[#allocation23 + $0x3f00] sm:$0xff]
    %v5462 = vld [vmem:[#allocation23 + $0x3f08] sm:$0xff]
    %v5463 = vld [vmem:[#allocation23 + $0x3f10] sm:$0xff]
    %v5464 = vld [vmem:[#allocation23 + $0x3f18] sm:$0xff]
    %v5465 = vld [vmem:[#allocation23 + $0x3f20] sm:$0xff]
    %v5466 = vld [vmem:[#allocation23 + $0x3f28] sm:$0xff]
    %v5467 = vld [vmem:[#allocation23 + $0x3f30] sm:$0xff]
    %v5468 = vld [vmem:[#allocation23 + $0x3f38] sm:$0xff]
    %v5469 = vld [vmem:[#allocation23 + $0x3f40] sm:$0xff]
    %v5470 = vld [vmem:[#allocation23 + $0x3f48] sm:$0xff]
    %v5471 = vld [vmem:[#allocation23 + $0x3f50] sm:$0xff]
    %v5472 = vld [vmem:[#allocation23 + $0x3f58] sm:$0xff]
    %v5473 = vld [vmem:[#allocation23 + $0x3f60] sm:$0xff]
    %v5474 = vld [vmem:[#allocation23 + $0x3f68] sm:$0xff]
    %v5475 = vld [vmem:[#allocation23 + $0x3f70] sm:$0xff]
    %v5476 = vld [vmem:[#allocation23 + $0x3f78] sm:$0xff]
    %v5477 = vld [vmem:[#allocation23 + $0x3f80] sm:$0xff]
    %v5478 = vld [vmem:[#allocation23 + $0x3f88] sm:$0xff]
    %v5479 = vld [vmem:[#allocation23 + $0x3f90] sm:$0xff]
    %v5480 = vld [vmem:[#allocation23 + $0x3f98] sm:$0xff]
    %v5481 = vld [vmem:[#allocation23 + $0x3fa0] sm:$0xff]
    %v5482 = vld [vmem:[#allocation23 + $0x3fa8] sm:$0xff]
    %v5483 = vld [vmem:[#allocation23 + $0x3fb0] sm:$0xff]
    %v5484 = vld [vmem:[#allocation23 + $0x3fb8] sm:$0xff]
    %v5485 = vld [vmem:[#allocation23 + $0x3fc0] sm:$0xff]
    %v5486 = vld [vmem:[#allocation23 + $0x3fc8] sm:$0xff]
    %v5487 = vld [vmem:[#allocation23 + $0x3fd0] sm:$0xff]
    %v5488 = vld [vmem:[#allocation23 + $0x3fd8] sm:$0xff]
    %v5489 = vld [vmem:[#allocation23 + $0x3fe0] sm:$0xff]
    %v5490 = vld [vmem:[#allocation23 + $0x3fe8] sm:$0xff]
    %v5491 = vld [vmem:[#allocation23 + $0x3ff0] sm:$0xff]
    %v5492 = vld [vmem:[#allocation23 + $0x3ff8] sm:$0xff]
    %v5493 = vld [vmem:[#allocation25] sm:$0xff]
    %v5495 = vlaneseq
    %v5496 = vshrl.u32 %v5495, 7
    %v5497 = vsub.s32 0, %v5496
    %v5498 = vrot.slane %v5493, %v5497
    %v5499 = vlaneseq
    %v5500 = vshrl.u32 %v5499, 7
    %v5501 = vsub.s32 1, %v5500
    %v5502 = vrot.slane %v5493, %v5501
    %v5503 = vlaneseq
    %v5504 = vshrl.u32 %v5503, 7
    %v5505 = vsub.s32 2, %v5504
    %v5506 = vrot.slane %v5493, %v5505
    %v5507 = vlaneseq
    %v5508 = vshrl.u32 %v5507, 7
    %v5509 = vsub.s32 3, %v5508
    %v5510 = vrot.slane %v5493, %v5509
    %v5511 = vlaneseq
    %v5512 = vshrl.u32 %v5511, 7
    %v5513 = vsub.s32 4, %v5512
    %v5514 = vrot.slane %v5493, %v5513
    %v5515 = vlaneseq
    %v5516 = vshrl.u32 %v5515, 7
    %v5517 = vsub.s32 5, %v5516
    %v5518 = vrot.slane %v5493, %v5517
    %v5519 = vlaneseq
    %v5520 = vshrl.u32 %v5519, 7
    %v5521 = vsub.s32 6, %v5520
    %v5522 = vrot.slane %v5493, %v5521
    %v5523 = vlaneseq
    %v5524 = vshrl.u32 %v5523, 7
    %v5525 = vsub.s32 7, %v5524
    %v5526 = vrot.slane %v5493, %v5525
    %5535 = vmatprep.subr.mxu0 %v3446
    %5536 = vmatpush1.msra.mxu0 %v3445
    %5537 = vmatprep.subr.mxu0 %v3454
    %5538 = vmatpush1.msra.mxu0 %v3453
    %5539 = vmatprep.subr.mxu0 %v3462
    %5540 = vmatpush1.msra.mxu0 %v3461
    %5541 = vmatprep.subr.mxu0 %v3470
    %5542 = vmatpush1.msra.mxu0 %v3469
    %5543 = vmatprep.subr.mxu0 %v3478
    %5544 = vmatpush1.msra.mxu0 %v3477
    %5545 = vmatprep.subr.mxu0 %v3486
    %5546 = vmatpush1.msra.mxu0 %v3485
    %5547 = vmatprep.subr.mxu0 %v3494
    %5548 = vmatpush1.msra.mxu0 %v3493
    %5549 = vmatprep.subr.mxu0 %v3502
    %5550 = vmatpush1.msra.mxu0 %v3501
    %5551 = vmatprep.subr.mxu0 %v3510
    %5552 = vmatpush1.msra.mxu0 %v3509
    %5553 = vmatprep.subr.mxu0 %v3518
    %5554 = vmatpush1.msra.mxu0 %v3517
    %5555 = vmatprep.subr.mxu0 %v3526
    %5556 = vmatpush1.msra.mxu0 %v3525
    %5557 = vmatprep.subr.mxu0 %v3534
    %5558 = vmatpush1.msra.mxu0 %v3533
    %5559 = vmatprep.subr.mxu0 %v3542
    %5560 = vmatpush1.msra.mxu0 %v3541
    %5561 = vmatprep.subr.mxu0 %v3550
    %5562 = vmatpush1.msra.mxu0 %v3549
    %5563 = vmatprep.subr.mxu0 %v3558
    %5564 = vmatpush1.msra.mxu0 %v3557
    %5565 = vmatprep.subr.mxu0 %v3566
    %5566 = vmatpush1.msra.mxu0 %v3565
    %5567 = vmatprep.subr.mxu0 %v3574
    %5568 = vmatpush1.msra.mxu0 %v3573
    %5569 = vmatprep.subr.mxu0 %v3582
    %5570 = vmatpush1.msra.mxu0 %v3581
    %5571 = vmatprep.subr.mxu0 %v3590
    %5572 = vmatpush1.msra.mxu0 %v3589
    %5573 = vmatprep.subr.mxu0 %v3598
    %5574 = vmatpush1.msra.mxu0 %v3597
    %5575 = vmatprep.subr.mxu0 %v3606
    %5576 = vmatpush1.msra.mxu0 %v3605
    %5577 = vmatprep.subr.mxu0 %v3614
    %5578 = vmatpush1.msra.mxu0 %v3613
    %5579 = vmatprep.subr.mxu0 %v3622
    %5580 = vmatpush1.msra.mxu0 %v3621
    %5581 = vmatprep.subr.mxu0 %v3630
    %5582 = vmatpush1.msra.mxu0 %v3629
    %5583 = vmatprep.subr.mxu0 %v3638
    %5584 = vmatpush1.msra.mxu0 %v3637
    %5585 = vmatprep.subr.mxu0 %v3646
    %5586 = vmatpush1.msra.mxu0 %v3645
    %5587 = vmatprep.subr.mxu0 %v3654
    %5588 = vmatpush1.msra.mxu0 %v3653
    %5589 = vmatprep.subr.mxu0 %v3662
    %5590 = vmatpush1.msra.mxu0 %v3661
    %5591 = vmatprep.subr.mxu0 %v3670
    %5592 = vmatpush1.msra.mxu0 %v3669
    %5593 = vmatprep.subr.mxu0 %v3678
    %5594 = vmatpush1.msra.mxu0 %v3677
    %5595 = vmatprep.subr.mxu0 %v3686
    %5596 = vmatpush1.msra.mxu0 %v3685
    %5597 = vmatprep.subr.mxu0 %v3694
    %5598 = vmatpush1.msra.mxu0 %v3693
    %5599 = vmatprep.mubr.f32.mxu0 %v2706
    %5600 = vmatmul.mubr.f32.gmra.mrb[0].mxu0 %v2705
    %v5601 = vpop.f32.mrb[0].mxu0
    %v5602 = vadd.f32 %v5498, %v5601
    %v5603 = vpop.f32.mrb[0].mxu0
    %v5604 = vadd.f32 %v5502, %v5603
    %5605 = vdwg.mxu0
    %5606 = vmatprep.subr.mxu0 %v3702
    %5607 = vmatpush1.msra.mxu0 %v3701
    %5608 = vmatprep.subr.mxu0 %v3710
    %5609 = vmatpush1.msra.mxu0 %v3709
    %5610 = vmatprep.subr.mxu0 %v3718
    %5611 = vmatpush1.msra.mxu0 %v3717
    %5612 = vmatprep.subr.mxu0 %v3726
    %5613 = vmatpush1.msra.mxu0 %v3725
    %5614 = vmatprep.subr.mxu0 %v3734
    %5615 = vmatpush1.msra.mxu0 %v3733
    %5616 = vmatprep.subr.mxu0 %v3742
    %5617 = vmatpush1.msra.mxu0 %v3741
    %5618 = vmatprep.subr.mxu0 %v3750
    %5619 = vmatpush1.msra.mxu0 %v3749
    %5620 = vmatprep.subr.mxu0 %v3758
    %5621 = vmatpush1.msra.mxu0 %v3757
    %5622 = vmatprep.subr.mxu0 %v3766
    %5623 = vmatpush1.msra.mxu0 %v3765
    %5624 = vmatprep.subr.mxu0 %v3774
    %5625 = vmatpush1.msra.mxu0 %v3773
    %5626 = vmatprep.subr.mxu0 %v3782
    %5627 = vmatpush1.msra.mxu0 %v3781
    %5628 = vmatprep.subr.mxu0 %v3790
    %5629 = vmatpush1.msra.mxu0 %v3789
    %5630 = vmatprep.subr.mxu0 %v3798
    %5631 = vmatpush1.msra.mxu0 %v3797
    %5632 = vmatprep.subr.mxu0 %v3806
    %5633 = vmatpush1.msra.mxu0 %v3805
    %5634 = vmatprep.subr.mxu0 %v3814
    %5635 = vmatpush1.msra.mxu0 %v3813
    %5636 = vmatprep.subr.mxu0 %v3822
    %5637 = vmatpush1.msra.mxu0 %v3821
    %5638 = vmatprep.subr.mxu0 %v3830
    %5639 = vmatpush1.msra.mxu0 %v3829
    %5640 = vmatprep.subr.mxu0 %v3838
    %5641 = vmatpush1.msra.mxu0 %v3837
    %5642 = vmatprep.subr.mxu0 %v3846
    %5643 = vmatpush1.msra.mxu0 %v3845
    %5644 = vmatprep.subr.mxu0 %v3854
    %5645 = vmatpush1.msra.mxu0 %v3853
    %5646 = vmatprep.subr.mxu0 %v3862
    %5647 = vmatpush1.msra.mxu0 %v3861
    %5648 = vmatprep.subr.mxu0 %v3870
    %5649 = vmatpush1.msra.mxu0 %v3869
    %5650 = vmatprep.subr.mxu0 %v3878
    %5651 = vmatpush1.msra.mxu0 %v3877
    %5652 = vmatprep.subr.mxu0 %v3886
    %5653 = vmatpush1.msra.mxu0 %v3885
    %5654 = vmatprep.subr.mxu0 %v3894
    %5655 = vmatpush1.msra.mxu0 %v3893
    %5656 = vmatprep.subr.mxu0 %v3902
    %5657 = vmatpush1.msra.mxu0 %v3901
    %5658 = vmatprep.subr.mxu0 %v3910
    %5659 = vmatpush1.msra.mxu0 %v3909
    %5660 = vmatprep.subr.mxu0 %v3918
    %5661 = vmatpush1.msra.mxu0 %v3917
    %5662 = vmatprep.subr.mxu0 %v3926
    %5663 = vmatpush1.msra.mxu0 %v3925
    %5664 = vmatprep.subr.mxu0 %v3934
    %5665 = vmatpush1.msra.mxu0 %v3933
    %5666 = vmatprep.subr.mxu0 %v3942
    %5667 = vmatpush1.msra.mxu0 %v3941
    %5668 = vmatprep.subr.mxu0 %v3950
    %5669 = vmatpush1.msra.mxu0 %v3949
    %5670 = vmatprep.mubr.f32.mxu0 %v2708
    %5671 = vmatmul.mubr.f32.gmra.mrb[0].mxu0 %v2707
    %v5672 = vpop.f32.mrb[0].mxu0
    %v5673 = vadd.f32 %v5602, %v5672
    %v5674 = vpop.f32.mrb[0].mxu0
    %v5675 = vadd.f32 %v5604, %v5674
    %5676 = vdwg.mxu0
    %5677 = vmatprep.subr.mxu0 %v3958
    %5678 = vmatpush1.msra.mxu0 %v3957
    %5679 = vmatprep.subr.mxu0 %v3966
    %5680 = vmatpush1.msra.mxu0 %v3965
    %5681 = vmatprep.subr.mxu0 %v3974
    %5682 = vmatpush1.msra.mxu0 %v3973
    %5683 = vmatprep.subr.mxu0 %v3982
    %5684 = vmatpush1.msra.mxu0 %v3981
    %5685 = vmatprep.subr.mxu0 %v3990
    %5686 = vmatpush1.msra.mxu0 %v3989
    %5687 = vmatprep.subr.mxu0 %v3998
    %5688 = vmatpush1.msra.mxu0 %v3997
    %5689 = vmatprep.subr.mxu0 %v4006
    %5690 = vmatpush1.msra.mxu0 %v4005
    %5691 = vmatprep.subr.mxu0 %v4014
    %5692 = vmatpush1.msra.mxu0 %v4013
    %5693 = vmatprep.subr.mxu0 %v4022
    %5694 = vmatpush1.msra.mxu0 %v4021
    %5695 = vmatprep.subr.mxu0 %v4030
    %5696 = vmatpush1.msra.mxu0 %v4029
    %5697 = vmatprep.subr.mxu0 %v4038
    %5698 = vmatpush1.msra.mxu0 %v4037
    %5699 = vmatprep.subr.mxu0 %v4046
    %5700 = vmatpush1.msra.mxu0 %v4045
    %5701 = vmatprep.subr.mxu0 %v4054
    %5702 = vmatpush1.msra.mxu0 %v4053
    %5703 = vmatprep.subr.mxu0 %v4062
    %5704 = vmatpush1.msra.mxu0 %v4061
    %5705 = vmatprep.subr.mxu0 %v4070
    %5706 = vmatpush1.msra.mxu0 %v4069
    %5707 = vmatprep.subr.mxu0 %v4078
    %5708 = vmatpush1.msra.mxu0 %v4077
    %5709 = vmatprep.subr.mxu0 %v4086
    %5710 = vmatpush1.msra.mxu0 %v4085
    %5711 = vmatprep.subr.mxu0 %v4094
    %5712 = vmatpush1.msra.mxu0 %v4093
    %5713 = vmatprep.subr.mxu0 %v4102
    %5714 = vmatpush1.msra.mxu0 %v4101
    %5715 = vmatprep.subr.mxu0 %v4110
    %5716 = vmatpush1.msra.mxu0 %v4109
    %5717 = vmatprep.subr.mxu0 %v4118
    %5718 = vmatpush1.msra.mxu0 %v4117
    %5719 = vmatprep.subr.mxu0 %v4126
    %5720 = vmatpush1.msra.mxu0 %v4125
    %5721 = vmatprep.subr.mxu0 %v4134
    %5722 = vmatpush1.msra.mxu0 %v4133
    %5723 = vmatprep.subr.mxu0 %v4142
    %5724 = vmatpush1.msra.mxu0 %v4141
    %5725 = vmatprep.subr.mxu0 %v4150
    %5726 = vmatpush1.msra.mxu0 %v4149
    %5727 = vmatprep.subr.mxu0 %v4158
    %5728 = vmatpush1.msra.mxu0 %v4157
    %5729 = vmatprep.subr.mxu0 %v4166
    %5730 = vmatpush1.msra.mxu0 %v4165
    %5731 = vmatprep.subr.mxu0 %v4174
    %5732 = vmatpush1.msra.mxu0 %v4173
    %5733 = vmatprep.subr.mxu0 %v4182
    %5734 = vmatpush1.msra.mxu0 %v4181
    %5735 = vmatprep.subr.mxu0 %v4190
    %5736 = vmatpush1.msra.mxu0 %v4189
    %5737 = vmatprep.subr.mxu0 %v4198
    %5738 = vmatpush1.msra.mxu0 %v4197
    %5739 = vmatprep.subr.mxu0 %v4206
    %5740 = vmatpush1.msra.mxu0 %v4205
    %5741 = vmatprep.mubr.f32.mxu0 %v2710
    %5742 = vmatmul.mubr.f32.gmra.mrb[0].mxu0 %v2709
    %v5743 = vpop.f32.mrb[0].mxu0
    %v5744 = vadd.f32 %v5673, %v5743
    %v5745 = vpop.f32.mrb[0].mxu0
    %v5746 = vadd.f32 %v5675, %v5745
    %5747 = vdwg.mxu0
    %5748 = vmatprep.subr.mxu0 %v4214
    %5749 = vmatpush1.msra.mxu0 %v4213
    %5750 = vmatprep.subr.mxu0 %v4222
    %5751 = vmatpush1.msra.mxu0 %v4221
    %5752 = vmatprep.subr.mxu0 %v4230
    %5753 = vmatpush1.msra.mxu0 %v4229
    %5754 = vmatprep.subr.mxu0 %v4238
    %5755 = vmatpush1.msra.mxu0 %v4237
    %5756 = vmatprep.subr.mxu0 %v4246
    %5757 = vmatpush1.msra.mxu0 %v4245
    %5758 = vmatprep.subr.mxu0 %v4254
    %5759 = vmatpush1.msra.mxu0 %v4253
    %5760 = vmatprep.subr.mxu0 %v4262
    %5761 = vmatpush1.msra.mxu0 %v4261
    %5762 = vmatprep.subr.mxu0 %v4270
    %5763 = vmatpush1.msra.mxu0 %v4269
    %5764 = vmatprep.subr.mxu0 %v4278
    %5765 = vmatpush1.msra.mxu0 %v4277
    %5766 = vmatprep.subr.mxu0 %v4286
    %5767 = vmatpush1.msra.mxu0 %v4285
    %5768 = vmatprep.subr.mxu0 %v4294
    %5769 = vmatpush1.msra.mxu0 %v4293
    %5770 = vmatprep.subr.mxu0 %v4302
    %5771 = vmatpush1.msra.mxu0 %v4301
    %5772 = vmatprep.subr.mxu0 %v4310
    %5773 = vmatpush1.msra.mxu0 %v4309
    %5774 = vmatprep.subr.mxu0 %v4318
    %5775 = vmatpush1.msra.mxu0 %v4317
    %5776 = vmatprep.subr.mxu0 %v4326
    %5777 = vmatpush1.msra.mxu0 %v4325
    %5778 = vmatprep.subr.mxu0 %v4334
    %5779 = vmatpush1.msra.mxu0 %v4333
    %5780 = vmatprep.subr.mxu0 %v4342
    %5781 = vmatpush1.msra.mxu0 %v4341
    %5782 = vmatprep.subr.mxu0 %v4350
    %5783 = vmatpush1.msra.mxu0 %v4349
    %5784 = vmatprep.subr.mxu0 %v4358
    %5785 = vmatpush1.msra.mxu0 %v4357
    %5786 = vmatprep.subr.mxu0 %v4366
    %5787 = vmatpush1.msra.mxu0 %v4365
    %5788 = vmatprep.subr.mxu0 %v4374
    %5789 = vmatpush1.msra.mxu0 %v4373
    %5790 = vmatprep.subr.mxu0 %v4382
    %5791 = vmatpush1.msra.mxu0 %v4381
    %5792 = vmatprep.subr.mxu0 %v4390
    %5793 = vmatpush1.msra.mxu0 %v4389
    %5794 = vmatprep.subr.mxu0 %v4398
    %5795 = vmatpush1.msra.mxu0 %v4397
    %5796 = vmatprep.subr.mxu0 %v4406
    %5797 = vmatpush1.msra.mxu0 %v4405
    %5798 = vmatprep.subr.mxu0 %v4414
    %5799 = vmatpush1.msra.mxu0 %v4413
    %5800 = vmatprep.subr.mxu0 %v4422
    %5801 = vmatpush1.msra.mxu0 %v4421
    %5802 = vmatprep.subr.mxu0 %v4430
    %5803 = vmatpush1.msra.mxu0 %v4429
    %5804 = vmatprep.subr.mxu0 %v4438
    %5805 = vmatpush1.msra.mxu0 %v4437
    %5806 = vmatprep.subr.mxu0 %v4446
    %5807 = vmatpush1.msra.mxu0 %v4445
    %5808 = vmatprep.subr.mxu0 %v4454
    %5809 = vmatpush1.msra.mxu0 %v4453
    %5810 = vmatprep.subr.mxu0 %v4462
    %5811 = vmatpush1.msra.mxu0 %v4461
    %5812 = vmatprep.mubr.f32.mxu0 %v2712
    %5813 = vmatmul.mubr.f32.gmra.mrb[0].mxu0 %v2711
    %v5814 = vpop.f32.mrb[0].mxu0
    %v5815 = vadd.f32 %v5744, %v5814
    %v5816 = vpop.f32.mrb[0].mxu0
    %v5817 = vadd.f32 %v5746, %v5816
    %5818 = vdwg.mxu0
    %5819 = vmatprep.subr.mxu0 %v4470
    %5820 = vmatpush1.msra.mxu0 %v4469
    %5821 = vmatprep.subr.mxu0 %v4478
    %5822 = vmatpush1.msra.mxu0 %v4477
    %5823 = vmatprep.subr.mxu0 %v4486
    %5824 = vmatpush1.msra.mxu0 %v4485
    %5825 = vmatprep.subr.mxu0 %v4494
    %5826 = vmatpush1.msra.mxu0 %v4493
    %5827 = vmatprep.subr.mxu0 %v4502
    %5828 = vmatpush1.msra.mxu0 %v4501
    %5829 = vmatprep.subr.mxu0 %v4510
    %5830 = vmatpush1.msra.mxu0 %v4509
    %5831 = vmatprep.subr.mxu0 %v4518
    %5832 = vmatpush1.msra.mxu0 %v4517
    %5833 = vmatprep.subr.mxu0 %v4526
    %5834 = vmatpush1.msra.mxu0 %v4525
    %5835 = vmatprep.subr.mxu0 %v4534
    %5836 = vmatpush1.msra.mxu0 %v4533
    %5837 = vmatprep.subr.mxu0 %v4542
    %5838 = vmatpush1.msra.mxu0 %v4541
    %5839 = vmatprep.subr.mxu0 %v4550
    %5840 = vmatpush1.msra.mxu0 %v4549
    %5841 = vmatprep.subr.mxu0 %v4558
    %5842 = vmatpush1.msra.mxu0 %v4557
    %5843 = vmatprep.subr.mxu0 %v4566
    %5844 = vmatpush1.msra.mxu0 %v4565
    %5845 = vmatprep.subr.mxu0 %v4574
    %5846 = vmatpush1.msra.mxu0 %v4573
    %5847 = vmatprep.subr.mxu0 %v4582
    %5848 = vmatpush1.msra.mxu0 %v4581
    %5849 = vmatprep.subr.mxu0 %v4590
    %5850 = vmatpush1.msra.mxu0 %v4589
    %5851 = vmatprep.subr.mxu0 %v4598
    %5852 = vmatpush1.msra.mxu0 %v4597
    %5853 = vmatprep.subr.mxu0 %v4606
    %5854 = vmatpush1.msra.mxu0 %v4605
    %5855 = vmatprep.subr.mxu0 %v4614
    %5856 = vmatpush1.msra.mxu0 %v4613
    %5857 = vmatprep.subr.mxu0 %v4622
    %5858 = vmatpush1.msra.mxu0 %v4621
    %5859 = vmatprep.subr.mxu0 %v4630
    %5860 = vmatpush1.msra.mxu0 %v4629
    %5861 = vmatprep.subr.mxu0 %v4638
    %5862 = vmatpush1.msra.mxu0 %v4637
    %5863 = vmatprep.subr.mxu0 %v4646
    %5864 = vmatpush1.msra.mxu0 %v4645
    %5865 = vmatprep.subr.mxu0 %v4654
    %5866 = vmatpush1.msra.mxu0 %v4653
    %5867 = vmatprep.subr.mxu0 %v4662
    %5868 = vmatpush1.msra.mxu0 %v4661
    %5869 = vmatprep.subr.mxu0 %v4670
    %5870 = vmatpush1.msra.mxu0 %v4669
    %5871 = vmatprep.subr.mxu0 %v4678
    %5872 = vmatpush1.msra.mxu0 %v4677
    %5873 = vmatprep.subr.mxu0 %v4686
    %5874 = vmatpush1.msra.mxu0 %v4685
    %5875 = vmatprep.subr.mxu0 %v4694
    %5876 = vmatpush1.msra.mxu0 %v4693
    %5877 = vmatprep.subr.mxu0 %v4702
    %5878 = vmatpush1.msra.mxu0 %v4701
    %5879 = vmatprep.subr.mxu0 %v4710
    %5880 = vmatpush1.msra.mxu0 %v4709
    %5881 = vmatprep.subr.mxu0 %v4718
    %5882 = vmatpush1.msra.mxu0 %v4717
    %5883 = vmatprep.mubr.f32.mxu0 %v2714
    %5884 = vmatmul.mubr.f32.gmra.mrb[0].mxu0 %v2713
    %v5885 = vpop.f32.mrb[0].mxu0
    %v5886 = vadd.f32 %v5815, %v5885
    %v5887 = vpop.f32.mrb[0].mxu0
    %v5888 = vadd.f32 %v5817, %v5887
    %5889 = vdwg.mxu0
    %5890 = vmatprep.subr.mxu0 %v4726
    %5891 = vmatpush1.msra.mxu0 %v4725
    %5892 = vmatprep.subr.mxu0 %v4734
    %5893 = vmatpush1.msra.mxu0 %v4733
    %5894 = vmatprep.subr.mxu0 %v4742
    %5895 = vmatpush1.msra.mxu0 %v4741
    %5896 = vmatprep.subr.mxu0 %v4750
    %5897 = vmatpush1.msra.mxu0 %v4749
    %5898 = vmatprep.subr.mxu0 %v4758
    %5899 = vmatpush1.msra.mxu0 %v4757
    %5900 = vmatprep.subr.mxu0 %v4766
    %5901 = vmatpush1.msra.mxu0 %v4765
    %5902 = vmatprep.subr.mxu0 %v4774
    %5903 = vmatpush1.msra.mxu0 %v4773
    %5904 = vmatprep.subr.mxu0 %v4782
    %5905 = vmatpush1.msra.mxu0 %v4781
    %5906 = vmatprep.subr.mxu0 %v4790
    %5907 = vmatpush1.msra.mxu0 %v4789
    %5908 = vmatprep.subr.mxu0 %v4798
    %5909 = vmatpush1.msra.mxu0 %v4797
    %5910 = vmatprep.subr.mxu0 %v4806
    %5911 = vmatpush1.msra.mxu0 %v4805
    %5912 = vmatprep.subr.mxu0 %v4814
    %5913 = vmatpush1.msra.mxu0 %v4813
    %5914 = vmatprep.subr.mxu0 %v4822
    %5915 = vmatpush1.msra.mxu0 %v4821
    %5916 = vmatprep.subr.mxu0 %v4830
    %5917 = vmatpush1.msra.mxu0 %v4829
    %5918 = vmatprep.subr.mxu0 %v4838
    %5919 = vmatpush1.msra.mxu0 %v4837
    %5920 = vmatprep.subr.mxu0 %v4846
    %5921 = vmatpush1.msra.mxu0 %v4845
    %5922 = vmatprep.subr.mxu0 %v4854
    %5923 = vmatpush1.msra.mxu0 %v4853
    %5924 = vmatprep.subr.mxu0 %v4862
    %5925 = vmatpush1.msra.mxu0 %v4861
    %5926 = vmatprep.subr.mxu0 %v4870
    %5927 = vmatpush1.msra.mxu0 %v4869
    %5928 = vmatprep.subr.mxu0 %v4878
    %5929 = vmatpush1.msra.mxu0 %v4877
    %5930 = vmatprep.subr.mxu0 %v4886
    %5931 = vmatpush1.msra.mxu0 %v4885
    %5932 = vmatprep.subr.mxu0 %v4894
    %5933 = vmatpush1.msra.mxu0 %v4893
    %5934 = vmatprep.subr.mxu0 %v4902
    %5935 = vmatpush1.msra.mxu0 %v4901
    %5936 = vmatprep.subr.mxu0 %v4910
    %5937 = vmatpush1.msra.mxu0 %v4909
    %5938 = vmatprep.subr.mxu0 %v4918
    %5939 = vmatpush1.msra.mxu0 %v4917
    %5940 = vmatprep.subr.mxu0 %v4926
    %5941 = vmatpush1.msra.mxu0 %v4925
    %5942 = vmatprep.subr.mxu0 %v4934
    %5943 = vmatpush1.msra.mxu0 %v4933
    %5944 = vmatprep.subr.mxu0 %v4942
    %5945 = vmatpush1.msra.mxu0 %v4941
    %5946 = vmatprep.subr.mxu0 %v4950
    %5947 = vmatpush1.msra.mxu0 %v4949
    %5948 = vmatprep.subr.mxu0 %v4958
    %5949 = vmatpush1.msra.mxu0 %v4957
    %5950 = vmatprep.subr.mxu0 %v4966
    %5951 = vmatpush1.msra.mxu0 %v4965
    %5952 = vmatprep.subr.mxu0 %v4974
    %5953 = vmatpush1.msra.mxu0 %v4973
    %5954 = vmatprep.mubr.f32.mxu0 %v2716
    %5955 = vmatmul.mubr.f32.gmra.mrb[0].mxu0 %v2715
    %v5956 = vpop.f32.mrb[0].mxu0
    %v5957 = vadd.f32 %v5886, %v5956
    %v5958 = vpop.f32.mrb[0].mxu0
    %v5959 = vadd.f32 %v5888, %v5958
    %5960 = vdwg.mxu0
    %5961 = vmatprep.subr.mxu0 %v4982
    %5962 = vmatpush1.msra.mxu0 %v4981
    %5963 = vmatprep.subr.mxu0 %v4990
    %5964 = vmatpush1.msra.mxu0 %v4989
    %5965 = vmatprep.subr.mxu0 %v4998
    %5966 = vmatpush1.msra.mxu0 %v4997
    %5967 = vmatprep.subr.mxu0 %v5006
    %5968 = vmatpush1.msra.mxu0 %v5005
    %5969 = vmatprep.subr.mxu0 %v5014
    %5970 = vmatpush1.msra.mxu0 %v5013
    %5971 = vmatprep.subr.mxu0 %v5022
    %5972 = vmatpush1.msra.mxu0 %v5021
    %5973 = vmatprep.subr.mxu0 %v5030
    %5974 = vmatpush1.msra.mxu0 %v5029
    %5975 = vmatprep.subr.mxu0 %v5038
    %5976 = vmatpush1.msra.mxu0 %v5037
    %5977 = vmatprep.subr.mxu0 %v5046
    %5978 = vmatpush1.msra.mxu0 %v5045
    %5979 = vmatprep.subr.mxu0 %v5054
    %5980 = vmatpush1.msra.mxu0 %v5053
    %5981 = vmatprep.subr.mxu0 %v5062
    %5982 = vmatpush1.msra.mxu0 %v5061
    %5983 = vmatprep.subr.mxu0 %v5070
    %5984 = vmatpush1.msra.mxu0 %v5069
    %5985 = vmatprep.subr.mxu0 %v5078
    %5986 = vmatpush1.msra.mxu0 %v5077
    %5987 = vmatprep.subr.mxu0 %v5086
    %5988 = vmatpush1.msra.mxu0 %v5085
    %5989 = vmatprep.subr.mxu0 %v5094
    %5990 = vmatpush1.msra.mxu0 %v5093
    %5991 = vmatprep.subr.mxu0 %v5102
    %5992 = vmatpush1.msra.mxu0 %v5101
    %5993 = vmatprep.subr.mxu0 %v5110
    %5994 = vmatpush1.msra.mxu0 %v5109
    %5995 = vmatprep.subr.mxu0 %v5118
    %5996 = vmatpush1.msra.mxu0 %v5117
    %5997 = vmatprep.subr.mxu0 %v5126
    %5998 = vmatpush1.msra.mxu0 %v5125
    %5999 = vmatprep.subr.mxu0 %v5134
    %6000 = vmatpush1.msra.mxu0 %v5133
    %6001 = vmatprep.subr.mxu0 %v5142
    %6002 = vmatpush1.msra.mxu0 %v5141
    %6003 = vmatprep.subr.mxu0 %v5150
    %6004 = vmatpush1.msra.mxu0 %v5149
    %6005 = vmatprep.subr.mxu0 %v5158
    %6006 = vmatpush1.msra.mxu0 %v5157
    %6007 = vmatprep.subr.mxu0 %v5166
    %6008 = vmatpush1.msra.mxu0 %v5165
    %6009 = vmatprep.subr.mxu0 %v5174
    %6010 = vmatpush1.msra.mxu0 %v5173
    %6011 = vmatprep.subr.mxu0 %v5182
    %6012 = vmatpush1.msra.mxu0 %v5181
    %6013 = vmatprep.subr.mxu0 %v5190
    %6014 = vmatpush1.msra.mxu0 %v5189
    %6015 = vmatprep.subr.mxu0 %v5198
    %6016 = vmatpush1.msra.mxu0 %v5197
    %6017 = vmatprep.subr.mxu0 %v5206
    %6018 = vmatpush1.msra.mxu0 %v5205
    %6019 = vmatprep.subr.mxu0 %v5214
    %6020 = vmatpush1.msra.mxu0 %v5213
    %6021 = vmatprep.subr.mxu0 %v5222
    %6022 = vmatpush1.msra.mxu0 %v5221
    %6023 = vmatprep.subr.mxu0 %v5230
    %6024 = vmatpush1.msra.mxu0 %v5229
    %6025 = vmatprep.mubr.f32.mxu0 %v2718
    %6026 = vmatmul.mubr.f32.gmra.mrb[0].mxu0 %v2717
    %v6027 = vpop.f32.mrb[0].mxu0
    %v6028 = vadd.f32 %v5957, %v6027
    %v6029 = vpop.f32.mrb[0].mxu0
    %v6030 = vadd.f32 %v5959, %v6029
    %6031 = vdwg.mxu0
    %6032 = vmatprep.subr.mxu0 %v5238
    %6033 = vmatpush1.msra.mxu0 %v5237
    %6034 = vmatprep.subr.mxu0 %v5246
    %6035 = vmatpush1.msra.mxu0 %v5245
    %6036 = vmatprep.subr.mxu0 %v5254
    %6037 = vmatpush1.msra.mxu0 %v5253
    %6038 = vmatprep.subr.mxu0 %v5262
    %6039 = vmatpush1.msra.mxu0 %v5261
    %6040 = vmatprep.subr.mxu0 %v5270
    %6041 = vmatpush1.msra.mxu0 %v5269
    %6042 = vmatprep.subr.mxu0 %v5278
    %6043 = vmatpush1.msra.mxu0 %v5277
    %6044 = vmatprep.subr.mxu0 %v5286
    %6045 = vmatpush1.msra.mxu0 %v5285
    %6046 = vmatprep.subr.mxu0 %v5294
    %6047 = vmatpush1.msra.mxu0 %v5293
    %6048 = vmatprep.subr.mxu0 %v5302
    %6049 = vmatpush1.msra.mxu0 %v5301
    %6050 = vmatprep.subr.mxu0 %v5310
    %6051 = vmatpush1.msra.mxu0 %v5309
    %6052 = vmatprep.subr.mxu0 %v5318
    %6053 = vmatpush1.msra.mxu0 %v5317
    %6054 = vmatprep.subr.mxu0 %v5326
    %6055 = vmatpush1.msra.mxu0 %v5325
    %6056 = vmatprep.subr.mxu0 %v5334
    %6057 = vmatpush1.msra.mxu0 %v5333
    %6058 = vmatprep.subr.mxu0 %v5342
    %6059 = vmatpush1.msra.mxu0 %v5341
    %6060 = vmatprep.subr.mxu0 %v5350
    %6061 = vmatpush1.msra.mxu0 %v5349
    %6062 = vmatprep.subr.mxu0 %v5358
    %6063 = vmatpush1.msra.mxu0 %v5357
    %6064 = vmatprep.subr.mxu0 %v5366
    %6065 = vmatpush1.msra.mxu0 %v5365
    %6066 = vmatprep.subr.mxu0 %v5374
    %6067 = vmatpush1.msra.mxu0 %v5373
    %6068 = vmatprep.subr.mxu0 %v5382
    %6069 = vmatpush1.msra.mxu0 %v5381
    %6070 = vmatprep.subr.mxu0 %v5390
    %6071 = vmatpush1.msra.mxu0 %v5389
    %6072 = vmatprep.subr.mxu0 %v5398
    %6073 = vmatpush1.msra.mxu0 %v5397
    %6074 = vmatprep.subr.mxu0 %v5406
    %6075 = vmatpush1.msra.mxu0 %v5405
    %6076 = vmatprep.subr.mxu0 %v5414
    %6077 = vmatpush1.msra.mxu0 %v5413
    %6078 = vmatprep.subr.mxu0 %v5422
    %6079 = vmatpush1.msra.mxu0 %v5421
    %6080 = vmatprep.subr.mxu0 %v5430
    %6081 = vmatpush1.msra.mxu0 %v5429
    %6082 = vmatprep.subr.mxu0 %v5438
    %6083 = vmatpush1.msra.mxu0 %v5437
    %6084 = vmatprep.subr.mxu0 %v5446
    %6085 = vmatpush1.msra.mxu0 %v5445
    %6086 = vmatprep.subr.mxu0 %v5454
    %6087 = vmatpush1.msra.mxu0 %v5453
    %6088 = vmatprep.subr.mxu0 %v5462
    %6089 = vmatpush1.msra.mxu0 %v5461
    %6090 = vmatprep.subr.mxu0 %v5470
    %6091 = vmatpush1.msra.mxu0 %v5469
    %6092 = vmatprep.subr.mxu0 %v5478
    %6093 = vmatpush1.msra.mxu0 %v5477
    %6094 = vmatprep.subr.mxu0 %v5486
    %6095 = vmatpush1.msra.mxu0 %v5485
    %6096 = vmatprep.mubr.f32.mxu0 %v2720
    %6097 = vmatmul.mubr.f32.gmra.mrb[0].mxu0 %v2719
    %v6098 = vpop.f32.mrb[0].mxu0
    %v6099 = vadd.f32 %v6028, %v6098
    %v6100 = vpop.f32.mrb[0].mxu0
    %v6101 = vadd.f32 %v6030, %v6100
    %6102 = vdwg.mxu0
    %6103 = vmatprep.subr.mxu0 %v3448
    %6104 = vmatpush1.msra.mxu0 %v3447
    %6105 = vmatprep.subr.mxu0 %v3456
    %6106 = vmatpush1.msra.mxu0 %v3455
    %6107 = vmatprep.subr.mxu0 %v3464
    %6108 = vmatpush1.msra.mxu0 %v3463
    %6109 = vmatprep.subr.mxu0 %v3472
    %6110 = vmatpush1.msra.mxu0 %v3471
    %6111 = vmatprep.subr.mxu0 %v3480
    %6112 = vmatpush1.msra.mxu0 %v3479
    %6113 = vmatprep.subr.mxu0 %v3488
    %6114 = vmatpush1.msra.mxu0 %v3487
    %6115 = vmatprep.subr.mxu0 %v3496
    %6116 = vmatpush1.msra.mxu0 %v3495
    %6117 = vmatprep.subr.mxu0 %v3504
    %6118 = vmatpush1.msra.mxu0 %v3503
    %6119 = vmatprep.subr.mxu0 %v3512
    %6120 = vmatpush1.msra.mxu0 %v3511
    %6121 = vmatprep.subr.mxu0 %v3520
    %6122 = vmatpush1.msra.mxu0 %v3519
    %6123 = vmatprep.subr.mxu0 %v3528
    %6124 = vmatpush1.msra.mxu0 %v3527
    %6125 = vmatprep.subr.mxu0 %v3536
    %6126 = vmatpush1.msra.mxu0 %v3535
    %6127 = vmatprep.subr.mxu0 %v3544
    %6128 = vmatpush1.msra.mxu0 %v3543
    %6129 = vmatprep.subr.mxu0 %v3552
    %6130 = vmatpush1.msra.mxu0 %v3551
    %6131 = vmatprep.subr.mxu0 %v3560
    %6132 = vmatpush1.msra.mxu0 %v3559
    %6133 = vmatprep.subr.mxu0 %v3568
    %6134 = vmatpush1.msra.mxu0 %v3567
    %6135 = vmatprep.subr.mxu0 %v3576
    %6136 = vmatpush1.msra.mxu0 %v3575
    %6137 = vmatprep.subr.mxu0 %v3584
    %6138 = vmatpush1.msra.mxu0 %v3583
    %6139 = vmatprep.subr.mxu0 %v3592
    %6140 = vmatpush1.msra.mxu0 %v3591
    %6141 = vmatprep.subr.mxu0 %v3600
    %6142 = vmatpush1.msra.mxu0 %v3599
    %6143 = vmatprep.subr.mxu0 %v3608
    %6144 = vmatpush1.msra.mxu0 %v3607
    %6145 = vmatprep.subr.mxu0 %v3616
    %6146 = vmatpush1.msra.mxu0 %v3615
    %6147 = vmatprep.subr.mxu0 %v3624
    %6148 = vmatpush1.msra.mxu0 %v3623
    %6149 = vmatprep.subr.mxu0 %v3632
    %6150 = vmatpush1.msra.mxu0 %v3631
    %6151 = vmatprep.subr.mxu0 %v3640
    %6152 = vmatpush1.msra.mxu0 %v3639
    %6153 = vmatprep.subr.mxu0 %v3648
    %6154 = vmatpush1.msra.mxu0 %v3647
    %6155 = vmatprep.subr.mxu0 %v3656
    %6156 = vmatpush1.msra.mxu0 %v3655
    %6157 = vmatprep.subr.mxu0 %v3664
    %6158 = vmatpush1.msra.mxu0 %v3663
    %6159 = vmatprep.subr.mxu0 %v3672
    %6160 = vmatpush1.msra.mxu0 %v3671
    %6161 = vmatprep.subr.mxu0 %v3680
    %6162 = vmatpush1.msra.mxu0 %v3679
    %6163 = vmatprep.subr.mxu0 %v3688
    %6164 = vmatpush1.msra.mxu0 %v3687
    %6165 = vmatprep.subr.mxu0 %v3696
    %6166 = vmatpush1.msra.mxu0 %v3695
    %6167 = vmatprep.mubr.f32.mxu0 %v2706
    %6168 = vmatmul.mubr.f32.gmra.mrb[0].mxu0 %v2705
    %v6169 = vpop.f32.mrb[0].mxu0
    %v6170 = vadd.f32 %v5506, %v6169
    %v6171 = vpop.f32.mrb[0].mxu0
    %v6172 = vadd.f32 %v5510, %v6171
    %6173 = vdwg.mxu0
    %6174 = vmatprep.subr.mxu0 %v3704
    %6175 = vmatpush1.msra.mxu0 %v3703
    %6176 = vmatprep.subr.mxu0 %v3712
    %6177 = vmatpush1.msra.mxu0 %v3711
    %6178 = vmatprep.subr.mxu0 %v3720
    %6179 = vmatpush1.msra.mxu0 %v3719
    %6180 = vmatprep.subr.mxu0 %v3728
    %6181 = vmatpush1.msra.mxu0 %v3727
    %6182 = vmatprep.subr.mxu0 %v3736
    %6183 = vmatpush1.msra.mxu0 %v3735
    %6184 = vmatprep.subr.mxu0 %v3744
    %6185 = vmatpush1.msra.mxu0 %v3743
    %6186 = vmatprep.subr.mxu0 %v3752
    %6187 = vmatpush1.msra.mxu0 %v3751
    %6188 = vmatprep.subr.mxu0 %v3760
    %6189 = vmatpush1.msra.mxu0 %v3759
    %6190 = vmatprep.subr.mxu0 %v3768
    %6191 = vmatpush1.msra.mxu0 %v3767
    %6192 = vmatprep.subr.mxu0 %v3776
    %6193 = vmatpush1.msra.mxu0 %v3775
    %6194 = vmatprep.subr.mxu0 %v3784
    %6195 = vmatpush1.msra.mxu0 %v3783
    %6196 = vmatprep.subr.mxu0 %v3792
    %6197 = vmatpush1.msra.mxu0 %v3791
    %6198 = vmatprep.subr.mxu0 %v3800
    %6199 = vmatpush1.msra.mxu0 %v3799
    %6200 = vmatprep.subr.mxu0 %v3808
    %6201 = vmatpush1.msra.mxu0 %v3807
    %6202 = vmatprep.subr.mxu0 %v3816
    %6203 = vmatpush1.msra.mxu0 %v3815
    %6204 = vmatprep.subr.mxu0 %v3824
    %6205 = vmatpush1.msra.mxu0 %v3823
    %6206 = vmatprep.subr.mxu0 %v3832
    %6207 = vmatpush1.msra.mxu0 %v3831
    %6208 = vmatprep.subr.mxu0 %v3840
    %6209 = vmatpush1.msra.mxu0 %v3839
    %6210 = vmatprep.subr.mxu0 %v3848
    %6211 = vmatpush1.msra.mxu0 %v3847
    %6212 = vmatprep.subr.mxu0 %v3856
    %6213 = vmatpush1.msra.mxu0 %v3855
    %6214 = vmatprep.subr.mxu0 %v3864
    %6215 = vmatpush1.msra.mxu0 %v3863
    %6216 = vmatprep.subr.mxu0 %v3872
    %6217 = vmatpush1.msra.mxu0 %v3871
    %6218 = vmatprep.subr.mxu0 %v3880
    %6219 = vmatpush1.msra.mxu0 %v3879
    %6220 = vmatprep.subr.mxu0 %v3888
    %6221 = vmatpush1.msra.mxu0 %v3887
    %6222 = vmatprep.subr.mxu0 %v3896
    %6223 = vmatpush1.msra.mxu0 %v3895
    %6224 = vmatprep.subr.mxu0 %v3904
    %6225 = vmatpush1.msra.mxu0 %v3903
    %6226 = vmatprep.subr.mxu0 %v3912
    %6227 = vmatpush1.msra.mxu0 %v3911
    %6228 = vmatprep.subr.mxu0 %v3920
    %6229 = vmatpush1.msra.mxu0 %v3919
    %6230 = vmatprep.subr.mxu0 %v3928
    %6231 = vmatpush1.msra.mxu0 %v3927
    %6232 = vmatprep.subr.mxu0 %v3936
    %6233 = vmatpush1.msra.mxu0 %v3935
    %6234 = vmatprep.subr.mxu0 %v3944
    %6235 = vmatpush1.msra.mxu0 %v3943
    %6236 = vmatprep.subr.mxu0 %v3952
    %6237 = vmatpush1.msra.mxu0 %v3951
    %6238 = vmatprep.mubr.f32.mxu0 %v2708
    %6239 = vmatmul.mubr.f32.gmra.mrb[0].mxu0 %v2707
    %v6240 = vpop.f32.mrb[0].mxu0
    %v6241 = vadd.f32 %v6170, %v6240
    %v6242 = vpop.f32.mrb[0].mxu0
    %v6243 = vadd.f32 %v6172, %v6242
    %6244 = vdwg.mxu0
    %6245 = vmatprep.subr.mxu0 %v3960
    %6246 = vmatpush1.msra.mxu0 %v3959
    %6247 = vmatprep.subr.mxu0 %v3968
    %6248 = vmatpush1.msra.mxu0 %v3967
    %6249 = vmatprep.subr.mxu0 %v3976
    %6250 = vmatpush1.msra.mxu0 %v3975
    %6251 = vmatprep.subr.mxu0 %v3984
    %6252 = vmatpush1.msra.mxu0 %v3983
    %6253 = vmatprep.subr.mxu0 %v3992
    %6254 = vmatpush1.msra.mxu0 %v3991
    %6255 = vmatprep.subr.mxu0 %v4000
    %6256 = vmatpush1.msra.mxu0 %v3999
    %6257 = vmatprep.subr.mxu0 %v4008
    %6258 = vmatpush1.msra.mxu0 %v4007
    %6259 = vmatprep.subr.mxu0 %v4016
    %6260 = vmatpush1.msra.mxu0 %v4015
    %6261 = vmatprep.subr.mxu0 %v4024
    %6262 = vmatpush1.msra.mxu0 %v4023
    %6263 = vmatprep.subr.mxu0 %v4032
    %6264 = vmatpush1.msra.mxu0 %v4031
    %6265 = vmatprep.subr.mxu0 %v4040
    %6266 = vmatpush1.msra.mxu0 %v4039
    %6267 = vmatprep.subr.mxu0 %v4048
    %6268 = vmatpush1.msra.mxu0 %v4047
    %6269 = vmatprep.subr.mxu0 %v4056
    %6270 = vmatpush1.msra.mxu0 %v4055
    %6271 = vmatprep.subr.mxu0 %v4064
    %6272 = vmatpush1.msra.mxu0 %v4063
    %6273 = vmatprep.subr.mxu0 %v4072
    %6274 = vmatpush1.msra.mxu0 %v4071
    %6275 = vmatprep.subr.mxu0 %v4080
    %6276 = vmatpush1.msra.mxu0 %v4079
    %6277 = vmatprep.subr.mxu0 %v4088
    %6278 = vmatpush1.msra.mxu0 %v4087
    %6279 = vmatprep.subr.mxu0 %v4096
    %6280 = vmatpush1.msra.mxu0 %v4095
    %6281 = vmatprep.subr.mxu0 %v4104
    %6282 = vmatpush1.msra.mxu0 %v4103
    %6283 = vmatprep.subr.mxu0 %v4112
    %6284 = vmatpush1.msra.mxu0 %v4111
    %6285 = vmatprep.subr.mxu0 %v4120
    %6286 = vmatpush1.msra.mxu0 %v4119
    %6287 = vmatprep.subr.mxu0 %v4128
    %6288 = vmatpush1.msra.mxu0 %v4127
    %6289 = vmatprep.subr.mxu0 %v4136
    %6290 = vmatpush1.msra.mxu0 %v4135
    %6291 = vmatprep.subr.mxu0 %v4144
    %6292 = vmatpush1.msra.mxu0 %v4143
    %6293 = vmatprep.subr.mxu0 %v4152
    %6294 = vmatpush1.msra.mxu0 %v4151
    %6295 = vmatprep.subr.mxu0 %v4160
    %6296 = vmatpush1.msra.mxu0 %v4159
    %6297 = vmatprep.subr.mxu0 %v4168
    %6298 = vmatpush1.msra.mxu0 %v4167
    %6299 = vmatprep.subr.mxu0 %v4176
    %6300 = vmatpush1.msra.mxu0 %v4175
    %6301 = vmatprep.subr.mxu0 %v4184
    %6302 = vmatpush1.msra.mxu0 %v4183
    %6303 = vmatprep.subr.mxu0 %v4192
    %6304 = vmatpush1.msra.mxu0 %v4191
    %6305 = vmatprep.subr.mxu0 %v4200
    %6306 = vmatpush1.msra.mxu0 %v4199
    %6307 = vmatprep.subr.mxu0 %v4208
    %6308 = vmatpush1.msra.mxu0 %v4207
    %6309 = vmatprep.mubr.f32.mxu0 %v2710
    %6310 = vmatmul.mubr.f32.gmra.mrb[0].mxu0 %v2709
    %v6311 = vpop.f32.mrb[0].mxu0
    %v6312 = vadd.f32 %v6241, %v6311
    %v6313 = vpop.f32.mrb[0].mxu0
    %v6314 = vadd.f32 %v6243, %v6313
    %6315 = vdwg.mxu0
    %6316 = vmatprep.subr.mxu0 %v4216
    %6317 = vmatpush1.msra.mxu0 %v4215
    %6318 = vmatprep.subr.mxu0 %v4224
    %6319 = vmatpush1.msra.mxu0 %v4223
    %6320 = vmatprep.subr.mxu0 %v4232
    %6321 = vmatpush1.msra.mxu0 %v4231
    %6322 = vmatprep.subr.mxu0 %v4240
    %6323 = vmatpush1.msra.mxu0 %v4239
    %6324 = vmatprep.subr.mxu0 %v4248
    %6325 = vmatpush1.msra.mxu0 %v4247
    %6326 = vmatprep.subr.mxu0 %v4256
    %6327 = vmatpush1.msra.mxu0 %v4255
    %6328 = vmatprep.subr.mxu0 %v4264
    %6329 = vmatpush1.msra.mxu0 %v4263
    %6330 = vmatprep.subr.mxu0 %v4272
    %6331 = vmatpush1.msra.mxu0 %v4271
    %6332 = vmatprep.subr.mxu0 %v4280
    %6333 = vmatpush1.msra.mxu0 %v4279
    %6334 = vmatprep.subr.mxu0 %v4288
    %6335 = vmatpush1.msra.mxu0 %v4287
    %6336 = vmatprep.subr.mxu0 %v4296
    %6337 = vmatpush1.msra.mxu0 %v4295
    %6338 = vmatprep.subr.mxu0 %v4304
    %6339 = vmatpush1.msra.mxu0 %v4303
    %6340 = vmatprep.subr.mxu0 %v4312
    %6341 = vmatpush1.msra.mxu0 %v4311
    %6342 = vmatprep.subr.mxu0 %v4320
    %6343 = vmatpush1.msra.mxu0 %v4319
    %6344 = vmatprep.subr.mxu0 %v4328
    %6345 = vmatpush1.msra.mxu0 %v4327
    %6346 = vmatprep.subr.mxu0 %v4336
    %6347 = vmatpush1.msra.mxu0 %v4335
    %6348 = vmatprep.subr.mxu0 %v4344
    %6349 = vmatpush1.msra.mxu0 %v4343
    %6350 = vmatprep.subr.mxu0 %v4352
    %6351 = vmatpush1.msra.mxu0 %v4351
    %6352 = vmatprep.subr.mxu0 %v4360
    %6353 = vmatpush1.msra.mxu0 %v4359
    %6354 = vmatprep.subr.mxu0 %v4368
    %6355 = vmatpush1.msra.mxu0 %v4367
    %6356 = vmatprep.subr.mxu0 %v4376
    %6357 = vmatpush1.msra.mxu0 %v4375
    %6358 = vmatprep.subr.mxu0 %v4384
    %6359 = vmatpush1.msra.mxu0 %v4383
    %6360 = vmatprep.subr.mxu0 %v4392
    %6361 = vmatpush1.msra.mxu0 %v4391
    %6362 = vmatprep.subr.mxu0 %v4400
    %6363 = vmatpush1.msra.mxu0 %v4399
    %6364 = vmatprep.subr.mxu0 %v4408
    %6365 = vmatpush1.msra.mxu0 %v4407
    %6366 = vmatprep.subr.mxu0 %v4416
    %6367 = vmatpush1.msra.mxu0 %v4415
    %6368 = vmatprep.subr.mxu0 %v4424
    %6369 = vmatpush1.msra.mxu0 %v4423
    %6370 = vmatprep.subr.mxu0 %v4432
    %6371 = vmatpush1.msra.mxu0 %v4431
    %6372 = vmatprep.subr.mxu0 %v4440
    %6373 = vmatpush1.msra.mxu0 %v4439
    %6374 = vmatprep.subr.mxu0 %v4448
    %6375 = vmatpush1.msra.mxu0 %v4447
    %6376 = vmatprep.subr.mxu0 %v4456
    %6377 = vmatpush1.msra.mxu0 %v4455
    %6378 = vmatprep.subr.mxu0 %v4464
    %6379 = vmatpush1.msra.mxu0 %v4463
    %6380 = vmatprep.mubr.f32.mxu0 %v2712
    %6381 = vmatmul.mubr.f32.gmra.mrb[0].mxu0 %v2711
    %v6382 = vpop.f32.mrb[0].mxu0
    %v6383 = vadd.f32 %v6312, %v6382
    %v6384 = vpop.f32.mrb[0].mxu0
    %v6385 = vadd.f32 %v6314, %v6384
    %6386 = vdwg.mxu0
    %6387 = vmatprep.subr.mxu0 %v4472
    %6388 = vmatpush1.msra.mxu0 %v4471
    %6389 = vmatprep.subr.mxu0 %v4480
    %6390 = vmatpush1.msra.mxu0 %v4479
    %6391 = vmatprep.subr.mxu0 %v4488
    %6392 = vmatpush1.msra.mxu0 %v4487
    %6393 = vmatprep.subr.mxu0 %v4496
    %6394 = vmatpush1.msra.mxu0 %v4495
    %6395 = vmatprep.subr.mxu0 %v4504
    %6396 = vmatpush1.msra.mxu0 %v4503
    %6397 = vmatprep.subr.mxu0 %v4512
    %6398 = vmatpush1.msra.mxu0 %v4511
    %6399 = vmatprep.subr.mxu0 %v4520
    %6400 = vmatpush1.msra.mxu0 %v4519
    %6401 = vmatprep.subr.mxu0 %v4528
    %6402 = vmatpush1.msra.mxu0 %v4527
    %6403 = vmatprep.subr.mxu0 %v4536
    %6404 = vmatpush1.msra.mxu0 %v4535
    %6405 = vmatprep.subr.mxu0 %v4544
    %6406 = vmatpush1.msra.mxu0 %v4543
    %6407 = vmatprep.subr.mxu0 %v4552
    %6408 = vmatpush1.msra.mxu0 %v4551
    %6409 = vmatprep.subr.mxu0 %v4560
    %6410 = vmatpush1.msra.mxu0 %v4559
    %6411 = vmatprep.subr.mxu0 %v4568
    %6412 = vmatpush1.msra.mxu0 %v4567
    %6413 = vmatprep.subr.mxu0 %v4576
    %6414 = vmatpush1.msra.mxu0 %v4575
    %6415 = vmatprep.subr.mxu0 %v4584
    %6416 = vmatpush1.msra.mxu0 %v4583
    %6417 = vmatprep.subr.mxu0 %v4592
    %6418 = vmatpush1.msra.mxu0 %v4591
    %6419 = vmatprep.subr.mxu0 %v4600
    %6420 = vmatpush1.msra.mxu0 %v4599
    %6421 = vmatprep.subr.mxu0 %v4608
    %6422 = vmatpush1.msra.mxu0 %v4607
    %6423 = vmatprep.subr.mxu0 %v4616
    %6424 = vmatpush1.msra.mxu0 %v4615
    %6425 = vmatprep.subr.mxu0 %v4624
    %6426 = vmatpush1.msra.mxu0 %v4623
    %6427 = vmatprep.subr.mxu0 %v4632
    %6428 = vmatpush1.msra.mxu0 %v4631
    %6429 = vmatprep.subr.mxu0 %v4640
    %6430 = vmatpush1.msra.mxu0 %v4639
    %6431 = vmatprep.subr.mxu0 %v4648
    %6432 = vmatpush1.msra.mxu0 %v4647
    %6433 = vmatprep.subr.mxu0 %v4656
    %6434 = vmatpush1.msra.mxu0 %v4655
    %6435 = vmatprep.subr.mxu0 %v4664
    %6436 = vmatpush1.msra.mxu0 %v4663
    %6437 = vmatprep.subr.mxu0 %v4672
    %6438 = vmatpush1.msra.mxu0 %v4671
    %6439 = vmatprep.subr.mxu0 %v4680
    %6440 = vmatpush1.msra.mxu0 %v4679
    %6441 = vmatprep.subr.mxu0 %v4688
    %6442 = vmatpush1.msra.mxu0 %v4687
    %6443 = vmatprep.subr.mxu0 %v4696
    %6444 = vmatpush1.msra.mxu0 %v4695
    %6445 = vmatprep.subr.mxu0 %v4704
    %6446 = vmatpush1.msra.mxu0 %v4703
    %6447 = vmatprep.subr.mxu0 %v4712
    %6448 = vmatpush1.msra.mxu0 %v4711
    %6449 = vmatprep.subr.mxu0 %v4720
    %6450 = vmatpush1.msra.mxu0 %v4719
    %6451 = vmatprep.mubr.f32.mxu0 %v2714
    %6452 = vmatmul.mubr.f32.gmra.mrb[0].mxu0 %v2713
    %v6453 = vpop.f32.mrb[0].mxu0
    %v6454 = vadd.f32 %v6383, %v6453
    %v6455 = vpop.f32.mrb[0].mxu0
    %v6456 = vadd.f32 %v6385, %v6455
    %6457 = vdwg.mxu0
    %6458 = vmatprep.subr.mxu0 %v4728
    %6459 = vmatpush1.msra.mxu0 %v4727
    %6460 = vmatprep.subr.mxu0 %v4736
    %6461 = vmatpush1.msra.mxu0 %v4735
    %6462 = vmatprep.subr.mxu0 %v4744
    %6463 = vmatpush1.msra.mxu0 %v4743
    %6464 = vmatprep.subr.mxu0 %v4752
    %6465 = vmatpush1.msra.mxu0 %v4751
    %6466 = vmatprep.subr.mxu0 %v4760
    %6467 = vmatpush1.msra.mxu0 %v4759
    %6468 = vmatprep.subr.mxu0 %v4768
    %6469 = vmatpush1.msra.mxu0 %v4767
    %6470 = vmatprep.subr.mxu0 %v4776
    %6471 = vmatpush1.msra.mxu0 %v4775
    %6472 = vmatprep.subr.mxu0 %v4784
    %6473 = vmatpush1.msra.mxu0 %v4783
    %6474 = vmatprep.subr.mxu0 %v4792
    %6475 = vmatpush1.msra.mxu0 %v4791
    %6476 = vmatprep.subr.mxu0 %v4800
    %6477 = vmatpush1.msra.mxu0 %v4799
    %6478 = vmatprep.subr.mxu0 %v4808
    %6479 = vmatpush1.msra.mxu0 %v4807
    %6480 = vmatprep.subr.mxu0 %v4816
    %6481 = vmatpush1.msra.mxu0 %v4815
    %6482 = vmatprep.subr.mxu0 %v4824
    %6483 = vmatpush1.msra.mxu0 %v4823
    %6484 = vmatprep.subr.mxu0 %v4832
    %6485 = vmatpush1.msra.mxu0 %v4831
    %6486 = vmatprep.subr.mxu0 %v4840
    %6487 = vmatpush1.msra.mxu0 %v4839
    %6488 = vmatprep.subr.mxu0 %v4848
    %6489 = vmatpush1.msra.mxu0 %v4847
    %6490 = vmatprep.subr.mxu0 %v4856
    %6491 = vmatpush1.msra.mxu0 %v4855
    %6492 = vmatprep.subr.mxu0 %v4864
    %6493 = vmatpush1.msra.mxu0 %v4863
    %6494 = vmatprep.subr.mxu0 %v4872
    %6495 = vmatpush1.msra.mxu0 %v4871
    %6496 = vmatprep.subr.mxu0 %v4880
    %6497 = vmatpush1.msra.mxu0 %v4879
    %6498 = vmatprep.subr.mxu0 %v4888
    %6499 = vmatpush1.msra.mxu0 %v4887
    %6500 = vmatprep.subr.mxu0 %v4896
    %6501 = vmatpush1.msra.mxu0 %v4895
    %6502 = vmatprep.subr.mxu0 %v4904
    %6503 = vmatpush1.msra.mxu0 %v4903
    %6504 = vmatprep.subr.mxu0 %v4912
    %6505 = vmatpush1.msra.mxu0 %v4911
    %6506 = vmatprep.subr.mxu0 %v4920
    %6507 = vmatpush1.msra.mxu0 %v4919
    %6508 = vmatprep.subr.mxu0 %v4928
    %6509 = vmatpush1.msra.mxu0 %v4927
    %6510 = vmatprep.subr.mxu0 %v4936
    %6511 = vmatpush1.msra.mxu0 %v4935
    %6512 = vmatprep.subr.mxu0 %v4944
    %6513 = vmatpush1.msra.mxu0 %v4943
    %6514 = vmatprep.subr.mxu0 %v4952
    %6515 = vmatpush1.msra.mxu0 %v4951
    %6516 = vmatprep.subr.mxu0 %v4960
    %6517 = vmatpush1.msra.mxu0 %v4959
    %6518 = vmatprep.subr.mxu0 %v4968
    %6519 = vmatpush1.msra.mxu0 %v4967
    %6520 = vmatprep.subr.mxu0 %v4976
    %6521 = vmatpush1.msra.mxu0 %v4975
    %6522 = vmatprep.mubr.f32.mxu0 %v2716
    %6523 = vmatmul.mubr.f32.gmra.mrb[0].mxu0 %v2715
    %v6524 = vpop.f32.mrb[0].mxu0
    %v6525 = vadd.f32 %v6454, %v6524
    %v6526 = vpop.f32.mrb[0].mxu0
    %v6527 = vadd.f32 %v6456, %v6526
    %6528 = vdwg.mxu0
    %6529 = vmatprep.subr.mxu0 %v4984
    %6530 = vmatpush1.msra.mxu0 %v4983
    %6531 = vmatprep.subr.mxu0 %v4992
    %6532 = vmatpush1.msra.mxu0 %v4991
    %6533 = vmatprep.subr.mxu0 %v5000
    %6534 = vmatpush1.msra.mxu0 %v4999
    %6535 = vmatprep.subr.mxu0 %v5008
    %6536 = vmatpush1.msra.mxu0 %v5007
    %6537 = vmatprep.subr.mxu0 %v5016
    %6538 = vmatpush1.msra.mxu0 %v5015
    %6539 = vmatprep.subr.mxu0 %v5024
    %6540 = vmatpush1.msra.mxu0 %v5023
    %6541 = vmatprep.subr.mxu0 %v5032
    %6542 = vmatpush1.msra.mxu0 %v5031
    %6543 = vmatprep.subr.mxu0 %v5040
    %6544 = vmatpush1.msra.mxu0 %v5039
    %6545 = vmatprep.subr.mxu0 %v5048
    %6546 = vmatpush1.msra.mxu0 %v5047
    %6547 = vmatprep.subr.mxu0 %v5056
    %6548 = vmatpush1.msra.mxu0 %v5055
    %6549 = vmatprep.subr.mxu0 %v5064
    %6550 = vmatpush1.msra.mxu0 %v5063
    %6551 = vmatprep.subr.mxu0 %v5072
    %6552 = vmatpush1.msra.mxu0 %v5071
    %6553 = vmatprep.subr.mxu0 %v5080
    %6554 = vmatpush1.msra.mxu0 %v5079
    %6555 = vmatprep.subr.mxu0 %v5088
    %6556 = vmatpush1.msra.mxu0 %v5087
    %6557 = vmatprep.subr.mxu0 %v5096
    %6558 = vmatpush1.msra.mxu0 %v5095
    %6559 = vmatprep.subr.mxu0 %v5104
    %6560 = vmatpush1.msra.mxu0 %v5103
    %6561 = vmatprep.subr.mxu0 %v5112
    %6562 = vmatpush1.msra.mxu0 %v5111
    %6563 = vmatprep.subr.mxu0 %v5120
    %6564 = vmatpush1.msra.mxu0 %v5119
    %6565 = vmatprep.subr.mxu0 %v5128
    %6566 = vmatpush1.msra.mxu0 %v5127
    %6567 = vmatprep.subr.mxu0 %v5136
    %6568 = vmatpush1.msra.mxu0 %v5135
    %6569 = vmatprep.subr.mxu0 %v5144
    %6570 = vmatpush1.msra.mxu0 %v5143
    %6571 = vmatprep.subr.mxu0 %v5152
    %6572 = vmatpush1.msra.mxu0 %v5151
    %6573 = vmatprep.subr.mxu0 %v5160
    %6574 = vmatpush1.msra.mxu0 %v5159
    %6575 = vmatprep.subr.mxu0 %v5168
    %6576 = vmatpush1.msra.mxu0 %v5167
    %6577 = vmatprep.subr.mxu0 %v5176
    %6578 = vmatpush1.msra.mxu0 %v5175
    %6579 = vmatprep.subr.mxu0 %v5184
    %6580 = vmatpush1.msra.mxu0 %v5183
    %6581 = vmatprep.subr.mxu0 %v5192
    %6582 = vmatpush1.msra.mxu0 %v5191
    %6583 = vmatprep.subr.mxu0 %v5200
    %6584 = vmatpush1.msra.mxu0 %v5199
    %6585 = vmatprep.subr.mxu0 %v5208
    %6586 = vmatpush1.msra.mxu0 %v5207
    %6587 = vmatprep.subr.mxu0 %v5216
    %6588 = vmatpush1.msra.mxu0 %v5215
    %6589 = vmatprep.subr.mxu0 %v5224
    %6590 = vmatpush1.msra.mxu0 %v5223
    %6591 = vmatprep.subr.mxu0 %v5232
    %6592 = vmatpush1.msra.mxu0 %v5231
    %6593 = vmatprep.mubr.f32.mxu0 %v2718
    %6594 = vmatmul.mubr.f32.gmra.mrb[0].mxu0 %v2717
    %v6595 = vpop.f32.mrb[0].mxu0
    %v6596 = vadd.f32 %v6525, %v6595
    %v6597 = vpop.f32.mrb[0].mxu0
    %v6598 = vadd.f32 %v6527, %v6597
    %6599 = vdwg.mxu0
    %6600 = vmatprep.subr.mxu0 %v5240
    %6601 = vmatpush1.msra.mxu0 %v5239
    %6602 = vmatprep.subr.mxu0 %v5248
    %6603 = vmatpush1.msra.mxu0 %v5247
    %6604 = vmatprep.subr.mxu0 %v5256
    %6605 = vmatpush1.msra.mxu0 %v5255
    %6606 = vmatprep.subr.mxu0 %v5264
    %6607 = vmatpush1.msra.mxu0 %v5263
    %6608 = vmatprep.subr.mxu0 %v5272
    %6609 = vmatpush1.msra.mxu0 %v5271
    %6610 = vmatprep.subr.mxu0 %v5280
    %6611 = vmatpush1.msra.mxu0 %v5279
    %6612 = vmatprep.subr.mxu0 %v5288
    %6613 = vmatpush1.msra.mxu0 %v5287
    %6614 = vmatprep.subr.mxu0 %v5296
    %6615 = vmatpush1.msra.mxu0 %v5295
    %6616 = vmatprep.subr.mxu0 %v5304
    %6617 = vmatpush1.msra.mxu0 %v5303
    %6618 = vmatprep.subr.mxu0 %v5312
    %6619 = vmatpush1.msra.mxu0 %v5311
    %6620 = vmatprep.subr.mxu0 %v5320
    %6621 = vmatpush1.msra.mxu0 %v5319
    %6622 = vmatprep.subr.mxu0 %v5328
    %6623 = vmatpush1.msra.mxu0 %v5327
    %6624 = vmatprep.subr.mxu0 %v5336
    %6625 = vmatpush1.msra.mxu0 %v5335
    %6626 = vmatprep.subr.mxu0 %v5344
    %6627 = vmatpush1.msra.mxu0 %v5343
    %6628 = vmatprep.subr.mxu0 %v5352
    %6629 = vmatpush1.msra.mxu0 %v5351
    %6630 = vmatprep.subr.mxu0 %v5360
    %6631 = vmatpush1.msra.mxu0 %v5359
    %6632 = vmatprep.subr.mxu0 %v5368
    %6633 = vmatpush1.msra.mxu0 %v5367
    %6634 = vmatprep.subr.mxu0 %v5376
    %6635 = vmatpush1.msra.mxu0 %v5375
    %6636 = vmatprep.subr.mxu0 %v5384
    %6637 = vmatpush1.msra.mxu0 %v5383
    %6638 = vmatprep.subr.mxu0 %v5392
    %6639 = vmatpush1.msra.mxu0 %v5391
    %6640 = vmatprep.subr.mxu0 %v5400
    %6641 = vmatpush1.msra.mxu0 %v5399
    %6642 = vmatprep.subr.mxu0 %v5408
    %6643 = vmatpush1.msra.mxu0 %v5407
    %6644 = vmatprep.subr.mxu0 %v5416
    %6645 = vmatpush1.msra.mxu0 %v5415
    %6646 = vmatprep.subr.mxu0 %v5424
    %6647 = vmatpush1.msra.mxu0 %v5423
    %6648 = vmatprep.subr.mxu0 %v5432
    %6649 = vmatpush1.msra.mxu0 %v5431
    %6650 = vmatprep.subr.mxu0 %v5440
    %6651 = vmatpush1.msra.mxu0 %v5439
    %6652 = vmatprep.subr.mxu0 %v5448
    %6653 = vmatpush1.msra.mxu0 %v5447
    %6654 = vmatprep.subr.mxu0 %v5456
    %6655 = vmatpush1.msra.mxu0 %v5455
    %6656 = vmatprep.subr.mxu0 %v5464
    %6657 = vmatpush1.msra.mxu0 %v5463
    %6658 = vmatprep.subr.mxu0 %v5472
    %6659 = vmatpush1.msra.mxu0 %v5471
    %6660 = vmatprep.subr.mxu0 %v5480
    %6661 = vmatpush1.msra.mxu0 %v5479
    %6662 = vmatprep.subr.mxu0 %v5488
    %6663 = vmatpush1.msra.mxu0 %v5487
    %6664 = vmatprep.mubr.f32.mxu0 %v2720
    %6665 = vmatmul.mubr.f32.gmra.mrb[0].mxu0 %v2719
    %v6666 = vpop.f32.mrb[0].mxu0
    %v6667 = vadd.f32 %v6596, %v6666
    %v6668 = vpop.f32.mrb[0].mxu0
    %v6669 = vadd.f32 %v6598, %v6668
    %6670 = vdwg.mxu0
    %6671 = vmatprep.subr.mxu0 %v3450
    %6672 = vmatpush1.msra.mxu0 %v3449
    %6673 = vmatprep.subr.mxu0 %v3458
    %6674 = vmatpush1.msra.mxu0 %v3457
    %6675 = vmatprep.subr.mxu0 %v3466
    %6676 = vmatpush1.msra.mxu0 %v3465
    %6677 = vmatprep.subr.mxu0 %v3474
    %6678 = vmatpush1.msra.mxu0 %v3473
    %6679 = vmatprep.subr.mxu0 %v3482
    %6680 = vmatpush1.msra.mxu0 %v3481
    %6681 = vmatprep.subr.mxu0 %v3490
    %6682 = vmatpush1.msra.mxu0 %v3489
    %6683 = vmatprep.subr.mxu0 %v3498
    %6684 = vmatpush1.msra.mxu0 %v3497
    %6685 = vmatprep.subr.mxu0 %v3506
    %6686 = vmatpush1.msra.mxu0 %v3505
    %6687 = vmatprep.subr.mxu0 %v3514
    %6688 = vmatpush1.msra.mxu0 %v3513
    %6689 = vmatprep.subr.mxu0 %v3522
    %6690 = vmatpush1.msra.mxu0 %v3521
    %6691 = vmatprep.subr.mxu0 %v3530
    %6692 = vmatpush1.msra.mxu0 %v3529
    %6693 = vmatprep.subr.mxu0 %v3538
    %6694 = vmatpush1.msra.mxu0 %v3537
    %6695 = vmatprep.subr.mxu0 %v3546
    %6696 = vmatpush1.msra.mxu0 %v3545
    %6697 = vmatprep.subr.mxu0 %v3554
    %6698 = vmatpush1.msra.mxu0 %v3553
    %6699 = vmatprep.subr.mxu0 %v3562
    %6700 = vmatpush1.msra.mxu0 %v3561
    %6701 = vmatprep.subr.mxu0 %v3570
    %6702 = vmatpush1.msra.mxu0 %v3569
    %6703 = vmatprep.subr.mxu0 %v3578
    %6704 = vmatpush1.msra.mxu0 %v3577
    %6705 = vmatprep.subr.mxu0 %v3586
    %6706 = vmatpush1.msra.mxu0 %v3585
    %6707 = vmatprep.subr.mxu0 %v3594
    %6708 = vmatpush1.msra.mxu0 %v3593
    %6709 = vmatprep.subr.mxu0 %v3602
    %6710 = vmatpush1.msra.mxu0 %v3601
    %6711 = vmatprep.subr.mxu0 %v3610
    %6712 = vmatpush1.msra.mxu0 %v3609
    %6713 = vmatprep.subr.mxu0 %v3618
    %6714 = vmatpush1.msra.mxu0 %v3617
    %6715 = vmatprep.subr.mxu0 %v3626
    %6716 = vmatpush1.msra.mxu0 %v3625
    %6717 = vmatprep.subr.mxu0 %v3634
    %6718 = vmatpush1.msra.mxu0 %v3633
    %6719 = vmatprep.subr.mxu0 %v3642
    %6720 = vmatpush1.msra.mxu0 %v3641
    %6721 = vmatprep.subr.mxu0 %v3650
    %6722 = vmatpush1.msra.mxu0 %v3649
    %6723 = vmatprep.subr.mxu0 %v3658
    %6724 = vmatpush1.msra.mxu0 %v3657
    %6725 = vmatprep.subr.mxu0 %v3666
    %6726 = vmatpush1.msra.mxu0 %v3665
    %6727 = vmatprep.subr.mxu0 %v3674
    %6728 = vmatpush1.msra.mxu0 %v3673
    %6729 = vmatprep.subr.mxu0 %v3682
    %6730 = vmatpush1.msra.mxu0 %v3681
    %6731 = vmatprep.subr.mxu0 %v3690
    %6732 = vmatpush1.msra.mxu0 %v3689
    %6733 = vmatprep.subr.mxu0 %v3698
    %6734 = vmatpush1.msra.mxu0 %v3697
    %6735 = vmatprep.mubr.f32.mxu0 %v2706
    %6736 = vmatmul.mubr.f32.gmra.mrb[0].mxu0 %v2705
    %v6737 = vpop.f32.mrb[0].mxu0
    %v6738 = vadd.f32 %v5514, %v6737
    %v6739 = vpop.f32.mrb[0].mxu0
    %v6740 = vadd.f32 %v5518, %v6739
    %6741 = vdwg.mxu0
    %6742 = vmatprep.subr.mxu0 %v3706
    %6743 = vmatpush1.msra.mxu0 %v3705
    %6744 = vmatprep.subr.mxu0 %v3714
    %6745 = vmatpush1.msra.mxu0 %v3713
    %6746 = vmatprep.subr.mxu0 %v3722
    %6747 = vmatpush1.msra.mxu0 %v3721
    %6748 = vmatprep.subr.mxu0 %v3730
    %6749 = vmatpush1.msra.mxu0 %v3729
    %6750 = vmatprep.subr.mxu0 %v3738
    %6751 = vmatpush1.msra.mxu0 %v3737
    %6752 = vmatprep.subr.mxu0 %v3746
    %6753 = vmatpush1.msra.mxu0 %v3745
    %6754 = vmatprep.subr.mxu0 %v3754
    %6755 = vmatpush1.msra.mxu0 %v3753
    %6756 = vmatprep.subr.mxu0 %v3762
    %6757 = vmatpush1.msra.mxu0 %v3761
    %6758 = vmatprep.subr.mxu0 %v3770
    %6759 = vmatpush1.msra.mxu0 %v3769
    %6760 = vmatprep.subr.mxu0 %v3778
    %6761 = vmatpush1.msra.mxu0 %v3777
    %6762 = vmatprep.subr.mxu0 %v3786
    %6763 = vmatpush1.msra.mxu0 %v3785
    %6764 = vmatprep.subr.mxu0 %v3794
    %6765 = vmatpush1.msra.mxu0 %v3793
    %6766 = vmatprep.subr.mxu0 %v3802
    %6767 = vmatpush1.msra.mxu0 %v3801
    %6768 = vmatprep.subr.mxu0 %v3810
    %6769 = vmatpush1.msra.mxu0 %v3809
    %6770 = vmatprep.subr.mxu0 %v3818
    %6771 = vmatpush1.msra.mxu0 %v3817
    %6772 = vmatprep.subr.mxu0 %v3826
    %6773 = vmatpush1.msra.mxu0 %v3825
    %6774 = vmatprep.subr.mxu0 %v3834
    %6775 = vmatpush1.msra.mxu0 %v3833
    %6776 = vmatprep.subr.mxu0 %v3842
    %6777 = vmatpush1.msra.mxu0 %v3841
    %6778 = vmatprep.subr.mxu0 %v3850
    %6779 = vmatpush1.msra.mxu0 %v3849
    %6780 = vmatprep.subr.mxu0 %v3858
    %6781 = vmatpush1.msra.mxu0 %v3857
    %6782 = vmatprep.subr.mxu0 %v3866
    %6783 = vmatpush1.msra.mxu0 %v3865
    %6784 = vmatprep.subr.mxu0 %v3874
    %6785 = vmatpush1.msra.mxu0 %v3873
    %6786 = vmatprep.subr.mxu0 %v3882
    %6787 = vmatpush1.msra.mxu0 %v3881
    %6788 = vmatprep.subr.mxu0 %v3890
    %6789 = vmatpush1.msra.mxu0 %v3889
    %6790 = vmatprep.subr.mxu0 %v3898
    %6791 = vmatpush1.msra.mxu0 %v3897
    %6792 = vmatprep.subr.mxu0 %v3906
    %6793 = vmatpush1.msra.mxu0 %v3905
    %6794 = vmatprep.subr.mxu0 %v3914
    %6795 = vmatpush1.msra.mxu0 %v3913
    %6796 = vmatprep.subr.mxu0 %v3922
    %6797 = vmatpush1.msra.mxu0 %v3921
    %6798 = vmatprep.subr.mxu0 %v3930
    %6799 = vmatpush1.msra.mxu0 %v3929
    %6800 = vmatprep.subr.mxu0 %v3938
    %6801 = vmatpush1.msra.mxu0 %v3937
    %6802 = vmatprep.subr.mxu0 %v3946
    %6803 = vmatpush1.msra.mxu0 %v3945
    %6804 = vmatprep.subr.mxu0 %v3954
    %6805 = vmatpush1.msra.mxu0 %v3953
    %6806 = vmatprep.mubr.f32.mxu0 %v2708
    %6807 = vmatmul.mubr.f32.gmra.mrb[0].mxu0 %v2707
    %v6808 = vpop.f32.mrb[0].mxu0
    %v6809 = vadd.f32 %v6738, %v6808
    %v6810 = vpop.f32.mrb[0].mxu0
    %v6811 = vadd.f32 %v6740, %v6810
    %6812 = vdwg.mxu0
    %6813 = vmatprep.subr.mxu0 %v3962
    %6814 = vmatpush1.msra.mxu0 %v3961
    %6815 = vmatprep.subr.mxu0 %v3970
    %6816 = vmatpush1.msra.mxu0 %v3969
    %6817 = vmatprep.subr.mxu0 %v3978
    %6818 = vmatpush1.msra.mxu0 %v3977
    %6819 = vmatprep.subr.mxu0 %v3986
    %6820 = vmatpush1.msra.mxu0 %v3985
    %6821 = vmatprep.subr.mxu0 %v3994
    %6822 = vmatpush1.msra.mxu0 %v3993
    %6823 = vmatprep.subr.mxu0 %v4002
    %6824 = vmatpush1.msra.mxu0 %v4001
    %6825 = vmatprep.subr.mxu0 %v4010
    %6826 = vmatpush1.msra.mxu0 %v4009
    %6827 = vmatprep.subr.mxu0 %v4018
    %6828 = vmatpush1.msra.mxu0 %v4017
    %6829 = vmatprep.subr.mxu0 %v4026
    %6830 = vmatpush1.msra.mxu0 %v4025
    %6831 = vmatprep.subr.mxu0 %v4034
    %6832 = vmatpush1.msra.mxu0 %v4033
    %6833 = vmatprep.subr.mxu0 %v4042
    %6834 = vmatpush1.msra.mxu0 %v4041
    %6835 = vmatprep.subr.mxu0 %v4050
    %6836 = vmatpush1.msra.mxu0 %v4049
    %6837 = vmatprep.subr.mxu0 %v4058
    %6838 = vmatpush1.msra.mxu0 %v4057
    %6839 = vmatprep.subr.mxu0 %v4066
    %6840 = vmatpush1.msra.mxu0 %v4065
    %6841 = vmatprep.subr.mxu0 %v4074
    %6842 = vmatpush1.msra.mxu0 %v4073
    %6843 = vmatprep.subr.mxu0 %v4082
    %6844 = vmatpush1.msra.mxu0 %v4081
    %6845 = vmatprep.subr.mxu0 %v4090
    %6846 = vmatpush1.msra.mxu0 %v4089
    %6847 = vmatprep.subr.mxu0 %v4098
    %6848 = vmatpush1.msra.mxu0 %v4097
    %6849 = vmatprep.subr.mxu0 %v4106
    %6850 = vmatpush1.msra.mxu0 %v4105
    %6851 = vmatprep.subr.mxu0 %v4114
    %6852 = vmatpush1.msra.mxu0 %v4113
    %6853 = vmatprep.subr.mxu0 %v4122
    %6854 = vmatpush1.msra.mxu0 %v4121
    %6855 = vmatprep.subr.mxu0 %v4130
    %6856 = vmatpush1.msra.mxu0 %v4129
    %6857 = vmatprep.subr.mxu0 %v4138
    %6858 = vmatpush1.msra.mxu0 %v4137
    %6859 = vmatprep.subr.mxu0 %v4146
    %6860 = vmatpush1.msra.mxu0 %v4145
    %6861 = vmatprep.subr.mxu0 %v4154
    %6862 = vmatpush1.msra.mxu0 %v4153
    %6863 = vmatprep.subr.mxu0 %v4162
    %6864 = vmatpush1.msra.mxu0 %v4161
    %6865 = vmatprep.subr.mxu0 %v4170
    %6866 = vmatpush1.msra.mxu0 %v4169
    %6867 = vmatprep.subr.mxu0 %v4178
    %6868 = vmatpush1.msra.mxu0 %v4177
    %6869 = vmatprep.subr.mxu0 %v4186
    %6870 = vmatpush1.msra.mxu0 %v4185
    %6871 = vmatprep.subr.mxu0 %v4194
    %6872 = vmatpush1.msra.mxu0 %v4193
    %6873 = vmatprep.subr.mxu0 %v4202
    %6874 = vmatpush1.msra.mxu0 %v4201
    %6875 = vmatprep.subr.mxu0 %v4210
    %6876 = vmatpush1.msra.mxu0 %v4209
    %6877 = vmatprep.mubr.f32.mxu0 %v2710
    %6878 = vmatmul.mubr.f32.gmra.mrb[0].mxu0 %v2709
    %v6879 = vpop.f32.mrb[0].mxu0
    %v6880 = vadd.f32 %v6809, %v6879
    %v6881 = vpop.f32.mrb[0].mxu0
    %v6882 = vadd.f32 %v6811, %v6881
    %6883 = vdwg.mxu0
    %6884 = vmatprep.subr.mxu0 %v4218
    %6885 = vmatpush1.msra.mxu0 %v4217
    %6886 = vmatprep.subr.mxu0 %v4226
    %6887 = vmatpush1.msra.mxu0 %v4225
    %6888 = vmatprep.subr.mxu0 %v4234
    %6889 = vmatpush1.msra.mxu0 %v4233
    %6890 = vmatprep.subr.mxu0 %v4242
    %6891 = vmatpush1.msra.mxu0 %v4241
    %6892 = vmatprep.subr.mxu0 %v4250
    %6893 = vmatpush1.msra.mxu0 %v4249
    %6894 = vmatprep.subr.mxu0 %v4258
    %6895 = vmatpush1.msra.mxu0 %v4257
    %6896 = vmatprep.subr.mxu0 %v4266
    %6897 = vmatpush1.msra.mxu0 %v4265
    %6898 = vmatprep.subr.mxu0 %v4274
    %6899 = vmatpush1.msra.mxu0 %v4273
    %6900 = vmatprep.subr.mxu0 %v4282
    %6901 = vmatpush1.msra.mxu0 %v4281
    %6902 = vmatprep.subr.mxu0 %v4290
    %6903 = vmatpush1.msra.mxu0 %v4289
    %6904 = vmatprep.subr.mxu0 %v4298
    %6905 = vmatpush1.msra.mxu0 %v4297
    %6906 = vmatprep.subr.mxu0 %v4306
    %6907 = vmatpush1.msra.mxu0 %v4305
    %6908 = vmatprep.subr.mxu0 %v4314
    %6909 = vmatpush1.msra.mxu0 %v4313
    %6910 = vmatprep.subr.mxu0 %v4322
    %6911 = vmatpush1.msra.mxu0 %v4321
    %6912 = vmatprep.subr.mxu0 %v4330
    %6913 = vmatpush1.msra.mxu0 %v4329
    %6914 = vmatprep.subr.mxu0 %v4338
    %6915 = vmatpush1.msra.mxu0 %v4337
    %6916 = vmatprep.subr.mxu0 %v4346
    %6917 = vmatpush1.msra.mxu0 %v4345
    %6918 = vmatprep.subr.mxu0 %v4354
    %6919 = vmatpush1.msra.mxu0 %v4353
    %6920 = vmatprep.subr.mxu0 %v4362
    %6921 = vmatpush1.msra.mxu0 %v4361
    %6922 = vmatprep.subr.mxu0 %v4370
    %6923 = vmatpush1.msra.mxu0 %v4369
    %6924 = vmatprep.subr.mxu0 %v4378
    %6925 = vmatpush1.msra.mxu0 %v4377
    %6926 = vmatprep.subr.mxu0 %v4386
    %6927 = vmatpush1.msra.mxu0 %v4385
    %6928 = vmatprep.subr.mxu0 %v4394
    %6929 = vmatpush1.msra.mxu0 %v4393
    %6930 = vmatprep.subr.mxu0 %v4402
    %6931 = vmatpush1.msra.mxu0 %v4401
    %6932 = vmatprep.subr.mxu0 %v4410
    %6933 = vmatpush1.msra.mxu0 %v4409
    %6934 = vmatprep.subr.mxu0 %v4418
    %6935 = vmatpush1.msra.mxu0 %v4417
    %6936 = vmatprep.subr.mxu0 %v4426
    %6937 = vmatpush1.msra.mxu0 %v4425
    %6938 = vmatprep.subr.mxu0 %v4434
    %6939 = vmatpush1.msra.mxu0 %v4433
    %6940 = vmatprep.subr.mxu0 %v4442
    %6941 = vmatpush1.msra.mxu0 %v4441
    %6942 = vmatprep.subr.mxu0 %v4450
    %6943 = vmatpush1.msra.mxu0 %v4449
    %6944 = vmatprep.subr.mxu0 %v4458
    %6945 = vmatpush1.msra.mxu0 %v4457
    %6946 = vmatprep.subr.mxu0 %v4466
    %6947 = vmatpush1.msra.mxu0 %v4465
    %6948 = vmatprep.mubr.f32.mxu0 %v2712
    %6949 = vmatmul.mubr.f32.gmra.mrb[0].mxu0 %v2711
    %v6950 = vpop.f32.mrb[0].mxu0
    %v6951 = vadd.f32 %v6880, %v6950
    %v6952 = vpop.f32.mrb[0].mxu0
    %v6953 = vadd.f32 %v6882, %v6952
    %6954 = vdwg.mxu0
    %6955 = vmatprep.subr.mxu0 %v4474
    %6956 = vmatpush1.msra.mxu0 %v4473
    %6957 = vmatprep.subr.mxu0 %v4482
    %6958 = vmatpush1.msra.mxu0 %v4481
    %6959 = vmatprep.subr.mxu0 %v4490
    %6960 = vmatpush1.msra.mxu0 %v4489
    %6961 = vmatprep.subr.mxu0 %v4498
    %6962 = vmatpush1.msra.mxu0 %v4497
    %6963 = vmatprep.subr.mxu0 %v4506
    %6964 = vmatpush1.msra.mxu0 %v4505
    %6965 = vmatprep.subr.mxu0 %v4514
    %6966 = vmatpush1.msra.mxu0 %v4513
    %6967 = vmatprep.subr.mxu0 %v4522
    %6968 = vmatpush1.msra.mxu0 %v4521
    %6969 = vmatprep.subr.mxu0 %v4530
    %6970 = vmatpush1.msra.mxu0 %v4529
    %6971 = vmatprep.subr.mxu0 %v4538
    %6972 = vmatpush1.msra.mxu0 %v4537
    %6973 = vmatprep.subr.mxu0 %v4546
    %6974 = vmatpush1.msra.mxu0 %v4545
    %6975 = vmatprep.subr.mxu0 %v4554
    %6976 = vmatpush1.msra.mxu0 %v4553
    %6977 = vmatprep.subr.mxu0 %v4562
    %6978 = vmatpush1.msra.mxu0 %v4561
    %6979 = vmatprep.subr.mxu0 %v4570
    %6980 = vmatpush1.msra.mxu0 %v4569
    %6981 = vmatprep.subr.mxu0 %v4578
    %6982 = vmatpush1.msra.mxu0 %v4577
    %6983 = vmatprep.subr.mxu0 %v4586
    %6984 = vmatpush1.msra.mxu0 %v4585
    %6985 = vmatprep.subr.mxu0 %v4594
    %6986 = vmatpush1.msra.mxu0 %v4593
    %6987 = vmatprep.subr.mxu0 %v4602
    %6988 = vmatpush1.msra.mxu0 %v4601
    %6989 = vmatprep.subr.mxu0 %v4610
    %6990 = vmatpush1.msra.mxu0 %v4609
    %6991 = vmatprep.subr.mxu0 %v4618
    %6992 = vmatpush1.msra.mxu0 %v4617
    %6993 = vmatprep.subr.mxu0 %v4626
    %6994 = vmatpush1.msra.mxu0 %v4625
    %6995 = vmatprep.subr.mxu0 %v4634
    %6996 = vmatpush1.msra.mxu0 %v4633
    %6997 = vmatprep.subr.mxu0 %v4642
    %6998 = vmatpush1.msra.mxu0 %v4641
    %6999 = vmatprep.subr.mxu0 %v4650
    %7000 = vmatpush1.msra.mxu0 %v4649
    %7001 = vmatprep.subr.mxu0 %v4658
    %7002 = vmatpush1.msra.mxu0 %v4657
    %7003 = vmatprep.subr.mxu0 %v4666
    %7004 = vmatpush1.msra.mxu0 %v4665
    %7005 = vmatprep.subr.mxu0 %v4674
    %7006 = vmatpush1.msra.mxu0 %v4673
    %7007 = vmatprep.subr.mxu0 %v4682
    %7008 = vmatpush1.msra.mxu0 %v4681
    %7009 = vmatprep.subr.mxu0 %v4690
    %7010 = vmatpush1.msra.mxu0 %v4689
    %7011 = vmatprep.subr.mxu0 %v4698
    %7012 = vmatpush1.msra.mxu0 %v4697
    %7013 = vmatprep.subr.mxu0 %v4706
    %7014 = vmatpush1.msra.mxu0 %v4705
    %7015 = vmatprep.subr.mxu0 %v4714
    %7016 = vmatpush1.msra.mxu0 %v4713
    %7017 = vmatprep.subr.mxu0 %v4722
    %7018 = vmatpush1.msra.mxu0 %v4721
    %7019 = vmatprep.mubr.f32.mxu0 %v2714
    %7020 = vmatmul.mubr.f32.gmra.mrb[0].mxu0 %v2713
    %v7021 = vpop.f32.mrb[0].mxu0
    %v7022 = vadd.f32 %v6951, %v7021
    %v7023 = vpop.f32.mrb[0].mxu0
    %v7024 = vadd.f32 %v6953, %v7023
    %7025 = vdwg.mxu0
    %7026 = vmatprep.subr.mxu0 %v4730
    %7027 = vmatpush1.msra.mxu0 %v4729
    %7028 = vmatprep.subr.mxu0 %v4738
    %7029 = vmatpush1.msra.mxu0 %v4737
    %7030 = vmatprep.subr.mxu0 %v4746
    %7031 = vmatpush1.msra.mxu0 %v4745
    %7032 = vmatprep.subr.mxu0 %v4754
    %7033 = vmatpush1.msra.mxu0 %v4753
    %7034 = vmatprep.subr.mxu0 %v4762
    %7035 = vmatpush1.msra.mxu0 %v4761
    %7036 = vmatprep.subr.mxu0 %v4770
    %7037 = vmatpush1.msra.mxu0 %v4769
    %7038 = vmatprep.subr.mxu0 %v4778
    %7039 = vmatpush1.msra.mxu0 %v4777
    %7040 = vmatprep.subr.mxu0 %v4786
    %7041 = vmatpush1.msra.mxu0 %v4785
    %7042 = vmatprep.subr.mxu0 %v4794
    %7043 = vmatpush1.msra.mxu0 %v4793
    %7044 = vmatprep.subr.mxu0 %v4802
    %7045 = vmatpush1.msra.mxu0 %v4801
    %7046 = vmatprep.subr.mxu0 %v4810
    %7047 = vmatpush1.msra.mxu0 %v4809
    %7048 = vmatprep.subr.mxu0 %v4818
    %7049 = vmatpush1.msra.mxu0 %v4817
    %7050 = vmatprep.subr.mxu0 %v4826
    %7051 = vmatpush1.msra.mxu0 %v4825
    %7052 = vmatprep.subr.mxu0 %v4834
    %7053 = vmatpush1.msra.mxu0 %v4833
    %7054 = vmatprep.subr.mxu0 %v4842
    %7055 = vmatpush1.msra.mxu0 %v4841
    %7056 = vmatprep.subr.mxu0 %v4850
    %7057 = vmatpush1.msra.mxu0 %v4849
    %7058 = vmatprep.subr.mxu0 %v4858
    %7059 = vmatpush1.msra.mxu0 %v4857
    %7060 = vmatprep.subr.mxu0 %v4866
    %7061 = vmatpush1.msra.mxu0 %v4865
    %7062 = vmatprep.subr.mxu0 %v4874
    %7063 = vmatpush1.msra.mxu0 %v4873
    %7064 = vmatprep.subr.mxu0 %v4882
    %7065 = vmatpush1.msra.mxu0 %v4881
    %7066 = vmatprep.subr.mxu0 %v4890
    %7067 = vmatpush1.msra.mxu0 %v4889
    %7068 = vmatprep.subr.mxu0 %v4898
    %7069 = vmatpush1.msra.mxu0 %v4897
    %7070 = vmatprep.subr.mxu0 %v4906
    %7071 = vmatpush1.msra.mxu0 %v4905
    %7072 = vmatprep.subr.mxu0 %v4914
    %7073 = vmatpush1.msra.mxu0 %v4913
    %7074 = vmatprep.subr.mxu0 %v4922
    %7075 = vmatpush1.msra.mxu0 %v4921
    %7076 = vmatprep.subr.mxu0 %v4930
    %7077 = vmatpush1.msra.mxu0 %v4929
    %7078 = vmatprep.subr.mxu0 %v4938
    %7079 = vmatpush1.msra.mxu0 %v4937
    %7080 = vmatprep.subr.mxu0 %v4946
    %7081 = vmatpush1.msra.mxu0 %v4945
    %7082 = vmatprep.subr.mxu0 %v4954
    %7083 = vmatpush1.msra.mxu0 %v4953
    %7084 = vmatprep.subr.mxu0 %v4962
    %7085 = vmatpush1.msra.mxu0 %v4961
    %7086 = vmatprep.subr.mxu0 %v4970
    %7087 = vmatpush1.msra.mxu0 %v4969
    %7088 = vmatprep.subr.mxu0 %v4978
    %7089 = vmatpush1.msra.mxu0 %v4977
    %7090 = vmatprep.mubr.f32.mxu0 %v2716
    %7091 = vmatmul.mubr.f32.gmra.mrb[0].mxu0 %v2715
    %v7092 = vpop.f32.mrb[0].mxu0
    %v7093 = vadd.f32 %v7022, %v7092
    %v7094 = vpop.f32.mrb[0].mxu0
    %v7095 = vadd.f32 %v7024, %v7094
    %7096 = vdwg.mxu0
    %7097 = vmatprep.subr.mxu0 %v4986
    %7098 = vmatpush1.msra.mxu0 %v4985
    %7099 = vmatprep.subr.mxu0 %v4994
    %7100 = vmatpush1.msra.mxu0 %v4993
    %7101 = vmatprep.subr.mxu0 %v5002
    %7102 = vmatpush1.msra.mxu0 %v5001
    %7103 = vmatprep.subr.mxu0 %v5010
    %7104 = vmatpush1.msra.mxu0 %v5009
    %7105 = vmatprep.subr.mxu0 %v5018
    %7106 = vmatpush1.msra.mxu0 %v5017
    %7107 = vmatprep.subr.mxu0 %v5026
    %7108 = vmatpush1.msra.mxu0 %v5025
    %7109 = vmatprep.subr.mxu0 %v5034
    %7110 = vmatpush1.msra.mxu0 %v5033
    %7111 = vmatprep.subr.mxu0 %v5042
    %7112 = vmatpush1.msra.mxu0 %v5041
    %7113 = vmatprep.subr.mxu0 %v5050
    %7114 = vmatpush1.msra.mxu0 %v5049
    %7115 = vmatprep.subr.mxu0 %v5058
    %7116 = vmatpush1.msra.mxu0 %v5057
    %7117 = vmatprep.subr.mxu0 %v5066
    %7118 = vmatpush1.msra.mxu0 %v5065
    %7119 = vmatprep.subr.mxu0 %v5074
    %7120 = vmatpush1.msra.mxu0 %v5073
    %7121 = vmatprep.subr.mxu0 %v5082
    %7122 = vmatpush1.msra.mxu0 %v5081
    %7123 = vmatprep.subr.mxu0 %v5090
    %7124 = vmatpush1.msra.mxu0 %v5089
    %7125 = vmatprep.subr.mxu0 %v5098
    %7126 = vmatpush1.msra.mxu0 %v5097
    %7127 = vmatprep.subr.mxu0 %v5106
    %7128 = vmatpush1.msra.mxu0 %v5105
    %7129 = vmatprep.subr.mxu0 %v5114
    %7130 = vmatpush1.msra.mxu0 %v5113
    %7131 = vmatprep.subr.mxu0 %v5122
    %7132 = vmatpush1.msra.mxu0 %v5121
    %7133 = vmatprep.subr.mxu0 %v5130
    %7134 = vmatpush1.msra.mxu0 %v5129
    %7135 = vmatprep.subr.mxu0 %v5138
    %7136 = vmatpush1.msra.mxu0 %v5137
    %7137 = vmatprep.subr.mxu0 %v5146
    %7138 = vmatpush1.msra.mxu0 %v5145
    %7139 = vmatprep.subr.mxu0 %v5154
    %7140 = vmatpush1.msra.mxu0 %v5153
    %7141 = vmatprep.subr.mxu0 %v5162
    %7142 = vmatpush1.msra.mxu0 %v5161
    %7143 = vmatprep.subr.mxu0 %v5170
    %7144 = vmatpush1.msra.mxu0 %v5169
    %7145 = vmatprep.subr.mxu0 %v5178
    %7146 = vmatpush1.msra.mxu0 %v5177
    %7147 = vmatprep.subr.mxu0 %v5186
    %7148 = vmatpush1.msra.mxu0 %v5185
    %7149 = vmatprep.subr.mxu0 %v5194
    %7150 = vmatpush1.msra.mxu0 %v5193
    %7151 = vmatprep.subr.mxu0 %v5202
    %7152 = vmatpush1.msra.mxu0 %v5201
    %7153 = vmatprep.subr.mxu0 %v5210
    %7154 = vmatpush1.msra.mxu0 %v5209
    %7155 = vmatprep.subr.mxu0 %v5218
    %7156 = vmatpush1.msra.mxu0 %v5217
    %7157 = vmatprep.subr.mxu0 %v5226
    %7158 = vmatpush1.msra.mxu0 %v5225
    %7159 = vmatprep.subr.mxu0 %v5234
    %7160 = vmatpush1.msra.mxu0 %v5233
    %7161 = vmatprep.mubr.f32.mxu0 %v2718
    %7162 = vmatmul.mubr.f32.gmra.mrb[0].mxu0 %v2717
    %v7163 = vpop.f32.mrb[0].mxu0
    %v7164 = vadd.f32 %v7093, %v7163
    %v7165 = vpop.f32.mrb[0].mxu0
    %v7166 = vadd.f32 %v7095, %v7165
    %7167 = vdwg.mxu0
    %7168 = vmatprep.subr.mxu0 %v5242
    %7169 = vmatpush1.msra.mxu0 %v5241
    %7170 = vmatprep.subr.mxu0 %v5250
    %7171 = vmatpush1.msra.mxu0 %v5249
    %7172 = vmatprep.subr.mxu0 %v5258
    %7173 = vmatpush1.msra.mxu0 %v5257
    %7174 = vmatprep.subr.mxu0 %v5266
    %7175 = vmatpush1.msra.mxu0 %v5265
    %7176 = vmatprep.subr.mxu0 %v5274
    %7177 = vmatpush1.msra.mxu0 %v5273
    %7178 = vmatprep.subr.mxu0 %v5282
    %7179 = vmatpush1.msra.mxu0 %v5281
    %7180 = vmatprep.subr.mxu0 %v5290
    %7181 = vmatpush1.msra.mxu0 %v5289
    %7182 = vmatprep.subr.mxu0 %v5298
    %7183 = vmatpush1.msra.mxu0 %v5297
    %7184 = vmatprep.subr.mxu0 %v5306
    %7185 = vmatpush1.msra.mxu0 %v5305
    %7186 = vmatprep.subr.mxu0 %v5314
    %7187 = vmatpush1.msra.mxu0 %v5313
    %7188 = vmatprep.subr.mxu0 %v5322
    %7189 = vmatpush1.msra.mxu0 %v5321
    %7190 = vmatprep.subr.mxu0 %v5330
    %7191 = vmatpush1.msra.mxu0 %v5329
    %7192 = vmatprep.subr.mxu0 %v5338
    %7193 = vmatpush1.msra.mxu0 %v5337
    %7194 = vmatprep.subr.mxu0 %v5346
    %7195 = vmatpush1.msra.mxu0 %v5345
    %7196 = vmatprep.subr.mxu0 %v5354
    %7197 = vmatpush1.msra.mxu0 %v5353
    %7198 = vmatprep.subr.mxu0 %v5362
    %7199 = vmatpush1.msra.mxu0 %v5361
    %7200 = vmatprep.subr.mxu0 %v5370
    %7201 = vmatpush1.msra.mxu0 %v5369
    %7202 = vmatprep.subr.mxu0 %v5378
    %7203 = vmatpush1.msra.mxu0 %v5377
    %7204 = vmatprep.subr.mxu0 %v5386
    %7205 = vmatpush1.msra.mxu0 %v5385
    %7206 = vmatprep.subr.mxu0 %v5394
    %7207 = vmatpush1.msra.mxu0 %v5393
    %7208 = vmatprep.subr.mxu0 %v5402
    %7209 = vmatpush1.msra.mxu0 %v5401
    %7210 = vmatprep.subr.mxu0 %v5410
    %7211 = vmatpush1.msra.mxu0 %v5409
    %7212 = vmatprep.subr.mxu0 %v5418
    %7213 = vmatpush1.msra.mxu0 %v5417
    %7214 = vmatprep.subr.mxu0 %v5426
    %7215 = vmatpush1.msra.mxu0 %v5425
    %7216 = vmatprep.subr.mxu0 %v5434
    %7217 = vmatpush1.msra.mxu0 %v5433
    %7218 = vmatprep.subr.mxu0 %v5442
    %7219 = vmatpush1.msra.mxu0 %v5441
    %7220 = vmatprep.subr.mxu0 %v5450
    %7221 = vmatpush1.msra.mxu0 %v5449
    %7222 = vmatprep.subr.mxu0 %v5458
    %7223 = vmatpush1.msra.mxu0 %v5457
    %7224 = vmatprep.subr.mxu0 %v5466
    %7225 = vmatpush1.msra.mxu0 %v5465
    %7226 = vmatprep.subr.mxu0 %v5474
    %7227 = vmatpush1.msra.mxu0 %v5473
    %7228 = vmatprep.subr.mxu0 %v5482
    %7229 = vmatpush1.msra.mxu0 %v5481
    %7230 = vmatprep.subr.mxu0 %v5490
    %7231 = vmatpush1.msra.mxu0 %v5489
    %7232 = vmatprep.mubr.f32.mxu0 %v2720
    %7233 = vmatmul.mubr.f32.gmra.mrb[0].mxu0 %v2719
    %v7234 = vpop.f32.mrb[0].mxu0
    %v7235 = vadd.f32 %v7164, %v7234
    %v7236 = vpop.f32.mrb[0].mxu0
    %v7237 = vadd.f32 %v7166, %v7236
    %7238 = vdwg.mxu0
    %7239 = vmatprep.subr.mxu0 %v3452
    %7240 = vmatpush1.msra.mxu0 %v3451
    %7241 = vmatprep.subr.mxu0 %v3460
    %7242 = vmatpush1.msra.mxu0 %v3459
    %7243 = vmatprep.subr.mxu0 %v3468
    %7244 = vmatpush1.msra.mxu0 %v3467
    %7245 = vmatprep.subr.mxu0 %v3476
    %7246 = vmatpush1.msra.mxu0 %v3475
    %7247 = vmatprep.subr.mxu0 %v3484
    %7248 = vmatpush1.msra.mxu0 %v3483
    %7249 = vmatprep.subr.mxu0 %v3492
    %7250 = vmatpush1.msra.mxu0 %v3491
    %7251 = vmatprep.subr.mxu0 %v3500
    %7252 = vmatpush1.msra.mxu0 %v3499
    %7253 = vmatprep.subr.mxu0 %v3508
    %7254 = vmatpush1.msra.mxu0 %v3507
    %7255 = vmatprep.subr.mxu0 %v3516
    %7256 = vmatpush1.msra.mxu0 %v3515
    %7257 = vmatprep.subr.mxu0 %v3524
    %7258 = vmatpush1.msra.mxu0 %v3523
    %7259 = vmatprep.subr.mxu0 %v3532
    %7260 = vmatpush1.msra.mxu0 %v3531
    %7261 = vmatprep.subr.mxu0 %v3540
    %7262 = vmatpush1.msra.mxu0 %v3539
    %7263 = vmatprep.subr.mxu0 %v3548
    %7264 = vmatpush1.msra.mxu0 %v3547
    %7265 = vmatprep.subr.mxu0 %v3556
    %7266 = vmatpush1.msra.mxu0 %v3555
    %7267 = vmatprep.subr.mxu0 %v3564
    %7268 = vmatpush1.msra.mxu0 %v3563
    %7269 = vmatprep.subr.mxu0 %v3572
    %7270 = vmatpush1.msra.mxu0 %v3571
    %7271 = vmatprep.subr.mxu0 %v3580
    %7272 = vmatpush1.msra.mxu0 %v3579
    %7273 = vmatprep.subr.mxu0 %v3588
    %7274 = vmatpush1.msra.mxu0 %v3587
    %7275 = vmatprep.subr.mxu0 %v3596
    %7276 = vmatpush1.msra.mxu0 %v3595
    %7277 = vmatprep.subr.mxu0 %v3604
    %7278 = vmatpush1.msra.mxu0 %v3603
    %7279 = vmatprep.subr.mxu0 %v3612
    %7280 = vmatpush1.msra.mxu0 %v3611
    %7281 = vmatprep.subr.mxu0 %v3620
    %7282 = vmatpush1.msra.mxu0 %v3619
    %7283 = vmatprep.subr.mxu0 %v3628
    %7284 = vmatpush1.msra.mxu0 %v3627
    %7285 = vmatprep.subr.mxu0 %v3636
    %7286 = vmatpush1.msra.mxu0 %v3635
    %7287 = vmatprep.subr.mxu0 %v3644
    %7288 = vmatpush1.msra.mxu0 %v3643
    %7289 = vmatprep.subr.mxu0 %v3652
    %7290 = vmatpush1.msra.mxu0 %v3651
    %7291 = vmatprep.subr.mxu0 %v3660
    %7292 = vmatpush1.msra.mxu0 %v3659
    %7293 = vmatprep.subr.mxu0 %v3668
    %7294 = vmatpush1.msra.mxu0 %v3667
    %7295 = vmatprep.subr.mxu0 %v3676
    %7296 = vmatpush1.msra.mxu0 %v3675
    %7297 = vmatprep.subr.mxu0 %v3684
    %7298 = vmatpush1.msra.mxu0 %v3683
    %7299 = vmatprep.subr.mxu0 %v3692
    %7300 = vmatpush1.msra.mxu0 %v3691
    %7301 = vmatprep.subr.mxu0 %v3700
    %7302 = vmatpush1.msra.mxu0 %v3699
    %7303 = vmatprep.mubr.f32.mxu0 %v2706
    %7304 = vmatmul.mubr.f32.gmra.mrb[0].mxu0 %v2705
    %v7305 = vpop.f32.mrb[0].mxu0
    %v7306 = vadd.f32 %v5522, %v7305
    %v7307 = vpop.f32.mrb[0].mxu0
    %v7308 = vadd.f32 %v5526, %v7307
    %7309 = vdwg.mxu0
    %7310 = vmatprep.subr.mxu0 %v3708
    %7311 = vmatpush1.msra.mxu0 %v3707
    %7312 = vmatprep.subr.mxu0 %v3716
    %7313 = vmatpush1.msra.mxu0 %v3715
    %7314 = vmatprep.subr.mxu0 %v3724
    %7315 = vmatpush1.msra.mxu0 %v3723
    %7316 = vmatprep.subr.mxu0 %v3732
    %7317 = vmatpush1.msra.mxu0 %v3731
    %7318 = vmatprep.subr.mxu0 %v3740
    %7319 = vmatpush1.msra.mxu0 %v3739
    %7320 = vmatprep.subr.mxu0 %v3748
    %7321 = vmatpush1.msra.mxu0 %v3747
    %7322 = vmatprep.subr.mxu0 %v3756
    %7323 = vmatpush1.msra.mxu0 %v3755
    %7324 = vmatprep.subr.mxu0 %v3764
    %7325 = vmatpush1.msra.mxu0 %v3763
    %7326 = vmatprep.subr.mxu0 %v3772
    %7327 = vmatpush1.msra.mxu0 %v3771
    %7328 = vmatprep.subr.mxu0 %v3780
    %7329 = vmatpush1.msra.mxu0 %v3779
    %7330 = vmatprep.subr.mxu0 %v3788
    %7331 = vmatpush1.msra.mxu0 %v3787
    %7332 = vmatprep.subr.mxu0 %v3796
    %7333 = vmatpush1.msra.mxu0 %v3795
    %7334 = vmatprep.subr.mxu0 %v3804
    %7335 = vmatpush1.msra.mxu0 %v3803
    %7336 = vmatprep.subr.mxu0 %v3812
    %7337 = vmatpush1.msra.mxu0 %v3811
    %7338 = vmatprep.subr.mxu0 %v3820
    %7339 = vmatpush1.msra.mxu0 %v3819
    %7340 = vmatprep.subr.mxu0 %v3828
    %7341 = vmatpush1.msra.mxu0 %v3827
    %7342 = vmatprep.subr.mxu0 %v3836
    %7343 = vmatpush1.msra.mxu0 %v3835
    %7344 = vmatprep.subr.mxu0 %v3844
    %7345 = vmatpush1.msra.mxu0 %v3843
    %7346 = vmatprep.subr.mxu0 %v3852
    %7347 = vmatpush1.msra.mxu0 %v3851
    %7348 = vmatprep.subr.mxu0 %v3860
    %7349 = vmatpush1.msra.mxu0 %v3859
    %7350 = vmatprep.subr.mxu0 %v3868
    %7351 = vmatpush1.msra.mxu0 %v3867
    %7352 = vmatprep.subr.mxu0 %v3876
    %7353 = vmatpush1.msra.mxu0 %v3875
    %7354 = vmatprep.subr.mxu0 %v3884
    %7355 = vmatpush1.msra.mxu0 %v3883
    %7356 = vmatprep.subr.mxu0 %v3892
    %7357 = vmatpush1.msra.mxu0 %v3891
    %7358 = vmatprep.subr.mxu0 %v3900
    %7359 = vmatpush1.msra.mxu0 %v3899
    %7360 = vmatprep.subr.mxu0 %v3908
    %7361 = vmatpush1.msra.mxu0 %v3907
    %7362 = vmatprep.subr.mxu0 %v3916
    %7363 = vmatpush1.msra.mxu0 %v3915
    %7364 = vmatprep.subr.mxu0 %v3924
    %7365 = vmatpush1.msra.mxu0 %v3923
    %7366 = vmatprep.subr.mxu0 %v3932
    %7367 = vmatpush1.msra.mxu0 %v3931
    %7368 = vmatprep.subr.mxu0 %v3940
    %7369 = vmatpush1.msra.mxu0 %v3939
    %7370 = vmatprep.subr.mxu0 %v3948
    %7371 = vmatpush1.msra.mxu0 %v3947
    %7372 = vmatprep.subr.mxu0 %v3956
    %7373 = vmatpush1.msra.mxu0 %v3955
    %7374 = vmatprep.mubr.f32.mxu0 %v2708
    %7375 = vmatmul.mubr.f32.gmra.mrb[0].mxu0 %v2707
    %v7376 = vpop.f32.mrb[0].mxu0
    %v7377 = vadd.f32 %v7306, %v7376
    %v7378 = vpop.f32.mrb[0].mxu0
    %v7379 = vadd.f32 %v7308, %v7378
    %7380 = vdwg.mxu0
    %7381 = vmatprep.subr.mxu0 %v3964
    %7382 = vmatpush1.msra.mxu0 %v3963
    %7383 = vmatprep.subr.mxu0 %v3972
    %7384 = vmatpush1.msra.mxu0 %v3971
    %7385 = vmatprep.subr.mxu0 %v3980
    %7386 = vmatpush1.msra.mxu0 %v3979
    %7387 = vmatprep.subr.mxu0 %v3988
    %7388 = vmatpush1.msra.mxu0 %v3987
    %7389 = vmatprep.subr.mxu0 %v3996
    %7390 = vmatpush1.msra.mxu0 %v3995
    %7391 = vmatprep.subr.mxu0 %v4004
    %7392 = vmatpush1.msra.mxu0 %v4003
    %7393 = vmatprep.subr.mxu0 %v4012
    %7394 = vmatpush1.msra.mxu0 %v4011
    %7395 = vmatprep.subr.mxu0 %v4020
    %7396 = vmatpush1.msra.mxu0 %v4019
    %7397 = vmatprep.subr.mxu0 %v4028
    %7398 = vmatpush1.msra.mxu0 %v4027
    %7399 = vmatprep.subr.mxu0 %v4036
    %7400 = vmatpush1.msra.mxu0 %v4035
    %7401 = vmatprep.subr.mxu0 %v4044
    %7402 = vmatpush1.msra.mxu0 %v4043
    %7403 = vmatprep.subr.mxu0 %v4052
    %7404 = vmatpush1.msra.mxu0 %v4051
    %7405 = vmatprep.subr.mxu0 %v4060
    %7406 = vmatpush1.msra.mxu0 %v4059
    %7407 = vmatprep.subr.mxu0 %v4068
    %7408 = vmatpush1.msra.mxu0 %v4067
    %7409 = vmatprep.subr.mxu0 %v4076
    %7410 = vmatpush1.msra.mxu0 %v4075
    %7411 = vmatprep.subr.mxu0 %v4084
    %7412 = vmatpush1.msra.mxu0 %v4083
    %7413 = vmatprep.subr.mxu0 %v4092
    %7414 = vmatpush1.msra.mxu0 %v4091
    %7415 = vmatprep.subr.mxu0 %v4100
    %7416 = vmatpush1.msra.mxu0 %v4099
    %7417 = vmatprep.subr.mxu0 %v4108
    %7418 = vmatpush1.msra.mxu0 %v4107
    %7419 = vmatprep.subr.mxu0 %v4116
    %7420 = vmatpush1.msra.mxu0 %v4115
    %7421 = vmatprep.subr.mxu0 %v4124
    %7422 = vmatpush1.msra.mxu0 %v4123
    %7423 = vmatprep.subr.mxu0 %v4132
    %7424 = vmatpush1.msra.mxu0 %v4131
    %7425 = vmatprep.subr.mxu0 %v4140
    %7426 = vmatpush1.msra.mxu0 %v4139
    %7427 = vmatprep.subr.mxu0 %v4148
    %7428 = vmatpush1.msra.mxu0 %v4147
    %7429 = vmatprep.subr.mxu0 %v4156
    %7430 = vmatpush1.msra.mxu0 %v4155
    %7431 = vmatprep.subr.mxu0 %v4164
    %7432 = vmatpush1.msra.mxu0 %v4163
    %7433 = vmatprep.subr.mxu0 %v4172
    %7434 = vmatpush1.msra.mxu0 %v4171
    %7435 = vmatprep.subr.mxu0 %v4180
    %7436 = vmatpush1.msra.mxu0 %v4179
    %7437 = vmatprep.subr.mxu0 %v4188
    %7438 = vmatpush1.msra.mxu0 %v4187
    %7439 = vmatprep.subr.mxu0 %v4196
    %7440 = vmatpush1.msra.mxu0 %v4195
    %7441 = vmatprep.subr.mxu0 %v4204
    %7442 = vmatpush1.msra.mxu0 %v4203
    %7443 = vmatprep.subr.mxu0 %v4212
    %7444 = vmatpush1.msra.mxu0 %v4211
    %7445 = vmatprep.mubr.f32.mxu0 %v2710
    %7446 = vmatmul.mubr.f32.gmra.mrb[0].mxu0 %v2709
    %v7447 = vpop.f32.mrb[0].mxu0
    %v7448 = vadd.f32 %v7377, %v7447
    %v7449 = vpop.f32.mrb[0].mxu0
    %v7450 = vadd.f32 %v7379, %v7449
    %7451 = vdwg.mxu0
    %7452 = vmatprep.subr.mxu0 %v4220
    %7453 = vmatpush1.msra.mxu0 %v4219
    %7454 = vmatprep.subr.mxu0 %v4228
    %7455 = vmatpush1.msra.mxu0 %v4227
    %7456 = vmatprep.subr.mxu0 %v4236
    %7457 = vmatpush1.msra.mxu0 %v4235
    %7458 = vmatprep.subr.mxu0 %v4244
    %7459 = vmatpush1.msra.mxu0 %v4243
    %7460 = vmatprep.subr.mxu0 %v4252
    %7461 = vmatpush1.msra.mxu0 %v4251
    %7462 = vmatprep.subr.mxu0 %v4260
    %7463 = vmatpush1.msra.mxu0 %v4259
    %7464 = vmatprep.subr.mxu0 %v4268
    %7465 = vmatpush1.msra.mxu0 %v4267
    %7466 = vmatprep.subr.mxu0 %v4276
    %7467 = vmatpush1.msra.mxu0 %v4275
    %7468 = vmatprep.subr.mxu0 %v4284
    %7469 = vmatpush1.msra.mxu0 %v4283
    %7470 = vmatprep.subr.mxu0 %v4292
    %7471 = vmatpush1.msra.mxu0 %v4291
    %7472 = vmatprep.subr.mxu0 %v4300
    %7473 = vmatpush1.msra.mxu0 %v4299
    %7474 = vmatprep.subr.mxu0 %v4308
    %7475 = vmatpush1.msra.mxu0 %v4307
    %7476 = vmatprep.subr.mxu0 %v4316
    %7477 = vmatpush1.msra.mxu0 %v4315
    %7478 = vmatprep.subr.mxu0 %v4324
    %7479 = vmatpush1.msra.mxu0 %v4323
    %7480 = vmatprep.subr.mxu0 %v4332
    %7481 = vmatpush1.msra.mxu0 %v4331
    %7482 = vmatprep.subr.mxu0 %v4340
    %7483 = vmatpush1.msra.mxu0 %v4339
    %7484 = vmatprep.subr.mxu0 %v4348
    %7485 = vmatpush1.msra.mxu0 %v4347
    %7486 = vmatprep.subr.mxu0 %v4356
    %7487 = vmatpush1.msra.mxu0 %v4355
    %7488 = vmatprep.subr.mxu0 %v4364
    %7489 = vmatpush1.msra.mxu0 %v4363
    %7490 = vmatprep.subr.mxu0 %v4372
    %7491 = vmatpush1.msra.mxu0 %v4371
    %7492 = vmatprep.subr.mxu0 %v4380
    %7493 = vmatpush1.msra.mxu0 %v4379
    %7494 = vmatprep.subr.mxu0 %v4388
    %7495 = vmatpush1.msra.mxu0 %v4387
    %7496 = vmatprep.subr.mxu0 %v4396
    %7497 = vmatpush1.msra.mxu0 %v4395
    %7498 = vmatprep.subr.mxu0 %v4404
    %7499 = vmatpush1.msra.mxu0 %v4403
    %7500 = vmatprep.subr.mxu0 %v4412
    %7501 = vmatpush1.msra.mxu0 %v4411
    %7502 = vmatprep.subr.mxu0 %v4420
    %7503 = vmatpush1.msra.mxu0 %v4419
    %7504 = vmatprep.subr.mxu0 %v4428
    %7505 = vmatpush1.msra.mxu0 %v4427
    %7506 = vmatprep.subr.mxu0 %v4436
    %7507 = vmatpush1.msra.mxu0 %v4435
    %7508 = vmatprep.subr.mxu0 %v4444
    %7509 = vmatpush1.msra.mxu0 %v4443
    %7510 = vmatprep.subr.mxu0 %v4452
    %7511 = vmatpush1.msra.mxu0 %v4451
    %7512 = vmatprep.subr.mxu0 %v4460
    %7513 = vmatpush1.msra.mxu0 %v4459
    %7514 = vmatprep.subr.mxu0 %v4468
    %7515 = vmatpush1.msra.mxu0 %v4467
    %7516 = vmatprep.mubr.f32.mxu0 %v2712
    %7517 = vmatmul.mubr.f32.gmra.mrb[0].mxu0 %v2711
    %v7518 = vpop.f32.mrb[0].mxu0
    %v7519 = vadd.f32 %v7448, %v7518
    %v7520 = vpop.f32.mrb[0].mxu0
    %v7521 = vadd.f32 %v7450, %v7520
    %7522 = vdwg.mxu0
    %7523 = vmatprep.subr.mxu0 %v4476
    %7524 = vmatpush1.msra.mxu0 %v4475
    %7525 = vmatprep.subr.mxu0 %v4484
    %7526 = vmatpush1.msra.mxu0 %v4483
    %7527 = vmatprep.subr.mxu0 %v4492
    %7528 = vmatpush1.msra.mxu0 %v4491
    %7529 = vmatprep.subr.mxu0 %v4500
    %7530 = vmatpush1.msra.mxu0 %v4499
    %7531 = vmatprep.subr.mxu0 %v4508
    %7532 = vmatpush1.msra.mxu0 %v4507
    %7533 = vmatprep.subr.mxu0 %v4516
    %7534 = vmatpush1.msra.mxu0 %v4515
    %7535 = vmatprep.subr.mxu0 %v4524
    %7536 = vmatpush1.msra.mxu0 %v4523
    %7537 = vmatprep.subr.mxu0 %v4532
    %7538 = vmatpush1.msra.mxu0 %v4531
    %7539 = vmatprep.subr.mxu0 %v4540
    %7540 = vmatpush1.msra.mxu0 %v4539
    %7541 = vmatprep.subr.mxu0 %v4548
    %7542 = vmatpush1.msra.mxu0 %v4547
    %7543 = vmatprep.subr.mxu0 %v4556
    %7544 = vmatpush1.msra.mxu0 %v4555
    %7545 = vmatprep.subr.mxu0 %v4564
    %7546 = vmatpush1.msra.mxu0 %v4563
    %7547 = vmatprep.subr.mxu0 %v4572
    %7548 = vmatpush1.msra.mxu0 %v4571
    %7549 = vmatprep.subr.mxu0 %v4580
    %7550 = vmatpush1.msra.mxu0 %v4579
    %7551 = vmatprep.subr.mxu0 %v4588
    %7552 = vmatpush1.msra.mxu0 %v4587
    %7553 = vmatprep.subr.mxu0 %v4596
    %7554 = vmatpush1.msra.mxu0 %v4595
    %7555 = vmatprep.subr.mxu0 %v4604
    %7556 = vmatpush1.msra.mxu0 %v4603
    %7557 = vmatprep.subr.mxu0 %v4612
    %7558 = vmatpush1.msra.mxu0 %v4611
    %7559 = vmatprep.subr.mxu0 %v4620
    %7560 = vmatpush1.msra.mxu0 %v4619
    %7561 = vmatprep.subr.mxu0 %v4628
    %7562 = vmatpush1.msra.mxu0 %v4627
    %7563 = vmatprep.subr.mxu0 %v4636
    %7564 = vmatpush1.msra.mxu0 %v4635
    %7565 = vmatprep.subr.mxu0 %v4644
    %7566 = vmatpush1.msra.mxu0 %v4643
    %7567 = vmatprep.subr.mxu0 %v4652
    %7568 = vmatpush1.msra.mxu0 %v4651
    %7569 = vmatprep.subr.mxu0 %v4660
    %7570 = vmatpush1.msra.mxu0 %v4659
    %7571 = vmatprep.subr.mxu0 %v4668
    %7572 = vmatpush1.msra.mxu0 %v4667
    %7573 = vmatprep.subr.mxu0 %v4676
    %7574 = vmatpush1.msra.mxu0 %v4675
    %7575 = vmatprep.subr.mxu0 %v4684
    %7576 = vmatpush1.msra.mxu0 %v4683
    %7577 = vmatprep.subr.mxu0 %v4692
    %7578 = vmatpush1.msra.mxu0 %v4691
    %7579 = vmatprep.subr.mxu0 %v4700
    %7580 = vmatpush1.msra.mxu0 %v4699
    %7581 = vmatprep.subr.mxu0 %v4708
    %7582 = vmatpush1.msra.mxu0 %v4707
    %7583 = vmatprep.subr.mxu0 %v4716
    %7584 = vmatpush1.msra.mxu0 %v4715
    %7585 = vmatprep.subr.mxu0 %v4724
    %7586 = vmatpush1.msra.mxu0 %v4723
    %7587 = vmatprep.mubr.f32.mxu0 %v2714
    %7588 = vmatmul.mubr.f32.gmra.mrb[0].mxu0 %v2713
    %v7589 = vpop.f32.mrb[0].mxu0
    %v7590 = vadd.f32 %v7519, %v7589
    %v7591 = vpop.f32.mrb[0].mxu0
    %v7592 = vadd.f32 %v7521, %v7591
    %7593 = vdwg.mxu0
    %7594 = vmatprep.subr.mxu0 %v4732
    %7595 = vmatpush1.msra.mxu0 %v4731
    %7596 = vmatprep.subr.mxu0 %v4740
    %7597 = vmatpush1.msra.mxu0 %v4739
    %7598 = vmatprep.subr.mxu0 %v4748
    %7599 = vmatpush1.msra.mxu0 %v4747
    %7600 = vmatprep.subr.mxu0 %v4756
    %7601 = vmatpush1.msra.mxu0 %v4755
    %7602 = vmatprep.subr.mxu0 %v4764
    %7603 = vmatpush1.msra.mxu0 %v4763
    %7604 = vmatprep.subr.mxu0 %v4772
    %7605 = vmatpush1.msra.mxu0 %v4771
    %7606 = vmatprep.subr.mxu0 %v4780
    %7607 = vmatpush1.msra.mxu0 %v4779
    %7608 = vmatprep.subr.mxu0 %v4788
    %7609 = vmatpush1.msra.mxu0 %v4787
    %7610 = vmatprep.subr.mxu0 %v4796
    %7611 = vmatpush1.msra.mxu0 %v4795
    %7612 = vmatprep.subr.mxu0 %v4804
    %7613 = vmatpush1.msra.mxu0 %v4803
    %7614 = vmatprep.subr.mxu0 %v4812
    %7615 = vmatpush1.msra.mxu0 %v4811
    %7616 = vmatprep.subr.mxu0 %v4820
    %7617 = vmatpush1.msra.mxu0 %v4819
    %7618 = vmatprep.subr.mxu0 %v4828
    %7619 = vmatpush1.msra.mxu0 %v4827
    %7620 = vmatprep.subr.mxu0 %v4836
    %7621 = vmatpush1.msra.mxu0 %v4835
    %7622 = vmatprep.subr.mxu0 %v4844
    %7623 = vmatpush1.msra.mxu0 %v4843
    %7624 = vmatprep.subr.mxu0 %v4852
    %7625 = vmatpush1.msra.mxu0 %v4851
    %7626 = vmatprep.subr.mxu0 %v4860
    %7627 = vmatpush1.msra.mxu0 %v4859
    %7628 = vmatprep.subr.mxu0 %v4868
    %7629 = vmatpush1.msra.mxu0 %v4867
    %7630 = vmatprep.subr.mxu0 %v4876
    %7631 = vmatpush1.msra.mxu0 %v4875
    %7632 = vmatprep.subr.mxu0 %v4884
    %7633 = vmatpush1.msra.mxu0 %v4883
    %7634 = vmatprep.subr.mxu0 %v4892
    %7635 = vmatpush1.msra.mxu0 %v4891
    %7636 = vmatprep.subr.mxu0 %v4900
    %7637 = vmatpush1.msra.mxu0 %v4899
    %7638 = vmatprep.subr.mxu0 %v4908
    %7639 = vmatpush1.msra.mxu0 %v4907
    %7640 = vmatprep.subr.mxu0 %v4916
    %7641 = vmatpush1.msra.mxu0 %v4915
    %7642 = vmatprep.subr.mxu0 %v4924
    %7643 = vmatpush1.msra.mxu0 %v4923
    %7644 = vmatprep.subr.mxu0 %v4932
    %7645 = vmatpush1.msra.mxu0 %v4931
    %7646 = vmatprep.subr.mxu0 %v4940
    %7647 = vmatpush1.msra.mxu0 %v4939
    %7648 = vmatprep.subr.mxu0 %v4948
    %7649 = vmatpush1.msra.mxu0 %v4947
    %7650 = vmatprep.subr.mxu0 %v4956
    %7651 = vmatpush1.msra.mxu0 %v4955
    %7652 = vmatprep.subr.mxu0 %v4964
    %7653 = vmatpush1.msra.mxu0 %v4963
    %7654 = vmatprep.subr.mxu0 %v4972
    %7655 = vmatpush1.msra.mxu0 %v4971
    %7656 = vmatprep.subr.mxu0 %v4980
    %7657 = vmatpush1.msra.mxu0 %v4979
    %7658 = vmatprep.mubr.f32.mxu0 %v2716
    %7659 = vmatmul.mubr.f32.gmra.mrb[0].mxu0 %v2715
    %v7660 = vpop.f32.mrb[0].mxu0
    %v7661 = vadd.f32 %v7590, %v7660
    %v7662 = vpop.f32.mrb[0].mxu0
    %v7663 = vadd.f32 %v7592, %v7662
    %7664 = vdwg.mxu0
    %7665 = vmatprep.subr.mxu0 %v4988
    %7666 = vmatpush1.msra.mxu0 %v4987
    %7667 = vmatprep.subr.mxu0 %v4996
    %7668 = vmatpush1.msra.mxu0 %v4995
    %7669 = vmatprep.subr.mxu0 %v5004
    %7670 = vmatpush1.msra.mxu0 %v5003
    %7671 = vmatprep.subr.mxu0 %v5012
    %7672 = vmatpush1.msra.mxu0 %v5011
    %7673 = vmatprep.subr.mxu0 %v5020
    %7674 = vmatpush1.msra.mxu0 %v5019
    %7675 = vmatprep.subr.mxu0 %v5028
    %7676 = vmatpush1.msra.mxu0 %v5027
    %7677 = vmatprep.subr.mxu0 %v5036
    %7678 = vmatpush1.msra.mxu0 %v5035
    %7679 = vmatprep.subr.mxu0 %v5044
    %7680 = vmatpush1.msra.mxu0 %v5043
    %7681 = vmatprep.subr.mxu0 %v5052
    %7682 = vmatpush1.msra.mxu0 %v5051
    %7683 = vmatprep.subr.mxu0 %v5060
    %7684 = vmatpush1.msra.mxu0 %v5059
    %7685 = vmatprep.subr.mxu0 %v5068
    %7686 = vmatpush1.msra.mxu0 %v5067
    %7687 = vmatprep.subr.mxu0 %v5076
    %7688 = vmatpush1.msra.mxu0 %v5075
    %7689 = vmatprep.subr.mxu0 %v5084
    %7690 = vmatpush1.msra.mxu0 %v5083
    %7691 = vmatprep.subr.mxu0 %v5092
    %7692 = vmatpush1.msra.mxu0 %v5091
    %7693 = vmatprep.subr.mxu0 %v5100
    %7694 = vmatpush1.msra.mxu0 %v5099
    %7695 = vmatprep.subr.mxu0 %v5108
    %7696 = vmatpush1.msra.mxu0 %v5107
    %7697 = vmatprep.subr.mxu0 %v5116
    %7698 = vmatpush1.msra.mxu0 %v5115
    %7699 = vmatprep.subr.mxu0 %v5124
    %7700 = vmatpush1.msra.mxu0 %v5123
    %7701 = vmatprep.subr.mxu0 %v5132
    %7702 = vmatpush1.msra.mxu0 %v5131
    %7703 = vmatprep.subr.mxu0 %v5140
    %7704 = vmatpush1.msra.mxu0 %v5139
    %7705 = vmatprep.subr.mxu0 %v5148
    %7706 = vmatpush1.msra.mxu0 %v5147
    %7707 = vmatprep.subr.mxu0 %v5156
    %7708 = vmatpush1.msra.mxu0 %v5155
    %7709 = vmatprep.subr.mxu0 %v5164
    %7710 = vmatpush1.msra.mxu0 %v5163
    %7711 = vmatprep.subr.mxu0 %v5172
    %7712 = vmatpush1.msra.mxu0 %v5171
    %7713 = vmatprep.subr.mxu0 %v5180
    %7714 = vmatpush1.msra.mxu0 %v5179
    %7715 = vmatprep.subr.mxu0 %v5188
    %7716 = vmatpush1.msra.mxu0 %v5187
    %7717 = vmatprep.subr.mxu0 %v5196
    %7718 = vmatpush1.msra.mxu0 %v5195
    %7719 = vmatprep.subr.mxu0 %v5204
    %7720 = vmatpush1.msra.mxu0 %v5203
    %7721 = vmatprep.subr.mxu0 %v5212
    %7722 = vmatpush1.msra.mxu0 %v5211
    %7723 = vmatprep.subr.mxu0 %v5220
    %7724 = vmatpush1.msra.mxu0 %v5219
    %7725 = vmatprep.subr.mxu0 %v5228
    %7726 = vmatpush1.msra.mxu0 %v5227
    %7727 = vmatprep.subr.mxu0 %v5236
    %7728 = vmatpush1.msra.mxu0 %v5235
    %7729 = vmatprep.mubr.f32.mxu0 %v2718
    %7730 = vmatmul.mubr.f32.gmra.mrb[0].mxu0 %v2717
    %v7731 = vpop.f32.mrb[0].mxu0
    %v7732 = vadd.f32 %v7661, %v7731
    %v7733 = vpop.f32.mrb[0].mxu0
    %v7734 = vadd.f32 %v7663, %v7733
    %7735 = vdwg.mxu0
    %7736 = vmatprep.subr.mxu0 %v5244
    %7737 = vmatpush1.msra.mxu0 %v5243
    %7738 = vmatprep.subr.mxu0 %v5252
    %7739 = vmatpush1.msra.mxu0 %v5251
    %7740 = vmatprep.subr.mxu0 %v5260
    %7741 = vmatpush1.msra.mxu0 %v5259
    %7742 = vmatprep.subr.mxu0 %v5268
    %7743 = vmatpush1.msra.mxu0 %v5267
    %7744 = vmatprep.subr.mxu0 %v5276
    %7745 = vmatpush1.msra.mxu0 %v5275
    %7746 = vmatprep.subr.mxu0 %v5284
    %7747 = vmatpush1.msra.mxu0 %v5283
    %7748 = vmatprep.subr.mxu0 %v5292
    %7749 = vmatpush1.msra.mxu0 %v5291
    %7750 = vmatprep.subr.mxu0 %v5300
    %7751 = vmatpush1.msra.mxu0 %v5299
    %7752 = vmatprep.subr.mxu0 %v5308
    %7753 = vmatpush1.msra.mxu0 %v5307
    %7754 = vmatprep.subr.mxu0 %v5316
    %7755 = vmatpush1.msra.mxu0 %v5315
    %7756 = vmatprep.subr.mxu0 %v5324
    %7757 = vmatpush1.msra.mxu0 %v5323
    %7758 = vmatprep.subr.mxu0 %v5332
    %7759 = vmatpush1.msra.mxu0 %v5331
    %7760 = vmatprep.subr.mxu0 %v5340
    %7761 = vmatpush1.msra.mxu0 %v5339
    %7762 = vmatprep.subr.mxu0 %v5348
    %7763 = vmatpush1.msra.mxu0 %v5347
    %7764 = vmatprep.subr.mxu0 %v5356
    %7765 = vmatpush1.msra.mxu0 %v5355
    %7766 = vmatprep.subr.mxu0 %v5364
    %7767 = vmatpush1.msra.mxu0 %v5363
    %7768 = vmatprep.subr.mxu0 %v5372
    %7769 = vmatpush1.msra.mxu0 %v5371
    %7770 = vmatprep.subr.mxu0 %v5380
    %7771 = vmatpush1.msra.mxu0 %v5379
    %7772 = vmatprep.subr.mxu0 %v5388
    %7773 = vmatpush1.msra.mxu0 %v5387
    %7774 = vmatprep.subr.mxu0 %v5396
    %7775 = vmatpush1.msra.mxu0 %v5395
    %7776 = vmatprep.subr.mxu0 %v5404
    %7777 = vmatpush1.msra.mxu0 %v5403
    %7778 = vmatprep.subr.mxu0 %v5412
    %7779 = vmatpush1.msra.mxu0 %v5411
    %7780 = vmatprep.subr.mxu0 %v5420
    %7781 = vmatpush1.msra.mxu0 %v5419
    %7782 = vmatprep.subr.mxu0 %v5428
    %7783 = vmatpush1.msra.mxu0 %v5427
    %7784 = vmatprep.subr.mxu0 %v5436
    %7785 = vmatpush1.msra.mxu0 %v5435
    %7786 = vmatprep.subr.mxu0 %v5444
    %7787 = vmatpush1.msra.mxu0 %v5443
    %7788 = vmatprep.subr.mxu0 %v5452
    %7789 = vmatpush1.msra.mxu0 %v5451
    %7790 = vmatprep.subr.mxu0 %v5460
    %7791 = vmatpush1.msra.mxu0 %v5459
    %7792 = vmatprep.subr.mxu0 %v5468
    %7793 = vmatpush1.msra.mxu0 %v5467
    %7794 = vmatprep.subr.mxu0 %v5476
    %7795 = vmatpush1.msra.mxu0 %v5475
    %7796 = vmatprep.subr.mxu0 %v5484
    %7797 = vmatpush1.msra.mxu0 %v5483
    %7798 = vmatprep.subr.mxu0 %v5492
    %7799 = vmatpush1.msra.mxu0 %v5491
    %7800 = vmatprep.mubr.f32.mxu0 %v2720
    %7801 = vmatmul.mubr.f32.gmra.mrb[0].mxu0 %v2719
    %v7802 = vpop.f32.mrb[0].mxu0
    %v7803 = vadd.f32 %v7732, %v7802
    %v7804 = vpop.f32.mrb[0].mxu0
    %v7805 = vadd.f32 %v7734, %v7804
    %7806 = vdwg.mxu0
    %v7807 = vadd.f32 %v6099, %v6101
    %v7808 = vadd.f32 %v7807, %v6667
    %v7809 = vadd.f32 %v7808, %v6669
    %v7810 = vadd.f32 %v7809, %v7235
    %v7811 = vadd.f32 %v7810, %v7237
    %v7812 = vadd.f32 %v7811, %v7803
    %v7813 = vadd.f32 %v7812, %v7805
    %7814 = vadd.xlane.f32.xlu0 %v7813
    %v7815 = vpop.xlane.xlu0 %7814
    %v7816 = vrcp.pop 1024.0
    %v7817 = vmul.f32 %v7815, %v7816
    %v7818 = vmul.f32 %v6099, %v6099
    %v7819 = vmul.f32 %v6101, %v6101
    %v7820 = vmul.f32 %v6667, %v6667
    %v7821 = vmul.f32 %v6669, %v6669
    %v7822 = vmul.f32 %v7235, %v7235
    %v7823 = vmul.f32 %v7237, %v7237
    %v7824 = vmul.f32 %v7803, %v7803
    %v7825 = vmul.f32 %v7805, %v7805
    %v7826 = vadd.f32 %v7818, %v7819
    %v7827 = vadd.f32 %v7826, %v7820
    %v7828 = vadd.f32 %v7827, %v7821
    %v7829 = vadd.f32 %v7828, %v7822
    %v7830 = vadd.f32 %v7829, %v7823
    %v7831 = vadd.f32 %v7830, %v7824
    %v7832 = vadd.f32 %v7831, %v7825
    %7833 = vadd.xlane.f32.xlu0 %v7832
    %v7834 = vpop.xlane.xlu0 %7833
    %v7835 = vmul.f32 %v7834, %v7816
    %v7836 = vmul.f32 %v7817, %v7817
    %v7837 = vsub.f32 %v7835, %v7836
    %v7838 = vmax.f32 %v7837, 0.0
    %v7839 = vsub.f32 %v6099, %v7817
    %v7840 = vsub.f32 %v6101, %v7817
    %v7841 = vsub.f32 %v6667, %v7817
    %v7842 = vsub.f32 %v6669, %v7817
    %v7843 = vsub.f32 %v7235, %v7817
    %v7844 = vsub.f32 %v7237, %v7817
    %v7845 = vsub.f32 %v7803, %v7817
    %v7846 = vsub.f32 %v7805, %v7817
    %v7847 = vadd.f32 %v7838, 1e-05
    %v7848 = vrsqrt.pop %v7847
    %v7849 = vmul.f32 %v7839, %v7848
    %v7850 = vmul.f32 %v7840, %v7848
    %v7851 = vmul.f32 %v7841, %v7848
    %v7852 = vmul.f32 %v7842, %v7848
    %v7853 = vmul.f32 %v7843, %v7848
    %v7854 = vmul.f32 %v7844, %v7848
    %v7855 = vmul.f32 %v7845, %v7848
    %v7856 = vmul.f32 %v7846, %v7848
    %v7857 = vmul.f32 %v7849, %v2866
    %v7858 = vmul.f32 %v7850, %v2868
    %v7859 = vmul.f32 %v7851, %v2937
    %v7860 = vmul.f32 %v7852, %v2939
    %v7861 = vmul.f32 %v7853, %v3008
    %v7862 = vmul.f32 %v7854, %v3010
    %v7863 = vmul.f32 %v7855, %v3079
    %v7864 = vmul.f32 %v7856, %v3081
    %v7865 = vadd.f32 %v7857, %v3228
    %v7866 = vadd.f32 %v7858, %v3230
    %v7867 = vadd.f32 %v7859, %v3299
    %v7868 = vadd.f32 %v7860, %v3301
    %v7869 = vadd.f32 %v7861, %v3370
    %v7870 = vadd.f32 %v7862, %v3372
    %v7871 = vadd.f32 %v7863, %v3441
    %v7872 = vadd.f32 %v7864, %v3443
    %v7873 = vmax.f32 %v7865, 0.0
    %v7874 = vmax.f32 %v7866, 0.0
    %v7875 = vmax.f32 %v7867, 0.0
    %v7876 = vmax.f32 %v7868, 0.0
    %v7877 = vmax.f32 %v7869, 0.0
    %v7878 = vmax.f32 %v7870, 0.0
    %v7879 = vmax.f32 %v7871, 0.0
    %v7880 = vmax.f32 %v7872, 0.0
    %v7881 = vld [vmem:[#allocation26] sm:$0xff]
    %v7882 = vld [vmem:[#allocation26 + $0x8] sm:$0xff]
    %v7883 = vld [vmem:[#allocation26 + $0x10] sm:$0xff]
    %v7884 = vld [vmem:[#allocation26 + $0x18] sm:$0xff]
    %v7885 = vld [vmem:[#allocation26 + $0x20] sm:$0xff]
    %v7886 = vld [vmem:[#allocation26 + $0x28] sm:$0xff]
    %v7887 = vld [vmem:[#allocation26 + $0x30] sm:$0xff]
    %v7888 = vld [vmem:[#allocation26 + $0x38] sm:$0xff]
    %v7889 = vld [vmem:[#allocation26 + $0x40] sm:$0xff]
    %v7890 = vld [vmem:[#allocation26 + $0x48] sm:$0xff]
    %v7891 = vld [vmem:[#allocation26 + $0x50] sm:$0xff]
    %v7892 = vld [vmem:[#allocation26 + $0x58] sm:$0xff]
    %v7893 = vld [vmem:[#allocation26 + $0x60] sm:$0xff]
    %v7894 = vld [vmem:[#allocation26 + $0x68] sm:$0xff]
    %v7895 = vld [vmem:[#allocation26 + $0x70] sm:$0xff]
    %v7896 = vld [vmem:[#allocation26 + $0x78] sm:$0xff]
    %v7897 = vld [vmem:[#allocation26 + $0x80] sm:$0xff]
    %v7898 = vld [vmem:[#allocation26 + $0x88] sm:$0xff]
    %v7899 = vld [vmem:[#allocation26 + $0x90] sm:$0xff]
    %v7900 = vld [vmem:[#allocation26 + $0x98] sm:$0xff]
    %v7901 = vld [vmem:[#allocation26 + $0xa0] sm:$0xff]
    %v7902 = vld [vmem:[#allocation26 + $0xa8] sm:$0xff]
    %v7903 = vld [vmem:[#allocation26 + $0xb0] sm:$0xff]
    %v7904 = vld [vmem:[#allocation26 + $0xb8] sm:$0xff]
    %v7905 = vld [vmem:[#allocation26 + $0xc0] sm:$0xff]
    %v7906 = vld [vmem:[#allocation26 + $0xc8] sm:$0xff]
    %v7907 = vld [vmem:[#allocation26 + $0xd0] sm:$0xff]
    %v7908 = vld [vmem:[#allocation26 + $0xd8] sm:$0xff]
    %v7909 = vld [vmem:[#allocation26 + $0xe0] sm:$0xff]
    %v7910 = vld [vmem:[#allocation26 + $0xe8] sm:$0xff]
    %v7911 = vld [vmem:[#allocation26 + $0xf0] sm:$0xff]
    %v7912 = vld [vmem:[#allocation26 + $0xf8] sm:$0xff]
    %v7913 = vld [vmem:[#allocation26 + $0x100] sm:$0xff]
    %v7914 = vld [vmem:[#allocation26 + $0x108] sm:$0xff]
    %v7915 = vld [vmem:[#allocation26 + $0x110] sm:$0xff]
    %v7916 = vld [vmem:[#allocation26 + $0x118] sm:$0xff]
    %v7917 = vld [vmem:[#allocation26 + $0x120] sm:$0xff]
    %v7918 = vld [vmem:[#allocation26 + $0x128] sm:$0xff]
    %v7919 = vld [vmem:[#allocation26 + $0x130] sm:$0xff]
    %v7920 = vld [vmem:[#allocation26 + $0x138] sm:$0xff]
    %v7921 = vld [vmem:[#allocation26 + $0x140] sm:$0xff]
    %v7922 = vld [vmem:[#allocation26 + $0x148] sm:$0xff]
    %v7923 = vld [vmem:[#allocation26 + $0x150] sm:$0xff]
    %v7924 = vld [vmem:[#allocation26 + $0x158] sm:$0xff]
    %v7925 = vld [vmem:[#allocation26 + $0x160] sm:$0xff]
    %v7926 = vld [vmem:[#allocation26 + $0x168] sm:$0xff]
    %v7927 = vld [vmem:[#allocation26 + $0x170] sm:$0xff]
    %v7928 = vld [vmem:[#allocation26 + $0x178] sm:$0xff]
    %v7929 = vld [vmem:[#allocation26 + $0x180] sm:$0xff]
    %v7930 = vld [vmem:[#allocation26 + $0x188] sm:$0xff]
    %v7931 = vld [vmem:[#allocation26 + $0x190] sm:$0xff]
    %v7932 = vld [vmem:[#allocation26 + $0x198] sm:$0xff]
    %v7933 = vld [vmem:[#allocation26 + $0x1a0] sm:$0xff]
    %v7934 = vld [vmem:[#allocation26 + $0x1a8] sm:$0xff]
    %v7935 = vld [vmem:[#allocation26 + $0x1b0] sm:$0xff]
    %v7936 = vld [vmem:[#allocation26 + $0x1b8] sm:$0xff]
    %v7937 = vld [vmem:[#allocation26 + $0x1c0] sm:$0xff]
    %v7938 = vld [vmem:[#allocation26 + $0x1c8] sm:$0xff]
    %v7939 = vld [vmem:[#allocation26 + $0x1d0] sm:$0xff]
    %v7940 = vld [vmem:[#allocation26 + $0x1d8] sm:$0xff]
    %v7941 = vld [vmem:[#allocation26 + $0x1e0] sm:$0xff]
    %v7942 = vld [vmem:[#allocation26 + $0x1e8] sm:$0xff]
    %v7943 = vld [vmem:[#allocation26 + $0x1f0] sm:$0xff]
    %v7944 = vld [vmem:[#allocation26 + $0x1f8] sm:$0xff]
    %v7945 = vld [vmem:[#allocation26 + $0x200] sm:$0xff]
    %v7946 = vld [vmem:[#allocation26 + $0x208] sm:$0xff]
    %v7947 = vld [vmem:[#allocation26 + $0x210] sm:$0xff]
    %v7948 = vld [vmem:[#allocation26 + $0x218] sm:$0xff]
    %v7949 = vld [vmem:[#allocation26 + $0x220] sm:$0xff]
    %v7950 = vld [vmem:[#allocation26 + $0x228] sm:$0xff]
    %v7951 = vld [vmem:[#allocation26 + $0x230] sm:$0xff]
    %v7952 = vld [vmem:[#allocation26 + $0x238] sm:$0xff]
    %v7953 = vld [vmem:[#allocation26 + $0x240] sm:$0xff]
    %v7954 = vld [vmem:[#allocation26 + $0x248] sm:$0xff]
    %v7955 = vld [vmem:[#allocation26 + $0x250] sm:$0xff]
    %v7956 = vld [vmem:[#allocation26 + $0x258] sm:$0xff]
    %v7957 = vld [vmem:[#allocation26 + $0x260] sm:$0xff]
    %v7958 = vld [vmem:[#allocation26 + $0x268] sm:$0xff]
    %v7959 = vld [vmem:[#allocation26 + $0x270] sm:$0xff]
    %v7960 = vld [vmem:[#allocation26 + $0x278] sm:$0xff]
    %v7961 = vld [vmem:[#allocation26 + $0x280] sm:$0xff]
    %v7962 = vld [vmem:[#allocation26 + $0x288] sm:$0xff]
    %v7963 = vld [vmem:[#allocation26 + $0x290] sm:$0xff]
    %v7964 = vld [vmem:[#allocation26 + $0x298] sm:$0xff]
    %v7965 = vld [vmem:[#allocation26 + $0x2a0] sm:$0xff]
    %v7966 = vld [vmem:[#allocation26 + $0x2a8] sm:$0xff]
    %v7967 = vld [vmem:[#allocation26 + $0x2b0] sm:$0xff]
    %v7968 = vld [vmem:[#allocation26 + $0x2b8] sm:$0xff]
    %v7969 = vld [vmem:[#allocation26 + $0x2c0] sm:$0xff]
    %v7970 = vld [vmem:[#allocation26 + $0x2c8] sm:$0xff]
    %v7971 = vld [vmem:[#allocation26 + $0x2d0] sm:$0xff]
    %v7972 = vld [vmem:[#allocation26 + $0x2d8] sm:$0xff]
    %v7973 = vld [vmem:[#allocation26 + $0x2e0] sm:$0xff]
    %v7974 = vld [vmem:[#allocation26 + $0x2e8] sm:$0xff]
    %v7975 = vld [vmem:[#allocation26 + $0x2f0] sm:$0xff]
    %v7976 = vld [vmem:[#allocation26 + $0x2f8] sm:$0xff]
    %v7977 = vld [vmem:[#allocation26 + $0x300] sm:$0xff]
    %v7978 = vld [vmem:[#allocation26 + $0x308] sm:$0xff]
    %v7979 = vld [vmem:[#allocation26 + $0x310] sm:$0xff]
    %v7980 = vld [vmem:[#allocation26 + $0x318] sm:$0xff]
    %v7981 = vld [vmem:[#allocation26 + $0x320] sm:$0xff]
    %v7982 = vld [vmem:[#allocation26 + $0x328] sm:$0xff]
    %v7983 = vld [vmem:[#allocation26 + $0x330] sm:$0xff]
    %v7984 = vld [vmem:[#allocation26 + $0x338] sm:$0xff]
    %v7985 = vld [vmem:[#allocation26 + $0x340] sm:$0xff]
    %v7986 = vld [vmem:[#allocation26 + $0x348] sm:$0xff]
    %v7987 = vld [vmem:[#allocation26 + $0x350] sm:$0xff]
    %v7988 = vld [vmem:[#allocation26 + $0x358] sm:$0xff]
    %v7989 = vld [vmem:[#allocation26 + $0x360] sm:$0xff]
    %v7990 = vld [vmem:[#allocation26 + $0x368] sm:$0xff]
    %v7991 = vld [vmem:[#allocation26 + $0x370] sm:$0xff]
    %v7992 = vld [vmem:[#allocation26 + $0x378] sm:$0xff]
    %v7993 = vld [vmem:[#allocation26 + $0x380] sm:$0xff]
    %v7994 = vld [vmem:[#allocation26 + $0x388] sm:$0xff]
    %v7995 = vld [vmem:[#allocation26 + $0x390] sm:$0xff]
    %v7996 = vld [vmem:[#allocation26 + $0x398] sm:$0xff]
    %v7997 = vld [vmem:[#allocation26 + $0x3a0] sm:$0xff]
    %v7998 = vld [vmem:[#allocation26 + $0x3a8] sm:$0xff]
    %v7999 = vld [vmem:[#allocation26 + $0x3b0] sm:$0xff]
    %v8000 = vld [vmem:[#allocation26 + $0x3b8] sm:$0xff]
    %v8001 = vld [vmem:[#allocation26 + $0x3c0] sm:$0xff]
    %v8002 = vld [vmem:[#allocation26 + $0x3c8] sm:$0xff]
    %v8003 = vld [vmem:[#allocation26 + $0x3d0] sm:$0xff]
    %v8004 = vld [vmem:[#allocation26 + $0x3d8] sm:$0xff]
    %v8005 = vld [vmem:[#allocation26 + $0x3e0] sm:$0xff]
    %v8006 = vld [vmem:[#allocation26 + $0x3e8] sm:$0xff]
    %v8007 = vld [vmem:[#allocation26 + $0x3f0] sm:$0xff]
    %v8008 = vld [vmem:[#allocation26 + $0x3f8] sm:$0xff]
    %v8009 = vld [vmem:[#allocation28] sm:$0x1]
    %v8011 = vlaneseq
    %v8012 = vshrl.u32 %v8011, 7
    %v8013 = vsub.s32 0, %v8012
    %v8014 = vrot.slane %v8009, %v8013
    %8016 = vmatprep.subr.mxu0 0.0
    %8017 = vmatpush1.msra.mxu0 %v7881
    %8018 = vmatprep.subr.mxu0 0.0
    %8019 = vmatpush1.msra.mxu0 %v7882
    %8020 = vmatprep.subr.mxu0 0.0
    %8021 = vmatpush1.msra.mxu0 %v7883
    %8022 = vmatprep.subr.mxu0 0.0
    %8023 = vmatpush1.msra.mxu0 %v7884
    %8024 = vmatprep.subr.mxu0 0.0
    %8025 = vmatpush1.msra.mxu0 %v7885
    %8026 = vmatprep.subr.mxu0 0.0
    %8027 = vmatpush1.msra.mxu0 %v7886
    %8028 = vmatprep.subr.mxu0 0.0
    %8029 = vmatpush1.msra.mxu0 %v7887
    %8030 = vmatprep.subr.mxu0 0.0
    %8031 = vmatpush1.msra.mxu0 %v7888
    %8032 = vmatprep.subr.mxu0 0.0
    %8033 = vmatpush1.msra.mxu0 %v7889
    %8034 = vmatprep.subr.mxu0 0.0
    %8035 = vmatpush1.msra.mxu0 %v7890
    %8036 = vmatprep.subr.mxu0 0.0
    %8037 = vmatpush1.msra.mxu0 %v7891
    %8038 = vmatprep.subr.mxu0 0.0
    %8039 = vmatpush1.msra.mxu0 %v7892
    %8040 = vmatprep.subr.mxu0 0.0
    %8041 = vmatpush1.msra.mxu0 %v7893
    %8042 = vmatprep.subr.mxu0 0.0
    %8043 = vmatpush1.msra.mxu0 %v7894
    %8044 = vmatprep.subr.mxu0 0.0
    %8045 = vmatpush1.msra.mxu0 %v7895
    %8046 = vmatprep.subr.mxu0 0.0
    %8047 = vmatpush1.msra.mxu0 %v7896
    %8048 = vmatprep.subr.mxu0 0.0
    %8049 = vmatpush1.msra.mxu0 %v7897
    %8050 = vmatprep.subr.mxu0 0.0
    %8051 = vmatpush1.msra.mxu0 %v7898
    %8052 = vmatprep.subr.mxu0 0.0
    %8053 = vmatpush1.msra.mxu0 %v7899
    %8054 = vmatprep.subr.mxu0 0.0
    %8055 = vmatpush1.msra.mxu0 %v7900
    %8056 = vmatprep.subr.mxu0 0.0
    %8057 = vmatpush1.msra.mxu0 %v7901
    %8058 = vmatprep.subr.mxu0 0.0
    %8059 = vmatpush1.msra.mxu0 %v7902
    %8060 = vmatprep.subr.mxu0 0.0
    %8061 = vmatpush1.msra.mxu0 %v7903
    %8062 = vmatprep.subr.mxu0 0.0
    %8063 = vmatpush1.msra.mxu0 %v7904
    %8064 = vmatprep.subr.mxu0 0.0
    %8065 = vmatpush1.msra.mxu0 %v7905
    %8066 = vmatprep.subr.mxu0 0.0
    %8067 = vmatpush1.msra.mxu0 %v7906
    %8068 = vmatprep.subr.mxu0 0.0
    %8069 = vmatpush1.msra.mxu0 %v7907
    %8070 = vmatprep.subr.mxu0 0.0
    %8071 = vmatpush1.msra.mxu0 %v7908
    %8072 = vmatprep.subr.mxu0 0.0
    %8073 = vmatpush1.msra.mxu0 %v7909
    %8074 = vmatprep.subr.mxu0 0.0
    %8075 = vmatpush1.msra.mxu0 %v7910
    %8076 = vmatprep.subr.mxu0 0.0
    %8077 = vmatpush1.msra.mxu0 %v7911
    %8078 = vmatprep.subr.mxu0 0.0
    %8079 = vmatpush1.msra.mxu0 %v7912
    %8080 = vmatprep.mubr.f32.mxu0 %v7874
    %8081 = vmatmul.mubr.f32.gmra.mrb[0].mxu0 %v7873
    %v8082 = vpop.f32.mrb[0].mxu0
    %v8083 = vadd.f32 %v8014, %v8082
    %v8084 = vpop.f32.mrb[0].mxu0
    %8085 = vdwg.mxu0
    %8086 = vmatprep.subr.mxu0 0.0
    %8087 = vmatpush1.msra.mxu0 %v7913
    %8088 = vmatprep.subr.mxu0 0.0
    %8089 = vmatpush1.msra.mxu0 %v7914
    %8090 = vmatprep.subr.mxu0 0.0
    %8091 = vmatpush1.msra.mxu0 %v7915
    %8092 = vmatprep.subr.mxu0 0.0
    %8093 = vmatpush1.msra.mxu0 %v7916
    %8094 = vmatprep.subr.mxu0 0.0
    %8095 = vmatpush1.msra.mxu0 %v7917
    %8096 = vmatprep.subr.mxu0 0.0
    %8097 = vmatpush1.msra.mxu0 %v7918
    %8098 = vmatprep.subr.mxu0 0.0
    %8099 = vmatpush1.msra.mxu0 %v7919
    %8100 = vmatprep.subr.mxu0 0.0
    %8101 = vmatpush1.msra.mxu0 %v7920
    %8102 = vmatprep.subr.mxu0 0.0
    %8103 = vmatpush1.msra.mxu0 %v7921
    %8104 = vmatprep.subr.mxu0 0.0
    %8105 = vmatpush1.msra.mxu0 %v7922
    %8106 = vmatprep.subr.mxu0 0.0
    %8107 = vmatpush1.msra.mxu0 %v7923
    %8108 = vmatprep.subr.mxu0 0.0
    %8109 = vmatpush1.msra.mxu0 %v7924
    %8110 = vmatprep.subr.mxu0 0.0
    %8111 = vmatpush1.msra.mxu0 %v7925
    %8112 = vmatprep.subr.mxu0 0.0
    %8113 = vmatpush1.msra.mxu0 %v7926
    %8114 = vmatprep.subr.mxu0 0.0
    %8115 = vmatpush1.msra.mxu0 %v7927
    %8116 = vmatprep.subr.mxu0 0.0
    %8117 = vmatpush1.msra.mxu0 %v7928
    %8118 = vmatprep.subr.mxu0 0.0
    %8119 = vmatpush1.msra.mxu0 %v7929
    %8120 = vmatprep.subr.mxu0 0.0
    %8121 = vmatpush1.msra.mxu0 %v7930
    %8122 = vmatprep.subr.mxu0 0.0
    %8123 = vmatpush1.msra.mxu0 %v7931
    %8124 = vmatprep.subr.mxu0 0.0
    %8125 = vmatpush1.msra.mxu0 %v7932
    %8126 = vmatprep.subr.mxu0 0.0
    %8127 = vmatpush1.msra.mxu0 %v7933
    %8128 = vmatprep.subr.mxu0 0.0
    %8129 = vmatpush1.msra.mxu0 %v7934
    %8130 = vmatprep.subr.mxu0 0.0
    %8131 = vmatpush1.msra.mxu0 %v7935
    %8132 = vmatprep.subr.mxu0 0.0
    %8133 = vmatpush1.msra.mxu0 %v7936
    %8134 = vmatprep.subr.mxu0 0.0
    %8135 = vmatpush1.msra.mxu0 %v7937
    %8136 = vmatprep.subr.mxu0 0.0
    %8137 = vmatpush1.msra.mxu0 %v7938
    %8138 = vmatprep.subr.mxu0 0.0
    %8139 = vmatpush1.msra.mxu0 %v7939
    %8140 = vmatprep.subr.mxu0 0.0
    %8141 = vmatpush1.msra.mxu0 %v7940
    %8142 = vmatprep.subr.mxu0 0.0
    %8143 = vmatpush1.msra.mxu0 %v7941
    %8144 = vmatprep.subr.mxu0 0.0
    %8145 = vmatpush1.msra.mxu0 %v7942
    %8146 = vmatprep.subr.mxu0 0.0
    %8147 = vmatpush1.msra.mxu0 %v7943
    %8148 = vmatprep.subr.mxu0 0.0
    %8149 = vmatpush1.msra.mxu0 %v7944
    %8150 = vmatprep.mubr.f32.mxu0 %v7876
    %8151 = vmatmul.mubr.f32.gmra.mrb[0].mxu0 %v7875
    %v8152 = vpop.f32.mrb[0].mxu0
    %v8153 = vadd.f32 %v8083, %v8152
    %v8154 = vpop.f32.mrb[0].mxu0
    %8155 = vdwg.mxu0
    %8156 = vmatprep.subr.mxu0 0.0
    %8157 = vmatpush1.msra.mxu0 %v7945
    %8158 = vmatprep.subr.mxu0 0.0
    %8159 = vmatpush1.msra.mxu0 %v7946
    %8160 = vmatprep.subr.mxu0 0.0
    %8161 = vmatpush1.msra.mxu0 %v7947
    %8162 = vmatprep.subr.mxu0 0.0
    %8163 = vmatpush1.msra.mxu0 %v7948
    %8164 = vmatprep.subr.mxu0 0.0
    %8165 = vmatpush1.msra.mxu0 %v7949
    %8166 = vmatprep.subr.mxu0 0.0
    %8167 = vmatpush1.msra.mxu0 %v7950
    %8168 = vmatprep.subr.mxu0 0.0
    %8169 = vmatpush1.msra.mxu0 %v7951
    %8170 = vmatprep.subr.mxu0 0.0
    %8171 = vmatpush1.msra.mxu0 %v7952
    %8172 = vmatprep.subr.mxu0 0.0
    %8173 = vmatpush1.msra.mxu0 %v7953
    %8174 = vmatprep.subr.mxu0 0.0
    %8175 = vmatpush1.msra.mxu0 %v7954
    %8176 = vmatprep.subr.mxu0 0.0
    %8177 = vmatpush1.msra.mxu0 %v7955
    %8178 = vmatprep.subr.mxu0 0.0
    %8179 = vmatpush1.msra.mxu0 %v7956
    %8180 = vmatprep.subr.mxu0 0.0
    %8181 = vmatpush1.msra.mxu0 %v7957
    %8182 = vmatprep.subr.mxu0 0.0
    %8183 = vmatpush1.msra.mxu0 %v7958
    %8184 = vmatprep.subr.mxu0 0.0
    %8185 = vmatpush1.msra.mxu0 %v7959
    %8186 = vmatprep.subr.mxu0 0.0
    %8187 = vmatpush1.msra.mxu0 %v7960
    %8188 = vmatprep.subr.mxu0 0.0
    %8189 = vmatpush1.msra.mxu0 %v7961
    %8190 = vmatprep.subr.mxu0 0.0
    %8191 = vmatpush1.msra.mxu0 %v7962
    %8192 = vmatprep.subr.mxu0 0.0
    %8193 = vmatpush1.msra.mxu0 %v7963
    %8194 = vmatprep.subr.mxu0 0.0
    %8195 = vmatpush1.msra.mxu0 %v7964
    %8196 = vmatprep.subr.mxu0 0.0
    %8197 = vmatpush1.msra.mxu0 %v7965
    %8198 = vmatprep.subr.mxu0 0.0
    %8199 = vmatpush1.msra.mxu0 %v7966
    %8200 = vmatprep.subr.mxu0 0.0
    %8201 = vmatpush1.msra.mxu0 %v7967
    %8202 = vmatprep.subr.mxu0 0.0
    %8203 = vmatpush1.msra.mxu0 %v7968
    %8204 = vmatprep.subr.mxu0 0.0
    %8205 = vmatpush1.msra.mxu0 %v7969
    %8206 = vmatprep.subr.mxu0 0.0
    %8207 = vmatpush1.msra.mxu0 %v7970
    %8208 = vmatprep.subr.mxu0 0.0
    %8209 = vmatpush1.msra.mxu0 %v7971
    %8210 = vmatprep.subr.mxu0 0.0
    %8211 = vmatpush1.msra.mxu0 %v7972
    %8212 = vmatprep.subr.mxu0 0.0
    %8213 = vmatpush1.msra.mxu0 %v7973
    %8214 = vmatprep.subr.mxu0 0.0
    %8215 = vmatpush1.msra.mxu0 %v7974
    %8216 = vmatprep.subr.mxu0 0.0
    %8217 = vmatpush1.msra.mxu0 %v7975
    %8218 = vmatprep.subr.mxu0 0.0
    %8219 = vmatpush1.msra.mxu0 %v7976
    %8220 = vmatprep.mubr.f32.mxu0 %v7878
    %8221 = vmatmul.mubr.f32.gmra.mrb[0].mxu0 %v7877
    %v8222 = vpop.f32.mrb[0].mxu0
    %v8223 = vadd.f32 %v8153, %v8222
    %v8224 = vpop.f32.mrb[0].mxu0
    %8225 = vdwg.mxu0
    %8226 = vmatprep.subr.mxu0 0.0
    %8227 = vmatpush1.msra.mxu0 %v7977
    %8228 = vmatprep.subr.mxu0 0.0
    %8229 = vmatpush1.msra.mxu0 %v7978
    %8230 = vmatprep.subr.mxu0 0.0
    %8231 = vmatpush1.msra.mxu0 %v7979
    %8232 = vmatprep.subr.mxu0 0.0
    %8233 = vmatpush1.msra.mxu0 %v7980
    %8234 = vmatprep.subr.mxu0 0.0
    %8235 = vmatpush1.msra.mxu0 %v7981
    %8236 = vmatprep.subr.mxu0 0.0
    %8237 = vmatpush1.msra.mxu0 %v7982
    %8238 = vmatprep.subr.mxu0 0.0
    %8239 = vmatpush1.msra.mxu0 %v7983
    %8240 = vmatprep.subr.mxu0 0.0
    %8241 = vmatpush1.msra.mxu0 %v7984
    %8242 = vmatprep.subr.mxu0 0.0
    %8243 = vmatpush1.msra.mxu0 %v7985
    %8244 = vmatprep.subr.mxu0 0.0
    %8245 = vmatpush1.msra.mxu0 %v7986
    %8246 = vmatprep.subr.mxu0 0.0
    %8247 = vmatpush1.msra.mxu0 %v7987
    %8248 = vmatprep.subr.mxu0 0.0
    %8249 = vmatpush1.msra.mxu0 %v7988
    %8250 = vmatprep.subr.mxu0 0.0
    %8251 = vmatpush1.msra.mxu0 %v7989
    %8252 = vmatprep.subr.mxu0 0.0
    %8253 = vmatpush1.msra.mxu0 %v7990
    %8254 = vmatprep.subr.mxu0 0.0
    %8255 = vmatpush1.msra.mxu0 %v7991
    %8256 = vmatprep.subr.mxu0 0.0
    %8257 = vmatpush1.msra.mxu0 %v7992
    %8258 = vmatprep.subr.mxu0 0.0
    %8259 = vmatpush1.msra.mxu0 %v7993
    %8260 = vmatprep.subr.mxu0 0.0
    %8261 = vmatpush1.msra.mxu0 %v7994
    %8262 = vmatprep.subr.mxu0 0.0
    %8263 = vmatpush1.msra.mxu0 %v7995
    %8264 = vmatprep.subr.mxu0 0.0
    %8265 = vmatpush1.msra.mxu0 %v7996
    %8266 = vmatprep.subr.mxu0 0.0
    %8267 = vmatpush1.msra.mxu0 %v7997
    %8268 = vmatprep.subr.mxu0 0.0
    %8269 = vmatpush1.msra.mxu0 %v7998
    %8270 = vmatprep.subr.mxu0 0.0
    %8271 = vmatpush1.msra.mxu0 %v7999
    %8272 = vmatprep.subr.mxu0 0.0
    %8273 = vmatpush1.msra.mxu0 %v8000
    %8274 = vmatprep.subr.mxu0 0.0
    %8275 = vmatpush1.msra.mxu0 %v8001
    %8276 = vmatprep.subr.mxu0 0.0
    %8277 = vmatpush1.msra.mxu0 %v8002
    %8278 = vmatprep.subr.mxu0 0.0
    %8279 = vmatpush1.msra.mxu0 %v8003
    %8280 = vmatprep.subr.mxu0 0.0
    %8281 = vmatpush1.msra.mxu0 %v8004
    %8282 = vmatprep.subr.mxu0 0.0
    %8283 = vmatpush1.msra.mxu0 %v8005
    %8284 = vmatprep.subr.mxu0 0.0
    %8285 = vmatpush1.msra.mxu0 %v8006
    %8286 = vmatprep.subr.mxu0 0.0
    %8287 = vmatpush1.msra.mxu0 %v8007
    %8288 = vmatprep.subr.mxu0 0.0
    %8289 = vmatpush1.msra.mxu0 %v8008
    %8290 = vmatprep.mubr.f32.mxu0 %v7880
    %8291 = vmatmul.mubr.f32.gmra.mrb[0].mxu0 %v7879
    %v8292 = vpop.f32.mrb[0].mxu0
    %v8293 = vadd.f32 %v8223, %v8292
    %v8294 = vpop.f32.mrb[0].mxu0
    %8295 = vdwg.mxu0
    %8296 = vmax.xlane.f32.xlu0 %v8293
    %v8297 = vpop.xlane.xlu0 %8296
    %v8298 = vsub.f32 %v8293, %v8297
    %v8299 = vmul.f32 %v8298, 1.442695
    %v8300 = vpow.pop %v8299
    %8301 = vadd.xlane.f32.xlu0 %v8300
    %v8302 = vpop.xlane.xlu0 %8301
    %v8303 = vlog2.pop %v8302
    %v8304 = vmul.f32 %v8303, 0.6931472
    %v8305 = vsub.f32 %v8298, %v8304
    %8306 = vst [vmem:[#allocation29] sm:$0xff] %v8305
    // Predicated region
    $region142: #{tpu_custom_call.1} parent=1 // pred_check
      _
    $region143: #{tpu_custom_call.1} parent=1 // pred_check_branch
      %8308 = sbr.rel (0) target = $region145
    $region144: #{tpu_custom_call.1} parent=1 // pred_region
      %s8310 = ssub.s32 128, 128
      %8311 = vsyncadd [#allocation4], %s8310
      %s8313 = sshll.u32 [#allocation29], 4
      %s8314 = int_to_ptr.vmem [resolvable:$true] %s8313
      %8316 = dma.vmem_to_hbm [thread:$0]  %s8314, 128, %s18, [#allocation4]
    $region145: #{tpu_custom_call.1} parent=1 // pred_fallthru
      _
    // Predicated region
    $region146: #{tpu_custom_call.1} parent=1 // pred_check
      _
    $region147: #{tpu_custom_call.1} parent=1 // pred_check_branch
      %8318 = sbr.rel (0) target = $region149
    $region148: #{tpu_custom_call.1} parent=1 // pred_region
      %8319 = dma.done [#allocation4], 128
    $region149: #{tpu_custom_call.1} parent=1 // pred_fallthru
      _
    %8320 = vsyncpa [#allocation3], 1
    %8321 = vsyncpa [#allocation6], 1
    %8322 = vsyncpa [#allocation9], 1
    %8323 = vsyncpa [#allocation12], 1
    %8324 = vsyncpa [#allocation15], 1
    %8325 = vsyncpa [#allocation18], 1
    %8326 = vsyncpa [#allocation21], 1
    %8327 = vsyncpa [#allocation24], 1
    %8328 = vsyncpa [#allocation27], 1
    %8329 = vsyncpa [#allocation4], 1

</llo_original>
